<compile_context>
chip_gen: v7x
topology: tpu7x:2x2x1
jax: 0.10.0
libtpu: 0.0.40
codegen_flags: <defaults>
</compile_context>

<pallas_src>
import functools

import numpy as np
import jax
import jax.numpy as jnp
from jax.experimental import pallas as pl
from jax.experimental.pallas import tpu as pltpu


_EPS = 1e-5       # torch nn.InstanceNorm2d default eps
_SLOPE = 0.01     # torch nn.LeakyReLU default negative_slope
_NHIDDEN = 128    # ADAIN mlp_shared hidden width (hard-coded in the reference module)


# ----------------------------- in-kernel helpers -----------------------------

def _leaky_relu(v):
    return jnp.where(v >= 0.0, v, _SLOPE * v)


def _instance_norm(xf):
    # xf: (H*W, C) f32. InstanceNorm2d(affine=False): normalize over spatial, per channel.
    # Single-traversal statistics: sum and sum-of-squares together.
    mu = jnp.mean(xf, axis=0, keepdims=True)
    ms = jnp.mean(xf * xf, axis=0, keepdims=True)
    var = jnp.maximum(ms - mu * mu, 0.0)
    return (xf - mu) * jax.lax.rsqrt(var + _EPS)


# --------------------------------- kernel ------------------------------------

def adain_decoder_block_kernel(
    x_ref, z_ref,
    wsh_ref, bsh_ref,                 # fused mlp_shared of the 3 ADAINs: (F, 3*128), (1, 3*128)
    wgb_s_ref, bgb_s_ref,             # norm_s [gamma | beta] head
    wgb_0_ref, bgb_0_ref,             # norm_0 [gamma | beta] head
    wgb_1_ref, bgb_1_ref,             # norm_1 [gamma | beta] head
    w0_ref, b0_ref,                   # conv_0 per-tap: (9, Cin, Chid),     (1, Chid)
    w1_ref, b1_ref,                   # conv_1 per-tap: (4, Chid, 4*Cout),  (1, 4*Cout)
    ws_ref, bs_ref,                   # conv_s per-tap: (4, Cin,  4*Cout),  (1, 4*Cout)
    out_ref,
    pad_ref,                          # shared zero-halo staging buffer (H+2, W+2, Cmax) f32
    *, H, W, Cin, Chid, Cout, cdt,
):
    del Cout  # implied by the weight shapes
    HW = H * W
    nh = _NHIDDEN
    f32 = jnp.float32
    Cmax = pad_ref.shape[-1]

    # Zero ONLY the halo strips (interior is fully overwritten before every conv below).
    # Re-done each grid step (scratch is per-TensorCore under megacore, so a
    # program_id==0 guard would leave the second core's halo uninitialized).
    pad_ref[0:1, :, :] = jnp.zeros((1, W + 2, Cmax), f32)
    pad_ref[H + 1:H + 2, :, :] = jnp.zeros((1, W + 2, Cmax), f32)
    pad_ref[:, 0:1, :] = jnp.zeros((H + 2, 1, Cmax), f32)
    pad_ref[:, W + 1:W + 2, :] = jnp.zeros((H + 2, 1, Cmax), f32)

    xf = x_ref[0].reshape(HW, Cin)             # (HW, Cin)  channels -> lanes, f32
    zb = z_ref[0].astype(cdt)                  # (1, F)

    # ----- ADAIN affine params: the three mlp_shared's fused into one matmul -----
    act = jnp.maximum(
        jnp.dot(zb, wsh_ref[...], preferred_element_type=f32) + bsh_ref[...], 0.0)
    act = act.astype(cdt)                      # (1, 3*nh) = [norm_s | norm_0 | norm_1]
    gb_s = jnp.dot(act[:, 0:nh], wgb_s_ref[...],
                   preferred_element_type=f32) + bgb_s_ref[...]     # (1, 2*Cin)
    gb_0 = jnp.dot(act[:, nh:2 * nh], wgb_0_ref[...],
                   preferred_element_type=f32) + bgb_0_ref[...]     # (1, 2*Cin)
    gb_1 = jnp.dot(act[:, 2 * nh:3 * nh], wgb_1_ref[...],
                   preferred_element_type=f32) + bgb_1_ref[...]     # (1, 2*Chid)

    # ----- shared InstanceNorm2d(x): norm_s and norm_0 apply the identical op -----
    xn = _instance_norm(xf)                    # (HW, Cin) f32

    def stage(act_hw_c, C):
        # write a (H, W, C) activation into the zero-halo staging buffer interior
        pad_ref[1:H + 1, 1:W + 1, 0:C] = act_hw_c.reshape(H, W, C)

    def conv_from_pad(C, w_taps_ref, taps):
        # per-tap accumulating matmuls (no im2col slab): acc_f32 += tap @ w_tap
        # (for small C the MXU K-dim is under-filled; flops are not the bottleneck here)
        acc = None
        for t, (dy, dx) in enumerate(taps):
            tap = pad_ref[dy:dy + H, dx:dx + W, 0:C].reshape(HW, C).astype(cdt)
            prod = jnp.dot(tap, w_taps_ref[t], preferred_element_type=f32)
            acc = prod if acc is None else acc + prod
        return acc

    TAPS3x3 = [(dy, dx) for dy in range(3) for dx in range(3)]   # conv tap -> x[p+dy-1, q+dx-1]
    TAPS2x2 = [(1, 1), (1, 2), (2, 1), (2, 2)]                   # convT taps x(P,Q)..x(P+1,Q+1)

    # ============ shortcut: conv_s( lrelu( ADAIN_s(x, z) ) )  (4-phase ConvTranspose) ============
    a_s = _leaky_relu(xn * (1.0 + gb_s[:, 0:Cin]) + gb_s[:, Cin:2 * Cin])
    stage(a_s, Cin)
    xs_ph = conv_from_pad(Cin, ws_ref, TAPS2x2) + bs_ref[...]    # (HW, 4*Cout)

    # ============ main: conv_0( lrelu( ADAIN_0(x, z) ) )  (3x3 s1 p1 conv) ============
    a_0 = _leaky_relu(xn * (1.0 + gb_0[:, 0:Cin]) + gb_0[:, Cin:2 * Cin])
    stage(a_0, Cin)
    dxh = conv_from_pad(Cin, w0_ref, TAPS3x3) + b0_ref[...]      # (HW, Chid) f32

    # ============ main: conv_1( lrelu( ADAIN_1(dx, z) ) )  (4-phase ConvTranspose) ============
    a_1 = _leaky_relu(_instance_norm(dxh) * (1.0 + gb_1[:, 0:Chid]) + gb_1[:, Chid:2 * Chid])
    stage(a_1, Chid)
    dx_ph = conv_from_pad(Chid, w1_ref, TAPS2x2) + b1_ref[...]   # (HW, 4*Cout)

    # residual add in phase space; the de-interleave to (2H, 2W) NCHW is wrapper-side plumbing
    out_ref[0] = (xs_ph + dx_ph).astype(out_ref.dtype)


# --------------------------------- wrapper ------------------------------------

def _const_spec(shape):
    zeros = (0,) * len(shape)
    return pl.BlockSpec(shape, lambda b, _z=zeros: _z)


def adain_decoder_block(x_nchw, z, p, *, compute_dtype=jnp.bfloat16):
    """x_nchw: (B, Cin, H, W) f32; z: (B, feature_nc) f32; p: pack_params(...) dict.
    Returns (B, Cout, 2H, 2W) f32 (matches the PyTorch module's NCHW output)."""
    B, Cin, H, W = x_nchw.shape
    F = z.shape[1]
    Chid = p['w0'].shape[2]
    Cout = p['ws'].shape[2] // 4
    HW = H * W
    Cmax = max(Cin, Chid)
    assert W % 8 == 0, "width must be a multiple of 8 (sublane-trivial (H,W,C)<->(HW,C) reshapes)"

    x_nhwc = jnp.transpose(x_nchw, (0, 2, 3, 1))     # channels-last (channels -> lanes)
    z3 = z[:, None, :]                               # (B, 1, F)

    kernel = functools.partial(adain_decoder_block_kernel,
                               H=H, W=W, Cin=Cin, Chid=Chid, Cout=Cout, cdt=compute_dtype)

    in_specs = [
        pl.BlockSpec((1, H, W, Cin), lambda b: (b, 0, 0, 0)),
        pl.BlockSpec((1, 1, F), lambda b: (b, 0, 0)),
        _const_spec((F, 3 * _NHIDDEN)), _const_spec((1, 3 * _NHIDDEN)),
        _const_spec((_NHIDDEN, 2 * Cin)), _const_spec((1, 2 * Cin)),
        _const_spec((_NHIDDEN, 2 * Cin)), _const_spec((1, 2 * Cin)),
        _const_spec((_NHIDDEN, 2 * Chid)), _const_spec((1, 2 * Chid)),
        _const_spec((9, Cin, Chid)), _const_spec((1, Chid)),
        _const_spec((4, Chid, 4 * Cout)), _const_spec((1, 4 * Cout)),
        _const_spec((4, Cin, 4 * Cout)), _const_spec((1, 4 * Cout)),
    ]

    out_phase = pl.pallas_call(
        kernel,
        out_shape=jax.ShapeDtypeStruct((B, HW, 4 * Cout), jnp.float32),
        grid=(B,),
        in_specs=in_specs,
        out_specs=pl.BlockSpec((1, HW, 4 * Cout), lambda b: (b, 0, 0)),
        scratch_shapes=[pltpu.VMEM((H + 2, W + 2, Cmax), jnp.float32)],   # one shared staging buf
        compiler_params=pltpu.CompilerParams(
            dimension_semantics=("parallel",),
            vmem_limit_bytes=32 * 1024 * 1024),
    )(x_nhwc, z3,
      p['wsh'], p['bsh'],
      p['wgb_s'], p['bgb_s'], p['wgb_0'], p['bgb_0'], p['wgb_1'], p['bgb_1'],
      p['w0'], p['b0'], p['w1'], p['b1'], p['ws'], p['bs'])

    # phase layout -> NCHW output (pure layout plumbing outside the kernel):
    # out_phase[b, P*W+Q, (r*2+s)*Cout + c]  ->  out[b, c, 2P+r, 2Q+s]
    y = out_phase.reshape(B, H, W, 2, 2, Cout)
    y = jnp.transpose(y, (0, 1, 3, 2, 4, 5)).reshape(B, 2 * H, 2 * W, Cout)
    return jnp.transpose(y, (0, 3, 1, 2))


# ---------------------------- parameter construction ---------------------------

def init_raw_params(key, input_nc, output_nc, hidden_nc, feature_nc):
    """Deterministic parameters in PyTorch layout."""
    k_s, k_0, k_1, k_c = jax.random.split(key, 4)

    def u(k, shape, fan_in):
        s = 1.0 / float(np.sqrt(fan_in))
        return jax.random.uniform(k, shape, jnp.float32, -s, s)

    def adain(k, norm_nc):
        k1, k2, k3, k4, k5, k6 = jax.random.split(k, 6)
        return dict(
            w_sh=u(k1, (_NHIDDEN, feature_nc), feature_nc), b_sh=u(k2, (_NHIDDEN,), feature_nc),
            w_g=u(k3, (norm_nc, _NHIDDEN), _NHIDDEN), b_g=u(k4, (norm_nc,), _NHIDDEN),
            w_b=u(k5, (norm_nc, _NHIDDEN), _NHIDDEN), b_b=u(k6, (norm_nc,), _NHIDDEN),
        )

    kw0, kb0, kw1, kb1, kws, kbs = jax.random.split(k_c, 6)
    return dict(
        norm_s=adain(k_s, input_nc),
        norm_0=adain(k_0, input_nc),
        norm_1=adain(k_1, hidden_nc),
        # conv_0: Conv2d(input_nc -> hidden_nc, k3 s1 p1): weight (Chid, Cin, 3, 3)
        w0=u(kw0, (hidden_nc, input_nc, 3, 3), input_nc * 9),
        b0=u(kb0, (hidden_nc,), input_nc * 9),
        # conv_1: ConvTranspose2d(hidden_nc -> output_nc, k3 s2 p1 op1): weight (Cin, Cout, 3, 3)
        w1=u(kw1, (hidden_nc, output_nc, 3, 3), hidden_nc * 9),
        b1=u(kb1, (output_nc,), hidden_nc * 9),
        # conv_s: ConvTranspose2d(input_nc -> output_nc, k3 s2 p1 op1)
        ws=u(kws, (input_nc, output_nc, 3, 3), input_nc * 9),
        bs=u(kbs, (output_nc,), input_nc * 9),
    )


def _phase_tap_weights(wt):
    """ConvTranspose2d(k3,s2,p1,op1) weight (Cin, Cout, 3, 3) -> per-tap (4, Cin, 4*Cout).
    Tap axis = [x(P,Q), x(P,Q+1), x(P+1,Q), x(P+1,Q+1)];
    columns = output phases [(even,even), (even,odd), (odd,even), (odd,odd)] x Cout."""
    cin, cout = wt.shape[0], wt.shape[1]
    z = jnp.zeros((cin, cout), wt.dtype)
    w = lambda ky, kx: wt[:, :, ky, kx]
    taps = [
        [w(1, 1), w(1, 2), w(2, 1), w(2, 2)],   # tap x(P,   Q)
        [z,       w(1, 0), z,       w(2, 0)],   # tap x(P,   Q+1)
        [z,       z,       w(0, 1), w(0, 2)],   # tap x(P+1, Q)
        [z,       z,       z,       w(0, 0)],   # tap x(P+1, Q+1)
    ]
    return jnp.stack([jnp.concatenate(t, axis=1) for t in taps], axis=0)


def pack_params(raw, dtype=jnp.bfloat16):
    """Torch-layout params -> MXU-friendly per-tap kernel layout.
    `dtype` is the matmul-operand (weight) dtype; biases stay f32 (added after the f32-acc dot)."""
    wd = dtype

    def adain_pack(a):
        return (jnp.transpose(a['w_sh']),                                             # (F, nh)
                a['b_sh'][None, :],                                                   # (1, nh)
                jnp.concatenate([jnp.transpose(a['w_g']), jnp.transpose(a['w_b'])], axis=1),
                jnp.concatenate([a['b_g'], a['b_b']])[None, :])

    wsh_s, bsh_s, wgb_s, bgb_s = adain_pack(raw['norm_s'])
    wsh_0, bsh_0, wgb_0, bgb_0 = adain_pack(raw['norm_0'])
    wsh_1, bsh_1, wgb_1, bgb_1 = adain_pack(raw['norm_1'])
    chid, cin = raw['w0'].shape[0], raw['w0'].shape[1]
    return dict(
        wsh=jnp.concatenate([wsh_s, wsh_0, wsh_1], axis=1).astype(wd),    # (F, 3*nh)
        bsh=jnp.concatenate([bsh_s, bsh_0, bsh_1], axis=1),               # (1, 3*nh) f32
        wgb_s=wgb_s.astype(wd), bgb_s=bgb_s,
        wgb_0=wgb_0.astype(wd), bgb_0=bgb_0,
        wgb_1=wgb_1.astype(wd), bgb_1=bgb_1,
        # conv_0 per-tap: w0[t = ky*3+kx] = raw_w0[:, :, ky, kx].T
        w0=jnp.transpose(raw['w0'], (2, 3, 1, 0)).reshape(9, cin, chid).astype(wd),
        b0=raw['b0'][None, :],
        w1=_phase_tap_weights(raw['w1']).astype(wd), b1=jnp.tile(raw['b1'], 4)[None, :],
        ws=_phase_tap_weights(raw['ws']).astype(wd), bs=jnp.tile(raw['bs'], 4)[None, :],
    )


# ------------------------- pure-JAX reference (for self-check) -------------------------

_mm = functools.partial(jnp.matmul, precision=jax.lax.Precision.HIGHEST)


def _adain_ref(x, z, a):
    mu = jnp.mean(x, axis=(2, 3), keepdims=True)
    var = jnp.mean((x - mu) ** 2, axis=(2, 3), keepdims=True)
    xn = (x - mu) * jax.lax.rsqrt(var + _EPS)
    actv = jax.nn.relu(_mm(z, a['w_sh'].T) + a['b_sh'])
    gamma = _mm(actv, a['w_g'].T) + a['b_g']
    beta = _mm(actv, a['w_b'].T) + a['b_b']
    return xn * (1.0 + gamma[:, :, None, None]) + beta[:, :, None, None]


def _conv3x3_ref(x, w, b):
    y = jax.lax.conv_general_dilated(x, w, (1, 1), ((1, 1), (1, 1)),
                                     dimension_numbers=('NCHW', 'OIHW', 'NCHW'),
                                     precision=jax.lax.Precision.HIGHEST)
    return y + b[None, :, None, None]


def _convT3x3_s2_ref(x, w, b):
    # ConvTranspose2d(k3, s2, p1, op1) == lhs-dilated conv with flipped kernel.
    w_eff = jnp.transpose(jnp.flip(w, axis=(2, 3)), (1, 0, 2, 3))   # (Cout, Cin, 3, 3)
    y = jax.lax.conv_general_dilated(x, w_eff, (1, 1), ((1, 2), (1, 2)),
                                     lhs_dilation=(2, 2),
                                     dimension_numbers=('NCHW', 'OIHW', 'NCHW'),
                                     precision=jax.lax.Precision.HIGHEST)
    return y + b[None, :, None, None]


def adain_decoder_block_ref(x, z, raw):
    lrelu = lambda v: jnp.where(v >= 0.0, v, _SLOPE * v)
    x_s = _convT3x3_s2_ref(lrelu(_adain_ref(x, z, raw['norm_s'])), raw['ws'], raw['bs'])
    dx = _conv3x3_ref(lrelu(_adain_ref(x, z, raw['norm_0'])), raw['w0'], raw['b0'])
    dx = _convT3x3_s2_ref(lrelu(_adain_ref(dx, z, raw['norm_1'])), raw['w1'], raw['b1'])
    return x_s + dx


# ------------------------------------ main -------------------------------------

if __name__ == "__main__":
    # channels chosen so the kernel output's last dim 4*Cout = 128 is lane-dense
    input_nc, output_nc, hidden_nc, feature_nc = 32, 32, 32, 8
    B, H, W = 2, 16, 16

    key = jax.random.PRNGKey(0)
    kx, kz, kp = jax.random.split(key, 3)
    x = jax.random.normal(kx, (B, input_nc, H, W), jnp.float32)
    z = jax.random.normal(kz, (B, feature_nc), jnp.float32)

    raw = init_raw_params(kp, input_nc, output_nc, hidden_nc, feature_nc)
    ref = jax.block_until_ready(adain_decoder_block_ref(x, z, raw))

    # 1) full-f32 path: tighter structural-correctness check
    run_f32 = jax.jit(functools.partial(adain_decoder_block, compute_dtype=jnp.float32))
    out_f32 = jax.block_until_ready(run_f32(x, z, pack_params(raw, dtype=jnp.float32)))
    assert out_f32.shape == (B, output_nc, 2 * H, 2 * W)
    np.testing.assert_allclose(np.asarray(out_f32), np.asarray(ref), rtol=1e-2, atol=1e-2)

    # 2) default perf path: bf16 matmul operands, f32 accumulation / f32 VPU elementwise
    run_bf16 = jax.jit(functools.partial(adain_decoder_block, compute_dtype=jnp.bfloat16))
    out_bf16 = jax.block_until_ready(run_bf16(x, z, pack_params(raw, dtype=jnp.bfloat16)))
    assert out_bf16.shape == (B, output_nc, 2 * H, 2 * W)
    np.testing.assert_allclose(np.asarray(out_bf16), np.asarray(ref), rtol=5e-2, atol=5e-2)

    print("KERNEL_OK")
</pallas_src>

<mosaic_0001>
module attributes {stable_mosaic.version = 11 : i64} {
  func.func @adain_decoder_block_kernel(%arg0: i32, %arg1: memref<1x16x16x32xf32, #tpu.memory_space<vmem>>, %arg2: memref<1x1x8xf32, #tpu.memory_space<vmem>>, %arg3: memref<8x384xf32, #tpu.memory_space<vmem>>, %arg4: memref<1x384xf32, #tpu.memory_space<vmem>>, %arg5: memref<128x64xf32, #tpu.memory_space<vmem>>, %arg6: memref<1x64xf32, #tpu.memory_space<vmem>>, %arg7: memref<128x64xf32, #tpu.memory_space<vmem>>, %arg8: memref<1x64xf32, #tpu.memory_space<vmem>>, %arg9: memref<128x64xf32, #tpu.memory_space<vmem>>, %arg10: memref<1x64xf32, #tpu.memory_space<vmem>>, %arg11: memref<9x32x32xf32, #tpu.memory_space<vmem>>, %arg12: memref<1x32xf32, #tpu.memory_space<vmem>>, %arg13: memref<4x32x128xf32, #tpu.memory_space<vmem>>, %arg14: memref<1x128xf32, #tpu.memory_space<vmem>>, %arg15: memref<4x32x128xf32, #tpu.memory_space<vmem>>, %arg16: memref<1x128xf32, #tpu.memory_space<vmem>>, %arg17: memref<1x256x128xf32, #tpu.memory_space<vmem>>, %arg18: memref<18x18x32xf32, #tpu.memory_space<vmem>>) attributes {dimension_semantics = [#tpu.dimension_semantics<parallel>], iteration_bounds = array<i64: 2>, scalar_prefetch = 0 : i64, scratch_operands = 1 : i64, tpu.core_type = #tpu.core_type<tc>, window_params = [{transform_indices = @transform_0, window_bounds = array<i64: 1, 16, 16, 32>}, {transform_indices = @transform_1, window_bounds = array<i64: 1, 1, 8>}, {pipeline_mode = #tpu.pipeline_mode<synchronous>, transform_indices = @transform_2, window_bounds = array<i64: 8, 384>}, {pipeline_mode = #tpu.pipeline_mode<synchronous>, transform_indices = @transform_3, window_bounds = array<i64: 1, 384>}, {pipeline_mode = #tpu.pipeline_mode<synchronous>, transform_indices = @transform_4, window_bounds = array<i64: 128, 64>}, {pipeline_mode = #tpu.pipeline_mode<synchronous>, transform_indices = @transform_5, window_bounds = array<i64: 1, 64>}, {pipeline_mode = #tpu.pipeline_mode<synchronous>, transform_indices = @transform_6, window_bounds = array<i64: 128, 64>}, {pipeline_mode = #tpu.pipeline_mode<synchronous>, transform_indices = @transform_7, window_bounds = array<i64: 1, 64>}, {pipeline_mode = #tpu.pipeline_mode<synchronous>, transform_indices = @transform_8, window_bounds = array<i64: 128, 64>}, {pipeline_mode = #tpu.pipeline_mode<synchronous>, transform_indices = @transform_9, window_bounds = array<i64: 1, 64>}, {pipeline_mode = #tpu.pipeline_mode<synchronous>, transform_indices = @transform_10, window_bounds = array<i64: 9, 32, 32>}, {pipeline_mode = #tpu.pipeline_mode<synchronous>, transform_indices = @transform_11, window_bounds = array<i64: 1, 32>}, {pipeline_mode = #tpu.pipeline_mode<synchronous>, transform_indices = @transform_12, window_bounds = array<i64: 4, 32, 128>}, {pipeline_mode = #tpu.pipeline_mode<synchronous>, transform_indices = @transform_13, window_bounds = array<i64: 1, 128>}, {pipeline_mode = #tpu.pipeline_mode<synchronous>, transform_indices = @transform_14, window_bounds = array<i64: 4, 32, 128>}, {pipeline_mode = #tpu.pipeline_mode<synchronous>, transform_indices = @transform_15, window_bounds = array<i64: 1, 128>}, {transform_indices = @transform_16, window_bounds = array<i64: 1, 256, 128>}]} {
    %cst = arith.constant 0.000000e+00 : f32
    %0 = vector.broadcast %cst : f32 to vector<1x18x32xf32>
    %c0 = arith.constant 0 : index
    %c0_0 = arith.constant 0 : index
    %c0_1 = arith.constant 0 : index
    %1 = vector.load %arg18[%c0, %c0_0, %c0_1] : memref<18x18x32xf32, #tpu.memory_space<vmem>>, vector<1x18x32xf32>
    tpu.vector_store %arg18[%c0, %c0_0, %c0_1], %0 {strides = array<i32>} : memref<18x18x32xf32, #tpu.memory_space<vmem>>, vector<1x18x32xf32>,
    %cst_2 = arith.constant 0.000000e+00 : f32
    %2 = vector.broadcast %cst_2 : f32 to vector<1x18x32xf32>
    %c17 = arith.constant 17 : index
    %c0_3 = arith.constant 0 : index
    %c0_4 = arith.constant 0 : index
    %3 = vector.load %arg18[%c17, %c0_3, %c0_4] : memref<18x18x32xf32, #tpu.memory_space<vmem>>, vector<1x18x32xf32>
    tpu.vector_store %arg18[%c17, %c0_3, %c0_4], %2 {strides = array<i32>} : memref<18x18x32xf32, #tpu.memory_space<vmem>>, vector<1x18x32xf32>,
    %cst_5 = arith.constant 0.000000e+00 : f32
    %4 = vector.broadcast %cst_5 : f32 to vector<18x1x32xf32>
    %c0_6 = arith.constant 0 : index
    %c0_7 = arith.constant 0 : index
    %c0_8 = arith.constant 0 : index
    %5 = vector.load %arg18[%c0_6, %c0_7, %c0_8] : memref<18x18x32xf32, #tpu.memory_space<vmem>>, vector<18x1x32xf32>
    tpu.vector_store %arg18[%c0_6, %c0_7, %c0_8], %4 {strides = array<i32>} : memref<18x18x32xf32, #tpu.memory_space<vmem>>, vector<18x1x32xf32>,
    %cst_9 = arith.constant 0.000000e+00 : f32
    %6 = vector.broadcast %cst_9 : f32 to vector<18x1x32xf32>
    %c0_10 = arith.constant 0 : index
    %c17_11 = arith.constant 17 : index
    %c0_12 = arith.constant 0 : index
    %7 = vector.load %arg18[%c0_10, %c17_11, %c0_12] : memref<18x18x32xf32, #tpu.memory_space<vmem>>, vector<18x1x32xf32>
    tpu.vector_store %arg18[%c0_10, %c17_11, %c0_12], %6 {strides = array<i32>} : memref<18x18x32xf32, #tpu.memory_space<vmem>>, vector<18x1x32xf32>,
    %c0_13 = arith.constant 0 : index
    %c0_14 = arith.constant 0 : index
    %c0_15 = arith.constant 0 : index
    %c0_16 = arith.constant 0 : index
    %8 = vector.load %arg1[%c0_13, %c0_14, %c0_15, %c0_16] : memref<1x16x16x32xf32, #tpu.memory_space<vmem>>, vector<1x16x16x32xf32>
    %9 = vector.shape_cast %8 : vector<1x16x16x32xf32> to vector<16x16x32xf32>
    %10 = vector.shape_cast %9 : vector<16x16x32xf32> to vector<256x32xf32>
    %c0_17 = arith.constant 0 : index
    %c0_18 = arith.constant 0 : index
    %c0_19 = arith.constant 0 : index
    %11 = vector.load %arg2[%c0_17, %c0_18, %c0_19] : memref<1x1x8xf32, #tpu.memory_space<vmem>>, vector<1x1x8xf32>
    %12 = vector.shape_cast %11 : vector<1x1x8xf32> to vector<1x8xf32>
    %c0_20 = arith.constant 0 : index
    %c0_21 = arith.constant 0 : index
    %13 = vector.load %arg3[%c0_20, %c0_21] : memref<8x384xf32, #tpu.memory_space<vmem>>, vector<8x384xf32>
    %cst_22 = arith.constant dense<0.000000e+00> : vector<1x384xf32>
    %14 = tpu.matmul %12, %13, %cst_22 {dimension_numbers = #tpu.dot_dimension_numbers<[1], [0], [0], [1], [0, 0, 1, 1], [], []>} : vector<1x8xf32>, vector<8x384xf32>, vector<1x384xf32> -> vector<1x384xf32>
    %c0_23 = arith.constant 0 : index
    %c0_24 = arith.constant 0 : index
    %15 = vector.load %arg4[%c0_23, %c0_24] : memref<1x384xf32, #tpu.memory_space<vmem>>, vector<1x384xf32>
    %16 = arith.addf %14, %15 : vector<1x384xf32>
    %cst_25 = arith.constant 0.000000e+00 : f32
    %17 = vector.broadcast %cst_25 : f32 to vector<1x384xf32>
    %18 = arith.maximumf %16, %17 : vector<1x384xf32>
    %19 = vector.extract_strided_slice %18 {offsets = [0, 0], sizes = [1, 128], strides = [1, 1]} : vector<1x384xf32> to vector<1x128xf32>
    %c0_26 = arith.constant 0 : index
    %c0_27 = arith.constant 0 : index
    %20 = vector.load %arg5[%c0_26, %c0_27] : memref<128x64xf32, #tpu.memory_space<vmem>>, vector<128x64xf32>
    %cst_28 = arith.constant dense<0.000000e+00> : vector<1x64xf32>
    %21 = tpu.matmul %19, %20, %cst_28 {dimension_numbers = #tpu.dot_dimension_numbers<[1], [0], [0], [1], [0, 0, 1, 1], [], []>} : vector<1x128xf32>, vector<128x64xf32>, vector<1x64xf32> -> vector<1x64xf32>
    %c0_29 = arith.constant 0 : index
    %c0_30 = arith.constant 0 : index
    %22 = vector.load %arg6[%c0_29, %c0_30] : memref<1x64xf32, #tpu.memory_space<vmem>>, vector<1x64xf32>
    %23 = arith.addf %21, %22 : vector<1x64xf32>
    %24 = vector.extract_strided_slice %18 {offsets = [0, 128], sizes = [1, 128], strides = [1, 1]} : vector<1x384xf32> to vector<1x128xf32>
    %c0_31 = arith.constant 0 : index
    %c0_32 = arith.constant 0 : index
    %25 = vector.load %arg7[%c0_31, %c0_32] : memref<128x64xf32, #tpu.memory_space<vmem>>, vector<128x64xf32>
    %cst_33 = arith.constant dense<0.000000e+00> : vector<1x64xf32>
    %26 = tpu.matmul %24, %25, %cst_33 {dimension_numbers = #tpu.dot_dimension_numbers<[1], [0], [0], [1], [0, 0, 1, 1], [], []>} : vector<1x128xf32>, vector<128x64xf32>, vector<1x64xf32> -> vector<1x64xf32>
    %c0_34 = arith.constant 0 : index
    %c0_35 = arith.constant 0 : index
    %27 = vector.load %arg8[%c0_34, %c0_35] : memref<1x64xf32, #tpu.memory_space<vmem>>, vector<1x64xf32>
    %28 = arith.addf %26, %27 : vector<1x64xf32>
    %29 = vector.extract_strided_slice %18 {offsets = [0, 256], sizes = [1, 128], strides = [1, 1]} : vector<1x384xf32> to vector<1x128xf32>
    %c0_36 = arith.constant 0 : index
    %c0_37 = arith.constant 0 : index
    %30 = vector.load %arg9[%c0_36, %c0_37] : memref<128x64xf32, #tpu.memory_space<vmem>>, vector<128x64xf32>
    %cst_38 = arith.constant dense<0.000000e+00> : vector<1x64xf32>
    %31 = tpu.matmul %29, %30, %cst_38 {dimension_numbers = #tpu.dot_dimension_numbers<[1], [0], [0], [1], [0, 0, 1, 1], [], []>} : vector<1x128xf32>, vector<128x64xf32>, vector<1x64xf32> -> vector<1x64xf32>
    %c0_39 = arith.constant 0 : index
    %c0_40 = arith.constant 0 : index
    %32 = vector.load %arg10[%c0_39, %c0_40] : memref<1x64xf32, #tpu.memory_space<vmem>>, vector<1x64xf32>
    %33 = arith.addf %31, %32 : vector<1x64xf32>
    %cst_41 = arith.constant dense<0.000000e+00> : vector<32xf32>
    %34 = vector.multi_reduction <add>, %10, %cst_41 [0] : vector<256x32xf32> to vector<32xf32>
    %35 = vector.shape_cast %34 : vector<32xf32> to vector<1x32xf32>
    %cst_42 = arith.constant 2.560000e+02 : f32
    %36 = vector.broadcast %cst_42 : f32 to vector<1x32xf32>
    %37 = arith.divf %35, %36 : vector<1x32xf32>
    %38 = arith.mulf %10, %10 : vector<256x32xf32>
    %cst_43 = arith.constant dense<0.000000e+00> : vector<32xf32>
    %39 = vector.multi_reduction <add>, %38, %cst_43 [0] : vector<256x32xf32> to vector<32xf32>
    %40 = vector.shape_cast %39 : vector<32xf32> to vector<1x32xf32>
    %cst_44 = arith.constant 2.560000e+02 : f32
    %41 = vector.broadcast %cst_44 : f32 to vector<1x32xf32>
    %42 = arith.divf %40, %41 : vector<1x32xf32>
    %43 = arith.mulf %37, %37 : vector<1x32xf32>
    %44 = arith.subf %42, %43 : vector<1x32xf32>
    %cst_45 = arith.constant 0.000000e+00 : f32
    %45 = vector.broadcast %cst_45 : f32 to vector<1x32xf32>
    %46 = arith.maximumf %44, %45 : vector<1x32xf32>
    %47 = vector.broadcast %37 : vector<1x32xf32> to vector<256x32xf32>
    %48 = arith.subf %10, %47 : vector<256x32xf32>
    %cst_46 = arith.constant 9.99999974E-6 : f32
    %49 = vector.broadcast %cst_46 : f32 to vector<1x32xf32>
    %50 = arith.addf %46, %49 : vector<1x32xf32>
    %51 = math.rsqrt %50 : vector<1x32xf32>
    %52 = vector.broadcast %51 : vector<1x32xf32> to vector<256x32xf32>
    %53 = arith.mulf %48, %52 : vector<256x32xf32>
    %54 = vector.extract_strided_slice %23 {offsets = [0, 0], sizes = [1, 32], strides = [1, 1]} : vector<1x64xf32> to vector<1x32xf32>
    %cst_47 = arith.constant 1.000000e+00 : f32
    %55 = vector.broadcast %cst_47 : f32 to vector<1x32xf32>
    %56 = arith.addf %55, %54 : vector<1x32xf32>
    %57 = vector.broadcast %56 : vector<1x32xf32> to vector<256x32xf32>
    %58 = arith.mulf %53, %57 : vector<256x32xf32>
    %59 = vector.extract_strided_slice %23 {offsets = [0, 32], sizes = [1, 32], strides = [1, 1]} : vector<1x64xf32> to vector<1x32xf32>
    %60 = vector.broadcast %59 : vector<1x32xf32> to vector<256x32xf32>
    %61 = arith.addf %58, %60 : vector<256x32xf32>
    %cst_48 = arith.constant 0.000000e+00 : f32
    %62 = vector.broadcast %cst_48 : f32 to vector<256x32xf32>
    %63 = arith.cmpf oge, %61, %62 : vector<256x32xf32>
    %cst_49 = arith.constant 0.00999999977 : f32
    %64 = vector.broadcast %cst_49 : f32 to vector<256x32xf32>
    %65 = arith.mulf %64, %61 : vector<256x32xf32>
    %66 = arith.select %63, %61, %65 : vector<256x32xi1>, vector<256x32xf32>
    %67 = vector.shape_cast %66 : vector<256x32xf32> to vector<16x16x32xf32>
    %c1 = arith.constant 1 : index
    %c1_50 = arith.constant 1 : index
    %c0_51 = arith.constant 0 : index
    %68 = vector.load %arg18[%c1, %c1_50, %c0_51] : memref<18x18x32xf32, #tpu.memory_space<vmem>>, vector<16x16x32xf32>
    tpu.vector_store %arg18[%c1, %c1_50, %c0_51], %67 {strides = array<i32>} : memref<18x18x32xf32, #tpu.memory_space<vmem>>, vector<16x16x32xf32>,
    %c1_52 = arith.constant 1 : index
    %c1_53 = arith.constant 1 : index
    %c0_54 = arith.constant 0 : index
    %69 = vector.load %arg18[%c1_52, %c1_53, %c0_54] : memref<18x18x32xf32, #tpu.memory_space<vmem>>, vector<16x16x32xf32>
    %70 = vector.shape_cast %69 : vector<16x16x32xf32> to vector<256x32xf32>
    %c0_55 = arith.constant 0 : index
    %c0_56 = arith.constant 0 : index
    %c0_57 = arith.constant 0 : index
    %71 = vector.load %arg15[%c0_55, %c0_56, %c0_57] : memref<4x32x128xf32, #tpu.memory_space<vmem>>, vector<1x32x128xf32>
    %72 = vector.shape_cast %71 : vector<1x32x128xf32> to vector<32x128xf32>
    %cst_58 = arith.constant dense<0.000000e+00> : vector<256x128xf32>
    %73 = tpu.matmul %70, %72, %cst_58 {dimension_numbers = #tpu.dot_dimension_numbers<[1], [0], [0], [1], [0, 0, 1, 1], [], []>} : vector<256x32xf32>, vector<32x128xf32>, vector<256x128xf32> -> vector<256x128xf32>
    %c1_59 = arith.constant 1 : index
    %c2 = arith.constant 2 : index
    %c0_60 = arith.constant 0 : index
    %74 = vector.load %arg18[%c1_59, %c2, %c0_60] : memref<18x18x32xf32, #tpu.memory_space<vmem>>, vector<16x16x32xf32>
    %75 = vector.shape_cast %74 : vector<16x16x32xf32> to vector<256x32xf32>
    %c1_61 = arith.constant 1 : index
    %c0_62 = arith.constant 0 : index
    %c0_63 = arith.constant 0 : index
    %76 = vector.load %arg15[%c1_61, %c0_62, %c0_63] : memref<4x32x128xf32, #tpu.memory_space<vmem>>, vector<1x32x128xf32>
    %77 = vector.shape_cast %76 : vector<1x32x128xf32> to vector<32x128xf32>
    %cst_64 = arith.constant dense<0.000000e+00> : vector<256x128xf32>
    %78 = tpu.matmul %75, %77, %cst_64 {dimension_numbers = #tpu.dot_dimension_numbers<[1], [0], [0], [1], [0, 0, 1, 1], [], []>} : vector<256x32xf32>, vector<32x128xf32>, vector<256x128xf32> -> vector<256x128xf32>
    %79 = arith.addf %73, %78 : vector<256x128xf32>
    %c2_65 = arith.constant 2 : index
    %c1_66 = arith.constant 1 : index
    %c0_67 = arith.constant 0 : index
    %80 = vector.load %arg18[%c2_65, %c1_66, %c0_67] : memref<18x18x32xf32, #tpu.memory_space<vmem>>, vector<16x16x32xf32>
    %81 = vector.shape_cast %80 : vector<16x16x32xf32> to vector<256x32xf32>
    %c2_68 = arith.constant 2 : index
    %c0_69 = arith.constant 0 : index
    %c0_70 = arith.constant 0 : index
    %82 = vector.load %arg15[%c2_68, %c0_69, %c0_70] : memref<4x32x128xf32, #tpu.memory_space<vmem>>, vector<1x32x128xf32>
    %83 = vector.shape_cast %82 : vector<1x32x128xf32> to vector<32x128xf32>
    %cst_71 = arith.constant dense<0.000000e+00> : vector<256x128xf32>
    %84 = tpu.matmul %81, %83, %cst_71 {dimension_numbers = #tpu.dot_dimension_numbers<[1], [0], [0], [1], [0, 0, 1, 1], [], []>} : vector<256x32xf32>, vector<32x128xf32>, vector<256x128xf32> -> vector<256x128xf32>
    %85 = arith.addf %79, %84 : vector<256x128xf32>
    %c2_72 = arith.constant 2 : index
    %c2_73 = arith.constant 2 : index
    %c0_74 = arith.constant 0 : index
    %86 = vector.load %arg18[%c2_72, %c2_73, %c0_74] : memref<18x18x32xf32, #tpu.memory_space<vmem>>, vector<16x16x32xf32>
    %87 = vector.shape_cast %86 : vector<16x16x32xf32> to vector<256x32xf32>
    %c3 = arith.constant 3 : index
    %c0_75 = arith.constant 0 : index
    %c0_76 = arith.constant 0 : index
    %88 = vector.load %arg15[%c3, %c0_75, %c0_76] : memref<4x32x128xf32, #tpu.memory_space<vmem>>, vector<1x32x128xf32>
    %89 = vector.shape_cast %88 : vector<1x32x128xf32> to vector<32x128xf32>
    %cst_77 = arith.constant dense<0.000000e+00> : vector<256x128xf32>
    %90 = tpu.matmul %87, %89, %cst_77 {dimension_numbers = #tpu.dot_dimension_numbers<[1], [0], [0], [1], [0, 0, 1, 1], [], []>} : vector<256x32xf32>, vector<32x128xf32>, vector<256x128xf32> -> vector<256x128xf32>
    %91 = arith.addf %85, %90 : vector<256x128xf32>
    %c0_78 = arith.constant 0 : index
    %c0_79 = arith.constant 0 : index
    %92 = vector.load %arg16[%c0_78, %c0_79] : memref<1x128xf32, #tpu.memory_space<vmem>>, vector<1x128xf32>
    %93 = vector.broadcast %92 : vector<1x128xf32> to vector<256x128xf32>
    %94 = arith.addf %91, %93 : vector<256x128xf32>
    %95 = vector.extract_strided_slice %28 {offsets = [0, 0], sizes = [1, 32], strides = [1, 1]} : vector<1x64xf32> to vector<1x32xf32>
    %cst_80 = arith.constant 1.000000e+00 : f32
    %96 = vector.broadcast %cst_80 : f32 to vector<1x32xf32>
    %97 = arith.addf %96, %95 : vector<1x32xf32>
    %98 = vector.broadcast %97 : vector<1x32xf32> to vector<256x32xf32>
    %99 = arith.mulf %53, %98 : vector<256x32xf32>
    %100 = vector.extract_strided_slice %28 {offsets = [0, 32], sizes = [1, 32], strides = [1, 1]} : vector<1x64xf32> to vector<1x32xf32>
    %101 = vector.broadcast %100 : vector<1x32xf32> to vector<256x32xf32>
    %102 = arith.addf %99, %101 : vector<256x32xf32>
    %cst_81 = arith.constant 0.000000e+00 : f32
    %103 = vector.broadcast %cst_81 : f32 to vector<256x32xf32>
    %104 = arith.cmpf oge, %102, %103 : vector<256x32xf32>
    %cst_82 = arith.constant 0.00999999977 : f32
    %105 = vector.broadcast %cst_82 : f32 to vector<256x32xf32>
    %106 = arith.mulf %105, %102 : vector<256x32xf32>
    %107 = arith.select %104, %102, %106 : vector<256x32xi1>, vector<256x32xf32>
    %108 = vector.shape_cast %107 : vector<256x32xf32> to vector<16x16x32xf32>
    %c1_83 = arith.constant 1 : index
    %c1_84 = arith.constant 1 : index
    %c0_85 = arith.constant 0 : index
    %109 = vector.load %arg18[%c1_83, %c1_84, %c0_85] : memref<18x18x32xf32, #tpu.memory_space<vmem>>, vector<16x16x32xf32>
    tpu.vector_store %arg18[%c1_83, %c1_84, %c0_85], %108 {strides = array<i32>} : memref<18x18x32xf32, #tpu.memory_space<vmem>>, vector<16x16x32xf32>,
    %c0_86 = arith.constant 0 : index
    %c0_87 = arith.constant 0 : index
    %c0_88 = arith.constant 0 : index
    %110 = vector.load %arg18[%c0_86, %c0_87, %c0_88] : memref<18x18x32xf32, #tpu.memory_space<vmem>>, vector<16x16x32xf32>
    %111 = vector.shape_cast %110 : vector<16x16x32xf32> to vector<256x32xf32>
    %c0_89 = arith.constant 0 : index
    %c0_90 = arith.constant 0 : index
    %c0_91 = arith.constant 0 : index
    %112 = vector.load %arg11[%c0_89, %c0_90, %c0_91] : memref<9x32x32xf32, #tpu.memory_space<vmem>>, vector<1x32x32xf32>
    %113 = vector.shape_cast %112 : vector<1x32x32xf32> to vector<32x32xf32>
    %cst_92 = arith.constant dense<0.000000e+00> : vector<256x32xf32>
    %114 = tpu.matmul %111, %113, %cst_92 {dimension_numbers = #tpu.dot_dimension_numbers<[1], [0], [0], [1], [0, 0, 1, 1], [], []>} : vector<256x32xf32>, vector<32x32xf32>, vector<256x32xf32> -> vector<256x32xf32>
    %c0_93 = arith.constant 0 : index
    %c1_94 = arith.constant 1 : index
    %c0_95 = arith.constant 0 : index
    %115 = vector.load %arg18[%c0_93, %c1_94, %c0_95] : memref<18x18x32xf32, #tpu.memory_space<vmem>>, vector<16x16x32xf32>
    %116 = vector.shape_cast %115 : vector<16x16x32xf32> to vector<256x32xf32>
    %c1_96 = arith.constant 1 : index
    %c0_97 = arith.constant 0 : index
    %c0_98 = arith.constant 0 : index
    %117 = vector.load %arg11[%c1_96, %c0_97, %c0_98] : memref<9x32x32xf32, #tpu.memory_space<vmem>>, vector<1x32x32xf32>
    %118 = vector.shape_cast %117 : vector<1x32x32xf32> to vector<32x32xf32>
    %cst_99 = arith.constant dense<0.000000e+00> : vector<256x32xf32>
    %119 = tpu.matmul %116, %118, %cst_99 {dimension_numbers = #tpu.dot_dimension_numbers<[1], [0], [0], [1], [0, 0, 1, 1], [], []>} : vector<256x32xf32>, vector<32x32xf32>, vector<256x32xf32> -> vector<256x32xf32>
    %120 = arith.addf %114, %119 : vector<256x32xf32>
    %c0_100 = arith.constant 0 : index
    %c2_101 = arith.constant 2 : index
    %c0_102 = arith.constant 0 : index
    %121 = vector.load %arg18[%c0_100, %c2_101, %c0_102] : memref<18x18x32xf32, #tpu.memory_space<vmem>>, vector<16x16x32xf32>
    %122 = vector.shape_cast %121 : vector<16x16x32xf32> to vector<256x32xf32>
    %c2_103 = arith.constant 2 : index
    %c0_104 = arith.constant 0 : index
    %c0_105 = arith.constant 0 : index
    %123 = vector.load %arg11[%c2_103, %c0_104, %c0_105] : memref<9x32x32xf32, #tpu.memory_space<vmem>>, vector<1x32x32xf32>
    %124 = vector.shape_cast %123 : vector<1x32x32xf32> to vector<32x32xf32>
    %cst_106 = arith.constant dense<0.000000e+00> : vector<256x32xf32>
    %125 = tpu.matmul %122, %124, %cst_106 {dimension_numbers = #tpu.dot_dimension_numbers<[1], [0], [0], [1], [0, 0, 1, 1], [], []>} : vector<256x32xf32>, vector<32x32xf32>, vector<256x32xf32> -> vector<256x32xf32>
    %126 = arith.addf %120, %125 : vector<256x32xf32>
    %c1_107 = arith.constant 1 : index
    %c0_108 = arith.constant 0 : index
    %c0_109 = arith.constant 0 : index
    %127 = vector.load %arg18[%c1_107, %c0_108, %c0_109] : memref<18x18x32xf32, #tpu.memory_space<vmem>>, vector<16x16x32xf32>
    %128 = vector.shape_cast %127 : vector<16x16x32xf32> to vector<256x32xf32>
    %c3_110 = arith.constant 3 : index
    %c0_111 = arith.constant 0 : index
    %c0_112 = arith.constant 0 : index
    %129 = vector.load %arg11[%c3_110, %c0_111, %c0_112] : memref<9x32x32xf32, #tpu.memory_space<vmem>>, vector<1x32x32xf32>
    %130 = vector.shape_cast %129 : vector<1x32x32xf32> to vector<32x32xf32>
    %cst_113 = arith.constant dense<0.000000e+00> : vector<256x32xf32>
    %131 = tpu.matmul %128, %130, %cst_113 {dimension_numbers = #tpu.dot_dimension_numbers<[1], [0], [0], [1], [0, 0, 1, 1], [], []>} : vector<256x32xf32>, vector<32x32xf32>, vector<256x32xf32> -> vector<256x32xf32>
    %132 = arith.addf %126, %131 : vector<256x32xf32>
    %c1_114 = arith.constant 1 : index
    %c1_115 = arith.constant 1 : index
    %c0_116 = arith.constant 0 : index
    %133 = vector.load %arg18[%c1_114, %c1_115, %c0_116] : memref<18x18x32xf32, #tpu.memory_space<vmem>>, vector<16x16x32xf32>
    %134 = vector.shape_cast %133 : vector<16x16x32xf32> to vector<256x32xf32>
    %c4 = arith.constant 4 : index
    %c0_117 = arith.constant 0 : index
    %c0_118 = arith.constant 0 : index
    %135 = vector.load %arg11[%c4, %c0_117, %c0_118] : memref<9x32x32xf32, #tpu.memory_space<vmem>>, vector<1x32x32xf32>
    %136 = vector.shape_cast %135 : vector<1x32x32xf32> to vector<32x32xf32>
    %cst_119 = arith.constant dense<0.000000e+00> : vector<256x32xf32>
    %137 = tpu.matmul %134, %136, %cst_119 {dimension_numbers = #tpu.dot_dimension_numbers<[1], [0], [0], [1], [0, 0, 1, 1], [], []>} : vector<256x32xf32>, vector<32x32xf32>, vector<256x32xf32> -> vector<256x32xf32>
    %138 = arith.addf %132, %137 : vector<256x32xf32>
    %c1_120 = arith.constant 1 : index
    %c2_121 = arith.constant 2 : index
    %c0_122 = arith.constant 0 : index
    %139 = vector.load %arg18[%c1_120, %c2_121, %c0_122] : memref<18x18x32xf32, #tpu.memory_space<vmem>>, vector<16x16x32xf32>
    %140 = vector.shape_cast %139 : vector<16x16x32xf32> to vector<256x32xf32>
    %c5 = arith.constant 5 : index
    %c0_123 = arith.constant 0 : index
    %c0_124 = arith.constant 0 : index
    %141 = vector.load %arg11[%c5, %c0_123, %c0_124] : memref<9x32x32xf32, #tpu.memory_space<vmem>>, vector<1x32x32xf32>
    %142 = vector.shape_cast %141 : vector<1x32x32xf32> to vector<32x32xf32>
    %cst_125 = arith.constant dense<0.000000e+00> : vector<256x32xf32>
    %143 = tpu.matmul %140, %142, %cst_125 {dimension_numbers = #tpu.dot_dimension_numbers<[1], [0], [0], [1], [0, 0, 1, 1], [], []>} : vector<256x32xf32>, vector<32x32xf32>, vector<256x32xf32> -> vector<256x32xf32>
    %144 = arith.addf %138, %143 : vector<256x32xf32>
    %c2_126 = arith.constant 2 : index
    %c0_127 = arith.constant 0 : index
    %c0_128 = arith.constant 0 : index
    %145 = vector.load %arg18[%c2_126, %c0_127, %c0_128] : memref<18x18x32xf32, #tpu.memory_space<vmem>>, vector<16x16x32xf32>
    %146 = vector.shape_cast %145 : vector<16x16x32xf32> to vector<256x32xf32>
    %c6 = arith.constant 6 : index
    %c0_129 = arith.constant 0 : index
    %c0_130 = arith.constant 0 : index
    %147 = vector.load %arg11[%c6, %c0_129, %c0_130] : memref<9x32x32xf32, #tpu.memory_space<vmem>>, vector<1x32x32xf32>
    %148 = vector.shape_cast %147 : vector<1x32x32xf32> to vector<32x32xf32>
    %cst_131 = arith.constant dense<0.000000e+00> : vector<256x32xf32>
    %149 = tpu.matmul %146, %148, %cst_131 {dimension_numbers = #tpu.dot_dimension_numbers<[1], [0], [0], [1], [0, 0, 1, 1], [], []>} : vector<256x32xf32>, vector<32x32xf32>, vector<256x32xf32> -> vector<256x32xf32>
    %150 = arith.addf %144, %149 : vector<256x32xf32>
    %c2_132 = arith.constant 2 : index
    %c1_133 = arith.constant 1 : index
    %c0_134 = arith.constant 0 : index
    %151 = vector.load %arg18[%c2_132, %c1_133, %c0_134] : memref<18x18x32xf32, #tpu.memory_space<vmem>>, vector<16x16x32xf32>
    %152 = vector.shape_cast %151 : vector<16x16x32xf32> to vector<256x32xf32>
    %c7 = arith.constant 7 : index
    %c0_135 = arith.constant 0 : index
    %c0_136 = arith.constant 0 : index
    %153 = vector.load %arg11[%c7, %c0_135, %c0_136] : memref<9x32x32xf32, #tpu.memory_space<vmem>>, vector<1x32x32xf32>
    %154 = vector.shape_cast %153 : vector<1x32x32xf32> to vector<32x32xf32>
    %cst_137 = arith.constant dense<0.000000e+00> : vector<256x32xf32>
    %155 = tpu.matmul %152, %154, %cst_137 {dimension_numbers = #tpu.dot_dimension_numbers<[1], [0], [0], [1], [0, 0, 1, 1], [], []>} : vector<256x32xf32>, vector<32x32xf32>, vector<256x32xf32> -> vector<256x32xf32>
    %156 = arith.addf %150, %155 : vector<256x32xf32>
    %c2_138 = arith.constant 2 : index
    %c2_139 = arith.constant 2 : index
    %c0_140 = arith.constant 0 : index
    %157 = vector.load %arg18[%c2_138, %c2_139, %c0_140] : memref<18x18x32xf32, #tpu.memory_space<vmem>>, vector<16x16x32xf32>
    %158 = vector.shape_cast %157 : vector<16x16x32xf32> to vector<256x32xf32>
    %c8 = arith.constant 8 : index
    %c0_141 = arith.constant 0 : index
    %c0_142 = arith.constant 0 : index
    %159 = vector.load %arg11[%c8, %c0_141, %c0_142] : memref<9x32x32xf32, #tpu.memory_space<vmem>>, vector<1x32x32xf32>
    %160 = vector.shape_cast %159 : vector<1x32x32xf32> to vector<32x32xf32>
    %cst_143 = arith.constant dense<0.000000e+00> : vector<256x32xf32>
    %161 = tpu.matmul %158, %160, %cst_143 {dimension_numbers = #tpu.dot_dimension_numbers<[1], [0], [0], [1], [0, 0, 1, 1], [], []>} : vector<256x32xf32>, vector<32x32xf32>, vector<256x32xf32> -> vector<256x32xf32>
    %162 = arith.addf %156, %161 : vector<256x32xf32>
    %c0_144 = arith.constant 0 : index
    %c0_145 = arith.constant 0 : index
    %163 = vector.load %arg12[%c0_144, %c0_145] : memref<1x32xf32, #tpu.memory_space<vmem>>, vector<1x32xf32>
    %164 = vector.broadcast %163 : vector<1x32xf32> to vector<256x32xf32>
    %165 = arith.addf %162, %164 : vector<256x32xf32>
    %cst_146 = arith.constant dense<0.000000e+00> : vector<32xf32>
    %166 = vector.multi_reduction <add>, %165, %cst_146 [0] : vector<256x32xf32> to vector<32xf32>
    %167 = vector.shape_cast %166 : vector<32xf32> to vector<1x32xf32>
    %cst_147 = arith.constant 2.560000e+02 : f32
    %168 = vector.broadcast %cst_147 : f32 to vector<1x32xf32>
    %169 = arith.divf %167, %168 : vector<1x32xf32>
    %170 = arith.mulf %165, %165 : vector<256x32xf32>
    %cst_148 = arith.constant dense<0.000000e+00> : vector<32xf32>
    %171 = vector.multi_reduction <add>, %170, %cst_148 [0] : vector<256x32xf32> to vector<32xf32>
    %172 = vector.shape_cast %171 : vector<32xf32> to vector<1x32xf32>
    %cst_149 = arith.constant 2.560000e+02 : f32
    %173 = vector.broadcast %cst_149 : f32 to vector<1x32xf32>
    %174 = arith.divf %172, %173 : vector<1x32xf32>
    %175 = arith.mulf %169, %169 : vector<1x32xf32>
    %176 = arith.subf %174, %175 : vector<1x32xf32>
    %cst_150 = arith.constant 0.000000e+00 : f32
    %177 = vector.broadcast %cst_150 : f32 to vector<1x32xf32>
    %178 = arith.maximumf %176, %177 : vector<1x32xf32>
    %179 = vector.broadcast %169 : vector<1x32xf32> to vector<256x32xf32>
    %180 = arith.subf %165, %179 : vector<256x32xf32>
    %cst_151 = arith.constant 9.99999974E-6 : f32
    %181 = vector.broadcast %cst_151 : f32 to vector<1x32xf32>
    %182 = arith.addf %178, %181 : vector<1x32xf32>
    %183 = math.rsqrt %182 : vector<1x32xf32>
    %184 = vector.broadcast %183 : vector<1x32xf32> to vector<256x32xf32>
    %185 = arith.mulf %180, %184 : vector<256x32xf32>
    %186 = vector.extract_strided_slice %33 {offsets = [0, 0], sizes = [1, 32], strides = [1, 1]} : vector<1x64xf32> to vector<1x32xf32>
    %cst_152 = arith.constant 1.000000e+00 : f32
    %187 = vector.broadcast %cst_152 : f32 to vector<1x32xf32>
    %188 = arith.addf %187, %186 : vector<1x32xf32>
    %189 = vector.broadcast %188 : vector<1x32xf32> to vector<256x32xf32>
    %190 = arith.mulf %185, %189 : vector<256x32xf32>
    %191 = vector.extract_strided_slice %33 {offsets = [0, 32], sizes = [1, 32], strides = [1, 1]} : vector<1x64xf32> to vector<1x32xf32>
    %192 = vector.broadcast %191 : vector<1x32xf32> to vector<256x32xf32>
    %193 = arith.addf %190, %192 : vector<256x32xf32>
    %cst_153 = arith.constant 0.000000e+00 : f32
    %194 = vector.broadcast %cst_153 : f32 to vector<256x32xf32>
    %195 = arith.cmpf oge, %193, %194 : vector<256x32xf32>
    %cst_154 = arith.constant 0.00999999977 : f32
    %196 = vector.broadcast %cst_154 : f32 to vector<256x32xf32>
    %197 = arith.mulf %196, %193 : vector<256x32xf32>
    %198 = arith.select %195, %193, %197 : vector<256x32xi1>, vector<256x32xf32>
    %199 = vector.shape_cast %198 : vector<256x32xf32> to vector<16x16x32xf32>
    %c1_155 = arith.constant 1 : index
    %c1_156 = arith.constant 1 : index
    %c0_157 = arith.constant 0 : index
    %200 = vector.load %arg18[%c1_155, %c1_156, %c0_157] : memref<18x18x32xf32, #tpu.memory_space<vmem>>, vector<16x16x32xf32>
    tpu.vector_store %arg18[%c1_155, %c1_156, %c0_157], %199 {strides = array<i32>} : memref<18x18x32xf32, #tpu.memory_space<vmem>>, vector<16x16x32xf32>,
    %c1_158 = arith.constant 1 : index
    %c1_159 = arith.constant 1 : index
    %c0_160 = arith.constant 0 : index
    %201 = vector.load %arg18[%c1_158, %c1_159, %c0_160] : memref<18x18x32xf32, #tpu.memory_space<vmem>>, vector<16x16x32xf32>
    %202 = vector.shape_cast %201 : vector<16x16x32xf32> to vector<256x32xf32>
    %c0_161 = arith.constant 0 : index
    %c0_162 = arith.constant 0 : index
    %c0_163 = arith.constant 0 : index
    %203 = vector.load %arg13[%c0_161, %c0_162, %c0_163] : memref<4x32x128xf32, #tpu.memory_space<vmem>>, vector<1x32x128xf32>
    %204 = vector.shape_cast %203 : vector<1x32x128xf32> to vector<32x128xf32>
    %cst_164 = arith.constant dense<0.000000e+00> : vector<256x128xf32>
    %205 = tpu.matmul %202, %204, %cst_164 {dimension_numbers = #tpu.dot_dimension_numbers<[1], [0], [0], [1], [0, 0, 1, 1], [], []>} : vector<256x32xf32>, vector<32x128xf32>, vector<256x128xf32> -> vector<256x128xf32>
    %c1_165 = arith.constant 1 : index
    %c2_166 = arith.constant 2 : index
    %c0_167 = arith.constant 0 : index
    %206 = vector.load %arg18[%c1_165, %c2_166, %c0_167] : memref<18x18x32xf32, #tpu.memory_space<vmem>>, vector<16x16x32xf32>
    %207 = vector.shape_cast %206 : vector<16x16x32xf32> to vector<256x32xf32>
    %c1_168 = arith.constant 1 : index
    %c0_169 = arith.constant 0 : index
    %c0_170 = arith.constant 0 : index
    %208 = vector.load %arg13[%c1_168, %c0_169, %c0_170] : memref<4x32x128xf32, #tpu.memory_space<vmem>>, vector<1x32x128xf32>
    %209 = vector.shape_cast %208 : vector<1x32x128xf32> to vector<32x128xf32>
    %cst_171 = arith.constant dense<0.000000e+00> : vector<256x128xf32>
    %210 = tpu.matmul %207, %209, %cst_171 {dimension_numbers = #tpu.dot_dimension_numbers<[1], [0], [0], [1], [0, 0, 1, 1], [], []>} : vector<256x32xf32>, vector<32x128xf32>, vector<256x128xf32> -> vector<256x128xf32>
    %211 = arith.addf %205, %210 : vector<256x128xf32>
    %c2_172 = arith.constant 2 : index
    %c1_173 = arith.constant 1 : index
    %c0_174 = arith.constant 0 : index
    %212 = vector.load %arg18[%c2_172, %c1_173, %c0_174] : memref<18x18x32xf32, #tpu.memory_space<vmem>>, vector<16x16x32xf32>
    %213 = vector.shape_cast %212 : vector<16x16x32xf32> to vector<256x32xf32>
    %c2_175 = arith.constant 2 : index
    %c0_176 = arith.constant 0 : index
    %c0_177 = arith.constant 0 : index
    %214 = vector.load %arg13[%c2_175, %c0_176, %c0_177] : memref<4x32x128xf32, #tpu.memory_space<vmem>>, vector<1x32x128xf32>
    %215 = vector.shape_cast %214 : vector<1x32x128xf32> to vector<32x128xf32>
    %cst_178 = arith.constant dense<0.000000e+00> : vector<256x128xf32>
    %216 = tpu.matmul %213, %215, %cst_178 {dimension_numbers = #tpu.dot_dimension_numbers<[1], [0], [0], [1], [0, 0, 1, 1], [], []>} : vector<256x32xf32>, vector<32x128xf32>, vector<256x128xf32> -> vector<256x128xf32>
    %217 = arith.addf %211, %216 : vector<256x128xf32>
    %c2_179 = arith.constant 2 : index
    %c2_180 = arith.constant 2 : index
    %c0_181 = arith.constant 0 : index
    %218 = vector.load %arg18[%c2_179, %c2_180, %c0_181] : memref<18x18x32xf32, #tpu.memory_space<vmem>>, vector<16x16x32xf32>
    %219 = vector.shape_cast %218 : vector<16x16x32xf32> to vector<256x32xf32>
    %c3_182 = arith.constant 3 : index
    %c0_183 = arith.constant 0 : index
    %c0_184 = arith.constant 0 : index
    %220 = vector.load %arg13[%c3_182, %c0_183, %c0_184] : memref<4x32x128xf32, #tpu.memory_space<vmem>>, vector<1x32x128xf32>
    %221 = vector.shape_cast %220 : vector<1x32x128xf32> to vector<32x128xf32>
    %cst_185 = arith.constant dense<0.000000e+00> : vector<256x128xf32>
    %222 = tpu.matmul %219, %221, %cst_185 {dimension_numbers = #tpu.dot_dimension_numbers<[1], [0], [0], [1], [0, 0, 1, 1], [], []>} : vector<256x32xf32>, vector<32x128xf32>, vector<256x128xf32> -> vector<256x128xf32>
    %223 = arith.addf %217, %222 : vector<256x128xf32>
    %c0_186 = arith.constant 0 : index
    %c0_187 = arith.constant 0 : index
    %224 = vector.load %arg14[%c0_186, %c0_187] : memref<1x128xf32, #tpu.memory_space<vmem>>, vector<1x128xf32>
    %225 = vector.broadcast %224 : vector<1x128xf32> to vector<256x128xf32>
    %226 = arith.addf %223, %225 : vector<256x128xf32>
    %227 = arith.addf %94, %226 : vector<256x128xf32>
    %c0_188 = arith.constant 0 : index
    %c0_189 = arith.constant 0 : index
    %c0_190 = arith.constant 0 : index
    %228 = vector.load %arg17[%c0_188, %c0_189, %c0_190] : memref<1x256x128xf32, #tpu.memory_space<vmem>>, vector<1x256x128xf32>
    %229 = vector.shape_cast %228 : vector<1x256x128xf32> to vector<256x128xf32>
    %230 = vector.shape_cast %227 : vector<256x128xf32> to vector<1x256x128xf32>
    tpu.vector_store %arg17[%c0_188, %c0_189, %c0_190], %230 {strides = array<i32>} : memref<1x256x128xf32, #tpu.memory_space<vmem>>, vector<1x256x128xf32>,
    return
  }
  func.func @transform_0(%arg0: i32) -> (i32, i32, i32, i32) {
    %c0_i32 = arith.constant 0 : i32
    %c0_i32_0 = arith.constant 0 : i32
    %c0_i32_1 = arith.constant 0 : i32
    %c0_i32_2 = arith.constant 0 : i32
    return %arg0, %c0_i32, %c0_i32_0, %c0_i32_1 : i32, i32, i32, i32
  }
  func.func @transform_1(%arg0: i32) -> (i32, i32, i32) {
    %c0_i32 = arith.constant 0 : i32
    %c0_i32_0 = arith.constant 0 : i32
    %c0_i32_1 = arith.constant 0 : i32
    return %arg0, %c0_i32, %c0_i32_0 : i32, i32, i32
  }
  func.func @transform_2(%arg0: i32) -> (i32, i32) {
    %c0_i32 = arith.constant 0 : i32
    %c0_i32_0 = arith.constant 0 : i32
    %c0_i32_1 = arith.constant 0 : i32
    return %c0_i32, %c0_i32_0 : i32, i32
  }
  func.func @transform_3(%arg0: i32) -> (i32, i32) {
    %c0_i32 = arith.constant 0 : i32
    %c0_i32_0 = arith.constant 0 : i32
    %c0_i32_1 = arith.constant 0 : i32
    return %c0_i32, %c0_i32_0 : i32, i32
  }
  func.func @transform_4(%arg0: i32) -> (i32, i32) {
    %c0_i32 = arith.constant 0 : i32
    %c0_i32_0 = arith.constant 0 : i32
    %c0_i32_1 = arith.constant 0 : i32
    return %c0_i32, %c0_i32_0 : i32, i32
  }
  func.func @transform_5(%arg0: i32) -> (i32, i32) {
    %c0_i32 = arith.constant 0 : i32
    %c0_i32_0 = arith.constant 0 : i32
    %c0_i32_1 = arith.constant 0 : i32
    return %c0_i32, %c0_i32_0 : i32, i32
  }
  func.func @transform_6(%arg0: i32) -> (i32, i32) {
    %c0_i32 = arith.constant 0 : i32
    %c0_i32_0 = arith.constant 0 : i32
    %c0_i32_1 = arith.constant 0 : i32
    return %c0_i32, %c0_i32_0 : i32, i32
  }
  func.func @transform_7(%arg0: i32) -> (i32, i32) {
    %c0_i32 = arith.constant 0 : i32
    %c0_i32_0 = arith.constant 0 : i32
    %c0_i32_1 = arith.constant 0 : i32
    return %c0_i32, %c0_i32_0 : i32, i32
  }
  func.func @transform_8(%arg0: i32) -> (i32, i32) {
    %c0_i32 = arith.constant 0 : i32
    %c0_i32_0 = arith.constant 0 : i32
    %c0_i32_1 = arith.constant 0 : i32
    return %c0_i32, %c0_i32_0 : i32, i32
  }
  func.func @transform_9(%arg0: i32) -> (i32, i32) {
    %c0_i32 = arith.constant 0 : i32
    %c0_i32_0 = arith.constant 0 : i32
    %c0_i32_1 = arith.constant 0 : i32
    return %c0_i32, %c0_i32_0 : i32, i32
  }
  func.func @transform_10(%arg0: i32) -> (i32, i32, i32) {
    %c0_i32 = arith.constant 0 : i32
    %c0_i32_0 = arith.constant 0 : i32
    %c0_i32_1 = arith.constant 0 : i32
    %c0_i32_2 = arith.constant 0 : i32
    return %c0_i32, %c0_i32_0, %c0_i32_1 : i32, i32, i32
  }
  func.func @transform_11(%arg0: i32) -> (i32, i32) {
    %c0_i32 = arith.constant 0 : i32
    %c0_i32_0 = arith.constant 0 : i32
    %c0_i32_1 = arith.constant 0 : i32
    return %c0_i32, %c0_i32_0 : i32, i32
  }
  func.func @transform_12(%arg0: i32) -> (i32, i32, i32) {
    %c0_i32 = arith.constant 0 : i32
    %c0_i32_0 = arith.constant 0 : i32
    %c0_i32_1 = arith.constant 0 : i32
    %c0_i32_2 = arith.constant 0 : i32
    return %c0_i32, %c0_i32_0, %c0_i32_1 : i32, i32, i32
  }
  func.func @transform_13(%arg0: i32) -> (i32, i32) {
    %c0_i32 = arith.constant 0 : i32
    %c0_i32_0 = arith.constant 0 : i32
    %c0_i32_1 = arith.constant 0 : i32
    return %c0_i32, %c0_i32_0 : i32, i32
  }
  func.func @transform_14(%arg0: i32) -> (i32, i32, i32) {
    %c0_i32 = arith.constant 0 : i32
    %c0_i32_0 = arith.constant 0 : i32
    %c0_i32_1 = arith.constant 0 : i32
    %c0_i32_2 = arith.constant 0 : i32
    return %c0_i32, %c0_i32_0, %c0_i32_1 : i32, i32, i32
  }
  func.func @transform_15(%arg0: i32) -> (i32, i32) {
    %c0_i32 = arith.constant 0 : i32
    %c0_i32_0 = arith.constant 0 : i32
    %c0_i32_1 = arith.constant 0 : i32
    return %c0_i32, %c0_i32_0 : i32, i32
  }
  func.func @transform_16(%arg0: i32) -> (i32, i32, i32) {
    %c0_i32 = arith.constant 0 : i32
    %c0_i32_0 = arith.constant 0 : i32
    %c0_i32_1 = arith.constant 0 : i32
    return %arg0, %c0_i32, %c0_i32_0 : i32, i32, i32
  }
}

</mosaic_0001>

<llo_original>
// kernel: adain_decoder_block.1
$region0: #{adain_decoder_block.1}
  #allocation0 [shape = 'u32[]', space=smem, size = 0x4, offset = 0x4, fixed_abs, tag = 'smem constant byte address 0x4 - core index']
  #allocation1 [shape = 'u32[144,128]{1,0:T(1,128)}', space=vmem, size = 0x12000, scoped, tag = 'internal scratch']
  #allocation2 [shape = 'f32[18,18,32]{2,1,0:T(8,128)}', space=vmem, size = 0x36000, scoped, tag = 'scratch operand']
  %s0 = inlined_call_operand.vmem [shape: f32[2,16,16,32], index: 0, kind: input, shape index: {}]
  %s1 = inlined_call_operand.vmem [shape: f32[2,1,8], index: 1, kind: input, shape index: {}]
  %s2 = inlined_call_operand.vmem [shape: f32[8,384], index: 2, kind: input, shape index: {}]
  %s3 = inlined_call_operand.vmem [shape: f32[1,384], index: 3, kind: input, shape index: {}]
  %s4 = inlined_call_operand.vmem [shape: f32[128,64], index: 4, kind: input, shape index: {}]
  %s5 = inlined_call_operand.vmem [shape: f32[1,64], index: 5, kind: input, shape index: {}]
  %s6 = inlined_call_operand.vmem [shape: f32[128,64], index: 6, kind: input, shape index: {}]
  %s7 = inlined_call_operand.hbm [shape: f32[1,64], index: 7, kind: input, shape index: {}]
  %s8 = inlined_call_operand.vmem [shape: f32[128,64], index: 8, kind: input, shape index: {}]
  %s9 = inlined_call_operand.hbm [shape: f32[1,64], index: 9, kind: input, shape index: {}]
  %s10 = inlined_call_operand.hbm [shape: f32[9,32,32], index: 10, kind: input, shape index: {}]
  %s11 = inlined_call_operand.hbm [shape: f32[1,32], index: 11, kind: input, shape index: {}]
  %s12 = inlined_call_operand.hbm [shape: f32[4,32,128], index: 12, kind: input, shape index: {}]
  %s13 = inlined_call_operand.hbm [shape: f32[1,128], index: 13, kind: input, shape index: {}]
  %s14 = inlined_call_operand.hbm [shape: f32[4,32,128], index: 14, kind: input, shape index: {}]
  %s15 = inlined_call_operand.hbm [shape: f32[1,128], index: 15, kind: input, shape index: {}]
  %s16 = inlined_call_operand.vmem [shape: f32[2,256,128], index: 16, kind: output, shape index: {}]
  %s17 = sld [smem:[#allocation0]]
  $region129: #{adain_decoder_block.1} parent=0
    _
  %s19 = ssub.s32 1, %s17
  %s20 = scalar_select 0, %s19, %s17
  $region1: #{adain_decoder_block.1} parent=0
    #allocation3 [shape = 'u8[512]{0}', space=vmem, size = 0x400, scoped, tag = 'input window, operand 7, single buffered']
    #allocation4 [shape = 's32[2]{0}', space=sflag, size = 0x8, scoped, tag = 'scoped memory for adain_decoder_block.1']
    #allocation5 [shape = 'u8[512]{0}', space=vmem, size = 0x400, scoped, tag = 'input window, operand 9, single buffered']
    #allocation6 [shape = 's32[1]{0}', space=sflag, size = 0x4, scoped, tag = 'scoped memory for adain_decoder_block.1']
    #allocation7 [shape = 'u8[147456]{0}', space=vmem, size = 0x24000, scoped, tag = 'input window, operand 10, single buffered']
    #allocation8 [shape = 'u8[512]{0}', space=vmem, size = 0x400, scoped, tag = 'input window, operand 11, single buffered']
    #allocation9 [shape = 's32[1]{0}', space=sflag, size = 0x4, scoped, tag = 'scoped memory for adain_decoder_block.1']
    #allocation10 [shape = 'u8[65536]{0}', space=vmem, size = 0x10000, scoped, tag = 'input window, operand 12, single buffered']
    #allocation11 [shape = 'u8[512]{0}', space=vmem, size = 0x400, scoped, tag = 'input window, operand 13, single buffered']
    #allocation12 [shape = 's32[1]{0}', space=sflag, size = 0x4, scoped, tag = 'scoped memory for adain_decoder_block.1']
    #allocation13 [shape = 'u8[65536]{0}', space=vmem, size = 0x10000, scoped, tag = 'input window, operand 14, single buffered']
    #allocation14 [shape = 'u8[512]{0}', space=vmem, size = 0x400, scoped, tag = 'input window, operand 15, single buffered']
    #allocation15 [shape = 's32[1]{0}', space=sflag, size = 0x4, scoped, tag = 'scoped memory for adain_decoder_block.1']
    %21 = vsyncpa [#allocation4], 0
    %22 = vsyncpa [#allocation6], 0
    %23 = vsyncpa [#allocation9], 0
    %24 = vsyncpa [#allocation12], 0
    %25 = vsyncpa [#allocation15], 0
    loop: start=0, step=1, limit=4
    $region2: #{adain_decoder_block.1} parent=1 // loop_pre_header
      _
    $region3: #{adain_decoder_block.1} parent=1 // loop_header
      %s27 = sphi 0, %s31
      %p28 = scmp.ge.s32.totalorder %s27, 4
      %s37 = sphi 0, %s39
      %s40 = sphi 0, %s37
      %s41 = sphi 0, %s40
      %s57 = sphi 0, %s41
      %s63 = sphi 0, %s65
      %s66 = sphi 0, %s63
      %s67 = sphi 0, %s66
      %s83 = sphi 0, %s67
      %s87 = sphi 0, %s87
      %s89 = sphi 0, %s87
      %s90 = sphi 0, %s89
      %s104 = sphi 0, %s90
      %s108 = sphi 0, %s108
      %s110 = sphi 0, %s108
      %s111 = sphi 0, %s110
      %s125 = sphi 0, %s111
      %s129 = sphi 0, %s129
      %s131 = sphi 0, %s129
      %s132 = sphi 0, %s131
      %s146 = sphi 0, %s132
      %s150 = sphi 0, %s150
      %s152 = sphi 0, %s150
      %s153 = sphi 0, %s152
      %s167 = sphi 0, %s153
      %s171 = sphi 0, %s171
      %s173 = sphi 0, %s171
      %s174 = sphi 0, %s173
      %s188 = sphi 0, %s174
      %s192 = sphi 0, %s192
      %s194 = sphi 0, %s192
      %s195 = sphi 0, %s194
      %s209 = sphi 0, %s195
      %s213 = sphi 0, %s213
      %s215 = sphi 0, %s213
      %s216 = sphi 0, %s215
      %s230 = sphi 0, %s216
      %s234 = sphi 0, %s234
      %s236 = sphi 0, %s234
      %s237 = sphi 0, %s236
      %s251 = sphi 0, %s237
      %s255 = sphi 0, %s255
      %s257 = sphi 0, %s255
      %s258 = sphi 0, %s257
      %s272 = sphi 0, %s258
      %s276 = sphi 0, %s276
      %s278 = sphi 0, %s276
      %s279 = sphi 0, %s278
      %s293 = sphi 0, %s279
      %s297 = sphi 0, %s297
      %s299 = sphi 0, %s297
      %s300 = sphi 0, %s299
      %s314 = sphi 0, %s300
      %s318 = sphi 0, %s318
      %s320 = sphi 0, %s318
      %s321 = sphi 0, %s320
      %s335 = sphi 0, %s321
      %s339 = sphi 0, %s339
      %s341 = sphi 0, %s339
      %s342 = sphi 0, %s341
      %s356 = sphi 0, %s342
      %s360 = sphi 0, %s360
      %s362 = sphi 0, %s360
      %s363 = sphi 0, %s362
      %s377 = sphi 0, %s363
      %s383 = sphi 0, %s385
      %s386 = sphi 0, %s383
      %s387 = sphi 0, %s386
      %s403 = sphi 0, %s387
    $region4: #{adain_decoder_block.1} parent=1 // loop_header_branch
      %30 = sbr.rel (%p28) target = $region8
    $region5: #{adain_decoder_block.1} parent=1 // loop_body
      %s32 = ssub.s32 %s27, 1
      %s33 = ssub.s32 %s27, 2
      %s34 = sadd.s32 %s27, 1
      %s35 = ssub.s32 %s27, %s34
      %p36 = scmp.eq.s32.totalorder %s35, 0
      %s38 = sadd.s32 %s37, 1
      %s39 = scalar_select %p36, %s37, %s38
      %p42 = pneg %p36
      %p43 = scmp.eq.s32.totalorder %s27, 1
      %p44 = por %p42, %p43
      %p45 = scmp.ne.s32.totalorder %s37, %s40
      %p46 = scmp.eq.s32.totalorder %s27, 0
      %p47 = por %p45, %p46
      %p48 = scmp.ne.s32.totalorder %s37, %s40
      %p49 = scmp.eq.s32.totalorder %s32, 1
      %p50 = por %p48, %p49
      %p51 = scmp.ne.s32.totalorder %s40, %s41
      %p52 = scmp.eq.s32.totalorder %s32, 0
      %p53 = por %p51, %p52
      %p54 = scmp.ne.s32.totalorder %s40, %s41
      %p55 = scmp.eq.s32.totalorder %s33, 1
      %p56 = por %p54, %p55
      %p58 = scmp.ne.s32.totalorder %s41, %s57
      %p59 = scmp.eq.s32.totalorder %s33, 0
      %p60 = por %p58, %p59
      %s61 = ssub.s32 %s27, %s34
      %p62 = scmp.eq.s32.totalorder %s61, 0
      %s64 = sadd.s32 %s63, 1
      %s65 = scalar_select %p62, %s63, %s64
      %p68 = pneg %p62
      %p69 = scmp.eq.s32.totalorder %s27, 1
      %p70 = por %p68, %p69
      %p71 = scmp.ne.s32.totalorder %s63, %s66
      %p72 = scmp.eq.s32.totalorder %s27, 0
      %p73 = por %p71, %p72
      %p74 = scmp.ne.s32.totalorder %s63, %s66
      %p75 = scmp.eq.s32.totalorder %s32, 1
      %p76 = por %p74, %p75
      %p77 = scmp.ne.s32.totalorder %s66, %s67
      %p78 = scmp.eq.s32.totalorder %s32, 0
      %p79 = por %p77, %p78
      %p80 = scmp.ne.s32.totalorder %s66, %s67
      %p81 = scmp.eq.s32.totalorder %s33, 1
      %p82 = por %p80, %p81
      %p84 = scmp.ne.s32.totalorder %s67, %s83
      %p85 = scmp.eq.s32.totalorder %s33, 0
      %p86 = por %p84, %p85
      %s88 = sadd.s32 %s87, 1
      %p91 = scmp.eq.s32.totalorder %s27, 1
      %p92 = scmp.ne.s32.totalorder %s87, %s89
      %p93 = scmp.eq.s32.totalorder %s27, 0
      %p94 = por %p92, %p93
      %p95 = scmp.ne.s32.totalorder %s87, %s89
      %p96 = scmp.eq.s32.totalorder %s32, 1
      %p97 = por %p95, %p96
      %p98 = scmp.ne.s32.totalorder %s89, %s90
      %p99 = scmp.eq.s32.totalorder %s32, 0
      %p100 = por %p98, %p99
      %p101 = scmp.ne.s32.totalorder %s89, %s90
      %p102 = scmp.eq.s32.totalorder %s33, 1
      %p103 = por %p101, %p102
      %p105 = scmp.ne.s32.totalorder %s90, %s104
      %p106 = scmp.eq.s32.totalorder %s33, 0
      %p107 = por %p105, %p106
      %s109 = sadd.s32 %s108, 1
      %p112 = scmp.eq.s32.totalorder %s27, 1
      %p113 = scmp.ne.s32.totalorder %s108, %s110
      %p114 = scmp.eq.s32.totalorder %s27, 0
      %p115 = por %p113, %p114
      %p116 = scmp.ne.s32.totalorder %s108, %s110
      %p117 = scmp.eq.s32.totalorder %s32, 1
      %p118 = por %p116, %p117
      %p119 = scmp.ne.s32.totalorder %s110, %s111
      %p120 = scmp.eq.s32.totalorder %s32, 0
      %p121 = por %p119, %p120
      %p122 = scmp.ne.s32.totalorder %s110, %s111
      %p123 = scmp.eq.s32.totalorder %s33, 1
      %p124 = por %p122, %p123
      %p126 = scmp.ne.s32.totalorder %s111, %s125
      %p127 = scmp.eq.s32.totalorder %s33, 0
      %p128 = por %p126, %p127
      %s130 = sadd.s32 %s129, 1
      %p133 = scmp.eq.s32.totalorder %s27, 1
      %p134 = scmp.ne.s32.totalorder %s129, %s131
      %p135 = scmp.eq.s32.totalorder %s27, 0
      %p136 = por %p134, %p135
      %p137 = scmp.ne.s32.totalorder %s129, %s131
      %p138 = scmp.eq.s32.totalorder %s32, 1
      %p139 = por %p137, %p138
      %p140 = scmp.ne.s32.totalorder %s131, %s132
      %p141 = scmp.eq.s32.totalorder %s32, 0
      %p142 = por %p140, %p141
      %p143 = scmp.ne.s32.totalorder %s131, %s132
      %p144 = scmp.eq.s32.totalorder %s33, 1
      %p145 = por %p143, %p144
      %p147 = scmp.ne.s32.totalorder %s132, %s146
      %p148 = scmp.eq.s32.totalorder %s33, 0
      %p149 = por %p147, %p148
      %s151 = sadd.s32 %s150, 1
      %p154 = scmp.eq.s32.totalorder %s27, 1
      %p155 = scmp.ne.s32.totalorder %s150, %s152
      %p156 = scmp.eq.s32.totalorder %s27, 0
      %p157 = por %p155, %p156
      %p158 = scmp.ne.s32.totalorder %s150, %s152
      %p159 = scmp.eq.s32.totalorder %s32, 1
      %p160 = por %p158, %p159
      %p161 = scmp.ne.s32.totalorder %s152, %s153
      %p162 = scmp.eq.s32.totalorder %s32, 0
      %p163 = por %p161, %p162
      %p164 = scmp.ne.s32.totalorder %s152, %s153
      %p165 = scmp.eq.s32.totalorder %s33, 1
      %p166 = por %p164, %p165
      %p168 = scmp.ne.s32.totalorder %s153, %s167
      %p169 = scmp.eq.s32.totalorder %s33, 0
      %p170 = por %p168, %p169
      %s172 = sadd.s32 %s171, 1
      %p175 = scmp.eq.s32.totalorder %s27, 1
      %p176 = scmp.ne.s32.totalorder %s171, %s173
      %p177 = scmp.eq.s32.totalorder %s27, 0
      %p178 = por %p176, %p177
      %p179 = scmp.ne.s32.totalorder %s171, %s173
      %p180 = scmp.eq.s32.totalorder %s32, 1
      %p181 = por %p179, %p180
      %p182 = scmp.ne.s32.totalorder %s173, %s174
      %p183 = scmp.eq.s32.totalorder %s32, 0
      %p184 = por %p182, %p183
      %p185 = scmp.ne.s32.totalorder %s173, %s174
      %p186 = scmp.eq.s32.totalorder %s33, 1
      %p187 = por %p185, %p186
      %p189 = scmp.ne.s32.totalorder %s174, %s188
      %p190 = scmp.eq.s32.totalorder %s33, 0
      %p191 = por %p189, %p190
      %s193 = sadd.s32 %s192, 1
      %p196 = scmp.eq.s32.totalorder %s27, 1
      %p197 = scmp.ne.s32.totalorder %s192, %s194
      %p198 = scmp.eq.s32.totalorder %s27, 0
      %p199 = por %p197, %p198
      %p200 = scmp.ne.s32.totalorder %s192, %s194
      %p201 = scmp.eq.s32.totalorder %s32, 1
      %p202 = por %p200, %p201
      %p203 = scmp.ne.s32.totalorder %s194, %s195
      %p204 = scmp.eq.s32.totalorder %s32, 0
      %p205 = por %p203, %p204
      %p206 = scmp.ne.s32.totalorder %s194, %s195
      %p207 = scmp.eq.s32.totalorder %s33, 1
      %p208 = por %p206, %p207
      %p210 = scmp.ne.s32.totalorder %s195, %s209
      %p211 = scmp.eq.s32.totalorder %s33, 0
      %p212 = por %p210, %p211
      %s214 = sadd.s32 %s213, 1
      %p217 = scmp.eq.s32.totalorder %s27, 1
      %p218 = scmp.ne.s32.totalorder %s213, %s215
      %p219 = scmp.eq.s32.totalorder %s27, 0
      %p220 = por %p218, %p219
      %p221 = scmp.ne.s32.totalorder %s213, %s215
      %p222 = scmp.eq.s32.totalorder %s32, 1
      %p223 = por %p221, %p222
      %p224 = scmp.ne.s32.totalorder %s215, %s216
      %p225 = scmp.eq.s32.totalorder %s32, 0
      %p226 = por %p224, %p225
      %p227 = scmp.ne.s32.totalorder %s215, %s216
      %p228 = scmp.eq.s32.totalorder %s33, 1
      %p229 = por %p227, %p228
      %p231 = scmp.ne.s32.totalorder %s216, %s230
      %p232 = scmp.eq.s32.totalorder %s33, 0
      %p233 = por %p231, %p232
      %s235 = sadd.s32 %s234, 1
      %p238 = scmp.eq.s32.totalorder %s27, 1
      %p239 = scmp.ne.s32.totalorder %s234, %s236
      %p240 = scmp.eq.s32.totalorder %s27, 0
      %p241 = por %p239, %p240
      %p242 = scmp.ne.s32.totalorder %s234, %s236
      %p243 = scmp.eq.s32.totalorder %s32, 1
      %p244 = por %p242, %p243
      %p245 = scmp.ne.s32.totalorder %s236, %s237
      %p246 = scmp.eq.s32.totalorder %s32, 0
      %p247 = por %p245, %p246
      %p248 = scmp.ne.s32.totalorder %s236, %s237
      %p249 = scmp.eq.s32.totalorder %s33, 1
      %p250 = por %p248, %p249
      %p252 = scmp.ne.s32.totalorder %s237, %s251
      %p253 = scmp.eq.s32.totalorder %s33, 0
      %p254 = por %p252, %p253
      %s256 = sadd.s32 %s255, 1
      %p259 = scmp.eq.s32.totalorder %s27, 1
      %p260 = scmp.ne.s32.totalorder %s255, %s257
      %p261 = scmp.eq.s32.totalorder %s27, 0
      %p262 = por %p260, %p261
      %p263 = scmp.ne.s32.totalorder %s255, %s257
      %p264 = scmp.eq.s32.totalorder %s32, 1
      %p265 = por %p263, %p264
      %p266 = scmp.ne.s32.totalorder %s257, %s258
      %p267 = scmp.eq.s32.totalorder %s32, 0
      %p268 = por %p266, %p267
      %p269 = scmp.ne.s32.totalorder %s257, %s258
      %p270 = scmp.eq.s32.totalorder %s33, 1
      %p271 = por %p269, %p270
      %p273 = scmp.ne.s32.totalorder %s258, %s272
      %p274 = scmp.eq.s32.totalorder %s33, 0
      %p275 = por %p273, %p274
      %s277 = sadd.s32 %s276, 1
      %p280 = scmp.eq.s32.totalorder %s27, 1
      %p281 = scmp.ne.s32.totalorder %s276, %s278
      %p282 = scmp.eq.s32.totalorder %s27, 0
      %p283 = por %p281, %p282
      %p284 = scmp.ne.s32.totalorder %s276, %s278
      %p285 = scmp.eq.s32.totalorder %s32, 1
      %p286 = por %p284, %p285
      %p287 = scmp.ne.s32.totalorder %s278, %s279
      %p288 = scmp.eq.s32.totalorder %s32, 0
      %p289 = por %p287, %p288
      %p290 = scmp.ne.s32.totalorder %s278, %s279
      %p291 = scmp.eq.s32.totalorder %s33, 1
      %p292 = por %p290, %p291
      %p294 = scmp.ne.s32.totalorder %s279, %s293
      %p295 = scmp.eq.s32.totalorder %s33, 0
      %p296 = por %p294, %p295
      %s298 = sadd.s32 %s297, 1
      %p301 = scmp.eq.s32.totalorder %s27, 1
      %p302 = scmp.ne.s32.totalorder %s297, %s299
      %p303 = scmp.eq.s32.totalorder %s27, 0
      %p304 = por %p302, %p303
      %p305 = scmp.ne.s32.totalorder %s297, %s299
      %p306 = scmp.eq.s32.totalorder %s32, 1
      %p307 = por %p305, %p306
      %p308 = scmp.ne.s32.totalorder %s299, %s300
      %p309 = scmp.eq.s32.totalorder %s32, 0
      %p310 = por %p308, %p309
      %p311 = scmp.ne.s32.totalorder %s299, %s300
      %p312 = scmp.eq.s32.totalorder %s33, 1
      %p313 = por %p311, %p312
      %p315 = scmp.ne.s32.totalorder %s300, %s314
      %p316 = scmp.eq.s32.totalorder %s33, 0
      %p317 = por %p315, %p316
      %s319 = sadd.s32 %s318, 1
      %p322 = scmp.eq.s32.totalorder %s27, 1
      %p323 = scmp.ne.s32.totalorder %s318, %s320
      %p324 = scmp.eq.s32.totalorder %s27, 0
      %p325 = por %p323, %p324
      %p326 = scmp.ne.s32.totalorder %s318, %s320
      %p327 = scmp.eq.s32.totalorder %s32, 1
      %p328 = por %p326, %p327
      %p329 = scmp.ne.s32.totalorder %s320, %s321
      %p330 = scmp.eq.s32.totalorder %s32, 0
      %p331 = por %p329, %p330
      %p332 = scmp.ne.s32.totalorder %s320, %s321
      %p333 = scmp.eq.s32.totalorder %s33, 1
      %p334 = por %p332, %p333
      %p336 = scmp.ne.s32.totalorder %s321, %s335
      %p337 = scmp.eq.s32.totalorder %s33, 0
      %p338 = por %p336, %p337
      %s340 = sadd.s32 %s339, 1
      %p343 = scmp.eq.s32.totalorder %s27, 1
      %p344 = scmp.ne.s32.totalorder %s339, %s341
      %p345 = scmp.eq.s32.totalorder %s27, 0
      %p346 = por %p344, %p345
      %p347 = scmp.ne.s32.totalorder %s339, %s341
      %p348 = scmp.eq.s32.totalorder %s32, 1
      %p349 = por %p347, %p348
      %p350 = scmp.ne.s32.totalorder %s341, %s342
      %p351 = scmp.eq.s32.totalorder %s32, 0
      %p352 = por %p350, %p351
      %p353 = scmp.ne.s32.totalorder %s341, %s342
      %p354 = scmp.eq.s32.totalorder %s33, 1
      %p355 = por %p353, %p354
      %p357 = scmp.ne.s32.totalorder %s342, %s356
      %p358 = scmp.eq.s32.totalorder %s33, 0
      %p359 = por %p357, %p358
      %s361 = sadd.s32 %s360, 1
      %p364 = scmp.eq.s32.totalorder %s27, 1
      %p365 = scmp.ne.s32.totalorder %s360, %s362
      %p366 = scmp.eq.s32.totalorder %s27, 0
      %p367 = por %p365, %p366
      %p368 = scmp.ne.s32.totalorder %s360, %s362
      %p369 = scmp.eq.s32.totalorder %s32, 1
      %p370 = por %p368, %p369
      %p371 = scmp.ne.s32.totalorder %s362, %s363
      %p372 = scmp.eq.s32.totalorder %s32, 0
      %p373 = por %p371, %p372
      %p374 = scmp.ne.s32.totalorder %s362, %s363
      %p375 = scmp.eq.s32.totalorder %s33, 1
      %p376 = por %p374, %p375
      %p378 = scmp.ne.s32.totalorder %s363, %s377
      %p379 = scmp.eq.s32.totalorder %s33, 0
      %p380 = por %p378, %p379
      %s381 = ssub.s32 %s27, %s34
      %p382 = scmp.eq.s32.totalorder %s381, 0
      %s384 = sadd.s32 %s383, 1
      %s385 = scalar_select %p382, %s383, %s384
      %p388 = pneg %p382
      %p389 = scmp.eq.s32.totalorder %s27, 1
      %p390 = por %p388, %p389
      %p391 = scmp.ne.s32.totalorder %s383, %s386
      %p392 = scmp.eq.s32.totalorder %s27, 0
      %p393 = por %p391, %p392
      %p394 = scmp.ne.s32.totalorder %s383, %s386
      %p395 = scmp.eq.s32.totalorder %s32, 1
      %p396 = por %p394, %p395
      %p397 = scmp.ne.s32.totalorder %s386, %s387
      %p398 = scmp.eq.s32.totalorder %s32, 0
      %p399 = por %p397, %p398
      %p400 = scmp.ne.s32.totalorder %s386, %s387
      %p401 = scmp.eq.s32.totalorder %s33, 1
      %p402 = por %p400, %p401
      %p404 = scmp.ne.s32.totalorder %s387, %s403
      %p405 = scmp.eq.s32.totalorder %s33, 0
      %p406 = por %p404, %p405
      %p407 = scmp.le.s32.totalorder 1, %s27
      %p408 = scmp.lt.s32.totalorder %s27, 3
      %p409 = pnand %p407, %p408
      %p410 = pneg %p409
      // Predicated region
      $region9: #{adain_decoder_block.1} parent=5 // pred_check
        _
      $region10: #{adain_decoder_block.1} parent=5 // pred_check_branch
        %412 = sbr.rel (%p409) target = $region12
      $region11: #{adain_decoder_block.1} parent=5 // pred_region
        %s413 = ssub.s32 %s27, 1
        // Predicated region
        $region13: #{adain_decoder_block.1} parent=11 // pred_check
          %p414 = pneg %p100
        $region14: #{adain_decoder_block.1} parent=11 // pred_check_branch
          %416 = sbr.rel (%p414) target = $region16
        $region15: #{adain_decoder_block.1} parent=11 // pred_region
          _
        $region16: #{adain_decoder_block.1} parent=11 // pred_fallthru
          _
        // Predicated region
        $region17: #{adain_decoder_block.1} parent=11 // pred_check
          %p417 = pneg %p121
        $region18: #{adain_decoder_block.1} parent=11 // pred_check_branch
          %419 = sbr.rel (%p417) target = $region20
        $region19: #{adain_decoder_block.1} parent=11 // pred_region
          _
        $region20: #{adain_decoder_block.1} parent=11 // pred_fallthru
          _
        // Predicated region
        $region21: #{adain_decoder_block.1} parent=11 // pred_check
          %p420 = pneg %p142
        $region22: #{adain_decoder_block.1} parent=11 // pred_check_branch
          %422 = sbr.rel (%p420) target = $region24
        $region23: #{adain_decoder_block.1} parent=11 // pred_region
          _
        $region24: #{adain_decoder_block.1} parent=11 // pred_fallthru
          _
        // Predicated region
        $region25: #{adain_decoder_block.1} parent=11 // pred_check
          %p423 = pneg %p163
        $region26: #{adain_decoder_block.1} parent=11 // pred_check_branch
          %425 = sbr.rel (%p423) target = $region28
        $region27: #{adain_decoder_block.1} parent=11 // pred_region
          _
        $region28: #{adain_decoder_block.1} parent=11 // pred_fallthru
          _
        // Predicated region
        $region29: #{adain_decoder_block.1} parent=11 // pred_check
          %p426 = pneg %p184
        $region30: #{adain_decoder_block.1} parent=11 // pred_check_branch
          %428 = sbr.rel (%p426) target = $region32
        $region31: #{adain_decoder_block.1} parent=11 // pred_region
          _
        $region32: #{adain_decoder_block.1} parent=11 // pred_fallthru
          _
        // Predicated region
        $region33: #{adain_decoder_block.1} parent=11 // pred_check
          %p429 = pneg %p205
        $region34: #{adain_decoder_block.1} parent=11 // pred_check_branch
          %431 = sbr.rel (%p429) target = $region36
        $region35: #{adain_decoder_block.1} parent=11 // pred_region
          %s433 = ssub.s32 16, 16
          %434 = vsyncadd [#allocation4], %s433
          %s436 = sshll.u32 [#allocation3], 4
          %s437 = int_to_ptr.vmem [resolvable:$true] %s436
          %439 = dma.hbm_to_vmem [thread:$0]  %s7, 16, %s437, [#allocation4]
        $region36: #{adain_decoder_block.1} parent=11 // pred_fallthru
          _
        // Predicated region
        $region37: #{adain_decoder_block.1} parent=11 // pred_check
          %p440 = pneg %p226
        $region38: #{adain_decoder_block.1} parent=11 // pred_check_branch
          %442 = sbr.rel (%p440) target = $region40
        $region39: #{adain_decoder_block.1} parent=11 // pred_region
          _
        $region40: #{adain_decoder_block.1} parent=11 // pred_fallthru
          _
        // Predicated region
        $region41: #{adain_decoder_block.1} parent=11 // pred_check
          %p443 = pneg %p247
        $region42: #{adain_decoder_block.1} parent=11 // pred_check_branch
          %445 = sbr.rel (%p443) target = $region44
        $region43: #{adain_decoder_block.1} parent=11 // pred_region
          %s447 = ssub.s32 16, 16
          %448 = vsyncadd [#allocation6], %s447
          %s450 = sshll.u32 [#allocation5], 4
          %s451 = int_to_ptr.vmem [resolvable:$true] %s450
          %453 = dma.hbm_to_vmem [thread:$0]  %s9, 16, %s451, [#allocation6]
        $region44: #{adain_decoder_block.1} parent=11 // pred_fallthru
          _
        // Predicated region
        $region45: #{adain_decoder_block.1} parent=11 // pred_check
          %p454 = pneg %p268
        $region46: #{adain_decoder_block.1} parent=11 // pred_check_branch
          %456 = sbr.rel (%p454) target = $region48
        $region47: #{adain_decoder_block.1} parent=11 // pred_region
          %s458 = ssub.s32 4608, 4608
          %459 = vsyncadd [#allocation6], %s458
          %s460 = sshll.u32 [#allocation7], 4
          %s461 = int_to_ptr.vmem [resolvable:$true] %s460
          %466 = dma.hbm_to_vmem [thread:$0]  %s10, 4608, %s461, [#allocation6], 128, 128, 8
        $region48: #{adain_decoder_block.1} parent=11 // pred_fallthru
          _
        // Predicated region
        $region49: #{adain_decoder_block.1} parent=11 // pred_check
          %p467 = pneg %p289
        $region50: #{adain_decoder_block.1} parent=11 // pred_check_branch
          %469 = sbr.rel (%p467) target = $region52
        $region51: #{adain_decoder_block.1} parent=11 // pred_region
          %s471 = ssub.s32 16, 16
          %472 = vsyncadd [#allocation9], %s471
          %s474 = sshll.u32 [#allocation8], 4
          %s475 = int_to_ptr.vmem [resolvable:$true] %s474
          %477 = dma.hbm_to_vmem [thread:$0]  %s11, 16, %s475, [#allocation9]
        $region52: #{adain_decoder_block.1} parent=11 // pred_fallthru
          _
        // Predicated region
        $region53: #{adain_decoder_block.1} parent=11 // pred_check
          %p478 = pneg %p310
        $region54: #{adain_decoder_block.1} parent=11 // pred_check_branch
          %480 = sbr.rel (%p478) target = $region56
        $region55: #{adain_decoder_block.1} parent=11 // pred_region
          %s482 = ssub.s32 2048, 2048
          %483 = vsyncadd [#allocation9], %s482
          %s484 = sshll.u32 [#allocation10], 4
          %s485 = int_to_ptr.vmem [resolvable:$true] %s484
          %490 = dma.hbm_to_vmem [thread:$0]  %s12, 2048, %s485, [#allocation9], 128, 128, 8
        $region56: #{adain_decoder_block.1} parent=11 // pred_fallthru
          _
        // Predicated region
        $region57: #{adain_decoder_block.1} parent=11 // pred_check
          %p491 = pneg %p331
        $region58: #{adain_decoder_block.1} parent=11 // pred_check_branch
          %493 = sbr.rel (%p491) target = $region60
        $region59: #{adain_decoder_block.1} parent=11 // pred_region
          %s495 = ssub.s32 16, 16
          %496 = vsyncadd [#allocation12], %s495
          %s498 = sshll.u32 [#allocation11], 4
          %s499 = int_to_ptr.vmem [resolvable:$true] %s498
          %501 = dma.hbm_to_vmem [thread:$0]  %s13, 16, %s499, [#allocation12]
        $region60: #{adain_decoder_block.1} parent=11 // pred_fallthru
          _
        // Predicated region
        $region61: #{adain_decoder_block.1} parent=11 // pred_check
          %p502 = pneg %p352
        $region62: #{adain_decoder_block.1} parent=11 // pred_check_branch
          %504 = sbr.rel (%p502) target = $region64
        $region63: #{adain_decoder_block.1} parent=11 // pred_region
          %s506 = ssub.s32 2048, 2048
          %507 = vsyncadd [#allocation12], %s506
          %s508 = sshll.u32 [#allocation13], 4
          %s509 = int_to_ptr.vmem [resolvable:$true] %s508
          %514 = dma.hbm_to_vmem [thread:$0]  %s14, 2048, %s509, [#allocation12], 128, 128, 8
        $region64: #{adain_decoder_block.1} parent=11 // pred_fallthru
          _
        // Predicated region
        $region65: #{adain_decoder_block.1} parent=11 // pred_check
          %p515 = pneg %p373
        $region66: #{adain_decoder_block.1} parent=11 // pred_check_branch
          %517 = sbr.rel (%p515) target = $region68
        $region67: #{adain_decoder_block.1} parent=11 // pred_region
          %s519 = ssub.s32 16, 16
          %520 = vsyncadd [#allocation15], %s519
          %s522 = sshll.u32 [#allocation14], 4
          %s523 = int_to_ptr.vmem [resolvable:$true] %s522
          %525 = dma.hbm_to_vmem [thread:$0]  %s15, 16, %s523, [#allocation15]
        $region68: #{adain_decoder_block.1} parent=11 // pred_fallthru
          _
      $region12: #{adain_decoder_block.1} parent=5 // pred_fallthru
        _
      %p526 = scmp.lt.s32.totalorder %s27, 2
      // Predicated region
      $region69: #{adain_decoder_block.1} parent=5 // pred_check
        %p527 = pneg %p526
      $region70: #{adain_decoder_block.1} parent=5 // pred_check_branch
        %529 = sbr.rel (%p527) target = $region72
      $region71: #{adain_decoder_block.1} parent=5 // pred_region
        // Predicated region
        $region73: #{adain_decoder_block.1} parent=71 // pred_check
          %p530 = pneg %p47
        $region74: #{adain_decoder_block.1} parent=71 // pred_check_branch
          %532 = sbr.rel (%p530) target = $region76
        $region75: #{adain_decoder_block.1} parent=71 // pred_region
          %p533 = scmp.lt.s32.totalorder %s27, 1
          %s534 = scalar_select %p533, %s27, 1
          %s535 = smul.addr %s534, 32
          %s536 = smul.addr %s535, 8
          %s537 = scalar_lea.vmem %s0, %s536
        $region76: #{adain_decoder_block.1} parent=71 // pred_fallthru
          _
        // Predicated region
        $region77: #{adain_decoder_block.1} parent=71 // pred_check
          %p538 = pneg %p73
        $region78: #{adain_decoder_block.1} parent=71 // pred_check_branch
          %540 = sbr.rel (%p538) target = $region80
        $region79: #{adain_decoder_block.1} parent=71 // pred_region
          %p541 = scmp.lt.s32.totalorder %s27, 1
          %s542 = scalar_select %p541, %s27, 1
          %s543 = scalar_lea.vmem %s1, %s542
        $region80: #{adain_decoder_block.1} parent=71 // pred_fallthru
          _
      $region72: #{adain_decoder_block.1} parent=5 // pred_fallthru
        _
      %p544 = scmp.le.s32.totalorder 1, %s27
      %p545 = scmp.lt.s32.totalorder %s27, 3
      %p546 = pnand %p544, %p545
      %p547 = pneg %p546
      // Predicated region
      $region81: #{adain_decoder_block.1} parent=5 // pred_check
        _
      $region82: #{adain_decoder_block.1} parent=5 // pred_check_branch
        %549 = sbr.rel (%p546) target = $region84
      $region83: #{adain_decoder_block.1} parent=5 // pred_region
        %s550 = ssub.s32 %s27, 1
        // Predicated region
        $region85: #{adain_decoder_block.1} parent=83 // pred_check
          %p551 = pneg %p205
        $region86: #{adain_decoder_block.1} parent=83 // pred_check_branch
          %553 = sbr.rel (%p551) target = $region88
        $region87: #{adain_decoder_block.1} parent=83 // pred_region
          %554 = dma.done [#allocation4], 16
        $region88: #{adain_decoder_block.1} parent=83 // pred_fallthru
          _
        // Predicated region
        $region89: #{adain_decoder_block.1} parent=83 // pred_check
          %p555 = pneg %p247
        $region90: #{adain_decoder_block.1} parent=83 // pred_check_branch
          %557 = sbr.rel (%p555) target = $region92
        $region91: #{adain_decoder_block.1} parent=83 // pred_region
          %558 = dma.done [#allocation6], 16
        $region92: #{adain_decoder_block.1} parent=83 // pred_fallthru
          _
        // Predicated region
        $region93: #{adain_decoder_block.1} parent=83 // pred_check
          %p559 = pneg %p268
        $region94: #{adain_decoder_block.1} parent=83 // pred_check_branch
          %561 = sbr.rel (%p559) target = $region96
        $region95: #{adain_decoder_block.1} parent=83 // pred_region
          %562 = dma.done [#allocation6], 4608
        $region96: #{adain_decoder_block.1} parent=83 // pred_fallthru
          _
        // Predicated region
        $region97: #{adain_decoder_block.1} parent=83 // pred_check
          %p563 = pneg %p289
        $region98: #{adain_decoder_block.1} parent=83 // pred_check_branch
          %565 = sbr.rel (%p563) target = $region100
        $region99: #{adain_decoder_block.1} parent=83 // pred_region
          %566 = dma.done [#allocation9], 16
        $region100: #{adain_decoder_block.1} parent=83 // pred_fallthru
          _
        // Predicated region
        $region101: #{adain_decoder_block.1} parent=83 // pred_check
          %p567 = pneg %p310
        $region102: #{adain_decoder_block.1} parent=83 // pred_check_branch
          %569 = sbr.rel (%p567) target = $region104
        $region103: #{adain_decoder_block.1} parent=83 // pred_region
          %570 = dma.done [#allocation9], 2048
        $region104: #{adain_decoder_block.1} parent=83 // pred_fallthru
          _
        // Predicated region
        $region105: #{adain_decoder_block.1} parent=83 // pred_check
          %p571 = pneg %p331
        $region106: #{adain_decoder_block.1} parent=83 // pred_check_branch
          %573 = sbr.rel (%p571) target = $region108
        $region107: #{adain_decoder_block.1} parent=83 // pred_region
          %574 = dma.done [#allocation12], 16
        $region108: #{adain_decoder_block.1} parent=83 // pred_fallthru
          _
        // Predicated region
        $region109: #{adain_decoder_block.1} parent=83 // pred_check
          %p575 = pneg %p352
        $region110: #{adain_decoder_block.1} parent=83 // pred_check_branch
          %577 = sbr.rel (%p575) target = $region112
        $region111: #{adain_decoder_block.1} parent=83 // pred_region
          %578 = dma.done [#allocation12], 2048
        $region112: #{adain_decoder_block.1} parent=83 // pred_fallthru
          _
        // Predicated region
        $region113: #{adain_decoder_block.1} parent=83 // pred_check
          %p579 = pneg %p373
        $region114: #{adain_decoder_block.1} parent=83 // pred_check_branch
          %581 = sbr.rel (%p579) target = $region116
        $region115: #{adain_decoder_block.1} parent=83 // pred_region
          %582 = dma.done [#allocation15], 16
        $region116: #{adain_decoder_block.1} parent=83 // pred_fallthru
          _
        %p583 = scmp.lt.s32.totalorder %s32, 1
        %s584 = scalar_select %p583, %s32, 1
        %s585 = smul.addr %s584, 32
        %s586 = smul.addr %s585, 8
        %s587 = scalar_lea.vmem %s0, %s586
        %p588 = pneg %p53
        %p589 = pneg %p50
        %p590 = scmp.lt.s32.totalorder %s32, 1
        %s591 = scalar_select %p590, %s32, 1
        %s592 = scalar_lea.vmem %s1, %s591
        %p593 = pneg %p79
        %p594 = pneg %p76
        %p595 = pneg %p100
        %p596 = pneg %p97
        %p597 = pneg %p121
        %p598 = pneg %p118
        %p599 = pneg %p142
        %p600 = pneg %p139
        %p601 = pneg %p163
        %p602 = pneg %p160
        %p603 = pneg %p184
        %p604 = pneg %p181
        %p605 = pneg %p205
        %p606 = pneg %p202
        %p607 = pneg %p226
        %p608 = pneg %p223
        %p609 = pneg %p247
        %p610 = pneg %p244
        %p611 = pneg %p268
        %p612 = pneg %p265
        %p613 = pneg %p289
        %p614 = pneg %p286
        %p615 = pneg %p310
        %p616 = pneg %p307
        %p617 = pneg %p331
        %p618 = pneg %p328
        %p619 = pneg %p352
        %p620 = pneg %p349
        %p621 = pneg %p373
        %p622 = pneg %p370
        %p623 = pneg %p399
        %p624 = pneg %p396
        %p625 = scmp.lt.s32.totalorder %s32, 1
        %s626 = scalar_select %p625, %s32, 1
        %s627 = smul.addr %s626, 32
        %s628 = smul.addr %s627, 8
        %s629 = scalar_lea.vmem %s16, %s628
        %p630 = scmp.lt.s32.totalorder %s32, 1
        %s631 = scalar_select %p630, %s32, 1
        %s632 = smul.addr %s631, 32
        %s633 = smul.addr %s632, 8
        %s634 = scalar_lea.vmem %s0, %s633
        %p635 = scmp.lt.s32.totalorder %s32, 1
        %s636 = scalar_select %p635, %s32, 1
        %s637 = scalar_lea.vmem %s1, %s636
        %p638 = scmp.lt.s32.totalorder %s32, 1
        %s639 = scalar_select %p638, %s32, 1
        %s640 = smul.addr %s639, 32
        %s641 = smul.addr %s640, 8
        %s642 = scalar_lea.vmem %s16, %s641
        %vm643 = vcmask 261120
        %644 = vst.msk [vmem:[#allocation2] sm:$0xff] %vm643, 0.0
        %645 = vst.msk [vmem:[#allocation2 + $0x8] sm:$0xff] %vm643, 0.0
        %vm646 = vcmask 254976
        %647 = vst.msk [vmem:[#allocation2 + $0x10] sm:$0x3] %vm646, 0.0
        %s648 = scalar_lea.vmem [#allocation2], 408
        %649 = vst.msk [vmem:[%s648] sm:$0xff] %vm643, 0.0
        %650 = vst.msk [vmem:[%s648 + $0x8] sm:$0xff] %vm643, 0.0
        %651 = vst.msk [vmem:[%s648 + $0x10] sm:$0x3] %vm646, 0.0
        %vm652 = vcmask 253952
        %653 = vst.msk [vmem:[#allocation2] sm:$0x1] %vm652, 0.0
        %654 = vst.msk [vmem:[#allocation2 + $0x18] sm:$0x1] %vm652, 0.0
        %655 = vst.msk [vmem:[#allocation2 + $0x30] sm:$0x1] %vm652, 0.0
        %656 = vst.msk [vmem:[#allocation2 + $0x48] sm:$0x1] %vm652, 0.0
        %657 = vst.msk [vmem:[#allocation2 + $0x60] sm:$0x1] %vm652, 0.0
        %658 = vst.msk [vmem:[#allocation2 + $0x78] sm:$0x1] %vm652, 0.0
        %659 = vst.msk [vmem:[#allocation2 + $0x90] sm:$0x1] %vm652, 0.0
        %660 = vst.msk [vmem:[#allocation2 + $0xa8] sm:$0x1] %vm652, 0.0
        %661 = vst.msk [vmem:[#allocation2 + $0xc0] sm:$0x1] %vm652, 0.0
        %662 = vst.msk [vmem:[#allocation2 + $0xd8] sm:$0x1] %vm652, 0.0
        %663 = vst.msk [vmem:[#allocation2 + $0xf0] sm:$0x1] %vm652, 0.0
        %664 = vst.msk [vmem:[#allocation2 + $0x108] sm:$0x1] %vm652, 0.0
        %665 = vst.msk [vmem:[#allocation2 + $0x120] sm:$0x1] %vm652, 0.0
        %666 = vst.msk [vmem:[#allocation2 + $0x138] sm:$0x1] %vm652, 0.0
        %667 = vst.msk [vmem:[#allocation2 + $0x150] sm:$0x1] %vm652, 0.0
        %668 = vst.msk [vmem:[#allocation2 + $0x168] sm:$0x1] %vm652, 0.0
        %669 = vst.msk [vmem:[#allocation2 + $0x180] sm:$0x1] %vm652, 0.0
        %670 = vst.msk [vmem:[#allocation2 + $0x198] sm:$0x1] %vm652, 0.0
        %671 = vst.msk [vmem:[#allocation2 + $0x11] sm:$0x1] %vm652, 0.0
        %672 = vst.msk [vmem:[#allocation2 + $0x29] sm:$0x1] %vm652, 0.0
        %673 = vst.msk [vmem:[#allocation2 + $0x41] sm:$0x1] %vm652, 0.0
        %674 = vst.msk [vmem:[#allocation2 + $0x59] sm:$0x1] %vm652, 0.0
        %675 = vst.msk [vmem:[#allocation2 + $0x71] sm:$0x1] %vm652, 0.0
        %676 = vst.msk [vmem:[#allocation2 + $0x89] sm:$0x1] %vm652, 0.0
        %677 = vst.msk [vmem:[#allocation2 + $0xa1] sm:$0x1] %vm652, 0.0
        %678 = vst.msk [vmem:[#allocation2 + $0xb9] sm:$0x1] %vm652, 0.0
        %679 = vst.msk [vmem:[#allocation2 + $0xd1] sm:$0x1] %vm652, 0.0
        %680 = vst.msk [vmem:[#allocation2 + $0xe9] sm:$0x1] %vm652, 0.0
        %681 = vst.msk [vmem:[#allocation2 + $0x101] sm:$0x1] %vm652, 0.0
        %682 = vst.msk [vmem:[#allocation2 + $0x119] sm:$0x1] %vm652, 0.0
        %683 = vst.msk [vmem:[#allocation2 + $0x131] sm:$0x1] %vm652, 0.0
        %684 = vst.msk [vmem:[#allocation2 + $0x149] sm:$0x1] %vm652, 0.0
        %685 = vst.msk [vmem:[#allocation2 + $0x161] sm:$0x1] %vm652, 0.0
        %686 = vst.msk [vmem:[#allocation2 + $0x179] sm:$0x1] %vm652, 0.0
        %687 = vst.msk [vmem:[#allocation2 + $0x191] sm:$0x1] %vm652, 0.0
        %688 = vst.msk [vmem:[#allocation2 + $0x1a9] sm:$0x1] %vm652, 0.0
        %v689 = vld [vmem:[%s634] sm:$0xff]
        %v690 = vld [vmem:[%s634 + $0x8] sm:$0xff]
        %v691 = vld [vmem:[%s634 + $0x10] sm:$0xff]
        %v692 = vld [vmem:[%s634 + $0x18] sm:$0xff]
        %v693 = vld [vmem:[%s634 + $0x20] sm:$0xff]
        %v694 = vld [vmem:[%s634 + $0x28] sm:$0xff]
        %v695 = vld [vmem:[%s634 + $0x30] sm:$0xff]
        %v696 = vld [vmem:[%s634 + $0x38] sm:$0xff]
        %v697 = vld [vmem:[%s634 + $0x40] sm:$0xff]
        %v698 = vld [vmem:[%s634 + $0x48] sm:$0xff]
        %v699 = vld [vmem:[%s634 + $0x50] sm:$0xff]
        %v700 = vld [vmem:[%s634 + $0x58] sm:$0xff]
        %v701 = vld [vmem:[%s634 + $0x60] sm:$0xff]
        %v702 = vld [vmem:[%s634 + $0x68] sm:$0xff]
        %v703 = vld [vmem:[%s634 + $0x70] sm:$0xff]
        %v704 = vld [vmem:[%s634 + $0x78] sm:$0xff]
        %v705 = vld [vmem:[%s634 + $0x80] sm:$0xff]
        %v706 = vld [vmem:[%s634 + $0x88] sm:$0xff]
        %v707 = vld [vmem:[%s634 + $0x90] sm:$0xff]
        %v708 = vld [vmem:[%s634 + $0x98] sm:$0xff]
        %v709 = vld [vmem:[%s634 + $0xa0] sm:$0xff]
        %v710 = vld [vmem:[%s634 + $0xa8] sm:$0xff]
        %v711 = vld [vmem:[%s634 + $0xb0] sm:$0xff]
        %v712 = vld [vmem:[%s634 + $0xb8] sm:$0xff]
        %v713 = vld [vmem:[%s634 + $0xc0] sm:$0xff]
        %v714 = vld [vmem:[%s634 + $0xc8] sm:$0xff]
        %v715 = vld [vmem:[%s634 + $0xd0] sm:$0xff]
        %v716 = vld [vmem:[%s634 + $0xd8] sm:$0xff]
        %v717 = vld [vmem:[%s634 + $0xe0] sm:$0xff]
        %v718 = vld [vmem:[%s634 + $0xe8] sm:$0xff]
        %v719 = vld [vmem:[%s634 + $0xf0] sm:$0xff]
        %v720 = vld [vmem:[%s634 + $0xf8] sm:$0xff]
        %v721 = vld [vmem:[%s637] sm:$0x1]
        %v722 = vld [vmem:[%s2] sm:$0xff]
        %v723 = vld [vmem:[%s2 + $0x8] sm:$0xff]
        %v724 = vld [vmem:[%s2 + $0x10] sm:$0xff]
        %v725 = vld [vmem:[%s3] sm:$0x7]
        %v727 = vlaneseq
        %v728 = vshrl.u32 %v727, 7
        %v729 = vsub.s32 0, %v728
        %v730 = vrot.slane %v725, %v729
        %v731 = vlaneseq
        %v732 = vshrl.u32 %v731, 7
        %v733 = vsub.s32 1, %v732
        %v734 = vrot.slane %v725, %v733
        %v735 = vlaneseq
        %v736 = vshrl.u32 %v735, 7
        %v737 = vsub.s32 2, %v736
        %v738 = vrot.slane %v725, %v737
        %vm742 = vcmask 64512
        %v744 = vsel %vm742, %v721, 0
        %746 = vmatprep.subr.mxu0 %v723
        %747 = vmatpush1.msra.mxu0 %v722
        %748 = vmatprep.subr.mxu0 0.0
        %749 = vmatpush1.msra.mxu0 0.0
        %750 = vmatprep.subr.mxu0 0.0
        %751 = vmatpush1.msra.mxu0 0.0
        %752 = vmatprep.subr.mxu0 0.0
        %753 = vmatpush1.msra.mxu0 0.0
        %754 = vmatprep.subr.mxu0 0.0
        %755 = vmatpush1.msra.mxu0 0.0
        %756 = vmatprep.subr.mxu0 0.0
        %757 = vmatpush1.msra.mxu0 0.0
        %758 = vmatprep.subr.mxu0 0.0
        %759 = vmatpush1.msra.mxu0 0.0
        %760 = vmatprep.subr.mxu0 0.0
        %761 = vmatpush1.msra.mxu0 0.0
        %762 = vmatprep.subr.mxu0 0.0
        %763 = vmatpush1.msra.mxu0 0.0
        %764 = vmatprep.subr.mxu0 0.0
        %765 = vmatpush1.msra.mxu0 0.0
        %766 = vmatprep.subr.mxu0 0.0
        %767 = vmatpush1.msra.mxu0 0.0
        %768 = vmatprep.subr.mxu0 0.0
        %769 = vmatpush1.msra.mxu0 0.0
        %770 = vmatprep.subr.mxu0 0.0
        %771 = vmatpush1.msra.mxu0 0.0
        %772 = vmatprep.subr.mxu0 0.0
        %773 = vmatpush1.msra.mxu0 0.0
        %774 = vmatprep.subr.mxu0 0.0
        %775 = vmatpush1.msra.mxu0 0.0
        %776 = vmatprep.subr.mxu0 0.0
        %777 = vmatpush1.msra.mxu0 0.0
        %778 = vmatprep.subr.mxu0 0.0
        %779 = vmatpush1.msra.mxu0 0.0
        %780 = vmatprep.subr.mxu0 0.0
        %781 = vmatpush1.msra.mxu0 0.0
        %782 = vmatprep.subr.mxu0 0.0
        %783 = vmatpush1.msra.mxu0 0.0
        %784 = vmatprep.subr.mxu0 0.0
        %785 = vmatpush1.msra.mxu0 0.0
        %786 = vmatprep.subr.mxu0 0.0
        %787 = vmatpush1.msra.mxu0 0.0
        %788 = vmatprep.subr.mxu0 0.0
        %789 = vmatpush1.msra.mxu0 0.0
        %790 = vmatprep.subr.mxu0 0.0
        %791 = vmatpush1.msra.mxu0 0.0
        %792 = vmatprep.subr.mxu0 0.0
        %793 = vmatpush1.msra.mxu0 0.0
        %794 = vmatprep.subr.mxu0 0.0
        %795 = vmatpush1.msra.mxu0 0.0
        %796 = vmatprep.subr.mxu0 0.0
        %797 = vmatpush1.msra.mxu0 0.0
        %798 = vmatprep.subr.mxu0 0.0
        %799 = vmatpush1.msra.mxu0 0.0
        %800 = vmatprep.subr.mxu0 0.0
        %801 = vmatpush1.msra.mxu0 0.0
        %802 = vmatprep.subr.mxu0 0.0
        %803 = vmatpush1.msra.mxu0 0.0
        %804 = vmatprep.subr.mxu0 0.0
        %805 = vmatpush1.msra.mxu0 0.0
        %806 = vmatprep.subr.mxu0 0.0
        %807 = vmatpush1.msra.mxu0 0.0
        %808 = vmatprep.subr.mxu0 0.0
        %809 = vmatpush1.msra.mxu0 0.0
        %810 = vmatprep.mubr.f32.mxu0 0.0
        %811 = vmatmul.mubr.f32.gmra.mrb[0].mxu0 %v744
        %v812 = vpop.f32.mrb[0].mxu0
        %v813 = vadd.f32 %v730, %v812
        %v814 = vpop.f32.mrb[0].mxu0
        %v815 = vadd.f32 %v734, %v814
        %816 = vdwg.mxu0
        %817 = vmatprep.subr.mxu0 0.0
        %818 = vmatpush1.msra.mxu0 %v724
        %819 = vmatprep.subr.mxu0 0.0
        %820 = vmatpush1.msra.mxu0 0.0
        %821 = vmatprep.subr.mxu0 0.0
        %822 = vmatpush1.msra.mxu0 0.0
        %823 = vmatprep.subr.mxu0 0.0
        %824 = vmatpush1.msra.mxu0 0.0
        %825 = vmatprep.subr.mxu0 0.0
        %826 = vmatpush1.msra.mxu0 0.0
        %827 = vmatprep.subr.mxu0 0.0
        %828 = vmatpush1.msra.mxu0 0.0
        %829 = vmatprep.subr.mxu0 0.0
        %830 = vmatpush1.msra.mxu0 0.0
        %831 = vmatprep.subr.mxu0 0.0
        %832 = vmatpush1.msra.mxu0 0.0
        %833 = vmatprep.subr.mxu0 0.0
        %834 = vmatpush1.msra.mxu0 0.0
        %835 = vmatprep.subr.mxu0 0.0
        %836 = vmatpush1.msra.mxu0 0.0
        %837 = vmatprep.subr.mxu0 0.0
        %838 = vmatpush1.msra.mxu0 0.0
        %839 = vmatprep.subr.mxu0 0.0
        %840 = vmatpush1.msra.mxu0 0.0
        %841 = vmatprep.subr.mxu0 0.0
        %842 = vmatpush1.msra.mxu0 0.0
        %843 = vmatprep.subr.mxu0 0.0
        %844 = vmatpush1.msra.mxu0 0.0
        %845 = vmatprep.subr.mxu0 0.0
        %846 = vmatpush1.msra.mxu0 0.0
        %847 = vmatprep.subr.mxu0 0.0
        %848 = vmatpush1.msra.mxu0 0.0
        %849 = vmatprep.subr.mxu0 0.0
        %850 = vmatpush1.msra.mxu0 0.0
        %851 = vmatprep.subr.mxu0 0.0
        %852 = vmatpush1.msra.mxu0 0.0
        %853 = vmatprep.subr.mxu0 0.0
        %854 = vmatpush1.msra.mxu0 0.0
        %855 = vmatprep.subr.mxu0 0.0
        %856 = vmatpush1.msra.mxu0 0.0
        %857 = vmatprep.subr.mxu0 0.0
        %858 = vmatpush1.msra.mxu0 0.0
        %859 = vmatprep.subr.mxu0 0.0
        %860 = vmatpush1.msra.mxu0 0.0
        %861 = vmatprep.subr.mxu0 0.0
        %862 = vmatpush1.msra.mxu0 0.0
        %863 = vmatprep.subr.mxu0 0.0
        %864 = vmatpush1.msra.mxu0 0.0
        %865 = vmatprep.subr.mxu0 0.0
        %866 = vmatpush1.msra.mxu0 0.0
        %867 = vmatprep.subr.mxu0 0.0
        %868 = vmatpush1.msra.mxu0 0.0
        %869 = vmatprep.subr.mxu0 0.0
        %870 = vmatpush1.msra.mxu0 0.0
        %871 = vmatprep.subr.mxu0 0.0
        %872 = vmatpush1.msra.mxu0 0.0
        %873 = vmatprep.subr.mxu0 0.0
        %874 = vmatpush1.msra.mxu0 0.0
        %875 = vmatprep.subr.mxu0 0.0
        %876 = vmatpush1.msra.mxu0 0.0
        %877 = vmatprep.subr.mxu0 0.0
        %878 = vmatpush1.msra.mxu0 0.0
        %879 = vmatprep.subr.mxu0 0.0
        %880 = vmatpush1.msra.mxu0 0.0
        %881 = vmatprep.mubr.f32.mxu0 0.0
        %882 = vmatmul.mubr.f32.gmra.mrb[0].mxu0 %v744
        %v883 = vpop.f32.mrb[0].mxu0
        %v884 = vadd.f32 %v738, %v883
        %v885 = vpop.f32.mrb[0].mxu0
        %886 = vdwg.mxu0
        %v887 = vmax.f32 %v813, 0.0
        %v888 = vmax.f32 %v815, 0.0
        %v889 = vmax.f32 %v884, 0.0
        %v890 = vld [vmem:[%s4] sm:$0xff]
        %v891 = vld [vmem:[%s4 + $0x8] sm:$0xff]
        %v892 = vld [vmem:[%s4 + $0x10] sm:$0xff]
        %v893 = vld [vmem:[%s4 + $0x18] sm:$0xff]
        %v894 = vld [vmem:[%s4 + $0x20] sm:$0xff]
        %v895 = vld [vmem:[%s4 + $0x28] sm:$0xff]
        %v896 = vld [vmem:[%s4 + $0x30] sm:$0xff]
        %v897 = vld [vmem:[%s4 + $0x38] sm:$0xff]
        %v898 = vld [vmem:[%s4 + $0x40] sm:$0xff]
        %v899 = vld [vmem:[%s4 + $0x48] sm:$0xff]
        %v900 = vld [vmem:[%s4 + $0x50] sm:$0xff]
        %v901 = vld [vmem:[%s4 + $0x58] sm:$0xff]
        %v902 = vld [vmem:[%s4 + $0x60] sm:$0xff]
        %v903 = vld [vmem:[%s4 + $0x68] sm:$0xff]
        %v904 = vld [vmem:[%s4 + $0x70] sm:$0xff]
        %v905 = vld [vmem:[%s4 + $0x78] sm:$0xff]
        %v906 = vld [vmem:[%s5] sm:$0x1]
        %907 = vmatprep.subr.mxu0 0.0
        %908 = vmatpush1.msra.mxu0 %v890
        %909 = vmatprep.subr.mxu0 0.0
        %910 = vmatpush1.msra.mxu0 %v891
        %911 = vmatprep.subr.mxu0 0.0
        %912 = vmatpush1.msra.mxu0 %v892
        %913 = vmatprep.subr.mxu0 0.0
        %914 = vmatpush1.msra.mxu0 %v893
        %915 = vmatprep.subr.mxu0 0.0
        %916 = vmatpush1.msra.mxu0 %v894
        %917 = vmatprep.subr.mxu0 0.0
        %918 = vmatpush1.msra.mxu0 %v895
        %919 = vmatprep.subr.mxu0 0.0
        %920 = vmatpush1.msra.mxu0 %v896
        %921 = vmatprep.subr.mxu0 0.0
        %922 = vmatpush1.msra.mxu0 %v897
        %923 = vmatprep.subr.mxu0 0.0
        %924 = vmatpush1.msra.mxu0 %v898
        %925 = vmatprep.subr.mxu0 0.0
        %926 = vmatpush1.msra.mxu0 %v899
        %927 = vmatprep.subr.mxu0 0.0
        %928 = vmatpush1.msra.mxu0 %v900
        %929 = vmatprep.subr.mxu0 0.0
        %930 = vmatpush1.msra.mxu0 %v901
        %931 = vmatprep.subr.mxu0 0.0
        %932 = vmatpush1.msra.mxu0 %v902
        %933 = vmatprep.subr.mxu0 0.0
        %934 = vmatpush1.msra.mxu0 %v903
        %935 = vmatprep.subr.mxu0 0.0
        %936 = vmatpush1.msra.mxu0 %v904
        %937 = vmatprep.subr.mxu0 0.0
        %938 = vmatpush1.msra.mxu0 %v905
        %939 = vmatprep.subr.mxu0 0.0
        %940 = vmatpush1.msra.mxu0 0.0
        %941 = vmatprep.subr.mxu0 0.0
        %942 = vmatpush1.msra.mxu0 0.0
        %943 = vmatprep.subr.mxu0 0.0
        %944 = vmatpush1.msra.mxu0 0.0
        %945 = vmatprep.subr.mxu0 0.0
        %946 = vmatpush1.msra.mxu0 0.0
        %947 = vmatprep.subr.mxu0 0.0
        %948 = vmatpush1.msra.mxu0 0.0
        %949 = vmatprep.subr.mxu0 0.0
        %950 = vmatpush1.msra.mxu0 0.0
        %951 = vmatprep.subr.mxu0 0.0
        %952 = vmatpush1.msra.mxu0 0.0
        %953 = vmatprep.subr.mxu0 0.0
        %954 = vmatpush1.msra.mxu0 0.0
        %955 = vmatprep.subr.mxu0 0.0
        %956 = vmatpush1.msra.mxu0 0.0
        %957 = vmatprep.subr.mxu0 0.0
        %958 = vmatpush1.msra.mxu0 0.0
        %959 = vmatprep.subr.mxu0 0.0
        %960 = vmatpush1.msra.mxu0 0.0
        %961 = vmatprep.subr.mxu0 0.0
        %962 = vmatpush1.msra.mxu0 0.0
        %963 = vmatprep.subr.mxu0 0.0
        %964 = vmatpush1.msra.mxu0 0.0
        %965 = vmatprep.subr.mxu0 0.0
        %966 = vmatpush1.msra.mxu0 0.0
        %967 = vmatprep.subr.mxu0 0.0
        %968 = vmatpush1.msra.mxu0 0.0
        %969 = vmatprep.subr.mxu0 0.0
        %970 = vmatpush1.msra.mxu0 0.0
        %971 = vmatprep.mubr.f32.mxu0 0.0
        %972 = vmatmul.mubr.f32.gmra.mrb[0].mxu0 %v887
        %v973 = vpop.f32.mrb[0].mxu0
        %v974 = vadd.f32 %v906, %v973
        %v975 = vpop.f32.mrb[0].mxu0
        %976 = vdwg.mxu0
        %v977 = vld [vmem:[%s6] sm:$0xff]
        %v978 = vld [vmem:[%s6 + $0x8] sm:$0xff]
        %v979 = vld [vmem:[%s6 + $0x10] sm:$0xff]
        %v980 = vld [vmem:[%s6 + $0x18] sm:$0xff]
        %v981 = vld [vmem:[%s6 + $0x20] sm:$0xff]
        %v982 = vld [vmem:[%s6 + $0x28] sm:$0xff]
        %v983 = vld [vmem:[%s6 + $0x30] sm:$0xff]
        %v984 = vld [vmem:[%s6 + $0x38] sm:$0xff]
        %v985 = vld [vmem:[%s6 + $0x40] sm:$0xff]
        %v986 = vld [vmem:[%s6 + $0x48] sm:$0xff]
        %v987 = vld [vmem:[%s6 + $0x50] sm:$0xff]
        %v988 = vld [vmem:[%s6 + $0x58] sm:$0xff]
        %v989 = vld [vmem:[%s6 + $0x60] sm:$0xff]
        %v990 = vld [vmem:[%s6 + $0x68] sm:$0xff]
        %v991 = vld [vmem:[%s6 + $0x70] sm:$0xff]
        %v992 = vld [vmem:[%s6 + $0x78] sm:$0xff]
        %v993 = vld [vmem:[#allocation3] sm:$0x1]
        %994 = vmatprep.subr.mxu0 0.0
        %995 = vmatpush1.msra.mxu0 %v977
        %996 = vmatprep.subr.mxu0 0.0
        %997 = vmatpush1.msra.mxu0 %v978
        %998 = vmatprep.subr.mxu0 0.0
        %999 = vmatpush1.msra.mxu0 %v979
        %1000 = vmatprep.subr.mxu0 0.0
        %1001 = vmatpush1.msra.mxu0 %v980
        %1002 = vmatprep.subr.mxu0 0.0
        %1003 = vmatpush1.msra.mxu0 %v981
        %1004 = vmatprep.subr.mxu0 0.0
        %1005 = vmatpush1.msra.mxu0 %v982
        %1006 = vmatprep.subr.mxu0 0.0
        %1007 = vmatpush1.msra.mxu0 %v983
        %1008 = vmatprep.subr.mxu0 0.0
        %1009 = vmatpush1.msra.mxu0 %v984
        %1010 = vmatprep.subr.mxu0 0.0
        %1011 = vmatpush1.msra.mxu0 %v985
        %1012 = vmatprep.subr.mxu0 0.0
        %1013 = vmatpush1.msra.mxu0 %v986
        %1014 = vmatprep.subr.mxu0 0.0
        %1015 = vmatpush1.msra.mxu0 %v987
        %1016 = vmatprep.subr.mxu0 0.0
        %1017 = vmatpush1.msra.mxu0 %v988
        %1018 = vmatprep.subr.mxu0 0.0
        %1019 = vmatpush1.msra.mxu0 %v989
        %1020 = vmatprep.subr.mxu0 0.0
        %1021 = vmatpush1.msra.mxu0 %v990
        %1022 = vmatprep.subr.mxu0 0.0
        %1023 = vmatpush1.msra.mxu0 %v991
        %1024 = vmatprep.subr.mxu0 0.0
        %1025 = vmatpush1.msra.mxu0 %v992
        %1026 = vmatprep.subr.mxu0 0.0
        %1027 = vmatpush1.msra.mxu0 0.0
        %1028 = vmatprep.subr.mxu0 0.0
        %1029 = vmatpush1.msra.mxu0 0.0
        %1030 = vmatprep.subr.mxu0 0.0
        %1031 = vmatpush1.msra.mxu0 0.0
        %1032 = vmatprep.subr.mxu0 0.0
        %1033 = vmatpush1.msra.mxu0 0.0
        %1034 = vmatprep.subr.mxu0 0.0
        %1035 = vmatpush1.msra.mxu0 0.0
        %1036 = vmatprep.subr.mxu0 0.0
        %1037 = vmatpush1.msra.mxu0 0.0
        %1038 = vmatprep.subr.mxu0 0.0
        %1039 = vmatpush1.msra.mxu0 0.0
        %1040 = vmatprep.subr.mxu0 0.0
        %1041 = vmatpush1.msra.mxu0 0.0
        %1042 = vmatprep.subr.mxu0 0.0
        %1043 = vmatpush1.msra.mxu0 0.0
        %1044 = vmatprep.subr.mxu0 0.0
        %1045 = vmatpush1.msra.mxu0 0.0
        %1046 = vmatprep.subr.mxu0 0.0
        %1047 = vmatpush1.msra.mxu0 0.0
        %1048 = vmatprep.subr.mxu0 0.0
        %1049 = vmatpush1.msra.mxu0 0.0
        %1050 = vmatprep.subr.mxu0 0.0
        %1051 = vmatpush1.msra.mxu0 0.0
        %1052 = vmatprep.subr.mxu0 0.0
        %1053 = vmatpush1.msra.mxu0 0.0
        %1054 = vmatprep.subr.mxu0 0.0
        %1055 = vmatpush1.msra.mxu0 0.0
        %1056 = vmatprep.subr.mxu0 0.0
        %1057 = vmatpush1.msra.mxu0 0.0
        %1058 = vmatprep.mubr.f32.mxu0 0.0
        %1059 = vmatmul.mubr.f32.gmra.mrb[0].mxu0 %v888
        %v1060 = vpop.f32.mrb[0].mxu0
        %v1061 = vadd.f32 %v993, %v1060
        %v1062 = vpop.f32.mrb[0].mxu0
        %1063 = vdwg.mxu0
        %v1064 = vld [vmem:[%s8] sm:$0xff]
        %v1065 = vld [vmem:[%s8 + $0x8] sm:$0xff]
        %v1066 = vld [vmem:[%s8 + $0x10] sm:$0xff]
        %v1067 = vld [vmem:[%s8 + $0x18] sm:$0xff]
        %v1068 = vld [vmem:[%s8 + $0x20] sm:$0xff]
        %v1069 = vld [vmem:[%s8 + $0x28] sm:$0xff]
        %v1070 = vld [vmem:[%s8 + $0x30] sm:$0xff]
        %v1071 = vld [vmem:[%s8 + $0x38] sm:$0xff]
        %v1072 = vld [vmem:[%s8 + $0x40] sm:$0xff]
        %v1073 = vld [vmem:[%s8 + $0x48] sm:$0xff]
        %v1074 = vld [vmem:[%s8 + $0x50] sm:$0xff]
        %v1075 = vld [vmem:[%s8 + $0x58] sm:$0xff]
        %v1076 = vld [vmem:[%s8 + $0x60] sm:$0xff]
        %v1077 = vld [vmem:[%s8 + $0x68] sm:$0xff]
        %v1078 = vld [vmem:[%s8 + $0x70] sm:$0xff]
        %v1079 = vld [vmem:[%s8 + $0x78] sm:$0xff]
        %v1080 = vld [vmem:[#allocation5] sm:$0x1]
        %1081 = vmatprep.subr.mxu0 0.0
        %1082 = vmatpush1.msra.mxu0 %v1064
        %1083 = vmatprep.subr.mxu0 0.0
        %1084 = vmatpush1.msra.mxu0 %v1065
        %1085 = vmatprep.subr.mxu0 0.0
        %1086 = vmatpush1.msra.mxu0 %v1066
        %1087 = vmatprep.subr.mxu0 0.0
        %1088 = vmatpush1.msra.mxu0 %v1067
        %1089 = vmatprep.subr.mxu0 0.0
        %1090 = vmatpush1.msra.mxu0 %v1068
        %1091 = vmatprep.subr.mxu0 0.0
        %1092 = vmatpush1.msra.mxu0 %v1069
        %1093 = vmatprep.subr.mxu0 0.0
        %1094 = vmatpush1.msra.mxu0 %v1070
        %1095 = vmatprep.subr.mxu0 0.0
        %1096 = vmatpush1.msra.mxu0 %v1071
        %1097 = vmatprep.subr.mxu0 0.0
        %1098 = vmatpush1.msra.mxu0 %v1072
        %1099 = vmatprep.subr.mxu0 0.0
        %1100 = vmatpush1.msra.mxu0 %v1073
        %1101 = vmatprep.subr.mxu0 0.0
        %1102 = vmatpush1.msra.mxu0 %v1074
        %1103 = vmatprep.subr.mxu0 0.0
        %1104 = vmatpush1.msra.mxu0 %v1075
        %1105 = vmatprep.subr.mxu0 0.0
        %1106 = vmatpush1.msra.mxu0 %v1076
        %1107 = vmatprep.subr.mxu0 0.0
        %1108 = vmatpush1.msra.mxu0 %v1077
        %1109 = vmatprep.subr.mxu0 0.0
        %1110 = vmatpush1.msra.mxu0 %v1078
        %1111 = vmatprep.subr.mxu0 0.0
        %1112 = vmatpush1.msra.mxu0 %v1079
        %1113 = vmatprep.subr.mxu0 0.0
        %1114 = vmatpush1.msra.mxu0 0.0
        %1115 = vmatprep.subr.mxu0 0.0
        %1116 = vmatpush1.msra.mxu0 0.0
        %1117 = vmatprep.subr.mxu0 0.0
        %1118 = vmatpush1.msra.mxu0 0.0
        %1119 = vmatprep.subr.mxu0 0.0
        %1120 = vmatpush1.msra.mxu0 0.0
        %1121 = vmatprep.subr.mxu0 0.0
        %1122 = vmatpush1.msra.mxu0 0.0
        %1123 = vmatprep.subr.mxu0 0.0
        %1124 = vmatpush1.msra.mxu0 0.0
        %1125 = vmatprep.subr.mxu0 0.0
        %1126 = vmatpush1.msra.mxu0 0.0
        %1127 = vmatprep.subr.mxu0 0.0
        %1128 = vmatpush1.msra.mxu0 0.0
        %1129 = vmatprep.subr.mxu0 0.0
        %1130 = vmatpush1.msra.mxu0 0.0
        %1131 = vmatprep.subr.mxu0 0.0
        %1132 = vmatpush1.msra.mxu0 0.0
        %1133 = vmatprep.subr.mxu0 0.0
        %1134 = vmatpush1.msra.mxu0 0.0
        %1135 = vmatprep.subr.mxu0 0.0
        %1136 = vmatpush1.msra.mxu0 0.0
        %1137 = vmatprep.subr.mxu0 0.0
        %1138 = vmatpush1.msra.mxu0 0.0
        %1139 = vmatprep.subr.mxu0 0.0
        %1140 = vmatpush1.msra.mxu0 0.0
        %1141 = vmatprep.subr.mxu0 0.0
        %1142 = vmatpush1.msra.mxu0 0.0
        %1143 = vmatprep.subr.mxu0 0.0
        %1144 = vmatpush1.msra.mxu0 0.0
        %1145 = vmatprep.mubr.f32.mxu0 0.0
        %1146 = vmatmul.mubr.f32.gmra.mrb[0].mxu0 %v889
        %v1147 = vpop.f32.mrb[0].mxu0
        %v1148 = vadd.f32 %v1080, %v1147
        %v1149 = vpop.f32.mrb[0].mxu0
        %1150 = vdwg.mxu0
        %v1151 = vsel %vm643, %v689, 0.0
        %v1152 = vsel %vm643, %v690, 0.0
        %v1153 = vadd.f32 %v1151, %v1152
        %v1154 = vsel %vm643, %v691, 0.0
        %v1155 = vadd.f32 %v1153, %v1154
        %v1156 = vsel %vm643, %v692, 0.0
        %v1157 = vadd.f32 %v1155, %v1156
        %v1158 = vsel %vm643, %v693, 0.0
        %v1159 = vadd.f32 %v1157, %v1158
        %v1160 = vsel %vm643, %v694, 0.0
        %v1161 = vadd.f32 %v1159, %v1160
        %v1162 = vsel %vm643, %v695, 0.0
        %v1163 = vadd.f32 %v1161, %v1162
        %v1164 = vsel %vm643, %v696, 0.0
        %v1165 = vadd.f32 %v1163, %v1164
        %v1166 = vsel %vm643, %v697, 0.0
        %v1167 = vadd.f32 %v1165, %v1166
        %v1168 = vsel %vm643, %v698, 0.0
        %v1169 = vadd.f32 %v1167, %v1168
        %v1170 = vsel %vm643, %v699, 0.0
        %v1171 = vadd.f32 %v1169, %v1170
        %v1172 = vsel %vm643, %v700, 0.0
        %v1173 = vadd.f32 %v1171, %v1172
        %v1174 = vsel %vm643, %v701, 0.0
        %v1175 = vadd.f32 %v1173, %v1174
        %v1176 = vsel %vm643, %v702, 0.0
        %v1177 = vadd.f32 %v1175, %v1176
        %v1178 = vsel %vm643, %v703, 0.0
        %v1179 = vadd.f32 %v1177, %v1178
        %v1180 = vsel %vm643, %v704, 0.0
        %v1181 = vadd.f32 %v1179, %v1180
        %v1182 = vsel %vm643, %v705, 0.0
        %v1183 = vadd.f32 %v1181, %v1182
        %v1184 = vsel %vm643, %v706, 0.0
        %v1185 = vadd.f32 %v1183, %v1184
        %v1186 = vsel %vm643, %v707, 0.0
        %v1187 = vadd.f32 %v1185, %v1186
        %v1188 = vsel %vm643, %v708, 0.0
        %v1189 = vadd.f32 %v1187, %v1188
        %v1190 = vsel %vm643, %v709, 0.0
        %v1191 = vadd.f32 %v1189, %v1190
        %v1192 = vsel %vm643, %v710, 0.0
        %v1193 = vadd.f32 %v1191, %v1192
        %v1194 = vsel %vm643, %v711, 0.0
        %v1195 = vadd.f32 %v1193, %v1194
        %v1196 = vsel %vm643, %v712, 0.0
        %v1197 = vadd.f32 %v1195, %v1196
        %v1198 = vsel %vm643, %v713, 0.0
        %v1199 = vadd.f32 %v1197, %v1198
        %v1200 = vsel %vm643, %v714, 0.0
        %v1201 = vadd.f32 %v1199, %v1200
        %v1202 = vsel %vm643, %v715, 0.0
        %v1203 = vadd.f32 %v1201, %v1202
        %v1204 = vsel %vm643, %v716, 0.0
        %v1205 = vadd.f32 %v1203, %v1204
        %v1206 = vsel %vm643, %v717, 0.0
        %v1207 = vadd.f32 %v1205, %v1206
        %v1208 = vsel %vm643, %v718, 0.0
        %v1209 = vadd.f32 %v1207, %v1208
        %v1210 = vsel %vm643, %v719, 0.0
        %v1211 = vadd.f32 %v1209, %v1210
        %v1212 = vsel %vm643, %v720, 0.0
        %v1213 = vadd.f32 %v1211, %v1212
        %v1214 = vrot.slane %v1213, 4
        %v1215 = vadd.f32 %v1213, %v1214
        %v1216 = vrot.slane %v1215, 2
        %v1217 = vadd.f32 %v1215, %v1216
        %v1218 = vrot.slane %v1217, 1
        %v1219 = vadd.f32 %v1217, %v1218
        %v1220 = vrcp.pop 256.0
        %v1221 = vmul.f32 %v1219, %v1220
        %v1222 = vmul.f32 %v689, %v689
        %v1223 = vmul.f32 %v690, %v690
        %v1224 = vmul.f32 %v691, %v691
        %v1225 = vmul.f32 %v692, %v692
        %v1226 = vmul.f32 %v693, %v693
        %v1227 = vmul.f32 %v694, %v694
        %v1228 = vmul.f32 %v695, %v695
        %v1229 = vmul.f32 %v696, %v696
        %v1230 = vmul.f32 %v697, %v697
        %v1231 = vmul.f32 %v698, %v698
        %v1232 = vmul.f32 %v699, %v699
        %v1233 = vmul.f32 %v700, %v700
        %v1234 = vmul.f32 %v701, %v701
        %v1235 = vmul.f32 %v702, %v702
        %v1236 = vmul.f32 %v703, %v703
        %v1237 = vmul.f32 %v704, %v704
        %v1238 = vmul.f32 %v705, %v705
        %v1239 = vmul.f32 %v706, %v706
        %v1240 = vmul.f32 %v707, %v707
        %v1241 = vmul.f32 %v708, %v708
        %v1242 = vmul.f32 %v709, %v709
        %v1243 = vmul.f32 %v710, %v710
        %v1244 = vmul.f32 %v711, %v711
        %v1245 = vmul.f32 %v712, %v712
        %v1246 = vmul.f32 %v713, %v713
        %v1247 = vmul.f32 %v714, %v714
        %v1248 = vmul.f32 %v715, %v715
        %v1249 = vmul.f32 %v716, %v716
        %v1250 = vmul.f32 %v717, %v717
        %v1251 = vmul.f32 %v718, %v718
        %v1252 = vmul.f32 %v719, %v719
        %v1253 = vmul.f32 %v720, %v720
        %v1254 = vsel %vm643, %v1222, 0.0
        %v1255 = vsel %vm643, %v1223, 0.0
        %v1256 = vadd.f32 %v1254, %v1255
        %v1257 = vsel %vm643, %v1224, 0.0
        %v1258 = vadd.f32 %v1256, %v1257
        %v1259 = vsel %vm643, %v1225, 0.0
        %v1260 = vadd.f32 %v1258, %v1259
        %v1261 = vsel %vm643, %v1226, 0.0
        %v1262 = vadd.f32 %v1260, %v1261
        %v1263 = vsel %vm643, %v1227, 0.0
        %v1264 = vadd.f32 %v1262, %v1263
        %v1265 = vsel %vm643, %v1228, 0.0
        %v1266 = vadd.f32 %v1264, %v1265
        %v1267 = vsel %vm643, %v1229, 0.0
        %v1268 = vadd.f32 %v1266, %v1267
        %v1269 = vsel %vm643, %v1230, 0.0
        %v1270 = vadd.f32 %v1268, %v1269
        %v1271 = vsel %vm643, %v1231, 0.0
        %v1272 = vadd.f32 %v1270, %v1271
        %v1273 = vsel %vm643, %v1232, 0.0
        %v1274 = vadd.f32 %v1272, %v1273
        %v1275 = vsel %vm643, %v1233, 0.0
        %v1276 = vadd.f32 %v1274, %v1275
        %v1277 = vsel %vm643, %v1234, 0.0
        %v1278 = vadd.f32 %v1276, %v1277
        %v1279 = vsel %vm643, %v1235, 0.0
        %v1280 = vadd.f32 %v1278, %v1279
        %v1281 = vsel %vm643, %v1236, 0.0
        %v1282 = vadd.f32 %v1280, %v1281
        %v1283 = vsel %vm643, %v1237, 0.0
        %v1284 = vadd.f32 %v1282, %v1283
        %v1285 = vsel %vm643, %v1238, 0.0
        %v1286 = vadd.f32 %v1284, %v1285
        %v1287 = vsel %vm643, %v1239, 0.0
        %v1288 = vadd.f32 %v1286, %v1287
        %v1289 = vsel %vm643, %v1240, 0.0
        %v1290 = vadd.f32 %v1288, %v1289
        %v1291 = vsel %vm643, %v1241, 0.0
        %v1292 = vadd.f32 %v1290, %v1291
        %v1293 = vsel %vm643, %v1242, 0.0
        %v1294 = vadd.f32 %v1292, %v1293
        %v1295 = vsel %vm643, %v1243, 0.0
        %v1296 = vadd.f32 %v1294, %v1295
        %v1297 = vsel %vm643, %v1244, 0.0
        %v1298 = vadd.f32 %v1296, %v1297
        %v1299 = vsel %vm643, %v1245, 0.0
        %v1300 = vadd.f32 %v1298, %v1299
        %v1301 = vsel %vm643, %v1246, 0.0
        %v1302 = vadd.f32 %v1300, %v1301
        %v1303 = vsel %vm643, %v1247, 0.0
        %v1304 = vadd.f32 %v1302, %v1303
        %v1305 = vsel %vm643, %v1248, 0.0
        %v1306 = vadd.f32 %v1304, %v1305
        %v1307 = vsel %vm643, %v1249, 0.0
        %v1308 = vadd.f32 %v1306, %v1307
        %v1309 = vsel %vm643, %v1250, 0.0
        %v1310 = vadd.f32 %v1308, %v1309
        %v1311 = vsel %vm643, %v1251, 0.0
        %v1312 = vadd.f32 %v1310, %v1311
        %v1313 = vsel %vm643, %v1252, 0.0
        %v1314 = vadd.f32 %v1312, %v1313
        %v1315 = vsel %vm643, %v1253, 0.0
        %v1316 = vadd.f32 %v1314, %v1315
        %v1317 = vrot.slane %v1316, 4
        %v1318 = vadd.f32 %v1316, %v1317
        %v1319 = vrot.slane %v1318, 2
        %v1320 = vadd.f32 %v1318, %v1319
        %v1321 = vrot.slane %v1320, 1
        %v1322 = vadd.f32 %v1320, %v1321
        %v1323 = vmul.f32 %v1322, %v1220
        %v1324 = vmul.f32 %v1221, %v1221
        %v1325 = vsub.f32 %v1323, %v1324
        %v1326 = vmax.f32 %v1325, 0.0
        %v1327 = vsub.f32 %v689, %v1221
        %v1328 = vsub.f32 %v690, %v1221
        %v1329 = vsub.f32 %v691, %v1221
        %v1330 = vsub.f32 %v692, %v1221
        %v1331 = vsub.f32 %v693, %v1221
        %v1332 = vsub.f32 %v694, %v1221
        %v1333 = vsub.f32 %v695, %v1221
        %v1334 = vsub.f32 %v696, %v1221
        %v1335 = vsub.f32 %v697, %v1221
        %v1336 = vsub.f32 %v698, %v1221
        %v1337 = vsub.f32 %v699, %v1221
        %v1338 = vsub.f32 %v700, %v1221
        %v1339 = vsub.f32 %v701, %v1221
        %v1340 = vsub.f32 %v702, %v1221
        %v1341 = vsub.f32 %v703, %v1221
        %v1342 = vsub.f32 %v704, %v1221
        %v1343 = vsub.f32 %v705, %v1221
        %v1344 = vsub.f32 %v706, %v1221
        %v1345 = vsub.f32 %v707, %v1221
        %v1346 = vsub.f32 %v708, %v1221
        %v1347 = vsub.f32 %v709, %v1221
        %v1348 = vsub.f32 %v710, %v1221
        %v1349 = vsub.f32 %v711, %v1221
        %v1350 = vsub.f32 %v712, %v1221
        %v1351 = vsub.f32 %v713, %v1221
        %v1352 = vsub.f32 %v714, %v1221
        %v1353 = vsub.f32 %v715, %v1221
        %v1354 = vsub.f32 %v716, %v1221
        %v1355 = vsub.f32 %v717, %v1221
        %v1356 = vsub.f32 %v718, %v1221
        %v1357 = vsub.f32 %v719, %v1221
        %v1358 = vsub.f32 %v720, %v1221
        %v1359 = vadd.f32 %v1326, 1e-05
        %v1360 = vrsqrt.pop %v1359
        %v1361 = vmul.f32 %v1327, %v1360
        %v1362 = vmul.f32 %v1328, %v1360
        %v1363 = vmul.f32 %v1329, %v1360
        %v1364 = vmul.f32 %v1330, %v1360
        %v1365 = vmul.f32 %v1331, %v1360
        %v1366 = vmul.f32 %v1332, %v1360
        %v1367 = vmul.f32 %v1333, %v1360
        %v1368 = vmul.f32 %v1334, %v1360
        %v1369 = vmul.f32 %v1335, %v1360
        %v1370 = vmul.f32 %v1336, %v1360
        %v1371 = vmul.f32 %v1337, %v1360
        %v1372 = vmul.f32 %v1338, %v1360
        %v1373 = vmul.f32 %v1339, %v1360
        %v1374 = vmul.f32 %v1340, %v1360
        %v1375 = vmul.f32 %v1341, %v1360
        %v1376 = vmul.f32 %v1342, %v1360
        %v1377 = vmul.f32 %v1343, %v1360
        %v1378 = vmul.f32 %v1344, %v1360
        %v1379 = vmul.f32 %v1345, %v1360
        %v1380 = vmul.f32 %v1346, %v1360
        %v1381 = vmul.f32 %v1347, %v1360
        %v1382 = vmul.f32 %v1348, %v1360
        %v1383 = vmul.f32 %v1349, %v1360
        %v1384 = vmul.f32 %v1350, %v1360
        %v1385 = vmul.f32 %v1351, %v1360
        %v1386 = vmul.f32 %v1352, %v1360
        %v1387 = vmul.f32 %v1353, %v1360
        %v1388 = vmul.f32 %v1354, %v1360
        %v1389 = vmul.f32 %v1355, %v1360
        %v1390 = vmul.f32 %v1356, %v1360
        %v1391 = vmul.f32 %v1357, %v1360
        %v1392 = vmul.f32 %v1358, %v1360
        %v1393 = vadd.f32 %v974, 1.0
        %v1394 = vlaneseq
        %v1395 = vshrl.u32 %v1394, 7
        %v1396 = vsub.s32 0, %v1395
        %v1397 = vrot.slane %v1393, %v1396
        %v1398 = vmul.f32 %v1361, %v1397
        %v1399 = vmul.f32 %v1362, %v1397
        %v1400 = vmul.f32 %v1363, %v1397
        %v1401 = vmul.f32 %v1364, %v1397
        %v1402 = vmul.f32 %v1365, %v1397
        %v1403 = vmul.f32 %v1366, %v1397
        %v1404 = vmul.f32 %v1367, %v1397
        %v1405 = vmul.f32 %v1368, %v1397
        %v1406 = vmul.f32 %v1369, %v1397
        %v1407 = vmul.f32 %v1370, %v1397
        %v1408 = vmul.f32 %v1371, %v1397
        %v1409 = vmul.f32 %v1372, %v1397
        %v1410 = vmul.f32 %v1373, %v1397
        %v1411 = vmul.f32 %v1374, %v1397
        %v1412 = vmul.f32 %v1375, %v1397
        %v1413 = vmul.f32 %v1376, %v1397
        %v1414 = vmul.f32 %v1377, %v1397
        %v1415 = vmul.f32 %v1378, %v1397
        %v1416 = vmul.f32 %v1379, %v1397
        %v1417 = vmul.f32 %v1380, %v1397
        %v1418 = vmul.f32 %v1381, %v1397
        %v1419 = vmul.f32 %v1382, %v1397
        %v1420 = vmul.f32 %v1383, %v1397
        %v1421 = vmul.f32 %v1384, %v1397
        %v1422 = vmul.f32 %v1385, %v1397
        %v1423 = vmul.f32 %v1386, %v1397
        %v1424 = vmul.f32 %v1387, %v1397
        %v1425 = vmul.f32 %v1388, %v1397
        %v1426 = vmul.f32 %v1389, %v1397
        %v1427 = vmul.f32 %v1390, %v1397
        %v1428 = vmul.f32 %v1391, %v1397
        %v1429 = vmul.f32 %v1392, %v1397
        %v1430 = vlaneseq
        %v1431 = vshrl.u32 %v1430, 7
        %v1432 = vsub.s32 0, %v1431
        %v1433 = vrot.slane %v974, %v1432
        %1435 = vrot.lane.b32.xlu0 %v1433, 96
        %v1436 = vpop.permute.xlu0 %1435
        %v1438 = vadd.f32 %v1398, %v1436
        %v1439 = vadd.f32 %v1399, %v1436
        %v1440 = vadd.f32 %v1400, %v1436
        %v1441 = vadd.f32 %v1401, %v1436
        %v1442 = vadd.f32 %v1402, %v1436
        %v1443 = vadd.f32 %v1403, %v1436
        %v1444 = vadd.f32 %v1404, %v1436
        %v1445 = vadd.f32 %v1405, %v1436
        %v1446 = vadd.f32 %v1406, %v1436
        %v1447 = vadd.f32 %v1407, %v1436
        %v1448 = vadd.f32 %v1408, %v1436
        %v1449 = vadd.f32 %v1409, %v1436
        %v1450 = vadd.f32 %v1410, %v1436
        %v1451 = vadd.f32 %v1411, %v1436
        %v1452 = vadd.f32 %v1412, %v1436
        %v1453 = vadd.f32 %v1413, %v1436
        %v1454 = vadd.f32 %v1414, %v1436
        %v1455 = vadd.f32 %v1415, %v1436
        %v1456 = vadd.f32 %v1416, %v1436
        %v1457 = vadd.f32 %v1417, %v1436
        %v1458 = vadd.f32 %v1418, %v1436
        %v1459 = vadd.f32 %v1419, %v1436
        %v1460 = vadd.f32 %v1420, %v1436
        %v1461 = vadd.f32 %v1421, %v1436
        %v1462 = vadd.f32 %v1422, %v1436
        %v1463 = vadd.f32 %v1423, %v1436
        %v1464 = vadd.f32 %v1424, %v1436
        %v1465 = vadd.f32 %v1425, %v1436
        %v1466 = vadd.f32 %v1426, %v1436
        %v1467 = vadd.f32 %v1427, %v1436
        %v1468 = vadd.f32 %v1428, %v1436
        %v1469 = vadd.f32 %v1429, %v1436
        %vm1470 = vcmp.ge.f32.partialorder %v1438, 0.0
        %vm1471 = vcmp.ge.f32.partialorder %v1439, 0.0
        %vm1472 = vcmp.ge.f32.partialorder %v1440, 0.0
        %vm1473 = vcmp.ge.f32.partialorder %v1441, 0.0
        %vm1474 = vcmp.ge.f32.partialorder %v1442, 0.0
        %vm1475 = vcmp.ge.f32.partialorder %v1443, 0.0
        %vm1476 = vcmp.ge.f32.partialorder %v1444, 0.0
        %vm1477 = vcmp.ge.f32.partialorder %v1445, 0.0
        %vm1478 = vcmp.ge.f32.partialorder %v1446, 0.0
        %vm1479 = vcmp.ge.f32.partialorder %v1447, 0.0
        %vm1480 = vcmp.ge.f32.partialorder %v1448, 0.0
        %vm1481 = vcmp.ge.f32.partialorder %v1449, 0.0
        %vm1482 = vcmp.ge.f32.partialorder %v1450, 0.0
        %vm1483 = vcmp.ge.f32.partialorder %v1451, 0.0
        %vm1484 = vcmp.ge.f32.partialorder %v1452, 0.0
        %vm1485 = vcmp.ge.f32.partialorder %v1453, 0.0
        %vm1486 = vcmp.ge.f32.partialorder %v1454, 0.0
        %vm1487 = vcmp.ge.f32.partialorder %v1455, 0.0
        %vm1488 = vcmp.ge.f32.partialorder %v1456, 0.0
        %vm1489 = vcmp.ge.f32.partialorder %v1457, 0.0
        %vm1490 = vcmp.ge.f32.partialorder %v1458, 0.0
        %vm1491 = vcmp.ge.f32.partialorder %v1459, 0.0
        %vm1492 = vcmp.ge.f32.partialorder %v1460, 0.0
        %vm1493 = vcmp.ge.f32.partialorder %v1461, 0.0
        %vm1494 = vcmp.ge.f32.partialorder %v1462, 0.0
        %vm1495 = vcmp.ge.f32.partialorder %v1463, 0.0
        %vm1496 = vcmp.ge.f32.partialorder %v1464, 0.0
        %vm1497 = vcmp.ge.f32.partialorder %v1465, 0.0
        %vm1498 = vcmp.ge.f32.partialorder %v1466, 0.0
        %vm1499 = vcmp.ge.f32.partialorder %v1467, 0.0
        %vm1500 = vcmp.ge.f32.partialorder %v1468, 0.0
        %vm1501 = vcmp.ge.f32.partialorder %v1469, 0.0
        %v1502 = vmul.f32 %v1438, 0.01
        %v1503 = vmul.f32 %v1439, 0.01
        %v1504 = vmul.f32 %v1440, 0.01
        %v1505 = vmul.f32 %v1441, 0.01
        %v1506 = vmul.f32 %v1442, 0.01
        %v1507 = vmul.f32 %v1443, 0.01
        %v1508 = vmul.f32 %v1444, 0.01
        %v1509 = vmul.f32 %v1445, 0.01
        %v1510 = vmul.f32 %v1446, 0.01
        %v1511 = vmul.f32 %v1447, 0.01
        %v1512 = vmul.f32 %v1448, 0.01
        %v1513 = vmul.f32 %v1449, 0.01
        %v1514 = vmul.f32 %v1450, 0.01
        %v1515 = vmul.f32 %v1451, 0.01
        %v1516 = vmul.f32 %v1452, 0.01
        %v1517 = vmul.f32 %v1453, 0.01
        %v1518 = vmul.f32 %v1454, 0.01
        %v1519 = vmul.f32 %v1455, 0.01
        %v1520 = vmul.f32 %v1456, 0.01
        %v1521 = vmul.f32 %v1457, 0.01
        %v1522 = vmul.f32 %v1458, 0.01
        %v1523 = vmul.f32 %v1459, 0.01
        %v1524 = vmul.f32 %v1460, 0.01
        %v1525 = vmul.f32 %v1461, 0.01
        %v1526 = vmul.f32 %v1462, 0.01
        %v1527 = vmul.f32 %v1463, 0.01
        %v1528 = vmul.f32 %v1464, 0.01
        %v1529 = vmul.f32 %v1465, 0.01
        %v1530 = vmul.f32 %v1466, 0.01
        %v1531 = vmul.f32 %v1467, 0.01
        %v1532 = vmul.f32 %v1468, 0.01
        %v1533 = vmul.f32 %v1469, 0.01
        %v1534 = vsel %vm1470, %v1438, %v1502
        %v1535 = vsel %vm1471, %v1439, %v1503
        %v1536 = vsel %vm1472, %v1440, %v1504
        %v1537 = vsel %vm1473, %v1441, %v1505
        %v1538 = vsel %vm1474, %v1442, %v1506
        %v1539 = vsel %vm1475, %v1443, %v1507
        %v1540 = vsel %vm1476, %v1444, %v1508
        %v1541 = vsel %vm1477, %v1445, %v1509
        %v1542 = vsel %vm1478, %v1446, %v1510
        %v1543 = vsel %vm1479, %v1447, %v1511
        %v1544 = vsel %vm1480, %v1448, %v1512
        %v1545 = vsel %vm1481, %v1449, %v1513
        %v1546 = vsel %vm1482, %v1450, %v1514
        %v1547 = vsel %vm1483, %v1451, %v1515
        %v1548 = vsel %vm1484, %v1452, %v1516
        %v1549 = vsel %vm1485, %v1453, %v1517
        %v1550 = vsel %vm1486, %v1454, %v1518
        %v1551 = vsel %vm1487, %v1455, %v1519
        %v1552 = vsel %vm1488, %v1456, %v1520
        %v1553 = vsel %vm1489, %v1457, %v1521
        %v1554 = vsel %vm1490, %v1458, %v1522
        %v1555 = vsel %vm1491, %v1459, %v1523
        %v1556 = vsel %vm1492, %v1460, %v1524
        %v1557 = vsel %vm1493, %v1461, %v1525
        %v1558 = vsel %vm1494, %v1462, %v1526
        %v1559 = vsel %vm1495, %v1463, %v1527
        %v1560 = vsel %vm1496, %v1464, %v1528
        %v1561 = vsel %vm1497, %v1465, %v1529
        %v1562 = vsel %vm1498, %v1466, %v1530
        %v1563 = vsel %vm1499, %v1467, %v1531
        %v1564 = vsel %vm1500, %v1468, %v1532
        %v1565 = vsel %vm1501, %v1469, %v1533
        %s1566 = scalar_lea.vmem [#allocation2], 24
        %1567 = vst.msk [vmem:[%s1566 + $0x1] sm:$0xff] %vm643, %v1534
        %1568 = vst.msk [vmem:[%s1566 + $0x9] sm:$0xff] %vm643, %v1535
        %1569 = vst.msk [vmem:[%s1566 + $0x19] sm:$0xff] %vm643, %v1536
        %1570 = vst.msk [vmem:[%s1566 + $0x21] sm:$0xff] %vm643, %v1537
        %1571 = vst.msk [vmem:[%s1566 + $0x31] sm:$0xff] %vm643, %v1538
        %1572 = vst.msk [vmem:[%s1566 + $0x39] sm:$0xff] %vm643, %v1539
        %1573 = vst.msk [vmem:[%s1566 + $0x49] sm:$0xff] %vm643, %v1540
        %1574 = vst.msk [vmem:[%s1566 + $0x51] sm:$0xff] %vm643, %v1541
        %1575 = vst.msk [vmem:[%s1566 + $0x61] sm:$0xff] %vm643, %v1542
        %1576 = vst.msk [vmem:[%s1566 + $0x69] sm:$0xff] %vm643, %v1543
        %1577 = vst.msk [vmem:[%s1566 + $0x79] sm:$0xff] %vm643, %v1544
        %1578 = vst.msk [vmem:[%s1566 + $0x81] sm:$0xff] %vm643, %v1545
        %1579 = vst.msk [vmem:[%s1566 + $0x91] sm:$0xff] %vm643, %v1546
        %1580 = vst.msk [vmem:[%s1566 + $0x99] sm:$0xff] %vm643, %v1547
        %1581 = vst.msk [vmem:[%s1566 + $0xa9] sm:$0xff] %vm643, %v1548
        %1582 = vst.msk [vmem:[%s1566 + $0xb1] sm:$0xff] %vm643, %v1549
        %1583 = vst.msk [vmem:[%s1566 + $0xc1] sm:$0xff] %vm643, %v1550
        %1584 = vst.msk [vmem:[%s1566 + $0xc9] sm:$0xff] %vm643, %v1551
        %1585 = vst.msk [vmem:[%s1566 + $0xd9] sm:$0xff] %vm643, %v1552
        %1586 = vst.msk [vmem:[%s1566 + $0xe1] sm:$0xff] %vm643, %v1553
        %1587 = vst.msk [vmem:[%s1566 + $0xf1] sm:$0xff] %vm643, %v1554
        %1588 = vst.msk [vmem:[%s1566 + $0xf9] sm:$0xff] %vm643, %v1555
        %1589 = vst.msk [vmem:[%s1566 + $0x109] sm:$0xff] %vm643, %v1556
        %1590 = vst.msk [vmem:[%s1566 + $0x111] sm:$0xff] %vm643, %v1557
        %1591 = vst.msk [vmem:[%s1566 + $0x121] sm:$0xff] %vm643, %v1558
        %1592 = vst.msk [vmem:[%s1566 + $0x129] sm:$0xff] %vm643, %v1559
        %1593 = vst.msk [vmem:[%s1566 + $0x139] sm:$0xff] %vm643, %v1560
        %1594 = vst.msk [vmem:[%s1566 + $0x141] sm:$0xff] %vm643, %v1561
        %1595 = vst.msk [vmem:[%s1566 + $0x151] sm:$0xff] %vm643, %v1562
        %1596 = vst.msk [vmem:[%s1566 + $0x159] sm:$0xff] %vm643, %v1563
        %1597 = vst.msk [vmem:[%s1566 + $0x169] sm:$0xff] %vm643, %v1564
        %1598 = vst.msk [vmem:[%s1566 + $0x171] sm:$0xff] %vm643, %v1565
        %v1599 = vld [vmem:[%s1566 + $0x1] sm:$0xff]
        %v1600 = vld [vmem:[%s1566 + $0x9] sm:$0xff]
        %v1601 = vld [vmem:[%s1566 + $0x19] sm:$0xff]
        %v1602 = vld [vmem:[%s1566 + $0x21] sm:$0xff]
        %v1603 = vld [vmem:[%s1566 + $0x31] sm:$0xff]
        %v1604 = vld [vmem:[%s1566 + $0x39] sm:$0xff]
        %v1605 = vld [vmem:[%s1566 + $0x49] sm:$0xff]
        %v1606 = vld [vmem:[%s1566 + $0x51] sm:$0xff]
        %v1607 = vld [vmem:[%s1566 + $0x61] sm:$0xff]
        %v1608 = vld [vmem:[%s1566 + $0x69] sm:$0xff]
        %v1609 = vld [vmem:[%s1566 + $0x79] sm:$0xff]
        %v1610 = vld [vmem:[%s1566 + $0x81] sm:$0xff]
        %v1611 = vld [vmem:[%s1566 + $0x91] sm:$0xff]
        %v1612 = vld [vmem:[%s1566 + $0x99] sm:$0xff]
        %v1613 = vld [vmem:[%s1566 + $0xa9] sm:$0xff]
        %v1614 = vld [vmem:[%s1566 + $0xb1] sm:$0xff]
        %v1615 = vld [vmem:[%s1566 + $0xc1] sm:$0xff]
        %v1616 = vld [vmem:[%s1566 + $0xc9] sm:$0xff]
        %v1617 = vld [vmem:[%s1566 + $0xd9] sm:$0xff]
        %v1618 = vld [vmem:[%s1566 + $0xe1] sm:$0xff]
        %v1619 = vld [vmem:[%s1566 + $0xf1] sm:$0xff]
        %v1620 = vld [vmem:[%s1566 + $0xf9] sm:$0xff]
        %v1621 = vld [vmem:[%s1566 + $0x109] sm:$0xff]
        %v1622 = vld [vmem:[%s1566 + $0x111] sm:$0xff]
        %v1623 = vld [vmem:[%s1566 + $0x121] sm:$0xff]
        %v1624 = vld [vmem:[%s1566 + $0x129] sm:$0xff]
        %v1625 = vld [vmem:[%s1566 + $0x139] sm:$0xff]
        %v1626 = vld [vmem:[%s1566 + $0x141] sm:$0xff]
        %v1627 = vld [vmem:[%s1566 + $0x151] sm:$0xff]
        %v1628 = vld [vmem:[%s1566 + $0x159] sm:$0xff]
        %v1629 = vld [vmem:[%s1566 + $0x169] sm:$0xff]
        %v1630 = vld [vmem:[%s1566 + $0x171] sm:$0xff]
        %v1631 = vld [vmem:[#allocation13] sm:$0xff]
        %v1632 = vld [vmem:[#allocation13 + $0x8] sm:$0xff]
        %v1633 = vld [vmem:[#allocation13 + $0x10] sm:$0xff]
        %v1634 = vld [vmem:[#allocation13 + $0x18] sm:$0xff]
        %v1635 = vld [vmem:[%s1566 + $0x2] sm:$0xff]
        %v1636 = vld [vmem:[%s1566 + $0xa] sm:$0xff]
        %v1637 = vld [vmem:[%s1566 + $0x1a] sm:$0xff]
        %v1638 = vld [vmem:[%s1566 + $0x22] sm:$0xff]
        %v1639 = vld [vmem:[%s1566 + $0x32] sm:$0xff]
        %v1640 = vld [vmem:[%s1566 + $0x3a] sm:$0xff]
        %v1641 = vld [vmem:[%s1566 + $0x4a] sm:$0xff]
        %v1642 = vld [vmem:[%s1566 + $0x52] sm:$0xff]
        %v1643 = vld [vmem:[%s1566 + $0x62] sm:$0xff]
        %v1644 = vld [vmem:[%s1566 + $0x6a] sm:$0xff]
        %v1645 = vld [vmem:[%s1566 + $0x7a] sm:$0xff]
        %v1646 = vld [vmem:[%s1566 + $0x82] sm:$0xff]
        %v1647 = vld [vmem:[%s1566 + $0x92] sm:$0xff]
        %v1648 = vld [vmem:[%s1566 + $0x9a] sm:$0xff]
        %v1649 = vld [vmem:[%s1566 + $0xaa] sm:$0xff]
        %v1650 = vld [vmem:[%s1566 + $0xb2] sm:$0xff]
        %v1651 = vld [vmem:[%s1566 + $0xc2] sm:$0xff]
        %v1652 = vld [vmem:[%s1566 + $0xca] sm:$0xff]
        %v1653 = vld [vmem:[%s1566 + $0xda] sm:$0xff]
        %v1654 = vld [vmem:[%s1566 + $0xe2] sm:$0xff]
        %v1655 = vld [vmem:[%s1566 + $0xf2] sm:$0xff]
        %v1656 = vld [vmem:[%s1566 + $0xfa] sm:$0xff]
        %v1657 = vld [vmem:[%s1566 + $0x10a] sm:$0xff]
        %v1658 = vld [vmem:[%s1566 + $0x112] sm:$0xff]
        %v1659 = vld [vmem:[%s1566 + $0x122] sm:$0xff]
        %v1660 = vld [vmem:[%s1566 + $0x12a] sm:$0xff]
        %v1661 = vld [vmem:[%s1566 + $0x13a] sm:$0xff]
        %v1662 = vld [vmem:[%s1566 + $0x142] sm:$0xff]
        %v1663 = vld [vmem:[%s1566 + $0x152] sm:$0xff]
        %v1664 = vld [vmem:[%s1566 + $0x15a] sm:$0xff]
        %v1665 = vld [vmem:[%s1566 + $0x16a] sm:$0xff]
        %v1666 = vld [vmem:[%s1566 + $0x172] sm:$0xff]
        %s1667 = scalar_lea.vmem [#allocation13], 32
        %v1668 = vld [vmem:[%s1667] sm:$0xff]
        %v1669 = vld [vmem:[%s1667 + $0x8] sm:$0xff]
        %v1670 = vld [vmem:[%s1667 + $0x10] sm:$0xff]
        %v1671 = vld [vmem:[%s1667 + $0x18] sm:$0xff]
        %v1673 = vsel %vm643, %v1635, 0
        %v1676 = vsel %vm643, %v1636, 0
        %v1679 = vsel %vm643, %v1637, 0
        %v1682 = vsel %vm643, %v1638, 0
        %v1685 = vsel %vm643, %v1639, 0
        %v1688 = vsel %vm643, %v1640, 0
        %v1691 = vsel %vm643, %v1641, 0
        %v1694 = vsel %vm643, %v1642, 0
        %v1697 = vsel %vm643, %v1643, 0
        %v1700 = vsel %vm643, %v1644, 0
        %v1703 = vsel %vm643, %v1645, 0
        %v1706 = vsel %vm643, %v1646, 0
        %v1709 = vsel %vm643, %v1647, 0
        %v1712 = vsel %vm643, %v1648, 0
        %v1715 = vsel %vm643, %v1649, 0
        %v1718 = vsel %vm643, %v1650, 0
        %v1721 = vsel %vm643, %v1651, 0
        %v1724 = vsel %vm643, %v1652, 0
        %v1727 = vsel %vm643, %v1653, 0
        %v1730 = vsel %vm643, %v1654, 0
        %v1733 = vsel %vm643, %v1655, 0
        %v1736 = vsel %vm643, %v1656, 0
        %v1739 = vsel %vm643, %v1657, 0
        %v1742 = vsel %vm643, %v1658, 0
        %v1745 = vsel %vm643, %v1659, 0
        %v1748 = vsel %vm643, %v1660, 0
        %v1751 = vsel %vm643, %v1661, 0
        %v1754 = vsel %vm643, %v1662, 0
        %v1757 = vsel %vm643, %v1663, 0
        %v1760 = vsel %vm643, %v1664, 0
        %v1763 = vsel %vm643, %v1665, 0
        %v1766 = vsel %vm643, %v1666, 0
        %1768 = vmatprep.subr.mxu0 0.0
        %1769 = vmatpush1.msra.mxu0 %v1668
        %1770 = vmatprep.subr.mxu0 0.0
        %1771 = vmatpush1.msra.mxu0 %v1669
        %1772 = vmatprep.subr.mxu0 0.0
        %1773 = vmatpush1.msra.mxu0 %v1670
        %1774 = vmatprep.subr.mxu0 0.0
        %1775 = vmatpush1.msra.mxu0 %v1671
        %1776 = vmatprep.subr.mxu0 0.0
        %1777 = vmatpush1.msra.mxu0 0.0
        %1778 = vmatprep.subr.mxu0 0.0
        %1779 = vmatpush1.msra.mxu0 0.0
        %1780 = vmatprep.subr.mxu0 0.0
        %1781 = vmatpush1.msra.mxu0 0.0
        %1782 = vmatprep.subr.mxu0 0.0
        %1783 = vmatpush1.msra.mxu0 0.0
        %1784 = vmatprep.subr.mxu0 0.0
        %1785 = vmatpush1.msra.mxu0 0.0
        %1786 = vmatprep.subr.mxu0 0.0
        %1787 = vmatpush1.msra.mxu0 0.0
        %1788 = vmatprep.subr.mxu0 0.0
        %1789 = vmatpush1.msra.mxu0 0.0
        %1790 = vmatprep.subr.mxu0 0.0
        %1791 = vmatpush1.msra.mxu0 0.0
        %1792 = vmatprep.subr.mxu0 0.0
        %1793 = vmatpush1.msra.mxu0 0.0
        %1794 = vmatprep.subr.mxu0 0.0
        %1795 = vmatpush1.msra.mxu0 0.0
        %1796 = vmatprep.subr.mxu0 0.0
        %1797 = vmatpush1.msra.mxu0 0.0
        %1798 = vmatprep.subr.mxu0 0.0
        %1799 = vmatpush1.msra.mxu0 0.0
        %1800 = vmatprep.subr.mxu0 0.0
        %1801 = vmatpush1.msra.mxu0 0.0
        %1802 = vmatprep.subr.mxu0 0.0
        %1803 = vmatpush1.msra.mxu0 0.0
        %1804 = vmatprep.subr.mxu0 0.0
        %1805 = vmatpush1.msra.mxu0 0.0
        %1806 = vmatprep.subr.mxu0 0.0
        %1807 = vmatpush1.msra.mxu0 0.0
        %1808 = vmatprep.subr.mxu0 0.0
        %1809 = vmatpush1.msra.mxu0 0.0
        %1810 = vmatprep.subr.mxu0 0.0
        %1811 = vmatpush1.msra.mxu0 0.0
        %1812 = vmatprep.subr.mxu0 0.0
        %1813 = vmatpush1.msra.mxu0 0.0
        %1814 = vmatprep.subr.mxu0 0.0
        %1815 = vmatpush1.msra.mxu0 0.0
        %1816 = vmatprep.subr.mxu0 0.0
        %1817 = vmatpush1.msra.mxu0 0.0
        %1818 = vmatprep.subr.mxu0 0.0
        %1819 = vmatpush1.msra.mxu0 0.0
        %1820 = vmatprep.subr.mxu0 0.0
        %1821 = vmatpush1.msra.mxu0 0.0
        %1822 = vmatprep.subr.mxu0 0.0
        %1823 = vmatpush1.msra.mxu0 0.0
        %1824 = vmatprep.subr.mxu0 0.0
        %1825 = vmatpush1.msra.mxu0 0.0
        %1826 = vmatprep.subr.mxu0 0.0
        %1827 = vmatpush1.msra.mxu0 0.0
        %1828 = vmatprep.subr.mxu0 0.0
        %1829 = vmatpush1.msra.mxu0 0.0
        %1830 = vmatprep.subr.mxu0 0.0
        %1831 = vmatpush1.msra.mxu0 0.0
        %1832 = vmatprep.mubr.f32.mxu0 0.0
        %1833 = vmatmul.mubr.f32.gmra.mrb[0].mxu0 %v1673
        %v1834 = vpop.f32.mrb[0].mxu0
        %v1835 = vadd.f32 0.0, %v1834
        %v1836 = vpop.f32.mrb[0].mxu0
        %1837 = vmatprep.mubr.f32.mxu0 0.0
        %1838 = vmatmul.mubr.f32.gmra.mrb[0].mxu0 %v1676
        %v1839 = vpop.f32.mrb[0].mxu0
        %v1840 = vadd.f32 0.0, %v1839
        %v1841 = vpop.f32.mrb[0].mxu0
        %1842 = vmatprep.mubr.f32.mxu0 0.0
        %1843 = vmatmul.mubr.f32.gmra.mrb[0].mxu0 %v1679
        %v1844 = vpop.f32.mrb[0].mxu0
        %v1845 = vadd.f32 0.0, %v1844
        %v1846 = vpop.f32.mrb[0].mxu0
        %1847 = vmatprep.mubr.f32.mxu0 0.0
        %1848 = vmatmul.mubr.f32.gmra.mrb[0].mxu0 %v1682
        %v1849 = vpop.f32.mrb[0].mxu0
        %v1850 = vadd.f32 0.0, %v1849
        %v1851 = vpop.f32.mrb[0].mxu0
        %1852 = vmatprep.mubr.f32.mxu0 0.0
        %1853 = vmatmul.mubr.f32.gmra.mrb[0].mxu0 %v1685
        %v1854 = vpop.f32.mrb[0].mxu0
        %v1855 = vadd.f32 0.0, %v1854
        %v1856 = vpop.f32.mrb[0].mxu0
        %1857 = vmatprep.mubr.f32.mxu0 0.0
        %1858 = vmatmul.mubr.f32.gmra.mrb[0].mxu0 %v1688
        %v1859 = vpop.f32.mrb[0].mxu0
        %v1860 = vadd.f32 0.0, %v1859
        %v1861 = vpop.f32.mrb[0].mxu0
        %1862 = vmatprep.mubr.f32.mxu0 0.0
        %1863 = vmatmul.mubr.f32.gmra.mrb[0].mxu0 %v1691
        %v1864 = vpop.f32.mrb[0].mxu0
        %v1865 = vadd.f32 0.0, %v1864
        %v1866 = vpop.f32.mrb[0].mxu0
        %1867 = vmatprep.mubr.f32.mxu0 0.0
        %1868 = vmatmul.mubr.f32.gmra.mrb[0].mxu0 %v1694
        %v1869 = vpop.f32.mrb[0].mxu0
        %v1870 = vadd.f32 0.0, %v1869
        %v1871 = vpop.f32.mrb[0].mxu0
        %1872 = vmatprep.mubr.f32.mxu0 0.0
        %1873 = vmatmul.mubr.f32.gmra.mrb[0].mxu0 %v1697
        %v1874 = vpop.f32.mrb[0].mxu0
        %v1875 = vadd.f32 0.0, %v1874
        %v1876 = vpop.f32.mrb[0].mxu0
        %1877 = vmatprep.mubr.f32.mxu0 0.0
        %1878 = vmatmul.mubr.f32.gmra.mrb[0].mxu0 %v1700
        %v1879 = vpop.f32.mrb[0].mxu0
        %v1880 = vadd.f32 0.0, %v1879
        %v1881 = vpop.f32.mrb[0].mxu0
        %1882 = vmatprep.mubr.f32.mxu0 0.0
        %1883 = vmatmul.mubr.f32.gmra.mrb[0].mxu0 %v1703
        %v1884 = vpop.f32.mrb[0].mxu0
        %v1885 = vadd.f32 0.0, %v1884
        %v1886 = vpop.f32.mrb[0].mxu0
        %1887 = vmatprep.mubr.f32.mxu0 0.0
        %1888 = vmatmul.mubr.f32.gmra.mrb[0].mxu0 %v1706
        %v1889 = vpop.f32.mrb[0].mxu0
        %v1890 = vadd.f32 0.0, %v1889
        %v1891 = vpop.f32.mrb[0].mxu0
        %1892 = vmatprep.mubr.f32.mxu0 0.0
        %1893 = vmatmul.mubr.f32.gmra.mrb[0].mxu0 %v1709
        %v1894 = vpop.f32.mrb[0].mxu0
        %v1895 = vadd.f32 0.0, %v1894
        %v1896 = vpop.f32.mrb[0].mxu0
        %1897 = vmatprep.mubr.f32.mxu0 0.0
        %1898 = vmatmul.mubr.f32.gmra.mrb[0].mxu0 %v1712
        %v1899 = vpop.f32.mrb[0].mxu0
        %v1900 = vadd.f32 0.0, %v1899
        %v1901 = vpop.f32.mrb[0].mxu0
        %1902 = vmatprep.mubr.f32.mxu0 0.0
        %1903 = vmatmul.mubr.f32.gmra.mrb[0].mxu0 %v1715
        %v1904 = vpop.f32.mrb[0].mxu0
        %v1905 = vadd.f32 0.0, %v1904
        %v1906 = vpop.f32.mrb[0].mxu0
        %1907 = vmatprep.mubr.f32.mxu0 0.0
        %1908 = vmatmul.mubr.f32.gmra.mrb[0].mxu0 %v1718
        %v1909 = vpop.f32.mrb[0].mxu0
        %v1910 = vadd.f32 0.0, %v1909
        %v1911 = vpop.f32.mrb[0].mxu0
        %1912 = vmatprep.mubr.f32.mxu0 0.0
        %1913 = vmatmul.mubr.f32.gmra.mrb[0].mxu0 %v1721
        %v1914 = vpop.f32.mrb[0].mxu0
        %v1915 = vadd.f32 0.0, %v1914
        %v1916 = vpop.f32.mrb[0].mxu0
        %1917 = vmatprep.mubr.f32.mxu0 0.0
        %1918 = vmatmul.mubr.f32.gmra.mrb[0].mxu0 %v1724
        %v1919 = vpop.f32.mrb[0].mxu0
        %v1920 = vadd.f32 0.0, %v1919
        %v1921 = vpop.f32.mrb[0].mxu0
        %1922 = vmatprep.mubr.f32.mxu0 0.0
        %1923 = vmatmul.mubr.f32.gmra.mrb[0].mxu0 %v1727
        %v1924 = vpop.f32.mrb[0].mxu0
        %v1925 = vadd.f32 0.0, %v1924
        %v1926 = vpop.f32.mrb[0].mxu0
        %1927 = vmatprep.mubr.f32.mxu0 0.0
        %1928 = vmatmul.mubr.f32.gmra.mrb[0].mxu0 %v1730
        %v1929 = vpop.f32.mrb[0].mxu0
        %v1930 = vadd.f32 0.0, %v1929
        %v1931 = vpop.f32.mrb[0].mxu0
        %1932 = vmatprep.mubr.f32.mxu0 0.0
        %1933 = vmatmul.mubr.f32.gmra.mrb[0].mxu0 %v1733
        %v1934 = vpop.f32.mrb[0].mxu0
        %v1935 = vadd.f32 0.0, %v1934
        %v1936 = vpop.f32.mrb[0].mxu0
        %1937 = vmatprep.mubr.f32.mxu0 0.0
        %1938 = vmatmul.mubr.f32.gmra.mrb[0].mxu0 %v1736
        %v1939 = vpop.f32.mrb[0].mxu0
        %v1940 = vadd.f32 0.0, %v1939
        %v1941 = vpop.f32.mrb[0].mxu0
        %1942 = vmatprep.mubr.f32.mxu0 0.0
        %1943 = vmatmul.mubr.f32.gmra.mrb[0].mxu0 %v1739
        %v1944 = vpop.f32.mrb[0].mxu0
        %v1945 = vadd.f32 0.0, %v1944
        %v1946 = vpop.f32.mrb[0].mxu0
        %1947 = vmatprep.mubr.f32.mxu0 0.0
        %1948 = vmatmul.mubr.f32.gmra.mrb[0].mxu0 %v1742
        %v1949 = vpop.f32.mrb[0].mxu0
        %v1950 = vadd.f32 0.0, %v1949
        %v1951 = vpop.f32.mrb[0].mxu0
        %1952 = vmatprep.mubr.f32.mxu0 0.0
        %1953 = vmatmul.mubr.f32.gmra.mrb[0].mxu0 %v1745
        %v1954 = vpop.f32.mrb[0].mxu0
        %v1955 = vadd.f32 0.0, %v1954
        %v1956 = vpop.f32.mrb[0].mxu0
        %1957 = vmatprep.mubr.f32.mxu0 0.0
        %1958 = vmatmul.mubr.f32.gmra.mrb[0].mxu0 %v1748
        %v1959 = vpop.f32.mrb[0].mxu0
        %v1960 = vadd.f32 0.0, %v1959
        %v1961 = vpop.f32.mrb[0].mxu0
        %1962 = vmatprep.mubr.f32.mxu0 0.0
        %1963 = vmatmul.mubr.f32.gmra.mrb[0].mxu0 %v1751
        %v1964 = vpop.f32.mrb[0].mxu0
        %v1965 = vadd.f32 0.0, %v1964
        %v1966 = vpop.f32.mrb[0].mxu0
        %1967 = vmatprep.mubr.f32.mxu0 0.0
        %1968 = vmatmul.mubr.f32.gmra.mrb[0].mxu0 %v1754
        %v1969 = vpop.f32.mrb[0].mxu0
        %v1970 = vadd.f32 0.0, %v1969
        %v1971 = vpop.f32.mrb[0].mxu0
        %1972 = vmatprep.mubr.f32.mxu0 0.0
        %1973 = vmatmul.mubr.f32.gmra.mrb[0].mxu0 %v1757
        %v1974 = vpop.f32.mrb[0].mxu0
        %v1975 = vadd.f32 0.0, %v1974
        %v1976 = vpop.f32.mrb[0].mxu0
        %1977 = vmatprep.mubr.f32.mxu0 0.0
        %1978 = vmatmul.mubr.f32.gmra.mrb[0].mxu0 %v1760
        %v1979 = vpop.f32.mrb[0].mxu0
        %v1980 = vadd.f32 0.0, %v1979
        %v1981 = vpop.f32.mrb[0].mxu0
        %1982 = vmatprep.mubr.f32.mxu0 0.0
        %1983 = vmatmul.mubr.f32.gmra.mrb[0].mxu0 %v1763
        %v1984 = vpop.f32.mrb[0].mxu0
        %v1985 = vadd.f32 0.0, %v1984
        %v1986 = vpop.f32.mrb[0].mxu0
        %1987 = vmatprep.mubr.f32.mxu0 0.0
        %1988 = vmatmul.mubr.f32.gmra.mrb[0].mxu0 %v1766
        %v1989 = vpop.f32.mrb[0].mxu0
        %v1990 = vadd.f32 0.0, %v1989
        %v1991 = vpop.f32.mrb[0].mxu0
        %1992 = vdwg.mxu0
        %v1994 = vsel %vm643, %v1599, 0
        %v1997 = vsel %vm643, %v1600, 0
        %v2000 = vsel %vm643, %v1601, 0
        %v2003 = vsel %vm643, %v1602, 0
        %v2006 = vsel %vm643, %v1603, 0
        %v2009 = vsel %vm643, %v1604, 0
        %v2012 = vsel %vm643, %v1605, 0
        %v2015 = vsel %vm643, %v1606, 0
        %v2018 = vsel %vm643, %v1607, 0
        %v2021 = vsel %vm643, %v1608, 0
        %v2024 = vsel %vm643, %v1609, 0
        %v2027 = vsel %vm643, %v1610, 0
        %v2030 = vsel %vm643, %v1611, 0
        %v2033 = vsel %vm643, %v1612, 0
        %v2036 = vsel %vm643, %v1613, 0
        %v2039 = vsel %vm643, %v1614, 0
        %v2042 = vsel %vm643, %v1615, 0
        %v2045 = vsel %vm643, %v1616, 0
        %v2048 = vsel %vm643, %v1617, 0
        %v2051 = vsel %vm643, %v1618, 0
        %v2054 = vsel %vm643, %v1619, 0
        %v2057 = vsel %vm643, %v1620, 0
        %v2060 = vsel %vm643, %v1621, 0
        %v2063 = vsel %vm643, %v1622, 0
        %v2066 = vsel %vm643, %v1623, 0
        %v2069 = vsel %vm643, %v1624, 0
        %v2072 = vsel %vm643, %v1625, 0
        %v2075 = vsel %vm643, %v1626, 0
        %v2078 = vsel %vm643, %v1627, 0
        %v2081 = vsel %vm643, %v1628, 0
        %v2084 = vsel %vm643, %v1629, 0
        %v2087 = vsel %vm643, %v1630, 0
        %2089 = vmatprep.subr.mxu0 0.0
        %2090 = vmatpush1.msra.mxu0 %v1631
        %2091 = vmatprep.subr.mxu0 0.0
        %2092 = vmatpush1.msra.mxu0 %v1632
        %2093 = vmatprep.subr.mxu0 0.0
        %2094 = vmatpush1.msra.mxu0 %v1633
        %2095 = vmatprep.subr.mxu0 0.0
        %2096 = vmatpush1.msra.mxu0 %v1634
        %2097 = vmatprep.subr.mxu0 0.0
        %2098 = vmatpush1.msra.mxu0 0.0
        %2099 = vmatprep.subr.mxu0 0.0
        %2100 = vmatpush1.msra.mxu0 0.0
        %2101 = vmatprep.subr.mxu0 0.0
        %2102 = vmatpush1.msra.mxu0 0.0
        %2103 = vmatprep.subr.mxu0 0.0
        %2104 = vmatpush1.msra.mxu0 0.0
        %2105 = vmatprep.subr.mxu0 0.0
        %2106 = vmatpush1.msra.mxu0 0.0
        %2107 = vmatprep.subr.mxu0 0.0
        %2108 = vmatpush1.msra.mxu0 0.0
        %2109 = vmatprep.subr.mxu0 0.0
        %2110 = vmatpush1.msra.mxu0 0.0
        %2111 = vmatprep.subr.mxu0 0.0
        %2112 = vmatpush1.msra.mxu0 0.0
        %2113 = vmatprep.subr.mxu0 0.0
        %2114 = vmatpush1.msra.mxu0 0.0
        %2115 = vmatprep.subr.mxu0 0.0
        %2116 = vmatpush1.msra.mxu0 0.0
        %2117 = vmatprep.subr.mxu0 0.0
        %2118 = vmatpush1.msra.mxu0 0.0
        %2119 = vmatprep.subr.mxu0 0.0
        %2120 = vmatpush1.msra.mxu0 0.0
        %2121 = vmatprep.subr.mxu0 0.0
        %2122 = vmatpush1.msra.mxu0 0.0
        %2123 = vmatprep.subr.mxu0 0.0
        %2124 = vmatpush1.msra.mxu0 0.0
        %2125 = vmatprep.subr.mxu0 0.0
        %2126 = vmatpush1.msra.mxu0 0.0
        %2127 = vmatprep.subr.mxu0 0.0
        %2128 = vmatpush1.msra.mxu0 0.0
        %2129 = vmatprep.subr.mxu0 0.0
        %2130 = vmatpush1.msra.mxu0 0.0
        %2131 = vmatprep.subr.mxu0 0.0
        %2132 = vmatpush1.msra.mxu0 0.0
        %2133 = vmatprep.subr.mxu0 0.0
        %2134 = vmatpush1.msra.mxu0 0.0
        %2135 = vmatprep.subr.mxu0 0.0
        %2136 = vmatpush1.msra.mxu0 0.0
        %2137 = vmatprep.subr.mxu0 0.0
        %2138 = vmatpush1.msra.mxu0 0.0
        %2139 = vmatprep.subr.mxu0 0.0
        %2140 = vmatpush1.msra.mxu0 0.0
        %2141 = vmatprep.subr.mxu0 0.0
        %2142 = vmatpush1.msra.mxu0 0.0
        %2143 = vmatprep.subr.mxu0 0.0
        %2144 = vmatpush1.msra.mxu0 0.0
        %2145 = vmatprep.subr.mxu0 0.0
        %2146 = vmatpush1.msra.mxu0 0.0
        %2147 = vmatprep.subr.mxu0 0.0
        %2148 = vmatpush1.msra.mxu0 0.0
        %2149 = vmatprep.subr.mxu0 0.0
        %2150 = vmatpush1.msra.mxu0 0.0
        %2151 = vmatprep.subr.mxu0 0.0
        %2152 = vmatpush1.msra.mxu0 0.0
        %2153 = vmatprep.mubr.f32.mxu0 0.0
        %2154 = vmatmul.mubr.f32.gmra.mrb[0].mxu0 %v1994
        %v2155 = vpop.f32.mrb[0].mxu0
        %v2156 = vadd.f32 %v1835, %v2155
        %v2157 = vpop.f32.mrb[0].mxu0
        %2158 = vmatprep.mubr.f32.mxu0 0.0
        %2159 = vmatmul.mubr.f32.gmra.mrb[0].mxu0 %v1997
        %v2160 = vpop.f32.mrb[0].mxu0
        %v2161 = vadd.f32 %v1840, %v2160
        %v2162 = vpop.f32.mrb[0].mxu0
        %2163 = vmatprep.mubr.f32.mxu0 0.0
        %2164 = vmatmul.mubr.f32.gmra.mrb[0].mxu0 %v2000
        %v2165 = vpop.f32.mrb[0].mxu0
        %v2166 = vadd.f32 %v1845, %v2165
        %v2167 = vpop.f32.mrb[0].mxu0
        %2168 = vmatprep.mubr.f32.mxu0 0.0
        %2169 = vmatmul.mubr.f32.gmra.mrb[0].mxu0 %v2003
        %v2170 = vpop.f32.mrb[0].mxu0
        %v2171 = vadd.f32 %v1850, %v2170
        %v2172 = vpop.f32.mrb[0].mxu0
        %2173 = vmatprep.mubr.f32.mxu0 0.0
        %2174 = vmatmul.mubr.f32.gmra.mrb[0].mxu0 %v2006
        %v2175 = vpop.f32.mrb[0].mxu0
        %v2176 = vadd.f32 %v1855, %v2175
        %v2177 = vpop.f32.mrb[0].mxu0
        %2178 = vmatprep.mubr.f32.mxu0 0.0
        %2179 = vmatmul.mubr.f32.gmra.mrb[0].mxu0 %v2009
        %v2180 = vpop.f32.mrb[0].mxu0
        %v2181 = vadd.f32 %v1860, %v2180
        %v2182 = vpop.f32.mrb[0].mxu0
        %2183 = vmatprep.mubr.f32.mxu0 0.0
        %2184 = vmatmul.mubr.f32.gmra.mrb[0].mxu0 %v2012
        %v2185 = vpop.f32.mrb[0].mxu0
        %v2186 = vadd.f32 %v1865, %v2185
        %v2187 = vpop.f32.mrb[0].mxu0
        %2188 = vmatprep.mubr.f32.mxu0 0.0
        %2189 = vmatmul.mubr.f32.gmra.mrb[0].mxu0 %v2015
        %v2190 = vpop.f32.mrb[0].mxu0
        %v2191 = vadd.f32 %v1870, %v2190
        %v2192 = vpop.f32.mrb[0].mxu0
        %2193 = vmatprep.mubr.f32.mxu0 0.0
        %2194 = vmatmul.mubr.f32.gmra.mrb[0].mxu0 %v2018
        %v2195 = vpop.f32.mrb[0].mxu0
        %v2196 = vadd.f32 %v1875, %v2195
        %v2197 = vpop.f32.mrb[0].mxu0
        %2198 = vmatprep.mubr.f32.mxu0 0.0
        %2199 = vmatmul.mubr.f32.gmra.mrb[0].mxu0 %v2021
        %v2200 = vpop.f32.mrb[0].mxu0
        %v2201 = vadd.f32 %v1880, %v2200
        %v2202 = vpop.f32.mrb[0].mxu0
        %2203 = vmatprep.mubr.f32.mxu0 0.0
        %2204 = vmatmul.mubr.f32.gmra.mrb[0].mxu0 %v2024
        %v2205 = vpop.f32.mrb[0].mxu0
        %v2206 = vadd.f32 %v1885, %v2205
        %v2207 = vpop.f32.mrb[0].mxu0
        %2208 = vmatprep.mubr.f32.mxu0 0.0
        %2209 = vmatmul.mubr.f32.gmra.mrb[0].mxu0 %v2027
        %v2210 = vpop.f32.mrb[0].mxu0
        %v2211 = vadd.f32 %v1890, %v2210
        %v2212 = vpop.f32.mrb[0].mxu0
        %2213 = vmatprep.mubr.f32.mxu0 0.0
        %2214 = vmatmul.mubr.f32.gmra.mrb[0].mxu0 %v2030
        %v2215 = vpop.f32.mrb[0].mxu0
        %v2216 = vadd.f32 %v1895, %v2215
        %v2217 = vpop.f32.mrb[0].mxu0
        %2218 = vmatprep.mubr.f32.mxu0 0.0
        %2219 = vmatmul.mubr.f32.gmra.mrb[0].mxu0 %v2033
        %v2220 = vpop.f32.mrb[0].mxu0
        %v2221 = vadd.f32 %v1900, %v2220
        %v2222 = vpop.f32.mrb[0].mxu0
        %2223 = vmatprep.mubr.f32.mxu0 0.0
        %2224 = vmatmul.mubr.f32.gmra.mrb[0].mxu0 %v2036
        %v2225 = vpop.f32.mrb[0].mxu0
        %v2226 = vadd.f32 %v1905, %v2225
        %v2227 = vpop.f32.mrb[0].mxu0
        %2228 = vmatprep.mubr.f32.mxu0 0.0
        %2229 = vmatmul.mubr.f32.gmra.mrb[0].mxu0 %v2039
        %v2230 = vpop.f32.mrb[0].mxu0
        %v2231 = vadd.f32 %v1910, %v2230
        %v2232 = vpop.f32.mrb[0].mxu0
        %2233 = vmatprep.mubr.f32.mxu0 0.0
        %2234 = vmatmul.mubr.f32.gmra.mrb[0].mxu0 %v2042
        %v2235 = vpop.f32.mrb[0].mxu0
        %v2236 = vadd.f32 %v1915, %v2235
        %v2237 = vpop.f32.mrb[0].mxu0
        %2238 = vmatprep.mubr.f32.mxu0 0.0
        %2239 = vmatmul.mubr.f32.gmra.mrb[0].mxu0 %v2045
        %v2240 = vpop.f32.mrb[0].mxu0
        %v2241 = vadd.f32 %v1920, %v2240
        %v2242 = vpop.f32.mrb[0].mxu0
        %2243 = vmatprep.mubr.f32.mxu0 0.0
        %2244 = vmatmul.mubr.f32.gmra.mrb[0].mxu0 %v2048
        %v2245 = vpop.f32.mrb[0].mxu0
        %v2246 = vadd.f32 %v1925, %v2245
        %v2247 = vpop.f32.mrb[0].mxu0
        %2248 = vmatprep.mubr.f32.mxu0 0.0
        %2249 = vmatmul.mubr.f32.gmra.mrb[0].mxu0 %v2051
        %v2250 = vpop.f32.mrb[0].mxu0
        %v2251 = vadd.f32 %v1930, %v2250
        %v2252 = vpop.f32.mrb[0].mxu0
        %2253 = vmatprep.mubr.f32.mxu0 0.0
        %2254 = vmatmul.mubr.f32.gmra.mrb[0].mxu0 %v2054
        %v2255 = vpop.f32.mrb[0].mxu0
        %v2256 = vadd.f32 %v1935, %v2255
        %v2257 = vpop.f32.mrb[0].mxu0
        %2258 = vmatprep.mubr.f32.mxu0 0.0
        %2259 = vmatmul.mubr.f32.gmra.mrb[0].mxu0 %v2057
        %v2260 = vpop.f32.mrb[0].mxu0
        %v2261 = vadd.f32 %v1940, %v2260
        %v2262 = vpop.f32.mrb[0].mxu0
        %2263 = vmatprep.mubr.f32.mxu0 0.0
        %2264 = vmatmul.mubr.f32.gmra.mrb[0].mxu0 %v2060
        %v2265 = vpop.f32.mrb[0].mxu0
        %v2266 = vadd.f32 %v1945, %v2265
        %v2267 = vpop.f32.mrb[0].mxu0
        %2268 = vmatprep.mubr.f32.mxu0 0.0
        %2269 = vmatmul.mubr.f32.gmra.mrb[0].mxu0 %v2063
        %v2270 = vpop.f32.mrb[0].mxu0
        %v2271 = vadd.f32 %v1950, %v2270
        %v2272 = vpop.f32.mrb[0].mxu0
        %2273 = vmatprep.mubr.f32.mxu0 0.0
        %2274 = vmatmul.mubr.f32.gmra.mrb[0].mxu0 %v2066
        %v2275 = vpop.f32.mrb[0].mxu0
        %v2276 = vadd.f32 %v1955, %v2275
        %v2277 = vpop.f32.mrb[0].mxu0
        %2278 = vmatprep.mubr.f32.mxu0 0.0
        %2279 = vmatmul.mubr.f32.gmra.mrb[0].mxu0 %v2069
        %v2280 = vpop.f32.mrb[0].mxu0
        %v2281 = vadd.f32 %v1960, %v2280
        %v2282 = vpop.f32.mrb[0].mxu0
        %2283 = vmatprep.mubr.f32.mxu0 0.0
        %2284 = vmatmul.mubr.f32.gmra.mrb[0].mxu0 %v2072
        %v2285 = vpop.f32.mrb[0].mxu0
        %v2286 = vadd.f32 %v1965, %v2285
        %v2287 = vpop.f32.mrb[0].mxu0
        %2288 = vmatprep.mubr.f32.mxu0 0.0
        %2289 = vmatmul.mubr.f32.gmra.mrb[0].mxu0 %v2075
        %v2290 = vpop.f32.mrb[0].mxu0
        %v2291 = vadd.f32 %v1970, %v2290
        %v2292 = vpop.f32.mrb[0].mxu0
        %2293 = vmatprep.mubr.f32.mxu0 0.0
        %2294 = vmatmul.mubr.f32.gmra.mrb[0].mxu0 %v2078
        %v2295 = vpop.f32.mrb[0].mxu0
        %v2296 = vadd.f32 %v1975, %v2295
        %v2297 = vpop.f32.mrb[0].mxu0
        %2298 = vmatprep.mubr.f32.mxu0 0.0
        %2299 = vmatmul.mubr.f32.gmra.mrb[0].mxu0 %v2081
        %v2300 = vpop.f32.mrb[0].mxu0
        %v2301 = vadd.f32 %v1980, %v2300
        %v2302 = vpop.f32.mrb[0].mxu0
        %2303 = vmatprep.mubr.f32.mxu0 0.0
        %2304 = vmatmul.mubr.f32.gmra.mrb[0].mxu0 %v2084
        %v2305 = vpop.f32.mrb[0].mxu0
        %v2306 = vadd.f32 %v1985, %v2305
        %v2307 = vpop.f32.mrb[0].mxu0
        %2308 = vmatprep.mubr.f32.mxu0 0.0
        %2309 = vmatmul.mubr.f32.gmra.mrb[0].mxu0 %v2087
        %v2310 = vpop.f32.mrb[0].mxu0
        %v2311 = vadd.f32 %v1990, %v2310
        %v2312 = vpop.f32.mrb[0].mxu0
        %2313 = vdwg.mxu0
        %s2314 = scalar_lea.vmem [#allocation2], 48
        %v2315 = vld [vmem:[%s2314 + $0x1] sm:$0xff]
        %v2316 = vld [vmem:[%s2314 + $0x9] sm:$0xff]
        %v2317 = vld [vmem:[%s2314 + $0x19] sm:$0xff]
        %v2318 = vld [vmem:[%s2314 + $0x21] sm:$0xff]
        %v2319 = vld [vmem:[%s2314 + $0x31] sm:$0xff]
        %v2320 = vld [vmem:[%s2314 + $0x39] sm:$0xff]
        %v2321 = vld [vmem:[%s2314 + $0x49] sm:$0xff]
        %v2322 = vld [vmem:[%s2314 + $0x51] sm:$0xff]
        %v2323 = vld [vmem:[%s2314 + $0x61] sm:$0xff]
        %v2324 = vld [vmem:[%s2314 + $0x69] sm:$0xff]
        %v2325 = vld [vmem:[%s2314 + $0x79] sm:$0xff]
        %v2326 = vld [vmem:[%s2314 + $0x81] sm:$0xff]
        %v2327 = vld [vmem:[%s2314 + $0x91] sm:$0xff]
        %v2328 = vld [vmem:[%s2314 + $0x99] sm:$0xff]
        %v2329 = vld [vmem:[%s2314 + $0xa9] sm:$0xff]
        %v2330 = vld [vmem:[%s2314 + $0xb1] sm:$0xff]
        %v2331 = vld [vmem:[%s2314 + $0xc1] sm:$0xff]
        %v2332 = vld [vmem:[%s2314 + $0xc9] sm:$0xff]
        %v2333 = vld [vmem:[%s2314 + $0xd9] sm:$0xff]
        %v2334 = vld [vmem:[%s2314 + $0xe1] sm:$0xff]
        %v2335 = vld [vmem:[%s2314 + $0xf1] sm:$0xff]
        %v2336 = vld [vmem:[%s2314 + $0xf9] sm:$0xff]
        %v2337 = vld [vmem:[%s2314 + $0x109] sm:$0xff]
        %v2338 = vld [vmem:[%s2314 + $0x111] sm:$0xff]
        %v2339 = vld [vmem:[%s2314 + $0x121] sm:$0xff]
        %v2340 = vld [vmem:[%s2314 + $0x129] sm:$0xff]
        %v2341 = vld [vmem:[%s2314 + $0x139] sm:$0xff]
        %v2342 = vld [vmem:[%s2314 + $0x141] sm:$0xff]
        %v2343 = vld [vmem:[%s2314 + $0x151] sm:$0xff]
        %v2344 = vld [vmem:[%s2314 + $0x159] sm:$0xff]
        %v2345 = vld [vmem:[%s2314 + $0x169] sm:$0xff]
        %v2346 = vld [vmem:[%s2314 + $0x171] sm:$0xff]
        %s2347 = scalar_lea.vmem [#allocation13], 64
        %v2348 = vld [vmem:[%s2347] sm:$0xff]
        %v2349 = vld [vmem:[%s2347 + $0x8] sm:$0xff]
        %v2350 = vld [vmem:[%s2347 + $0x10] sm:$0xff]
        %v2351 = vld [vmem:[%s2347 + $0x18] sm:$0xff]
        %v2353 = vsel %vm643, %v2315, 0
        %v2356 = vsel %vm643, %v2316, 0
        %v2359 = vsel %vm643, %v2317, 0
        %v2362 = vsel %vm643, %v2318, 0
        %v2365 = vsel %vm643, %v2319, 0
        %v2368 = vsel %vm643, %v2320, 0
        %v2371 = vsel %vm643, %v2321, 0
        %v2374 = vsel %vm643, %v2322, 0
        %v2377 = vsel %vm643, %v2323, 0
        %v2380 = vsel %vm643, %v2324, 0
        %v2383 = vsel %vm643, %v2325, 0
        %v2386 = vsel %vm643, %v2326, 0
        %v2389 = vsel %vm643, %v2327, 0
        %v2392 = vsel %vm643, %v2328, 0
        %v2395 = vsel %vm643, %v2329, 0
        %v2398 = vsel %vm643, %v2330, 0
        %v2401 = vsel %vm643, %v2331, 0
        %v2404 = vsel %vm643, %v2332, 0
        %v2407 = vsel %vm643, %v2333, 0
        %v2410 = vsel %vm643, %v2334, 0
        %v2413 = vsel %vm643, %v2335, 0
        %v2416 = vsel %vm643, %v2336, 0
        %v2419 = vsel %vm643, %v2337, 0
        %v2422 = vsel %vm643, %v2338, 0
        %v2425 = vsel %vm643, %v2339, 0
        %v2428 = vsel %vm643, %v2340, 0
        %v2431 = vsel %vm643, %v2341, 0
        %v2434 = vsel %vm643, %v2342, 0
        %v2437 = vsel %vm643, %v2343, 0
        %v2440 = vsel %vm643, %v2344, 0
        %v2443 = vsel %vm643, %v2345, 0
        %v2446 = vsel %vm643, %v2346, 0
        %2448 = vmatprep.subr.mxu0 0.0
        %2449 = vmatpush1.msra.mxu0 %v2348
        %2450 = vmatprep.subr.mxu0 0.0
        %2451 = vmatpush1.msra.mxu0 %v2349
        %2452 = vmatprep.subr.mxu0 0.0
        %2453 = vmatpush1.msra.mxu0 %v2350
        %2454 = vmatprep.subr.mxu0 0.0
        %2455 = vmatpush1.msra.mxu0 %v2351
        %2456 = vmatprep.subr.mxu0 0.0
        %2457 = vmatpush1.msra.mxu0 0.0
        %2458 = vmatprep.subr.mxu0 0.0
        %2459 = vmatpush1.msra.mxu0 0.0
        %2460 = vmatprep.subr.mxu0 0.0
        %2461 = vmatpush1.msra.mxu0 0.0
        %2462 = vmatprep.subr.mxu0 0.0
        %2463 = vmatpush1.msra.mxu0 0.0
        %2464 = vmatprep.subr.mxu0 0.0
        %2465 = vmatpush1.msra.mxu0 0.0
        %2466 = vmatprep.subr.mxu0 0.0
        %2467 = vmatpush1.msra.mxu0 0.0
        %2468 = vmatprep.subr.mxu0 0.0
        %2469 = vmatpush1.msra.mxu0 0.0
        %2470 = vmatprep.subr.mxu0 0.0
        %2471 = vmatpush1.msra.mxu0 0.0
        %2472 = vmatprep.subr.mxu0 0.0
        %2473 = vmatpush1.msra.mxu0 0.0
        %2474 = vmatprep.subr.mxu0 0.0
        %2475 = vmatpush1.msra.mxu0 0.0
        %2476 = vmatprep.subr.mxu0 0.0
        %2477 = vmatpush1.msra.mxu0 0.0
        %2478 = vmatprep.subr.mxu0 0.0
        %2479 = vmatpush1.msra.mxu0 0.0
        %2480 = vmatprep.subr.mxu0 0.0
        %2481 = vmatpush1.msra.mxu0 0.0
        %2482 = vmatprep.subr.mxu0 0.0
        %2483 = vmatpush1.msra.mxu0 0.0
        %2484 = vmatprep.subr.mxu0 0.0
        %2485 = vmatpush1.msra.mxu0 0.0
        %2486 = vmatprep.subr.mxu0 0.0
        %2487 = vmatpush1.msra.mxu0 0.0
        %2488 = vmatprep.subr.mxu0 0.0
        %2489 = vmatpush1.msra.mxu0 0.0
        %2490 = vmatprep.subr.mxu0 0.0
        %2491 = vmatpush1.msra.mxu0 0.0
        %2492 = vmatprep.subr.mxu0 0.0
        %2493 = vmatpush1.msra.mxu0 0.0
        %2494 = vmatprep.subr.mxu0 0.0
        %2495 = vmatpush1.msra.mxu0 0.0
        %2496 = vmatprep.subr.mxu0 0.0
        %2497 = vmatpush1.msra.mxu0 0.0
        %2498 = vmatprep.subr.mxu0 0.0
        %2499 = vmatpush1.msra.mxu0 0.0
        %2500 = vmatprep.subr.mxu0 0.0
        %2501 = vmatpush1.msra.mxu0 0.0
        %2502 = vmatprep.subr.mxu0 0.0
        %2503 = vmatpush1.msra.mxu0 0.0
        %2504 = vmatprep.subr.mxu0 0.0
        %2505 = vmatpush1.msra.mxu0 0.0
        %2506 = vmatprep.subr.mxu0 0.0
        %2507 = vmatpush1.msra.mxu0 0.0
        %2508 = vmatprep.subr.mxu0 0.0
        %2509 = vmatpush1.msra.mxu0 0.0
        %2510 = vmatprep.subr.mxu0 0.0
        %2511 = vmatpush1.msra.mxu0 0.0
        %2512 = vmatprep.mubr.f32.mxu0 0.0
        %2513 = vmatmul.mubr.f32.gmra.mrb[0].mxu0 %v2353
        %v2514 = vpop.f32.mrb[0].mxu0
        %v2515 = vadd.f32 0.0, %v2514
        %v2516 = vpop.f32.mrb[0].mxu0
        %2517 = vmatprep.mubr.f32.mxu0 0.0
        %2518 = vmatmul.mubr.f32.gmra.mrb[0].mxu0 %v2356
        %v2519 = vpop.f32.mrb[0].mxu0
        %v2520 = vadd.f32 0.0, %v2519
        %v2521 = vpop.f32.mrb[0].mxu0
        %2522 = vmatprep.mubr.f32.mxu0 0.0
        %2523 = vmatmul.mubr.f32.gmra.mrb[0].mxu0 %v2359
        %v2524 = vpop.f32.mrb[0].mxu0
        %v2525 = vadd.f32 0.0, %v2524
        %v2526 = vpop.f32.mrb[0].mxu0
        %2527 = vmatprep.mubr.f32.mxu0 0.0
        %2528 = vmatmul.mubr.f32.gmra.mrb[0].mxu0 %v2362
        %v2529 = vpop.f32.mrb[0].mxu0
        %v2530 = vadd.f32 0.0, %v2529
        %v2531 = vpop.f32.mrb[0].mxu0
        %2532 = vmatprep.mubr.f32.mxu0 0.0
        %2533 = vmatmul.mubr.f32.gmra.mrb[0].mxu0 %v2365
        %v2534 = vpop.f32.mrb[0].mxu0
        %v2535 = vadd.f32 0.0, %v2534
        %v2536 = vpop.f32.mrb[0].mxu0
        %2537 = vmatprep.mubr.f32.mxu0 0.0
        %2538 = vmatmul.mubr.f32.gmra.mrb[0].mxu0 %v2368
        %v2539 = vpop.f32.mrb[0].mxu0
        %v2540 = vadd.f32 0.0, %v2539
        %v2541 = vpop.f32.mrb[0].mxu0
        %2542 = vmatprep.mubr.f32.mxu0 0.0
        %2543 = vmatmul.mubr.f32.gmra.mrb[0].mxu0 %v2371
        %v2544 = vpop.f32.mrb[0].mxu0
        %v2545 = vadd.f32 0.0, %v2544
        %v2546 = vpop.f32.mrb[0].mxu0
        %2547 = vmatprep.mubr.f32.mxu0 0.0
        %2548 = vmatmul.mubr.f32.gmra.mrb[0].mxu0 %v2374
        %v2549 = vpop.f32.mrb[0].mxu0
        %v2550 = vadd.f32 0.0, %v2549
        %v2551 = vpop.f32.mrb[0].mxu0
        %2552 = vmatprep.mubr.f32.mxu0 0.0
        %2553 = vmatmul.mubr.f32.gmra.mrb[0].mxu0 %v2377
        %v2554 = vpop.f32.mrb[0].mxu0
        %v2555 = vadd.f32 0.0, %v2554
        %v2556 = vpop.f32.mrb[0].mxu0
        %2557 = vmatprep.mubr.f32.mxu0 0.0
        %2558 = vmatmul.mubr.f32.gmra.mrb[0].mxu0 %v2380
        %v2559 = vpop.f32.mrb[0].mxu0
        %v2560 = vadd.f32 0.0, %v2559
        %v2561 = vpop.f32.mrb[0].mxu0
        %2562 = vmatprep.mubr.f32.mxu0 0.0
        %2563 = vmatmul.mubr.f32.gmra.mrb[0].mxu0 %v2383
        %v2564 = vpop.f32.mrb[0].mxu0
        %v2565 = vadd.f32 0.0, %v2564
        %v2566 = vpop.f32.mrb[0].mxu0
        %2567 = vmatprep.mubr.f32.mxu0 0.0
        %2568 = vmatmul.mubr.f32.gmra.mrb[0].mxu0 %v2386
        %v2569 = vpop.f32.mrb[0].mxu0
        %v2570 = vadd.f32 0.0, %v2569
        %v2571 = vpop.f32.mrb[0].mxu0
        %2572 = vmatprep.mubr.f32.mxu0 0.0
        %2573 = vmatmul.mubr.f32.gmra.mrb[0].mxu0 %v2389
        %v2574 = vpop.f32.mrb[0].mxu0
        %v2575 = vadd.f32 0.0, %v2574
        %v2576 = vpop.f32.mrb[0].mxu0
        %2577 = vmatprep.mubr.f32.mxu0 0.0
        %2578 = vmatmul.mubr.f32.gmra.mrb[0].mxu0 %v2392
        %v2579 = vpop.f32.mrb[0].mxu0
        %v2580 = vadd.f32 0.0, %v2579
        %v2581 = vpop.f32.mrb[0].mxu0
        %2582 = vmatprep.mubr.f32.mxu0 0.0
        %2583 = vmatmul.mubr.f32.gmra.mrb[0].mxu0 %v2395
        %v2584 = vpop.f32.mrb[0].mxu0
        %v2585 = vadd.f32 0.0, %v2584
        %v2586 = vpop.f32.mrb[0].mxu0
        %2587 = vmatprep.mubr.f32.mxu0 0.0
        %2588 = vmatmul.mubr.f32.gmra.mrb[0].mxu0 %v2398
        %v2589 = vpop.f32.mrb[0].mxu0
        %v2590 = vadd.f32 0.0, %v2589
        %v2591 = vpop.f32.mrb[0].mxu0
        %2592 = vmatprep.mubr.f32.mxu0 0.0
        %2593 = vmatmul.mubr.f32.gmra.mrb[0].mxu0 %v2401
        %v2594 = vpop.f32.mrb[0].mxu0
        %v2595 = vadd.f32 0.0, %v2594
        %v2596 = vpop.f32.mrb[0].mxu0
        %2597 = vmatprep.mubr.f32.mxu0 0.0
        %2598 = vmatmul.mubr.f32.gmra.mrb[0].mxu0 %v2404
        %v2599 = vpop.f32.mrb[0].mxu0
        %v2600 = vadd.f32 0.0, %v2599
        %v2601 = vpop.f32.mrb[0].mxu0
        %2602 = vmatprep.mubr.f32.mxu0 0.0
        %2603 = vmatmul.mubr.f32.gmra.mrb[0].mxu0 %v2407
        %v2604 = vpop.f32.mrb[0].mxu0
        %v2605 = vadd.f32 0.0, %v2604
        %v2606 = vpop.f32.mrb[0].mxu0
        %2607 = vmatprep.mubr.f32.mxu0 0.0
        %2608 = vmatmul.mubr.f32.gmra.mrb[0].mxu0 %v2410
        %v2609 = vpop.f32.mrb[0].mxu0
        %v2610 = vadd.f32 0.0, %v2609
        %v2611 = vpop.f32.mrb[0].mxu0
        %2612 = vmatprep.mubr.f32.mxu0 0.0
        %2613 = vmatmul.mubr.f32.gmra.mrb[0].mxu0 %v2413
        %v2614 = vpop.f32.mrb[0].mxu0
        %v2615 = vadd.f32 0.0, %v2614
        %v2616 = vpop.f32.mrb[0].mxu0
        %2617 = vmatprep.mubr.f32.mxu0 0.0
        %2618 = vmatmul.mubr.f32.gmra.mrb[0].mxu0 %v2416
        %v2619 = vpop.f32.mrb[0].mxu0
        %v2620 = vadd.f32 0.0, %v2619
        %v2621 = vpop.f32.mrb[0].mxu0
        %2622 = vmatprep.mubr.f32.mxu0 0.0
        %2623 = vmatmul.mubr.f32.gmra.mrb[0].mxu0 %v2419
        %v2624 = vpop.f32.mrb[0].mxu0
        %v2625 = vadd.f32 0.0, %v2624
        %v2626 = vpop.f32.mrb[0].mxu0
        %2627 = vmatprep.mubr.f32.mxu0 0.0
        %2628 = vmatmul.mubr.f32.gmra.mrb[0].mxu0 %v2422
        %v2629 = vpop.f32.mrb[0].mxu0
        %v2630 = vadd.f32 0.0, %v2629
        %v2631 = vpop.f32.mrb[0].mxu0
        %2632 = vmatprep.mubr.f32.mxu0 0.0
        %2633 = vmatmul.mubr.f32.gmra.mrb[0].mxu0 %v2425
        %v2634 = vpop.f32.mrb[0].mxu0
        %v2635 = vadd.f32 0.0, %v2634
        %v2636 = vpop.f32.mrb[0].mxu0
        %2637 = vmatprep.mubr.f32.mxu0 0.0
        %2638 = vmatmul.mubr.f32.gmra.mrb[0].mxu0 %v2428
        %v2639 = vpop.f32.mrb[0].mxu0
        %v2640 = vadd.f32 0.0, %v2639
        %v2641 = vpop.f32.mrb[0].mxu0
        %2642 = vmatprep.mubr.f32.mxu0 0.0
        %2643 = vmatmul.mubr.f32.gmra.mrb[0].mxu0 %v2431
        %v2644 = vpop.f32.mrb[0].mxu0
        %v2645 = vadd.f32 0.0, %v2644
        %v2646 = vpop.f32.mrb[0].mxu0
        %2647 = vmatprep.mubr.f32.mxu0 0.0
        %2648 = vmatmul.mubr.f32.gmra.mrb[0].mxu0 %v2434
        %v2649 = vpop.f32.mrb[0].mxu0
        %v2650 = vadd.f32 0.0, %v2649
        %v2651 = vpop.f32.mrb[0].mxu0
        %2652 = vmatprep.mubr.f32.mxu0 0.0
        %2653 = vmatmul.mubr.f32.gmra.mrb[0].mxu0 %v2437
        %v2654 = vpop.f32.mrb[0].mxu0
        %v2655 = vadd.f32 0.0, %v2654
        %v2656 = vpop.f32.mrb[0].mxu0
        %2657 = vmatprep.mubr.f32.mxu0 0.0
        %2658 = vmatmul.mubr.f32.gmra.mrb[0].mxu0 %v2440
        %v2659 = vpop.f32.mrb[0].mxu0
        %v2660 = vadd.f32 0.0, %v2659
        %v2661 = vpop.f32.mrb[0].mxu0
        %2662 = vmatprep.mubr.f32.mxu0 0.0
        %2663 = vmatmul.mubr.f32.gmra.mrb[0].mxu0 %v2443
        %v2664 = vpop.f32.mrb[0].mxu0
        %v2665 = vadd.f32 0.0, %v2664
        %v2666 = vpop.f32.mrb[0].mxu0
        %2667 = vmatprep.mubr.f32.mxu0 0.0
        %2668 = vmatmul.mubr.f32.gmra.mrb[0].mxu0 %v2446
        %v2669 = vpop.f32.mrb[0].mxu0
        %v2670 = vadd.f32 0.0, %v2669
        %v2671 = vpop.f32.mrb[0].mxu0
        %2672 = vdwg.mxu0
        %v2673 = vadd.f32 %v2156, %v2515
        %v2674 = vadd.f32 %v2161, %v2520
        %v2675 = vadd.f32 %v2166, %v2525
        %v2676 = vadd.f32 %v2171, %v2530
        %v2677 = vadd.f32 %v2176, %v2535
        %v2678 = vadd.f32 %v2181, %v2540
        %v2679 = vadd.f32 %v2186, %v2545
        %v2680 = vadd.f32 %v2191, %v2550
        %v2681 = vadd.f32 %v2196, %v2555
        %v2682 = vadd.f32 %v2201, %v2560
        %v2683 = vadd.f32 %v2206, %v2565
        %v2684 = vadd.f32 %v2211, %v2570
        %v2685 = vadd.f32 %v2216, %v2575
        %v2686 = vadd.f32 %v2221, %v2580
        %v2687 = vadd.f32 %v2226, %v2585
        %v2688 = vadd.f32 %v2231, %v2590
        %v2689 = vadd.f32 %v2236, %v2595
        %v2690 = vadd.f32 %v2241, %v2600
        %v2691 = vadd.f32 %v2246, %v2605
        %v2692 = vadd.f32 %v2251, %v2610
        %v2693 = vadd.f32 %v2256, %v2615
        %v2694 = vadd.f32 %v2261, %v2620
        %v2695 = vadd.f32 %v2266, %v2625
        %v2696 = vadd.f32 %v2271, %v2630
        %v2697 = vadd.f32 %v2276, %v2635
        %v2698 = vadd.f32 %v2281, %v2640
        %v2699 = vadd.f32 %v2286, %v2645
        %v2700 = vadd.f32 %v2291, %v2650
        %v2701 = vadd.f32 %v2296, %v2655
        %v2702 = vadd.f32 %v2301, %v2660
        %v2703 = vadd.f32 %v2306, %v2665
        %v2704 = vadd.f32 %v2311, %v2670
        %v2705 = vld [vmem:[%s2314 + $0x2] sm:$0xff]
        %v2706 = vld [vmem:[%s2314 + $0xa] sm:$0xff]
        %v2707 = vld [vmem:[%s2314 + $0x1a] sm:$0xff]
        %v2708 = vld [vmem:[%s2314 + $0x22] sm:$0xff]
        %v2709 = vld [vmem:[%s2314 + $0x32] sm:$0xff]
        %v2710 = vld [vmem:[%s2314 + $0x3a] sm:$0xff]
        %v2711 = vld [vmem:[%s2314 + $0x4a] sm:$0xff]
        %v2712 = vld [vmem:[%s2314 + $0x52] sm:$0xff]
        %v2713 = vld [vmem:[%s2314 + $0x62] sm:$0xff]
        %v2714 = vld [vmem:[%s2314 + $0x6a] sm:$0xff]
        %v2715 = vld [vmem:[%s2314 + $0x7a] sm:$0xff]
        %v2716 = vld [vmem:[%s2314 + $0x82] sm:$0xff]
        %v2717 = vld [vmem:[%s2314 + $0x92] sm:$0xff]
        %v2718 = vld [vmem:[%s2314 + $0x9a] sm:$0xff]
        %v2719 = vld [vmem:[%s2314 + $0xaa] sm:$0xff]
        %v2720 = vld [vmem:[%s2314 + $0xb2] sm:$0xff]
        %v2721 = vld [vmem:[%s2314 + $0xc2] sm:$0xff]
        %v2722 = vld [vmem:[%s2314 + $0xca] sm:$0xff]
        %v2723 = vld [vmem:[%s2314 + $0xda] sm:$0xff]
        %v2724 = vld [vmem:[%s2314 + $0xe2] sm:$0xff]
        %v2725 = vld [vmem:[%s2314 + $0xf2] sm:$0xff]
        %v2726 = vld [vmem:[%s2314 + $0xfa] sm:$0xff]
        %v2727 = vld [vmem:[%s2314 + $0x10a] sm:$0xff]
        %v2728 = vld [vmem:[%s2314 + $0x112] sm:$0xff]
        %v2729 = vld [vmem:[%s2314 + $0x122] sm:$0xff]
        %v2730 = vld [vmem:[%s2314 + $0x12a] sm:$0xff]
        %v2731 = vld [vmem:[%s2314 + $0x13a] sm:$0xff]
        %v2732 = vld [vmem:[%s2314 + $0x142] sm:$0xff]
        %v2733 = vld [vmem:[%s2314 + $0x152] sm:$0xff]
        %v2734 = vld [vmem:[%s2314 + $0x15a] sm:$0xff]
        %v2735 = vld [vmem:[%s2314 + $0x16a] sm:$0xff]
        %v2736 = vld [vmem:[%s2314 + $0x172] sm:$0xff]
        %s2737 = scalar_lea.vmem [#allocation13], 96
        %v2738 = vld [vmem:[%s2737] sm:$0xff]
        %v2739 = vld [vmem:[%s2737 + $0x8] sm:$0xff]
        %v2740 = vld [vmem:[%s2737 + $0x10] sm:$0xff]
        %v2741 = vld [vmem:[%s2737 + $0x18] sm:$0xff]
        %v2743 = vsel %vm643, %v2705, 0
        %v2746 = vsel %vm643, %v2706, 0
        %v2749 = vsel %vm643, %v2707, 0
        %v2752 = vsel %vm643, %v2708, 0
        %v2755 = vsel %vm643, %v2709, 0
        %v2758 = vsel %vm643, %v2710, 0
        %v2761 = vsel %vm643, %v2711, 0
        %v2764 = vsel %vm643, %v2712, 0
        %v2767 = vsel %vm643, %v2713, 0
        %v2770 = vsel %vm643, %v2714, 0
        %v2773 = vsel %vm643, %v2715, 0
        %v2776 = vsel %vm643, %v2716, 0
        %v2779 = vsel %vm643, %v2717, 0
        %v2782 = vsel %vm643, %v2718, 0
        %v2785 = vsel %vm643, %v2719, 0
        %v2788 = vsel %vm643, %v2720, 0
        %v2791 = vsel %vm643, %v2721, 0
        %v2794 = vsel %vm643, %v2722, 0
        %v2797 = vsel %vm643, %v2723, 0
        %v2800 = vsel %vm643, %v2724, 0
        %v2803 = vsel %vm643, %v2725, 0
        %v2806 = vsel %vm643, %v2726, 0
        %v2809 = vsel %vm643, %v2727, 0
        %v2812 = vsel %vm643, %v2728, 0
        %v2815 = vsel %vm643, %v2729, 0
        %v2818 = vsel %vm643, %v2730, 0
        %v2821 = vsel %vm643, %v2731, 0
        %v2824 = vsel %vm643, %v2732, 0
        %v2827 = vsel %vm643, %v2733, 0
        %v2830 = vsel %vm643, %v2734, 0
        %v2833 = vsel %vm643, %v2735, 0
        %v2836 = vsel %vm643, %v2736, 0
        %2838 = vmatprep.subr.mxu0 0.0
        %2839 = vmatpush1.msra.mxu0 %v2738
        %2840 = vmatprep.subr.mxu0 0.0
        %2841 = vmatpush1.msra.mxu0 %v2739
        %2842 = vmatprep.subr.mxu0 0.0
        %2843 = vmatpush1.msra.mxu0 %v2740
        %2844 = vmatprep.subr.mxu0 0.0
        %2845 = vmatpush1.msra.mxu0 %v2741
        %2846 = vmatprep.subr.mxu0 0.0
        %2847 = vmatpush1.msra.mxu0 0.0
        %2848 = vmatprep.subr.mxu0 0.0
        %2849 = vmatpush1.msra.mxu0 0.0
        %2850 = vmatprep.subr.mxu0 0.0
        %2851 = vmatpush1.msra.mxu0 0.0
        %2852 = vmatprep.subr.mxu0 0.0
        %2853 = vmatpush1.msra.mxu0 0.0
        %2854 = vmatprep.subr.mxu0 0.0
        %2855 = vmatpush1.msra.mxu0 0.0
        %2856 = vmatprep.subr.mxu0 0.0
        %2857 = vmatpush1.msra.mxu0 0.0
        %2858 = vmatprep.subr.mxu0 0.0
        %2859 = vmatpush1.msra.mxu0 0.0
        %2860 = vmatprep.subr.mxu0 0.0
        %2861 = vmatpush1.msra.mxu0 0.0
        %2862 = vmatprep.subr.mxu0 0.0
        %2863 = vmatpush1.msra.mxu0 0.0
        %2864 = vmatprep.subr.mxu0 0.0
        %2865 = vmatpush1.msra.mxu0 0.0
        %2866 = vmatprep.subr.mxu0 0.0
        %2867 = vmatpush1.msra.mxu0 0.0
        %2868 = vmatprep.subr.mxu0 0.0
        %2869 = vmatpush1.msra.mxu0 0.0
        %2870 = vmatprep.subr.mxu0 0.0
        %2871 = vmatpush1.msra.mxu0 0.0
        %2872 = vmatprep.subr.mxu0 0.0
        %2873 = vmatpush1.msra.mxu0 0.0
        %2874 = vmatprep.subr.mxu0 0.0
        %2875 = vmatpush1.msra.mxu0 0.0
        %2876 = vmatprep.subr.mxu0 0.0
        %2877 = vmatpush1.msra.mxu0 0.0
        %2878 = vmatprep.subr.mxu0 0.0
        %2879 = vmatpush1.msra.mxu0 0.0
        %2880 = vmatprep.subr.mxu0 0.0
        %2881 = vmatpush1.msra.mxu0 0.0
        %2882 = vmatprep.subr.mxu0 0.0
        %2883 = vmatpush1.msra.mxu0 0.0
        %2884 = vmatprep.subr.mxu0 0.0
        %2885 = vmatpush1.msra.mxu0 0.0
        %2886 = vmatprep.subr.mxu0 0.0
        %2887 = vmatpush1.msra.mxu0 0.0
        %2888 = vmatprep.subr.mxu0 0.0
        %2889 = vmatpush1.msra.mxu0 0.0
        %2890 = vmatprep.subr.mxu0 0.0
        %2891 = vmatpush1.msra.mxu0 0.0
        %2892 = vmatprep.subr.mxu0 0.0
        %2893 = vmatpush1.msra.mxu0 0.0
        %2894 = vmatprep.subr.mxu0 0.0
        %2895 = vmatpush1.msra.mxu0 0.0
        %2896 = vmatprep.subr.mxu0 0.0
        %2897 = vmatpush1.msra.mxu0 0.0
        %2898 = vmatprep.subr.mxu0 0.0
        %2899 = vmatpush1.msra.mxu0 0.0
        %2900 = vmatprep.subr.mxu0 0.0
        %2901 = vmatpush1.msra.mxu0 0.0
        %2902 = vmatprep.mubr.f32.mxu0 0.0
        %2903 = vmatmul.mubr.f32.gmra.mrb[0].mxu0 %v2743
        %v2904 = vpop.f32.mrb[0].mxu0
        %v2905 = vadd.f32 0.0, %v2904
        %v2906 = vpop.f32.mrb[0].mxu0
        %2907 = vmatprep.mubr.f32.mxu0 0.0
        %2908 = vmatmul.mubr.f32.gmra.mrb[0].mxu0 %v2746
        %v2909 = vpop.f32.mrb[0].mxu0
        %v2910 = vadd.f32 0.0, %v2909
        %v2911 = vpop.f32.mrb[0].mxu0
        %2912 = vmatprep.mubr.f32.mxu0 0.0
        %2913 = vmatmul.mubr.f32.gmra.mrb[0].mxu0 %v2749
        %v2914 = vpop.f32.mrb[0].mxu0
        %v2915 = vadd.f32 0.0, %v2914
        %v2916 = vpop.f32.mrb[0].mxu0
        %2917 = vmatprep.mubr.f32.mxu0 0.0
        %2918 = vmatmul.mubr.f32.gmra.mrb[0].mxu0 %v2752
        %v2919 = vpop.f32.mrb[0].mxu0
        %v2920 = vadd.f32 0.0, %v2919
        %v2921 = vpop.f32.mrb[0].mxu0
        %2922 = vmatprep.mubr.f32.mxu0 0.0
        %2923 = vmatmul.mubr.f32.gmra.mrb[0].mxu0 %v2755
        %v2924 = vpop.f32.mrb[0].mxu0
        %v2925 = vadd.f32 0.0, %v2924
        %v2926 = vpop.f32.mrb[0].mxu0
        %2927 = vmatprep.mubr.f32.mxu0 0.0
        %2928 = vmatmul.mubr.f32.gmra.mrb[0].mxu0 %v2758
        %v2929 = vpop.f32.mrb[0].mxu0
        %v2930 = vadd.f32 0.0, %v2929
        %v2931 = vpop.f32.mrb[0].mxu0
        %2932 = vmatprep.mubr.f32.mxu0 0.0
        %2933 = vmatmul.mubr.f32.gmra.mrb[0].mxu0 %v2761
        %v2934 = vpop.f32.mrb[0].mxu0
        %v2935 = vadd.f32 0.0, %v2934
        %v2936 = vpop.f32.mrb[0].mxu0
        %2937 = vmatprep.mubr.f32.mxu0 0.0
        %2938 = vmatmul.mubr.f32.gmra.mrb[0].mxu0 %v2764
        %v2939 = vpop.f32.mrb[0].mxu0
        %v2940 = vadd.f32 0.0, %v2939
        %v2941 = vpop.f32.mrb[0].mxu0
        %2942 = vmatprep.mubr.f32.mxu0 0.0
        %2943 = vmatmul.mubr.f32.gmra.mrb[0].mxu0 %v2767
        %v2944 = vpop.f32.mrb[0].mxu0
        %v2945 = vadd.f32 0.0, %v2944
        %v2946 = vpop.f32.mrb[0].mxu0
        %2947 = vmatprep.mubr.f32.mxu0 0.0
        %2948 = vmatmul.mubr.f32.gmra.mrb[0].mxu0 %v2770
        %v2949 = vpop.f32.mrb[0].mxu0
        %v2950 = vadd.f32 0.0, %v2949
        %v2951 = vpop.f32.mrb[0].mxu0
        %2952 = vmatprep.mubr.f32.mxu0 0.0
        %2953 = vmatmul.mubr.f32.gmra.mrb[0].mxu0 %v2773
        %v2954 = vpop.f32.mrb[0].mxu0
        %v2955 = vadd.f32 0.0, %v2954
        %v2956 = vpop.f32.mrb[0].mxu0
        %2957 = vmatprep.mubr.f32.mxu0 0.0
        %2958 = vmatmul.mubr.f32.gmra.mrb[0].mxu0 %v2776
        %v2959 = vpop.f32.mrb[0].mxu0
        %v2960 = vadd.f32 0.0, %v2959
        %v2961 = vpop.f32.mrb[0].mxu0
        %2962 = vmatprep.mubr.f32.mxu0 0.0
        %2963 = vmatmul.mubr.f32.gmra.mrb[0].mxu0 %v2779
        %v2964 = vpop.f32.mrb[0].mxu0
        %v2965 = vadd.f32 0.0, %v2964
        %v2966 = vpop.f32.mrb[0].mxu0
        %2967 = vmatprep.mubr.f32.mxu0 0.0
        %2968 = vmatmul.mubr.f32.gmra.mrb[0].mxu0 %v2782
        %v2969 = vpop.f32.mrb[0].mxu0
        %v2970 = vadd.f32 0.0, %v2969
        %v2971 = vpop.f32.mrb[0].mxu0
        %2972 = vmatprep.mubr.f32.mxu0 0.0
        %2973 = vmatmul.mubr.f32.gmra.mrb[0].mxu0 %v2785
        %v2974 = vpop.f32.mrb[0].mxu0
        %v2975 = vadd.f32 0.0, %v2974
        %v2976 = vpop.f32.mrb[0].mxu0
        %2977 = vmatprep.mubr.f32.mxu0 0.0
        %2978 = vmatmul.mubr.f32.gmra.mrb[0].mxu0 %v2788
        %v2979 = vpop.f32.mrb[0].mxu0
        %v2980 = vadd.f32 0.0, %v2979
        %v2981 = vpop.f32.mrb[0].mxu0
        %2982 = vmatprep.mubr.f32.mxu0 0.0
        %2983 = vmatmul.mubr.f32.gmra.mrb[0].mxu0 %v2791
        %v2984 = vpop.f32.mrb[0].mxu0
        %v2985 = vadd.f32 0.0, %v2984
        %v2986 = vpop.f32.mrb[0].mxu0
        %2987 = vmatprep.mubr.f32.mxu0 0.0
        %2988 = vmatmul.mubr.f32.gmra.mrb[0].mxu0 %v2794
        %v2989 = vpop.f32.mrb[0].mxu0
        %v2990 = vadd.f32 0.0, %v2989
        %v2991 = vpop.f32.mrb[0].mxu0
        %2992 = vmatprep.mubr.f32.mxu0 0.0
        %2993 = vmatmul.mubr.f32.gmra.mrb[0].mxu0 %v2797
        %v2994 = vpop.f32.mrb[0].mxu0
        %v2995 = vadd.f32 0.0, %v2994
        %v2996 = vpop.f32.mrb[0].mxu0
        %2997 = vmatprep.mubr.f32.mxu0 0.0
        %2998 = vmatmul.mubr.f32.gmra.mrb[0].mxu0 %v2800
        %v2999 = vpop.f32.mrb[0].mxu0
        %v3000 = vadd.f32 0.0, %v2999
        %v3001 = vpop.f32.mrb[0].mxu0
        %3002 = vmatprep.mubr.f32.mxu0 0.0
        %3003 = vmatmul.mubr.f32.gmra.mrb[0].mxu0 %v2803
        %v3004 = vpop.f32.mrb[0].mxu0
        %v3005 = vadd.f32 0.0, %v3004
        %v3006 = vpop.f32.mrb[0].mxu0
        %3007 = vmatprep.mubr.f32.mxu0 0.0
        %3008 = vmatmul.mubr.f32.gmra.mrb[0].mxu0 %v2806
        %v3009 = vpop.f32.mrb[0].mxu0
        %v3010 = vadd.f32 0.0, %v3009
        %v3011 = vpop.f32.mrb[0].mxu0
        %3012 = vmatprep.mubr.f32.mxu0 0.0
        %3013 = vmatmul.mubr.f32.gmra.mrb[0].mxu0 %v2809
        %v3014 = vpop.f32.mrb[0].mxu0
        %v3015 = vadd.f32 0.0, %v3014
        %v3016 = vpop.f32.mrb[0].mxu0
        %3017 = vmatprep.mubr.f32.mxu0 0.0
        %3018 = vmatmul.mubr.f32.gmra.mrb[0].mxu0 %v2812
        %v3019 = vpop.f32.mrb[0].mxu0
        %v3020 = vadd.f32 0.0, %v3019
        %v3021 = vpop.f32.mrb[0].mxu0
        %3022 = vmatprep.mubr.f32.mxu0 0.0
        %3023 = vmatmul.mubr.f32.gmra.mrb[0].mxu0 %v2815
        %v3024 = vpop.f32.mrb[0].mxu0
        %v3025 = vadd.f32 0.0, %v3024
        %v3026 = vpop.f32.mrb[0].mxu0
        %3027 = vmatprep.mubr.f32.mxu0 0.0
        %3028 = vmatmul.mubr.f32.gmra.mrb[0].mxu0 %v2818
        %v3029 = vpop.f32.mrb[0].mxu0
        %v3030 = vadd.f32 0.0, %v3029
        %v3031 = vpop.f32.mrb[0].mxu0
        %3032 = vmatprep.mubr.f32.mxu0 0.0
        %3033 = vmatmul.mubr.f32.gmra.mrb[0].mxu0 %v2821
        %v3034 = vpop.f32.mrb[0].mxu0
        %v3035 = vadd.f32 0.0, %v3034
        %v3036 = vpop.f32.mrb[0].mxu0
        %3037 = vmatprep.mubr.f32.mxu0 0.0
        %3038 = vmatmul.mubr.f32.gmra.mrb[0].mxu0 %v2824
        %v3039 = vpop.f32.mrb[0].mxu0
        %v3040 = vadd.f32 0.0, %v3039
        %v3041 = vpop.f32.mrb[0].mxu0
        %3042 = vmatprep.mubr.f32.mxu0 0.0
        %3043 = vmatmul.mubr.f32.gmra.mrb[0].mxu0 %v2827
        %v3044 = vpop.f32.mrb[0].mxu0
        %v3045 = vadd.f32 0.0, %v3044
        %v3046 = vpop.f32.mrb[0].mxu0
        %3047 = vmatprep.mubr.f32.mxu0 0.0
        %3048 = vmatmul.mubr.f32.gmra.mrb[0].mxu0 %v2830
        %v3049 = vpop.f32.mrb[0].mxu0
        %v3050 = vadd.f32 0.0, %v3049
        %v3051 = vpop.f32.mrb[0].mxu0
        %3052 = vmatprep.mubr.f32.mxu0 0.0
        %3053 = vmatmul.mubr.f32.gmra.mrb[0].mxu0 %v2833
        %v3054 = vpop.f32.mrb[0].mxu0
        %v3055 = vadd.f32 0.0, %v3054
        %v3056 = vpop.f32.mrb[0].mxu0
        %3057 = vmatprep.mubr.f32.mxu0 0.0
        %3058 = vmatmul.mubr.f32.gmra.mrb[0].mxu0 %v2836
        %v3059 = vpop.f32.mrb[0].mxu0
        %v3060 = vadd.f32 0.0, %v3059
        %v3061 = vpop.f32.mrb[0].mxu0
        %3062 = vdwg.mxu0
        %v3063 = vadd.f32 %v2673, %v2905
        %v3064 = vadd.f32 %v2674, %v2910
        %v3065 = vadd.f32 %v2675, %v2915
        %v3066 = vadd.f32 %v2676, %v2920
        %v3067 = vadd.f32 %v2677, %v2925
        %v3068 = vadd.f32 %v2678, %v2930
        %v3069 = vadd.f32 %v2679, %v2935
        %v3070 = vadd.f32 %v2680, %v2940
        %v3071 = vadd.f32 %v2681, %v2945
        %v3072 = vadd.f32 %v2682, %v2950
        %v3073 = vadd.f32 %v2683, %v2955
        %v3074 = vadd.f32 %v2684, %v2960
        %v3075 = vadd.f32 %v2685, %v2965
        %v3076 = vadd.f32 %v2686, %v2970
        %v3077 = vadd.f32 %v2687, %v2975
        %v3078 = vadd.f32 %v2688, %v2980
        %v3079 = vadd.f32 %v2689, %v2985
        %v3080 = vadd.f32 %v2690, %v2990
        %v3081 = vadd.f32 %v2691, %v2995
        %v3082 = vadd.f32 %v2692, %v3000
        %v3083 = vadd.f32 %v2693, %v3005
        %v3084 = vadd.f32 %v2694, %v3010
        %v3085 = vadd.f32 %v2695, %v3015
        %v3086 = vadd.f32 %v2696, %v3020
        %v3087 = vadd.f32 %v2697, %v3025
        %v3088 = vadd.f32 %v2698, %v3030
        %v3089 = vadd.f32 %v2699, %v3035
        %v3090 = vadd.f32 %v2700, %v3040
        %v3091 = vadd.f32 %v2701, %v3045
        %v3092 = vadd.f32 %v2702, %v3050
        %v3093 = vadd.f32 %v2703, %v3055
        %v3094 = vadd.f32 %v2704, %v3060
        %v3095 = vld [vmem:[#allocation14] sm:$0x1]
        %v3097 = vlaneseq
        %v3098 = vshrl.u32 %v3097, 7
        %v3099 = vsub.s32 0, %v3098
        %v3100 = vrot.slane %v3095, %v3099
        %v3102 = vadd.f32 %v3063, %v3100
        %v3103 = vadd.f32 %v3064, %v3100
        %v3104 = vadd.f32 %v3065, %v3100
        %v3105 = vadd.f32 %v3066, %v3100
        %v3106 = vadd.f32 %v3067, %v3100
        %v3107 = vadd.f32 %v3068, %v3100
        %v3108 = vadd.f32 %v3069, %v3100
        %v3109 = vadd.f32 %v3070, %v3100
        %v3110 = vadd.f32 %v3071, %v3100
        %v3111 = vadd.f32 %v3072, %v3100
        %v3112 = vadd.f32 %v3073, %v3100
        %v3113 = vadd.f32 %v3074, %v3100
        %v3114 = vadd.f32 %v3075, %v3100
        %v3115 = vadd.f32 %v3076, %v3100
        %v3116 = vadd.f32 %v3077, %v3100
        %v3117 = vadd.f32 %v3078, %v3100
        %v3118 = vadd.f32 %v3079, %v3100
        %v3119 = vadd.f32 %v3080, %v3100
        %v3120 = vadd.f32 %v3081, %v3100
        %v3121 = vadd.f32 %v3082, %v3100
        %v3122 = vadd.f32 %v3083, %v3100
        %v3123 = vadd.f32 %v3084, %v3100
        %v3124 = vadd.f32 %v3085, %v3100
        %v3125 = vadd.f32 %v3086, %v3100
        %v3126 = vadd.f32 %v3087, %v3100
        %v3127 = vadd.f32 %v3088, %v3100
        %v3128 = vadd.f32 %v3089, %v3100
        %v3129 = vadd.f32 %v3090, %v3100
        %v3130 = vadd.f32 %v3091, %v3100
        %v3131 = vadd.f32 %v3092, %v3100
        %v3132 = vadd.f32 %v3093, %v3100
        %v3133 = vadd.f32 %v3094, %v3100
        %v3134 = vadd.f32 %v1061, 1.0
        %v3135 = vlaneseq
        %v3136 = vshrl.u32 %v3135, 7
        %v3137 = vsub.s32 0, %v3136
        %v3138 = vrot.slane %v3134, %v3137
        %v3139 = vmul.f32 %v1361, %v3138
        %v3140 = vmul.f32 %v1362, %v3138
        %v3141 = vmul.f32 %v1363, %v3138
        %v3142 = vmul.f32 %v1364, %v3138
        %v3143 = vmul.f32 %v1365, %v3138
        %v3144 = vmul.f32 %v1366, %v3138
        %v3145 = vmul.f32 %v1367, %v3138
        %v3146 = vmul.f32 %v1368, %v3138
        %v3147 = vmul.f32 %v1369, %v3138
        %v3148 = vmul.f32 %v1370, %v3138
        %v3149 = vmul.f32 %v1371, %v3138
        %v3150 = vmul.f32 %v1372, %v3138
        %v3151 = vmul.f32 %v1373, %v3138
        %v3152 = vmul.f32 %v1374, %v3138
        %v3153 = vmul.f32 %v1375, %v3138
        %v3154 = vmul.f32 %v1376, %v3138
        %v3155 = vmul.f32 %v1377, %v3138
        %v3156 = vmul.f32 %v1378, %v3138
        %v3157 = vmul.f32 %v1379, %v3138
        %v3158 = vmul.f32 %v1380, %v3138
        %v3159 = vmul.f32 %v1381, %v3138
        %v3160 = vmul.f32 %v1382, %v3138
        %v3161 = vmul.f32 %v1383, %v3138
        %v3162 = vmul.f32 %v1384, %v3138
        %v3163 = vmul.f32 %v1385, %v3138
        %v3164 = vmul.f32 %v1386, %v3138
        %v3165 = vmul.f32 %v1387, %v3138
        %v3166 = vmul.f32 %v1388, %v3138
        %v3167 = vmul.f32 %v1389, %v3138
        %v3168 = vmul.f32 %v1390, %v3138
        %v3169 = vmul.f32 %v1391, %v3138
        %v3170 = vmul.f32 %v1392, %v3138
        %v3171 = vlaneseq
        %v3172 = vshrl.u32 %v3171, 7
        %v3173 = vsub.s32 0, %v3172
        %v3174 = vrot.slane %v1061, %v3173
        %3176 = vrot.lane.b32.xlu0 %v3174, 96
        %v3177 = vpop.permute.xlu0 %3176
        %v3179 = vadd.f32 %v3139, %v3177
        %v3180 = vadd.f32 %v3140, %v3177
        %v3181 = vadd.f32 %v3141, %v3177
        %v3182 = vadd.f32 %v3142, %v3177
        %v3183 = vadd.f32 %v3143, %v3177
        %v3184 = vadd.f32 %v3144, %v3177
        %v3185 = vadd.f32 %v3145, %v3177
        %v3186 = vadd.f32 %v3146, %v3177
        %v3187 = vadd.f32 %v3147, %v3177
        %v3188 = vadd.f32 %v3148, %v3177
        %v3189 = vadd.f32 %v3149, %v3177
        %v3190 = vadd.f32 %v3150, %v3177
        %v3191 = vadd.f32 %v3151, %v3177
        %v3192 = vadd.f32 %v3152, %v3177
        %v3193 = vadd.f32 %v3153, %v3177
        %v3194 = vadd.f32 %v3154, %v3177
        %v3195 = vadd.f32 %v3155, %v3177
        %v3196 = vadd.f32 %v3156, %v3177
        %v3197 = vadd.f32 %v3157, %v3177
        %v3198 = vadd.f32 %v3158, %v3177
        %v3199 = vadd.f32 %v3159, %v3177
        %v3200 = vadd.f32 %v3160, %v3177
        %v3201 = vadd.f32 %v3161, %v3177
        %v3202 = vadd.f32 %v3162, %v3177
        %v3203 = vadd.f32 %v3163, %v3177
        %v3204 = vadd.f32 %v3164, %v3177
        %v3205 = vadd.f32 %v3165, %v3177
        %v3206 = vadd.f32 %v3166, %v3177
        %v3207 = vadd.f32 %v3167, %v3177
        %v3208 = vadd.f32 %v3168, %v3177
        %v3209 = vadd.f32 %v3169, %v3177
        %v3210 = vadd.f32 %v3170, %v3177
        %vm3211 = vcmp.ge.f32.partialorder %v3179, 0.0
        %vm3212 = vcmp.ge.f32.partialorder %v3180, 0.0
        %vm3213 = vcmp.ge.f32.partialorder %v3181, 0.0
        %vm3214 = vcmp.ge.f32.partialorder %v3182, 0.0
        %vm3215 = vcmp.ge.f32.partialorder %v3183, 0.0
        %vm3216 = vcmp.ge.f32.partialorder %v3184, 0.0
        %vm3217 = vcmp.ge.f32.partialorder %v3185, 0.0
        %vm3218 = vcmp.ge.f32.partialorder %v3186, 0.0
        %vm3219 = vcmp.ge.f32.partialorder %v3187, 0.0
        %vm3220 = vcmp.ge.f32.partialorder %v3188, 0.0
        %vm3221 = vcmp.ge.f32.partialorder %v3189, 0.0
        %vm3222 = vcmp.ge.f32.partialorder %v3190, 0.0
        %vm3223 = vcmp.ge.f32.partialorder %v3191, 0.0
        %vm3224 = vcmp.ge.f32.partialorder %v3192, 0.0
        %vm3225 = vcmp.ge.f32.partialorder %v3193, 0.0
        %vm3226 = vcmp.ge.f32.partialorder %v3194, 0.0
        %vm3227 = vcmp.ge.f32.partialorder %v3195, 0.0
        %vm3228 = vcmp.ge.f32.partialorder %v3196, 0.0
        %vm3229 = vcmp.ge.f32.partialorder %v3197, 0.0
        %vm3230 = vcmp.ge.f32.partialorder %v3198, 0.0
        %vm3231 = vcmp.ge.f32.partialorder %v3199, 0.0
        %vm3232 = vcmp.ge.f32.partialorder %v3200, 0.0
        %vm3233 = vcmp.ge.f32.partialorder %v3201, 0.0
        %vm3234 = vcmp.ge.f32.partialorder %v3202, 0.0
        %vm3235 = vcmp.ge.f32.partialorder %v3203, 0.0
        %vm3236 = vcmp.ge.f32.partialorder %v3204, 0.0
        %vm3237 = vcmp.ge.f32.partialorder %v3205, 0.0
        %vm3238 = vcmp.ge.f32.partialorder %v3206, 0.0
        %vm3239 = vcmp.ge.f32.partialorder %v3207, 0.0
        %vm3240 = vcmp.ge.f32.partialorder %v3208, 0.0
        %vm3241 = vcmp.ge.f32.partialorder %v3209, 0.0
        %vm3242 = vcmp.ge.f32.partialorder %v3210, 0.0
        %v3243 = vmul.f32 %v3179, 0.01
        %v3244 = vmul.f32 %v3180, 0.01
        %v3245 = vmul.f32 %v3181, 0.01
        %v3246 = vmul.f32 %v3182, 0.01
        %v3247 = vmul.f32 %v3183, 0.01
        %v3248 = vmul.f32 %v3184, 0.01
        %v3249 = vmul.f32 %v3185, 0.01
        %v3250 = vmul.f32 %v3186, 0.01
        %v3251 = vmul.f32 %v3187, 0.01
        %v3252 = vmul.f32 %v3188, 0.01
        %v3253 = vmul.f32 %v3189, 0.01
        %v3254 = vmul.f32 %v3190, 0.01
        %v3255 = vmul.f32 %v3191, 0.01
        %v3256 = vmul.f32 %v3192, 0.01
        %v3257 = vmul.f32 %v3193, 0.01
        %v3258 = vmul.f32 %v3194, 0.01
        %v3259 = vmul.f32 %v3195, 0.01
        %v3260 = vmul.f32 %v3196, 0.01
        %v3261 = vmul.f32 %v3197, 0.01
        %v3262 = vmul.f32 %v3198, 0.01
        %v3263 = vmul.f32 %v3199, 0.01
        %v3264 = vmul.f32 %v3200, 0.01
        %v3265 = vmul.f32 %v3201, 0.01
        %v3266 = vmul.f32 %v3202, 0.01
        %v3267 = vmul.f32 %v3203, 0.01
        %v3268 = vmul.f32 %v3204, 0.01
        %v3269 = vmul.f32 %v3205, 0.01
        %v3270 = vmul.f32 %v3206, 0.01
        %v3271 = vmul.f32 %v3207, 0.01
        %v3272 = vmul.f32 %v3208, 0.01
        %v3273 = vmul.f32 %v3209, 0.01
        %v3274 = vmul.f32 %v3210, 0.01
        %v3275 = vsel %vm3211, %v3179, %v3243
        %v3276 = vsel %vm3212, %v3180, %v3244
        %v3277 = vsel %vm3213, %v3181, %v3245
        %v3278 = vsel %vm3214, %v3182, %v3246
        %v3279 = vsel %vm3215, %v3183, %v3247
        %v3280 = vsel %vm3216, %v3184, %v3248
        %v3281 = vsel %vm3217, %v3185, %v3249
        %v3282 = vsel %vm3218, %v3186, %v3250
        %v3283 = vsel %vm3219, %v3187, %v3251
        %v3284 = vsel %vm3220, %v3188, %v3252
        %v3285 = vsel %vm3221, %v3189, %v3253
        %v3286 = vsel %vm3222, %v3190, %v3254
        %v3287 = vsel %vm3223, %v3191, %v3255
        %v3288 = vsel %vm3224, %v3192, %v3256
        %v3289 = vsel %vm3225, %v3193, %v3257
        %v3290 = vsel %vm3226, %v3194, %v3258
        %v3291 = vsel %vm3227, %v3195, %v3259
        %v3292 = vsel %vm3228, %v3196, %v3260
        %v3293 = vsel %vm3229, %v3197, %v3261
        %v3294 = vsel %vm3230, %v3198, %v3262
        %v3295 = vsel %vm3231, %v3199, %v3263
        %v3296 = vsel %vm3232, %v3200, %v3264
        %v3297 = vsel %vm3233, %v3201, %v3265
        %v3298 = vsel %vm3234, %v3202, %v3266
        %v3299 = vsel %vm3235, %v3203, %v3267
        %v3300 = vsel %vm3236, %v3204, %v3268
        %v3301 = vsel %vm3237, %v3205, %v3269
        %v3302 = vsel %vm3238, %v3206, %v3270
        %v3303 = vsel %vm3239, %v3207, %v3271
        %v3304 = vsel %vm3240, %v3208, %v3272
        %v3305 = vsel %vm3241, %v3209, %v3273
        %v3306 = vsel %vm3242, %v3210, %v3274
        %3307 = vst.msk [vmem:[%s1566 + $0x1] sm:$0xff] %vm643, %v3275
        %3308 = vst.msk [vmem:[%s1566 + $0x9] sm:$0xff] %vm643, %v3276
        %3309 = vst.msk [vmem:[%s1566 + $0x19] sm:$0xff] %vm643, %v3277
        %3310 = vst.msk [vmem:[%s1566 + $0x21] sm:$0xff] %vm643, %v3278
        %3311 = vst.msk [vmem:[%s1566 + $0x31] sm:$0xff] %vm643, %v3279
        %3312 = vst.msk [vmem:[%s1566 + $0x39] sm:$0xff] %vm643, %v3280
        %3313 = vst.msk [vmem:[%s1566 + $0x49] sm:$0xff] %vm643, %v3281
        %3314 = vst.msk [vmem:[%s1566 + $0x51] sm:$0xff] %vm643, %v3282
        %3315 = vst.msk [vmem:[%s1566 + $0x61] sm:$0xff] %vm643, %v3283
        %3316 = vst.msk [vmem:[%s1566 + $0x69] sm:$0xff] %vm643, %v3284
        %3317 = vst.msk [vmem:[%s1566 + $0x79] sm:$0xff] %vm643, %v3285
        %3318 = vst.msk [vmem:[%s1566 + $0x81] sm:$0xff] %vm643, %v3286
        %3319 = vst.msk [vmem:[%s1566 + $0x91] sm:$0xff] %vm643, %v3287
        %3320 = vst.msk [vmem:[%s1566 + $0x99] sm:$0xff] %vm643, %v3288
        %3321 = vst.msk [vmem:[%s1566 + $0xa9] sm:$0xff] %vm643, %v3289
        %3322 = vst.msk [vmem:[%s1566 + $0xb1] sm:$0xff] %vm643, %v3290
        %3323 = vst.msk [vmem:[%s1566 + $0xc1] sm:$0xff] %vm643, %v3291
        %3324 = vst.msk [vmem:[%s1566 + $0xc9] sm:$0xff] %vm643, %v3292
        %3325 = vst.msk [vmem:[%s1566 + $0xd9] sm:$0xff] %vm643, %v3293
        %3326 = vst.msk [vmem:[%s1566 + $0xe1] sm:$0xff] %vm643, %v3294
        %3327 = vst.msk [vmem:[%s1566 + $0xf1] sm:$0xff] %vm643, %v3295
        %3328 = vst.msk [vmem:[%s1566 + $0xf9] sm:$0xff] %vm643, %v3296
        %3329 = vst.msk [vmem:[%s1566 + $0x109] sm:$0xff] %vm643, %v3297
        %3330 = vst.msk [vmem:[%s1566 + $0x111] sm:$0xff] %vm643, %v3298
        %3331 = vst.msk [vmem:[%s1566 + $0x121] sm:$0xff] %vm643, %v3299
        %3332 = vst.msk [vmem:[%s1566 + $0x129] sm:$0xff] %vm643, %v3300
        %3333 = vst.msk [vmem:[%s1566 + $0x139] sm:$0xff] %vm643, %v3301
        %3334 = vst.msk [vmem:[%s1566 + $0x141] sm:$0xff] %vm643, %v3302
        %3335 = vst.msk [vmem:[%s1566 + $0x151] sm:$0xff] %vm643, %v3303
        %3336 = vst.msk [vmem:[%s1566 + $0x159] sm:$0xff] %vm643, %v3304
        %3337 = vst.msk [vmem:[%s1566 + $0x169] sm:$0xff] %vm643, %v3305
        %3338 = vst.msk [vmem:[%s1566 + $0x171] sm:$0xff] %vm643, %v3306
        %v3339 = vld [vmem:[#allocation2] sm:$0xff]
        %v3340 = vld [vmem:[#allocation2 + $0x8] sm:$0xff]
        %v3341 = vld [vmem:[#allocation2 + $0x18] sm:$0xff]
        %v3342 = vld [vmem:[#allocation2 + $0x20] sm:$0xff]
        %v3343 = vld [vmem:[#allocation2 + $0x30] sm:$0xff]
        %v3344 = vld [vmem:[#allocation2 + $0x38] sm:$0xff]
        %v3345 = vld [vmem:[#allocation2 + $0x48] sm:$0xff]
        %v3346 = vld [vmem:[#allocation2 + $0x50] sm:$0xff]
        %v3347 = vld [vmem:[#allocation2 + $0x60] sm:$0xff]
        %v3348 = vld [vmem:[#allocation2 + $0x68] sm:$0xff]
        %v3349 = vld [vmem:[#allocation2 + $0x78] sm:$0xff]
        %v3350 = vld [vmem:[#allocation2 + $0x80] sm:$0xff]
        %v3351 = vld [vmem:[#allocation2 + $0x90] sm:$0xff]
        %v3352 = vld [vmem:[#allocation2 + $0x98] sm:$0xff]
        %v3353 = vld [vmem:[#allocation2 + $0xa8] sm:$0xff]
        %v3354 = vld [vmem:[#allocation2 + $0xb0] sm:$0xff]
        %v3355 = vld [vmem:[#allocation2 + $0xc0] sm:$0xff]
        %v3356 = vld [vmem:[#allocation2 + $0xc8] sm:$0xff]
        %v3357 = vld [vmem:[#allocation2 + $0xd8] sm:$0xff]
        %v3358 = vld [vmem:[#allocation2 + $0xe0] sm:$0xff]
        %v3359 = vld [vmem:[#allocation2 + $0xf0] sm:$0xff]
        %v3360 = vld [vmem:[#allocation2 + $0xf8] sm:$0xff]
        %v3361 = vld [vmem:[#allocation2 + $0x108] sm:$0xff]
        %v3362 = vld [vmem:[#allocation2 + $0x110] sm:$0xff]
        %v3363 = vld [vmem:[#allocation2 + $0x120] sm:$0xff]
        %v3364 = vld [vmem:[#allocation2 + $0x128] sm:$0xff]
        %v3365 = vld [vmem:[#allocation2 + $0x138] sm:$0xff]
        %v3366 = vld [vmem:[#allocation2 + $0x140] sm:$0xff]
        %v3367 = vld [vmem:[#allocation2 + $0x150] sm:$0xff]
        %v3368 = vld [vmem:[#allocation2 + $0x158] sm:$0xff]
        %v3369 = vld [vmem:[#allocation2 + $0x168] sm:$0xff]
        %v3370 = vld [vmem:[#allocation2 + $0x170] sm:$0xff]
        %v3371 = vld [vmem:[#allocation7] sm:$0xff]
        %v3372 = vld [vmem:[#allocation7 + $0x8] sm:$0xff]
        %v3373 = vld [vmem:[#allocation7 + $0x10] sm:$0xff]
        %v3374 = vld [vmem:[#allocation7 + $0x18] sm:$0xff]
        %v3375 = vld [vmem:[#allocation2 + $0x1] sm:$0xff]
        %v3376 = vld [vmem:[#allocation2 + $0x9] sm:$0xff]
        %v3377 = vld [vmem:[#allocation2 + $0x19] sm:$0xff]
        %v3378 = vld [vmem:[#allocation2 + $0x21] sm:$0xff]
        %v3379 = vld [vmem:[#allocation2 + $0x31] sm:$0xff]
        %v3380 = vld [vmem:[#allocation2 + $0x39] sm:$0xff]
        %v3381 = vld [vmem:[#allocation2 + $0x49] sm:$0xff]
        %v3382 = vld [vmem:[#allocation2 + $0x51] sm:$0xff]
        %v3383 = vld [vmem:[#allocation2 + $0x61] sm:$0xff]
        %v3384 = vld [vmem:[#allocation2 + $0x69] sm:$0xff]
        %v3385 = vld [vmem:[#allocation2 + $0x79] sm:$0xff]
        %v3386 = vld [vmem:[#allocation2 + $0x81] sm:$0xff]
        %v3387 = vld [vmem:[#allocation2 + $0x91] sm:$0xff]
        %v3388 = vld [vmem:[#allocation2 + $0x99] sm:$0xff]
        %v3389 = vld [vmem:[#allocation2 + $0xa9] sm:$0xff]
        %v3390 = vld [vmem:[#allocation2 + $0xb1] sm:$0xff]
        %v3391 = vld [vmem:[#allocation2 + $0xc1] sm:$0xff]
        %v3392 = vld [vmem:[#allocation2 + $0xc9] sm:$0xff]
        %v3393 = vld [vmem:[#allocation2 + $0xd9] sm:$0xff]
        %v3394 = vld [vmem:[#allocation2 + $0xe1] sm:$0xff]
        %v3395 = vld [vmem:[#allocation2 + $0xf1] sm:$0xff]
        %v3396 = vld [vmem:[#allocation2 + $0xf9] sm:$0xff]
        %v3397 = vld [vmem:[#allocation2 + $0x109] sm:$0xff]
        %v3398 = vld [vmem:[#allocation2 + $0x111] sm:$0xff]
        %v3399 = vld [vmem:[#allocation2 + $0x121] sm:$0xff]
        %v3400 = vld [vmem:[#allocation2 + $0x129] sm:$0xff]
        %v3401 = vld [vmem:[#allocation2 + $0x139] sm:$0xff]
        %v3402 = vld [vmem:[#allocation2 + $0x141] sm:$0xff]
        %v3403 = vld [vmem:[#allocation2 + $0x151] sm:$0xff]
        %v3404 = vld [vmem:[#allocation2 + $0x159] sm:$0xff]
        %v3405 = vld [vmem:[#allocation2 + $0x169] sm:$0xff]
        %v3406 = vld [vmem:[#allocation2 + $0x171] sm:$0xff]
        %s3407 = scalar_lea.vmem [#allocation7], 32
        %v3408 = vld [vmem:[%s3407] sm:$0xff]
        %v3409 = vld [vmem:[%s3407 + $0x8] sm:$0xff]
        %v3410 = vld [vmem:[%s3407 + $0x10] sm:$0xff]
        %v3411 = vld [vmem:[%s3407 + $0x18] sm:$0xff]
        %v3413 = vsel %vm643, %v3375, 0
        %v3416 = vsel %vm643, %v3376, 0
        %v3419 = vsel %vm643, %v3377, 0
        %v3422 = vsel %vm643, %v3378, 0
        %v3425 = vsel %vm643, %v3379, 0
        %v3428 = vsel %vm643, %v3380, 0
        %v3431 = vsel %vm643, %v3381, 0
        %v3434 = vsel %vm643, %v3382, 0
        %v3437 = vsel %vm643, %v3383, 0
        %v3440 = vsel %vm643, %v3384, 0
        %v3443 = vsel %vm643, %v3385, 0
        %v3446 = vsel %vm643, %v3386, 0
        %v3449 = vsel %vm643, %v3387, 0
        %v3452 = vsel %vm643, %v3388, 0
        %v3455 = vsel %vm643, %v3389, 0
        %v3458 = vsel %vm643, %v3390, 0
        %v3461 = vsel %vm643, %v3391, 0
        %v3464 = vsel %vm643, %v3392, 0
        %v3467 = vsel %vm643, %v3393, 0
        %v3470 = vsel %vm643, %v3394, 0
        %v3473 = vsel %vm643, %v3395, 0
        %v3476 = vsel %vm643, %v3396, 0
        %v3479 = vsel %vm643, %v3397, 0
        %v3482 = vsel %vm643, %v3398, 0
        %v3485 = vsel %vm643, %v3399, 0
        %v3488 = vsel %vm643, %v3400, 0
        %v3491 = vsel %vm643, %v3401, 0
        %v3494 = vsel %vm643, %v3402, 0
        %v3497 = vsel %vm643, %v3403, 0
        %v3500 = vsel %vm643, %v3404, 0
        %v3503 = vsel %vm643, %v3405, 0
        %v3506 = vsel %vm643, %v3406, 0
        %3508 = vmatprep.subr.mxu0 0.0
        %3509 = vmatpush1.msra.mxu0 %v3408
        %3510 = vmatprep.subr.mxu0 0.0
        %3511 = vmatpush1.msra.mxu0 %v3409
        %3512 = vmatprep.subr.mxu0 0.0
        %3513 = vmatpush1.msra.mxu0 %v3410
        %3514 = vmatprep.subr.mxu0 0.0
        %3515 = vmatpush1.msra.mxu0 %v3411
        %3516 = vmatprep.subr.mxu0 0.0
        %3517 = vmatpush1.msra.mxu0 0.0
        %3518 = vmatprep.subr.mxu0 0.0
        %3519 = vmatpush1.msra.mxu0 0.0
        %3520 = vmatprep.subr.mxu0 0.0
        %3521 = vmatpush1.msra.mxu0 0.0
        %3522 = vmatprep.subr.mxu0 0.0
        %3523 = vmatpush1.msra.mxu0 0.0
        %3524 = vmatprep.subr.mxu0 0.0
        %3525 = vmatpush1.msra.mxu0 0.0
        %3526 = vmatprep.subr.mxu0 0.0
        %3527 = vmatpush1.msra.mxu0 0.0
        %3528 = vmatprep.subr.mxu0 0.0
        %3529 = vmatpush1.msra.mxu0 0.0
        %3530 = vmatprep.subr.mxu0 0.0
        %3531 = vmatpush1.msra.mxu0 0.0
        %3532 = vmatprep.subr.mxu0 0.0
        %3533 = vmatpush1.msra.mxu0 0.0
        %3534 = vmatprep.subr.mxu0 0.0
        %3535 = vmatpush1.msra.mxu0 0.0
        %3536 = vmatprep.subr.mxu0 0.0
        %3537 = vmatpush1.msra.mxu0 0.0
        %3538 = vmatprep.subr.mxu0 0.0
        %3539 = vmatpush1.msra.mxu0 0.0
        %3540 = vmatprep.subr.mxu0 0.0
        %3541 = vmatpush1.msra.mxu0 0.0
        %3542 = vmatprep.subr.mxu0 0.0
        %3543 = vmatpush1.msra.mxu0 0.0
        %3544 = vmatprep.subr.mxu0 0.0
        %3545 = vmatpush1.msra.mxu0 0.0
        %3546 = vmatprep.subr.mxu0 0.0
        %3547 = vmatpush1.msra.mxu0 0.0
        %3548 = vmatprep.subr.mxu0 0.0
        %3549 = vmatpush1.msra.mxu0 0.0
        %3550 = vmatprep.subr.mxu0 0.0
        %3551 = vmatpush1.msra.mxu0 0.0
        %3552 = vmatprep.subr.mxu0 0.0
        %3553 = vmatpush1.msra.mxu0 0.0
        %3554 = vmatprep.subr.mxu0 0.0
        %3555 = vmatpush1.msra.mxu0 0.0
        %3556 = vmatprep.subr.mxu0 0.0
        %3557 = vmatpush1.msra.mxu0 0.0
        %3558 = vmatprep.subr.mxu0 0.0
        %3559 = vmatpush1.msra.mxu0 0.0
        %3560 = vmatprep.subr.mxu0 0.0
        %3561 = vmatpush1.msra.mxu0 0.0
        %3562 = vmatprep.subr.mxu0 0.0
        %3563 = vmatpush1.msra.mxu0 0.0
        %3564 = vmatprep.subr.mxu0 0.0
        %3565 = vmatpush1.msra.mxu0 0.0
        %3566 = vmatprep.subr.mxu0 0.0
        %3567 = vmatpush1.msra.mxu0 0.0
        %3568 = vmatprep.subr.mxu0 0.0
        %3569 = vmatpush1.msra.mxu0 0.0
        %3570 = vmatprep.subr.mxu0 0.0
        %3571 = vmatpush1.msra.mxu0 0.0
        %3572 = vmatprep.mubr.f32.mxu0 0.0
        %3573 = vmatmul.mubr.f32.gmra.mrb[0].mxu0 %v3413
        %v3574 = vpop.f32.mrb[0].mxu0
        %v3575 = vadd.f32 0.0, %v3574
        %v3576 = vpop.f32.mrb[0].mxu0
        %3577 = vmatprep.mubr.f32.mxu0 0.0
        %3578 = vmatmul.mubr.f32.gmra.mrb[0].mxu0 %v3416
        %v3579 = vpop.f32.mrb[0].mxu0
        %v3580 = vadd.f32 0.0, %v3579
        %v3581 = vpop.f32.mrb[0].mxu0
        %3582 = vmatprep.mubr.f32.mxu0 0.0
        %3583 = vmatmul.mubr.f32.gmra.mrb[0].mxu0 %v3419
        %v3584 = vpop.f32.mrb[0].mxu0
        %v3585 = vadd.f32 0.0, %v3584
        %v3586 = vpop.f32.mrb[0].mxu0
        %3587 = vmatprep.mubr.f32.mxu0 0.0
        %3588 = vmatmul.mubr.f32.gmra.mrb[0].mxu0 %v3422
        %v3589 = vpop.f32.mrb[0].mxu0
        %v3590 = vadd.f32 0.0, %v3589
        %v3591 = vpop.f32.mrb[0].mxu0
        %3592 = vmatprep.mubr.f32.mxu0 0.0
        %3593 = vmatmul.mubr.f32.gmra.mrb[0].mxu0 %v3425
        %v3594 = vpop.f32.mrb[0].mxu0
        %v3595 = vadd.f32 0.0, %v3594
        %v3596 = vpop.f32.mrb[0].mxu0
        %3597 = vmatprep.mubr.f32.mxu0 0.0
        %3598 = vmatmul.mubr.f32.gmra.mrb[0].mxu0 %v3428
        %v3599 = vpop.f32.mrb[0].mxu0
        %v3600 = vadd.f32 0.0, %v3599
        %v3601 = vpop.f32.mrb[0].mxu0
        %3602 = vmatprep.mubr.f32.mxu0 0.0
        %3603 = vmatmul.mubr.f32.gmra.mrb[0].mxu0 %v3431
        %v3604 = vpop.f32.mrb[0].mxu0
        %v3605 = vadd.f32 0.0, %v3604
        %v3606 = vpop.f32.mrb[0].mxu0
        %3607 = vmatprep.mubr.f32.mxu0 0.0
        %3608 = vmatmul.mubr.f32.gmra.mrb[0].mxu0 %v3434
        %v3609 = vpop.f32.mrb[0].mxu0
        %v3610 = vadd.f32 0.0, %v3609
        %v3611 = vpop.f32.mrb[0].mxu0
        %3612 = vmatprep.mubr.f32.mxu0 0.0
        %3613 = vmatmul.mubr.f32.gmra.mrb[0].mxu0 %v3437
        %v3614 = vpop.f32.mrb[0].mxu0
        %v3615 = vadd.f32 0.0, %v3614
        %v3616 = vpop.f32.mrb[0].mxu0
        %3617 = vmatprep.mubr.f32.mxu0 0.0
        %3618 = vmatmul.mubr.f32.gmra.mrb[0].mxu0 %v3440
        %v3619 = vpop.f32.mrb[0].mxu0
        %v3620 = vadd.f32 0.0, %v3619
        %v3621 = vpop.f32.mrb[0].mxu0
        %3622 = vmatprep.mubr.f32.mxu0 0.0
        %3623 = vmatmul.mubr.f32.gmra.mrb[0].mxu0 %v3443
        %v3624 = vpop.f32.mrb[0].mxu0
        %v3625 = vadd.f32 0.0, %v3624
        %v3626 = vpop.f32.mrb[0].mxu0
        %3627 = vmatprep.mubr.f32.mxu0 0.0
        %3628 = vmatmul.mubr.f32.gmra.mrb[0].mxu0 %v3446
        %v3629 = vpop.f32.mrb[0].mxu0
        %v3630 = vadd.f32 0.0, %v3629
        %v3631 = vpop.f32.mrb[0].mxu0
        %3632 = vmatprep.mubr.f32.mxu0 0.0
        %3633 = vmatmul.mubr.f32.gmra.mrb[0].mxu0 %v3449
        %v3634 = vpop.f32.mrb[0].mxu0
        %v3635 = vadd.f32 0.0, %v3634
        %v3636 = vpop.f32.mrb[0].mxu0
        %3637 = vmatprep.mubr.f32.mxu0 0.0
        %3638 = vmatmul.mubr.f32.gmra.mrb[0].mxu0 %v3452
        %v3639 = vpop.f32.mrb[0].mxu0
        %v3640 = vadd.f32 0.0, %v3639
        %v3641 = vpop.f32.mrb[0].mxu0
        %3642 = vmatprep.mubr.f32.mxu0 0.0
        %3643 = vmatmul.mubr.f32.gmra.mrb[0].mxu0 %v3455
        %v3644 = vpop.f32.mrb[0].mxu0
        %v3645 = vadd.f32 0.0, %v3644
        %v3646 = vpop.f32.mrb[0].mxu0
        %3647 = vmatprep.mubr.f32.mxu0 0.0
        %3648 = vmatmul.mubr.f32.gmra.mrb[0].mxu0 %v3458
        %v3649 = vpop.f32.mrb[0].mxu0
        %v3650 = vadd.f32 0.0, %v3649
        %v3651 = vpop.f32.mrb[0].mxu0
        %3652 = vmatprep.mubr.f32.mxu0 0.0
        %3653 = vmatmul.mubr.f32.gmra.mrb[0].mxu0 %v3461
        %v3654 = vpop.f32.mrb[0].mxu0
        %v3655 = vadd.f32 0.0, %v3654
        %v3656 = vpop.f32.mrb[0].mxu0
        %3657 = vmatprep.mubr.f32.mxu0 0.0
        %3658 = vmatmul.mubr.f32.gmra.mrb[0].mxu0 %v3464
        %v3659 = vpop.f32.mrb[0].mxu0
        %v3660 = vadd.f32 0.0, %v3659
        %v3661 = vpop.f32.mrb[0].mxu0
        %3662 = vmatprep.mubr.f32.mxu0 0.0
        %3663 = vmatmul.mubr.f32.gmra.mrb[0].mxu0 %v3467
        %v3664 = vpop.f32.mrb[0].mxu0
        %v3665 = vadd.f32 0.0, %v3664
        %v3666 = vpop.f32.mrb[0].mxu0
        %3667 = vmatprep.mubr.f32.mxu0 0.0
        %3668 = vmatmul.mubr.f32.gmra.mrb[0].mxu0 %v3470
        %v3669 = vpop.f32.mrb[0].mxu0
        %v3670 = vadd.f32 0.0, %v3669
        %v3671 = vpop.f32.mrb[0].mxu0
        %3672 = vmatprep.mubr.f32.mxu0 0.0
        %3673 = vmatmul.mubr.f32.gmra.mrb[0].mxu0 %v3473
        %v3674 = vpop.f32.mrb[0].mxu0
        %v3675 = vadd.f32 0.0, %v3674
        %v3676 = vpop.f32.mrb[0].mxu0
        %3677 = vmatprep.mubr.f32.mxu0 0.0
        %3678 = vmatmul.mubr.f32.gmra.mrb[0].mxu0 %v3476
        %v3679 = vpop.f32.mrb[0].mxu0
        %v3680 = vadd.f32 0.0, %v3679
        %v3681 = vpop.f32.mrb[0].mxu0
        %3682 = vmatprep.mubr.f32.mxu0 0.0
        %3683 = vmatmul.mubr.f32.gmra.mrb[0].mxu0 %v3479
        %v3684 = vpop.f32.mrb[0].mxu0
        %v3685 = vadd.f32 0.0, %v3684
        %v3686 = vpop.f32.mrb[0].mxu0
        %3687 = vmatprep.mubr.f32.mxu0 0.0
        %3688 = vmatmul.mubr.f32.gmra.mrb[0].mxu0 %v3482
        %v3689 = vpop.f32.mrb[0].mxu0
        %v3690 = vadd.f32 0.0, %v3689
        %v3691 = vpop.f32.mrb[0].mxu0
        %3692 = vmatprep.mubr.f32.mxu0 0.0
        %3693 = vmatmul.mubr.f32.gmra.mrb[0].mxu0 %v3485
        %v3694 = vpop.f32.mrb[0].mxu0
        %v3695 = vadd.f32 0.0, %v3694
        %v3696 = vpop.f32.mrb[0].mxu0
        %3697 = vmatprep.mubr.f32.mxu0 0.0
        %3698 = vmatmul.mubr.f32.gmra.mrb[0].mxu0 %v3488
        %v3699 = vpop.f32.mrb[0].mxu0
        %v3700 = vadd.f32 0.0, %v3699
        %v3701 = vpop.f32.mrb[0].mxu0
        %3702 = vmatprep.mubr.f32.mxu0 0.0
        %3703 = vmatmul.mubr.f32.gmra.mrb[0].mxu0 %v3491
        %v3704 = vpop.f32.mrb[0].mxu0
        %v3705 = vadd.f32 0.0, %v3704
        %v3706 = vpop.f32.mrb[0].mxu0
        %3707 = vmatprep.mubr.f32.mxu0 0.0
        %3708 = vmatmul.mubr.f32.gmra.mrb[0].mxu0 %v3494
        %v3709 = vpop.f32.mrb[0].mxu0
        %v3710 = vadd.f32 0.0, %v3709
        %v3711 = vpop.f32.mrb[0].mxu0
        %3712 = vmatprep.mubr.f32.mxu0 0.0
        %3713 = vmatmul.mubr.f32.gmra.mrb[0].mxu0 %v3497
        %v3714 = vpop.f32.mrb[0].mxu0
        %v3715 = vadd.f32 0.0, %v3714
        %v3716 = vpop.f32.mrb[0].mxu0
        %3717 = vmatprep.mubr.f32.mxu0 0.0
        %3718 = vmatmul.mubr.f32.gmra.mrb[0].mxu0 %v3500
        %v3719 = vpop.f32.mrb[0].mxu0
        %v3720 = vadd.f32 0.0, %v3719
        %v3721 = vpop.f32.mrb[0].mxu0
        %3722 = vmatprep.mubr.f32.mxu0 0.0
        %3723 = vmatmul.mubr.f32.gmra.mrb[0].mxu0 %v3503
        %v3724 = vpop.f32.mrb[0].mxu0
        %v3725 = vadd.f32 0.0, %v3724
        %v3726 = vpop.f32.mrb[0].mxu0
        %3727 = vmatprep.mubr.f32.mxu0 0.0
        %3728 = vmatmul.mubr.f32.gmra.mrb[0].mxu0 %v3506
        %v3729 = vpop.f32.mrb[0].mxu0
        %v3730 = vadd.f32 0.0, %v3729
        %v3731 = vpop.f32.mrb[0].mxu0
        %3732 = vdwg.mxu0
        %v3734 = vsel %vm643, %v3339, 0
        %v3737 = vsel %vm643, %v3340, 0
        %v3740 = vsel %vm643, %v3341, 0
        %v3743 = vsel %vm643, %v3342, 0
        %v3746 = vsel %vm643, %v3343, 0
        %v3749 = vsel %vm643, %v3344, 0
        %v3752 = vsel %vm643, %v3345, 0
        %v3755 = vsel %vm643, %v3346, 0
        %v3758 = vsel %vm643, %v3347, 0
        %v3761 = vsel %vm643, %v3348, 0
        %v3764 = vsel %vm643, %v3349, 0
        %v3767 = vsel %vm643, %v3350, 0
        %v3770 = vsel %vm643, %v3351, 0
        %v3773 = vsel %vm643, %v3352, 0
        %v3776 = vsel %vm643, %v3353, 0
        %v3779 = vsel %vm643, %v3354, 0
        %v3782 = vsel %vm643, %v3355, 0
        %v3785 = vsel %vm643, %v3356, 0
        %v3788 = vsel %vm643, %v3357, 0
        %v3791 = vsel %vm643, %v3358, 0
        %v3794 = vsel %vm643, %v3359, 0
        %v3797 = vsel %vm643, %v3360, 0
        %v3800 = vsel %vm643, %v3361, 0
        %v3803 = vsel %vm643, %v3362, 0
        %v3806 = vsel %vm643, %v3363, 0
        %v3809 = vsel %vm643, %v3364, 0
        %v3812 = vsel %vm643, %v3365, 0
        %v3815 = vsel %vm643, %v3366, 0
        %v3818 = vsel %vm643, %v3367, 0
        %v3821 = vsel %vm643, %v3368, 0
        %v3824 = vsel %vm643, %v3369, 0
        %v3827 = vsel %vm643, %v3370, 0
        %3829 = vmatprep.subr.mxu0 0.0
        %3830 = vmatpush1.msra.mxu0 %v3371
        %3831 = vmatprep.subr.mxu0 0.0
        %3832 = vmatpush1.msra.mxu0 %v3372
        %3833 = vmatprep.subr.mxu0 0.0
        %3834 = vmatpush1.msra.mxu0 %v3373
        %3835 = vmatprep.subr.mxu0 0.0
        %3836 = vmatpush1.msra.mxu0 %v3374
        %3837 = vmatprep.subr.mxu0 0.0
        %3838 = vmatpush1.msra.mxu0 0.0
        %3839 = vmatprep.subr.mxu0 0.0
        %3840 = vmatpush1.msra.mxu0 0.0
        %3841 = vmatprep.subr.mxu0 0.0
        %3842 = vmatpush1.msra.mxu0 0.0
        %3843 = vmatprep.subr.mxu0 0.0
        %3844 = vmatpush1.msra.mxu0 0.0
        %3845 = vmatprep.subr.mxu0 0.0
        %3846 = vmatpush1.msra.mxu0 0.0
        %3847 = vmatprep.subr.mxu0 0.0
        %3848 = vmatpush1.msra.mxu0 0.0
        %3849 = vmatprep.subr.mxu0 0.0
        %3850 = vmatpush1.msra.mxu0 0.0
        %3851 = vmatprep.subr.mxu0 0.0
        %3852 = vmatpush1.msra.mxu0 0.0
        %3853 = vmatprep.subr.mxu0 0.0
        %3854 = vmatpush1.msra.mxu0 0.0
        %3855 = vmatprep.subr.mxu0 0.0
        %3856 = vmatpush1.msra.mxu0 0.0
        %3857 = vmatprep.subr.mxu0 0.0
        %3858 = vmatpush1.msra.mxu0 0.0
        %3859 = vmatprep.subr.mxu0 0.0
        %3860 = vmatpush1.msra.mxu0 0.0
        %3861 = vmatprep.subr.mxu0 0.0
        %3862 = vmatpush1.msra.mxu0 0.0
        %3863 = vmatprep.subr.mxu0 0.0
        %3864 = vmatpush1.msra.mxu0 0.0
        %3865 = vmatprep.subr.mxu0 0.0
        %3866 = vmatpush1.msra.mxu0 0.0
        %3867 = vmatprep.subr.mxu0 0.0
        %3868 = vmatpush1.msra.mxu0 0.0
        %3869 = vmatprep.subr.mxu0 0.0
        %3870 = vmatpush1.msra.mxu0 0.0
        %3871 = vmatprep.subr.mxu0 0.0
        %3872 = vmatpush1.msra.mxu0 0.0
        %3873 = vmatprep.subr.mxu0 0.0
        %3874 = vmatpush1.msra.mxu0 0.0
        %3875 = vmatprep.subr.mxu0 0.0
        %3876 = vmatpush1.msra.mxu0 0.0
        %3877 = vmatprep.subr.mxu0 0.0
        %3878 = vmatpush1.msra.mxu0 0.0
        %3879 = vmatprep.subr.mxu0 0.0
        %3880 = vmatpush1.msra.mxu0 0.0
        %3881 = vmatprep.subr.mxu0 0.0
        %3882 = vmatpush1.msra.mxu0 0.0
        %3883 = vmatprep.subr.mxu0 0.0
        %3884 = vmatpush1.msra.mxu0 0.0
        %3885 = vmatprep.subr.mxu0 0.0
        %3886 = vmatpush1.msra.mxu0 0.0
        %3887 = vmatprep.subr.mxu0 0.0
        %3888 = vmatpush1.msra.mxu0 0.0
        %3889 = vmatprep.subr.mxu0 0.0
        %3890 = vmatpush1.msra.mxu0 0.0
        %3891 = vmatprep.subr.mxu0 0.0
        %3892 = vmatpush1.msra.mxu0 0.0
        %3893 = vmatprep.mubr.f32.mxu0 0.0
        %3894 = vmatmul.mubr.f32.gmra.mrb[0].mxu0 %v3734
        %v3895 = vpop.f32.mrb[0].mxu0
        %v3896 = vadd.f32 %v3575, %v3895
        %v3897 = vpop.f32.mrb[0].mxu0
        %3898 = vmatprep.mubr.f32.mxu0 0.0
        %3899 = vmatmul.mubr.f32.gmra.mrb[0].mxu0 %v3737
        %v3900 = vpop.f32.mrb[0].mxu0
        %v3901 = vadd.f32 %v3580, %v3900
        %v3902 = vpop.f32.mrb[0].mxu0
        %3903 = vmatprep.mubr.f32.mxu0 0.0
        %3904 = vmatmul.mubr.f32.gmra.mrb[0].mxu0 %v3740
        %v3905 = vpop.f32.mrb[0].mxu0
        %v3906 = vadd.f32 %v3585, %v3905
        %v3907 = vpop.f32.mrb[0].mxu0
        %3908 = vmatprep.mubr.f32.mxu0 0.0
        %3909 = vmatmul.mubr.f32.gmra.mrb[0].mxu0 %v3743
        %v3910 = vpop.f32.mrb[0].mxu0
        %v3911 = vadd.f32 %v3590, %v3910
        %v3912 = vpop.f32.mrb[0].mxu0
        %3913 = vmatprep.mubr.f32.mxu0 0.0
        %3914 = vmatmul.mubr.f32.gmra.mrb[0].mxu0 %v3746
        %v3915 = vpop.f32.mrb[0].mxu0
        %v3916 = vadd.f32 %v3595, %v3915
        %v3917 = vpop.f32.mrb[0].mxu0
        %3918 = vmatprep.mubr.f32.mxu0 0.0
        %3919 = vmatmul.mubr.f32.gmra.mrb[0].mxu0 %v3749
        %v3920 = vpop.f32.mrb[0].mxu0
        %v3921 = vadd.f32 %v3600, %v3920
        %v3922 = vpop.f32.mrb[0].mxu0
        %3923 = vmatprep.mubr.f32.mxu0 0.0
        %3924 = vmatmul.mubr.f32.gmra.mrb[0].mxu0 %v3752
        %v3925 = vpop.f32.mrb[0].mxu0
        %v3926 = vadd.f32 %v3605, %v3925
        %v3927 = vpop.f32.mrb[0].mxu0
        %3928 = vmatprep.mubr.f32.mxu0 0.0
        %3929 = vmatmul.mubr.f32.gmra.mrb[0].mxu0 %v3755
        %v3930 = vpop.f32.mrb[0].mxu0
        %v3931 = vadd.f32 %v3610, %v3930
        %v3932 = vpop.f32.mrb[0].mxu0
        %3933 = vmatprep.mubr.f32.mxu0 0.0
        %3934 = vmatmul.mubr.f32.gmra.mrb[0].mxu0 %v3758
        %v3935 = vpop.f32.mrb[0].mxu0
        %v3936 = vadd.f32 %v3615, %v3935
        %v3937 = vpop.f32.mrb[0].mxu0
        %3938 = vmatprep.mubr.f32.mxu0 0.0
        %3939 = vmatmul.mubr.f32.gmra.mrb[0].mxu0 %v3761
        %v3940 = vpop.f32.mrb[0].mxu0
        %v3941 = vadd.f32 %v3620, %v3940
        %v3942 = vpop.f32.mrb[0].mxu0
        %3943 = vmatprep.mubr.f32.mxu0 0.0
        %3944 = vmatmul.mubr.f32.gmra.mrb[0].mxu0 %v3764
        %v3945 = vpop.f32.mrb[0].mxu0
        %v3946 = vadd.f32 %v3625, %v3945
        %v3947 = vpop.f32.mrb[0].mxu0
        %3948 = vmatprep.mubr.f32.mxu0 0.0
        %3949 = vmatmul.mubr.f32.gmra.mrb[0].mxu0 %v3767
        %v3950 = vpop.f32.mrb[0].mxu0
        %v3951 = vadd.f32 %v3630, %v3950
        %v3952 = vpop.f32.mrb[0].mxu0
        %3953 = vmatprep.mubr.f32.mxu0 0.0
        %3954 = vmatmul.mubr.f32.gmra.mrb[0].mxu0 %v3770
        %v3955 = vpop.f32.mrb[0].mxu0
        %v3956 = vadd.f32 %v3635, %v3955
        %v3957 = vpop.f32.mrb[0].mxu0
        %3958 = vmatprep.mubr.f32.mxu0 0.0
        %3959 = vmatmul.mubr.f32.gmra.mrb[0].mxu0 %v3773
        %v3960 = vpop.f32.mrb[0].mxu0
        %v3961 = vadd.f32 %v3640, %v3960
        %v3962 = vpop.f32.mrb[0].mxu0
        %3963 = vmatprep.mubr.f32.mxu0 0.0
        %3964 = vmatmul.mubr.f32.gmra.mrb[0].mxu0 %v3776
        %v3965 = vpop.f32.mrb[0].mxu0
        %v3966 = vadd.f32 %v3645, %v3965
        %v3967 = vpop.f32.mrb[0].mxu0
        %3968 = vmatprep.mubr.f32.mxu0 0.0
        %3969 = vmatmul.mubr.f32.gmra.mrb[0].mxu0 %v3779
        %v3970 = vpop.f32.mrb[0].mxu0
        %v3971 = vadd.f32 %v3650, %v3970
        %v3972 = vpop.f32.mrb[0].mxu0
        %3973 = vmatprep.mubr.f32.mxu0 0.0
        %3974 = vmatmul.mubr.f32.gmra.mrb[0].mxu0 %v3782
        %v3975 = vpop.f32.mrb[0].mxu0
        %v3976 = vadd.f32 %v3655, %v3975
        %v3977 = vpop.f32.mrb[0].mxu0
        %3978 = vmatprep.mubr.f32.mxu0 0.0
        %3979 = vmatmul.mubr.f32.gmra.mrb[0].mxu0 %v3785
        %v3980 = vpop.f32.mrb[0].mxu0
        %v3981 = vadd.f32 %v3660, %v3980
        %v3982 = vpop.f32.mrb[0].mxu0
        %3983 = vmatprep.mubr.f32.mxu0 0.0
        %3984 = vmatmul.mubr.f32.gmra.mrb[0].mxu0 %v3788
        %v3985 = vpop.f32.mrb[0].mxu0
        %v3986 = vadd.f32 %v3665, %v3985
        %v3987 = vpop.f32.mrb[0].mxu0
        %3988 = vmatprep.mubr.f32.mxu0 0.0
        %3989 = vmatmul.mubr.f32.gmra.mrb[0].mxu0 %v3791
        %v3990 = vpop.f32.mrb[0].mxu0
        %v3991 = vadd.f32 %v3670, %v3990
        %v3992 = vpop.f32.mrb[0].mxu0
        %3993 = vmatprep.mubr.f32.mxu0 0.0
        %3994 = vmatmul.mubr.f32.gmra.mrb[0].mxu0 %v3794
        %v3995 = vpop.f32.mrb[0].mxu0
        %v3996 = vadd.f32 %v3675, %v3995
        %v3997 = vpop.f32.mrb[0].mxu0
        %3998 = vmatprep.mubr.f32.mxu0 0.0
        %3999 = vmatmul.mubr.f32.gmra.mrb[0].mxu0 %v3797
        %v4000 = vpop.f32.mrb[0].mxu0
        %v4001 = vadd.f32 %v3680, %v4000
        %v4002 = vpop.f32.mrb[0].mxu0
        %4003 = vmatprep.mubr.f32.mxu0 0.0
        %4004 = vmatmul.mubr.f32.gmra.mrb[0].mxu0 %v3800
        %v4005 = vpop.f32.mrb[0].mxu0
        %v4006 = vadd.f32 %v3685, %v4005
        %v4007 = vpop.f32.mrb[0].mxu0
        %4008 = vmatprep.mubr.f32.mxu0 0.0
        %4009 = vmatmul.mubr.f32.gmra.mrb[0].mxu0 %v3803
        %v4010 = vpop.f32.mrb[0].mxu0
        %v4011 = vadd.f32 %v3690, %v4010
        %v4012 = vpop.f32.mrb[0].mxu0
        %4013 = vmatprep.mubr.f32.mxu0 0.0
        %4014 = vmatmul.mubr.f32.gmra.mrb[0].mxu0 %v3806
        %v4015 = vpop.f32.mrb[0].mxu0
        %v4016 = vadd.f32 %v3695, %v4015
        %v4017 = vpop.f32.mrb[0].mxu0
        %4018 = vmatprep.mubr.f32.mxu0 0.0
        %4019 = vmatmul.mubr.f32.gmra.mrb[0].mxu0 %v3809
        %v4020 = vpop.f32.mrb[0].mxu0
        %v4021 = vadd.f32 %v3700, %v4020
        %v4022 = vpop.f32.mrb[0].mxu0
        %4023 = vmatprep.mubr.f32.mxu0 0.0
        %4024 = vmatmul.mubr.f32.gmra.mrb[0].mxu0 %v3812
        %v4025 = vpop.f32.mrb[0].mxu0
        %v4026 = vadd.f32 %v3705, %v4025
        %v4027 = vpop.f32.mrb[0].mxu0
        %4028 = vmatprep.mubr.f32.mxu0 0.0
        %4029 = vmatmul.mubr.f32.gmra.mrb[0].mxu0 %v3815
        %v4030 = vpop.f32.mrb[0].mxu0
        %v4031 = vadd.f32 %v3710, %v4030
        %v4032 = vpop.f32.mrb[0].mxu0
        %4033 = vmatprep.mubr.f32.mxu0 0.0
        %4034 = vmatmul.mubr.f32.gmra.mrb[0].mxu0 %v3818
        %v4035 = vpop.f32.mrb[0].mxu0
        %v4036 = vadd.f32 %v3715, %v4035
        %v4037 = vpop.f32.mrb[0].mxu0
        %4038 = vmatprep.mubr.f32.mxu0 0.0
        %4039 = vmatmul.mubr.f32.gmra.mrb[0].mxu0 %v3821
        %v4040 = vpop.f32.mrb[0].mxu0
        %v4041 = vadd.f32 %v3720, %v4040
        %v4042 = vpop.f32.mrb[0].mxu0
        %4043 = vmatprep.mubr.f32.mxu0 0.0
        %4044 = vmatmul.mubr.f32.gmra.mrb[0].mxu0 %v3824
        %v4045 = vpop.f32.mrb[0].mxu0
        %v4046 = vadd.f32 %v3725, %v4045
        %v4047 = vpop.f32.mrb[0].mxu0
        %4048 = vmatprep.mubr.f32.mxu0 0.0
        %4049 = vmatmul.mubr.f32.gmra.mrb[0].mxu0 %v3827
        %v4050 = vpop.f32.mrb[0].mxu0
        %v4051 = vadd.f32 %v3730, %v4050
        %v4052 = vpop.f32.mrb[0].mxu0
        %4053 = vdwg.mxu0
        %v4054 = vld [vmem:[#allocation2 + $0x2] sm:$0xff]
        %v4055 = vld [vmem:[#allocation2 + $0xa] sm:$0xff]
        %v4056 = vld [vmem:[#allocation2 + $0x1a] sm:$0xff]
        %v4057 = vld [vmem:[#allocation2 + $0x22] sm:$0xff]
        %v4058 = vld [vmem:[#allocation2 + $0x32] sm:$0xff]
        %v4059 = vld [vmem:[#allocation2 + $0x3a] sm:$0xff]
        %v4060 = vld [vmem:[#allocation2 + $0x4a] sm:$0xff]
        %v4061 = vld [vmem:[#allocation2 + $0x52] sm:$0xff]
        %v4062 = vld [vmem:[#allocation2 + $0x62] sm:$0xff]
        %v4063 = vld [vmem:[#allocation2 + $0x6a] sm:$0xff]
        %v4064 = vld [vmem:[#allocation2 + $0x7a] sm:$0xff]
        %v4065 = vld [vmem:[#allocation2 + $0x82] sm:$0xff]
        %v4066 = vld [vmem:[#allocation2 + $0x92] sm:$0xff]
        %v4067 = vld [vmem:[#allocation2 + $0x9a] sm:$0xff]
        %v4068 = vld [vmem:[#allocation2 + $0xaa] sm:$0xff]
        %v4069 = vld [vmem:[#allocation2 + $0xb2] sm:$0xff]
        %v4070 = vld [vmem:[#allocation2 + $0xc2] sm:$0xff]
        %v4071 = vld [vmem:[#allocation2 + $0xca] sm:$0xff]
        %v4072 = vld [vmem:[#allocation2 + $0xda] sm:$0xff]
        %v4073 = vld [vmem:[#allocation2 + $0xe2] sm:$0xff]
        %v4074 = vld [vmem:[#allocation2 + $0xf2] sm:$0xff]
        %v4075 = vld [vmem:[#allocation2 + $0xfa] sm:$0xff]
        %v4076 = vld [vmem:[#allocation2 + $0x10a] sm:$0xff]
        %v4077 = vld [vmem:[#allocation2 + $0x112] sm:$0xff]
        %v4078 = vld [vmem:[#allocation2 + $0x122] sm:$0xff]
        %v4079 = vld [vmem:[#allocation2 + $0x12a] sm:$0xff]
        %v4080 = vld [vmem:[#allocation2 + $0x13a] sm:$0xff]
        %v4081 = vld [vmem:[#allocation2 + $0x142] sm:$0xff]
        %v4082 = vld [vmem:[#allocation2 + $0x152] sm:$0xff]
        %v4083 = vld [vmem:[#allocation2 + $0x15a] sm:$0xff]
        %v4084 = vld [vmem:[#allocation2 + $0x16a] sm:$0xff]
        %v4085 = vld [vmem:[#allocation2 + $0x172] sm:$0xff]
        %s4086 = scalar_lea.vmem [#allocation7], 64
        %v4087 = vld [vmem:[%s4086] sm:$0xff]
        %v4088 = vld [vmem:[%s4086 + $0x8] sm:$0xff]
        %v4089 = vld [vmem:[%s4086 + $0x10] sm:$0xff]
        %v4090 = vld [vmem:[%s4086 + $0x18] sm:$0xff]
        %v4092 = vsel %vm643, %v4054, 0
        %v4095 = vsel %vm643, %v4055, 0
        %v4098 = vsel %vm643, %v4056, 0
        %v4101 = vsel %vm643, %v4057, 0
        %v4104 = vsel %vm643, %v4058, 0
        %v4107 = vsel %vm643, %v4059, 0
        %v4110 = vsel %vm643, %v4060, 0
        %v4113 = vsel %vm643, %v4061, 0
        %v4116 = vsel %vm643, %v4062, 0
        %v4119 = vsel %vm643, %v4063, 0
        %v4122 = vsel %vm643, %v4064, 0
        %v4125 = vsel %vm643, %v4065, 0
        %v4128 = vsel %vm643, %v4066, 0
        %v4131 = vsel %vm643, %v4067, 0
        %v4134 = vsel %vm643, %v4068, 0
        %v4137 = vsel %vm643, %v4069, 0
        %v4140 = vsel %vm643, %v4070, 0
        %v4143 = vsel %vm643, %v4071, 0
        %v4146 = vsel %vm643, %v4072, 0
        %v4149 = vsel %vm643, %v4073, 0
        %v4152 = vsel %vm643, %v4074, 0
        %v4155 = vsel %vm643, %v4075, 0
        %v4158 = vsel %vm643, %v4076, 0
        %v4161 = vsel %vm643, %v4077, 0
        %v4164 = vsel %vm643, %v4078, 0
        %v4167 = vsel %vm643, %v4079, 0
        %v4170 = vsel %vm643, %v4080, 0
        %v4173 = vsel %vm643, %v4081, 0
        %v4176 = vsel %vm643, %v4082, 0
        %v4179 = vsel %vm643, %v4083, 0
        %v4182 = vsel %vm643, %v4084, 0
        %v4185 = vsel %vm643, %v4085, 0
        %4187 = vmatprep.subr.mxu0 0.0
        %4188 = vmatpush1.msra.mxu0 %v4087
        %4189 = vmatprep.subr.mxu0 0.0
        %4190 = vmatpush1.msra.mxu0 %v4088
        %4191 = vmatprep.subr.mxu0 0.0
        %4192 = vmatpush1.msra.mxu0 %v4089
        %4193 = vmatprep.subr.mxu0 0.0
        %4194 = vmatpush1.msra.mxu0 %v4090
        %4195 = vmatprep.subr.mxu0 0.0
        %4196 = vmatpush1.msra.mxu0 0.0
        %4197 = vmatprep.subr.mxu0 0.0
        %4198 = vmatpush1.msra.mxu0 0.0
        %4199 = vmatprep.subr.mxu0 0.0
        %4200 = vmatpush1.msra.mxu0 0.0
        %4201 = vmatprep.subr.mxu0 0.0
        %4202 = vmatpush1.msra.mxu0 0.0
        %4203 = vmatprep.subr.mxu0 0.0
        %4204 = vmatpush1.msra.mxu0 0.0
        %4205 = vmatprep.subr.mxu0 0.0
        %4206 = vmatpush1.msra.mxu0 0.0
        %4207 = vmatprep.subr.mxu0 0.0
        %4208 = vmatpush1.msra.mxu0 0.0
        %4209 = vmatprep.subr.mxu0 0.0
        %4210 = vmatpush1.msra.mxu0 0.0
        %4211 = vmatprep.subr.mxu0 0.0
        %4212 = vmatpush1.msra.mxu0 0.0
        %4213 = vmatprep.subr.mxu0 0.0
        %4214 = vmatpush1.msra.mxu0 0.0
        %4215 = vmatprep.subr.mxu0 0.0
        %4216 = vmatpush1.msra.mxu0 0.0
        %4217 = vmatprep.subr.mxu0 0.0
        %4218 = vmatpush1.msra.mxu0 0.0
        %4219 = vmatprep.subr.mxu0 0.0
        %4220 = vmatpush1.msra.mxu0 0.0
        %4221 = vmatprep.subr.mxu0 0.0
        %4222 = vmatpush1.msra.mxu0 0.0
        %4223 = vmatprep.subr.mxu0 0.0
        %4224 = vmatpush1.msra.mxu0 0.0
        %4225 = vmatprep.subr.mxu0 0.0
        %4226 = vmatpush1.msra.mxu0 0.0
        %4227 = vmatprep.subr.mxu0 0.0
        %4228 = vmatpush1.msra.mxu0 0.0
        %4229 = vmatprep.subr.mxu0 0.0
        %4230 = vmatpush1.msra.mxu0 0.0
        %4231 = vmatprep.subr.mxu0 0.0
        %4232 = vmatpush1.msra.mxu0 0.0
        %4233 = vmatprep.subr.mxu0 0.0
        %4234 = vmatpush1.msra.mxu0 0.0
        %4235 = vmatprep.subr.mxu0 0.0
        %4236 = vmatpush1.msra.mxu0 0.0
        %4237 = vmatprep.subr.mxu0 0.0
        %4238 = vmatpush1.msra.mxu0 0.0
        %4239 = vmatprep.subr.mxu0 0.0
        %4240 = vmatpush1.msra.mxu0 0.0
        %4241 = vmatprep.subr.mxu0 0.0
        %4242 = vmatpush1.msra.mxu0 0.0
        %4243 = vmatprep.subr.mxu0 0.0
        %4244 = vmatpush1.msra.mxu0 0.0
        %4245 = vmatprep.subr.mxu0 0.0
        %4246 = vmatpush1.msra.mxu0 0.0
        %4247 = vmatprep.subr.mxu0 0.0
        %4248 = vmatpush1.msra.mxu0 0.0
        %4249 = vmatprep.subr.mxu0 0.0
        %4250 = vmatpush1.msra.mxu0 0.0
        %4251 = vmatprep.mubr.f32.mxu0 0.0
        %4252 = vmatmul.mubr.f32.gmra.mrb[0].mxu0 %v4092
        %v4253 = vpop.f32.mrb[0].mxu0
        %v4254 = vadd.f32 0.0, %v4253
        %v4255 = vpop.f32.mrb[0].mxu0
        %4256 = vmatprep.mubr.f32.mxu0 0.0
        %4257 = vmatmul.mubr.f32.gmra.mrb[0].mxu0 %v4095
        %v4258 = vpop.f32.mrb[0].mxu0
        %v4259 = vadd.f32 0.0, %v4258
        %v4260 = vpop.f32.mrb[0].mxu0
        %4261 = vmatprep.mubr.f32.mxu0 0.0
        %4262 = vmatmul.mubr.f32.gmra.mrb[0].mxu0 %v4098
        %v4263 = vpop.f32.mrb[0].mxu0
        %v4264 = vadd.f32 0.0, %v4263
        %v4265 = vpop.f32.mrb[0].mxu0
        %4266 = vmatprep.mubr.f32.mxu0 0.0
        %4267 = vmatmul.mubr.f32.gmra.mrb[0].mxu0 %v4101
        %v4268 = vpop.f32.mrb[0].mxu0
        %v4269 = vadd.f32 0.0, %v4268
        %v4270 = vpop.f32.mrb[0].mxu0
        %4271 = vmatprep.mubr.f32.mxu0 0.0
        %4272 = vmatmul.mubr.f32.gmra.mrb[0].mxu0 %v4104
        %v4273 = vpop.f32.mrb[0].mxu0
        %v4274 = vadd.f32 0.0, %v4273
        %v4275 = vpop.f32.mrb[0].mxu0
        %4276 = vmatprep.mubr.f32.mxu0 0.0
        %4277 = vmatmul.mubr.f32.gmra.mrb[0].mxu0 %v4107
        %v4278 = vpop.f32.mrb[0].mxu0
        %v4279 = vadd.f32 0.0, %v4278
        %v4280 = vpop.f32.mrb[0].mxu0
        %4281 = vmatprep.mubr.f32.mxu0 0.0
        %4282 = vmatmul.mubr.f32.gmra.mrb[0].mxu0 %v4110
        %v4283 = vpop.f32.mrb[0].mxu0
        %v4284 = vadd.f32 0.0, %v4283
        %v4285 = vpop.f32.mrb[0].mxu0
        %4286 = vmatprep.mubr.f32.mxu0 0.0
        %4287 = vmatmul.mubr.f32.gmra.mrb[0].mxu0 %v4113
        %v4288 = vpop.f32.mrb[0].mxu0
        %v4289 = vadd.f32 0.0, %v4288
        %v4290 = vpop.f32.mrb[0].mxu0
        %4291 = vmatprep.mubr.f32.mxu0 0.0
        %4292 = vmatmul.mubr.f32.gmra.mrb[0].mxu0 %v4116
        %v4293 = vpop.f32.mrb[0].mxu0
        %v4294 = vadd.f32 0.0, %v4293
        %v4295 = vpop.f32.mrb[0].mxu0
        %4296 = vmatprep.mubr.f32.mxu0 0.0
        %4297 = vmatmul.mubr.f32.gmra.mrb[0].mxu0 %v4119
        %v4298 = vpop.f32.mrb[0].mxu0
        %v4299 = vadd.f32 0.0, %v4298
        %v4300 = vpop.f32.mrb[0].mxu0
        %4301 = vmatprep.mubr.f32.mxu0 0.0
        %4302 = vmatmul.mubr.f32.gmra.mrb[0].mxu0 %v4122
        %v4303 = vpop.f32.mrb[0].mxu0
        %v4304 = vadd.f32 0.0, %v4303
        %v4305 = vpop.f32.mrb[0].mxu0
        %4306 = vmatprep.mubr.f32.mxu0 0.0
        %4307 = vmatmul.mubr.f32.gmra.mrb[0].mxu0 %v4125
        %v4308 = vpop.f32.mrb[0].mxu0
        %v4309 = vadd.f32 0.0, %v4308
        %v4310 = vpop.f32.mrb[0].mxu0
        %4311 = vmatprep.mubr.f32.mxu0 0.0
        %4312 = vmatmul.mubr.f32.gmra.mrb[0].mxu0 %v4128
        %v4313 = vpop.f32.mrb[0].mxu0
        %v4314 = vadd.f32 0.0, %v4313
        %v4315 = vpop.f32.mrb[0].mxu0
        %4316 = vmatprep.mubr.f32.mxu0 0.0
        %4317 = vmatmul.mubr.f32.gmra.mrb[0].mxu0 %v4131
        %v4318 = vpop.f32.mrb[0].mxu0
        %v4319 = vadd.f32 0.0, %v4318
        %v4320 = vpop.f32.mrb[0].mxu0
        %4321 = vmatprep.mubr.f32.mxu0 0.0
        %4322 = vmatmul.mubr.f32.gmra.mrb[0].mxu0 %v4134
        %v4323 = vpop.f32.mrb[0].mxu0
        %v4324 = vadd.f32 0.0, %v4323
        %v4325 = vpop.f32.mrb[0].mxu0
        %4326 = vmatprep.mubr.f32.mxu0 0.0
        %4327 = vmatmul.mubr.f32.gmra.mrb[0].mxu0 %v4137
        %v4328 = vpop.f32.mrb[0].mxu0
        %v4329 = vadd.f32 0.0, %v4328
        %v4330 = vpop.f32.mrb[0].mxu0
        %4331 = vmatprep.mubr.f32.mxu0 0.0
        %4332 = vmatmul.mubr.f32.gmra.mrb[0].mxu0 %v4140
        %v4333 = vpop.f32.mrb[0].mxu0
        %v4334 = vadd.f32 0.0, %v4333
        %v4335 = vpop.f32.mrb[0].mxu0
        %4336 = vmatprep.mubr.f32.mxu0 0.0
        %4337 = vmatmul.mubr.f32.gmra.mrb[0].mxu0 %v4143
        %v4338 = vpop.f32.mrb[0].mxu0
        %v4339 = vadd.f32 0.0, %v4338
        %v4340 = vpop.f32.mrb[0].mxu0
        %4341 = vmatprep.mubr.f32.mxu0 0.0
        %4342 = vmatmul.mubr.f32.gmra.mrb[0].mxu0 %v4146
        %v4343 = vpop.f32.mrb[0].mxu0
        %v4344 = vadd.f32 0.0, %v4343
        %v4345 = vpop.f32.mrb[0].mxu0
        %4346 = vmatprep.mubr.f32.mxu0 0.0
        %4347 = vmatmul.mubr.f32.gmra.mrb[0].mxu0 %v4149
        %v4348 = vpop.f32.mrb[0].mxu0
        %v4349 = vadd.f32 0.0, %v4348
        %v4350 = vpop.f32.mrb[0].mxu0
        %4351 = vmatprep.mubr.f32.mxu0 0.0
        %4352 = vmatmul.mubr.f32.gmra.mrb[0].mxu0 %v4152
        %v4353 = vpop.f32.mrb[0].mxu0
        %v4354 = vadd.f32 0.0, %v4353
        %v4355 = vpop.f32.mrb[0].mxu0
        %4356 = vmatprep.mubr.f32.mxu0 0.0
        %4357 = vmatmul.mubr.f32.gmra.mrb[0].mxu0 %v4155
        %v4358 = vpop.f32.mrb[0].mxu0
        %v4359 = vadd.f32 0.0, %v4358
        %v4360 = vpop.f32.mrb[0].mxu0
        %4361 = vmatprep.mubr.f32.mxu0 0.0
        %4362 = vmatmul.mubr.f32.gmra.mrb[0].mxu0 %v4158
        %v4363 = vpop.f32.mrb[0].mxu0
        %v4364 = vadd.f32 0.0, %v4363
        %v4365 = vpop.f32.mrb[0].mxu0
        %4366 = vmatprep.mubr.f32.mxu0 0.0
        %4367 = vmatmul.mubr.f32.gmra.mrb[0].mxu0 %v4161
        %v4368 = vpop.f32.mrb[0].mxu0
        %v4369 = vadd.f32 0.0, %v4368
        %v4370 = vpop.f32.mrb[0].mxu0
        %4371 = vmatprep.mubr.f32.mxu0 0.0
        %4372 = vmatmul.mubr.f32.gmra.mrb[0].mxu0 %v4164
        %v4373 = vpop.f32.mrb[0].mxu0
        %v4374 = vadd.f32 0.0, %v4373
        %v4375 = vpop.f32.mrb[0].mxu0
        %4376 = vmatprep.mubr.f32.mxu0 0.0
        %4377 = vmatmul.mubr.f32.gmra.mrb[0].mxu0 %v4167
        %v4378 = vpop.f32.mrb[0].mxu0
        %v4379 = vadd.f32 0.0, %v4378
        %v4380 = vpop.f32.mrb[0].mxu0
        %4381 = vmatprep.mubr.f32.mxu0 0.0
        %4382 = vmatmul.mubr.f32.gmra.mrb[0].mxu0 %v4170
        %v4383 = vpop.f32.mrb[0].mxu0
        %v4384 = vadd.f32 0.0, %v4383
        %v4385 = vpop.f32.mrb[0].mxu0
        %4386 = vmatprep.mubr.f32.mxu0 0.0
        %4387 = vmatmul.mubr.f32.gmra.mrb[0].mxu0 %v4173
        %v4388 = vpop.f32.mrb[0].mxu0
        %v4389 = vadd.f32 0.0, %v4388
        %v4390 = vpop.f32.mrb[0].mxu0
        %4391 = vmatprep.mubr.f32.mxu0 0.0
        %4392 = vmatmul.mubr.f32.gmra.mrb[0].mxu0 %v4176
        %v4393 = vpop.f32.mrb[0].mxu0
        %v4394 = vadd.f32 0.0, %v4393
        %v4395 = vpop.f32.mrb[0].mxu0
        %4396 = vmatprep.mubr.f32.mxu0 0.0
        %4397 = vmatmul.mubr.f32.gmra.mrb[0].mxu0 %v4179
        %v4398 = vpop.f32.mrb[0].mxu0
        %v4399 = vadd.f32 0.0, %v4398
        %v4400 = vpop.f32.mrb[0].mxu0
        %4401 = vmatprep.mubr.f32.mxu0 0.0
        %4402 = vmatmul.mubr.f32.gmra.mrb[0].mxu0 %v4182
        %v4403 = vpop.f32.mrb[0].mxu0
        %v4404 = vadd.f32 0.0, %v4403
        %v4405 = vpop.f32.mrb[0].mxu0
        %4406 = vmatprep.mubr.f32.mxu0 0.0
        %4407 = vmatmul.mubr.f32.gmra.mrb[0].mxu0 %v4185
        %v4408 = vpop.f32.mrb[0].mxu0
        %v4409 = vadd.f32 0.0, %v4408
        %v4410 = vpop.f32.mrb[0].mxu0
        %4411 = vdwg.mxu0
        %v4412 = vadd.f32 %v3896, %v4254
        %v4413 = vadd.f32 %v3901, %v4259
        %v4414 = vadd.f32 %v3906, %v4264
        %v4415 = vadd.f32 %v3911, %v4269
        %v4416 = vadd.f32 %v3916, %v4274
        %v4417 = vadd.f32 %v3921, %v4279
        %v4418 = vadd.f32 %v3926, %v4284
        %v4419 = vadd.f32 %v3931, %v4289
        %v4420 = vadd.f32 %v3936, %v4294
        %v4421 = vadd.f32 %v3941, %v4299
        %v4422 = vadd.f32 %v3946, %v4304
        %v4423 = vadd.f32 %v3951, %v4309
        %v4424 = vadd.f32 %v3956, %v4314
        %v4425 = vadd.f32 %v3961, %v4319
        %v4426 = vadd.f32 %v3966, %v4324
        %v4427 = vadd.f32 %v3971, %v4329
        %v4428 = vadd.f32 %v3976, %v4334
        %v4429 = vadd.f32 %v3981, %v4339
        %v4430 = vadd.f32 %v3986, %v4344
        %v4431 = vadd.f32 %v3991, %v4349
        %v4432 = vadd.f32 %v3996, %v4354
        %v4433 = vadd.f32 %v4001, %v4359
        %v4434 = vadd.f32 %v4006, %v4364
        %v4435 = vadd.f32 %v4011, %v4369
        %v4436 = vadd.f32 %v4016, %v4374
        %v4437 = vadd.f32 %v4021, %v4379
        %v4438 = vadd.f32 %v4026, %v4384
        %v4439 = vadd.f32 %v4031, %v4389
        %v4440 = vadd.f32 %v4036, %v4394
        %v4441 = vadd.f32 %v4041, %v4399
        %v4442 = vadd.f32 %v4046, %v4404
        %v4443 = vadd.f32 %v4051, %v4409
        %v4444 = vld [vmem:[%s1566] sm:$0xff]
        %v4445 = vld [vmem:[%s1566 + $0x8] sm:$0xff]
        %v4446 = vld [vmem:[%s1566 + $0x18] sm:$0xff]
        %v4447 = vld [vmem:[%s1566 + $0x20] sm:$0xff]
        %v4448 = vld [vmem:[%s1566 + $0x30] sm:$0xff]
        %v4449 = vld [vmem:[%s1566 + $0x38] sm:$0xff]
        %v4450 = vld [vmem:[%s1566 + $0x48] sm:$0xff]
        %v4451 = vld [vmem:[%s1566 + $0x50] sm:$0xff]
        %v4452 = vld [vmem:[%s1566 + $0x60] sm:$0xff]
        %v4453 = vld [vmem:[%s1566 + $0x68] sm:$0xff]
        %v4454 = vld [vmem:[%s1566 + $0x78] sm:$0xff]
        %v4455 = vld [vmem:[%s1566 + $0x80] sm:$0xff]
        %v4456 = vld [vmem:[%s1566 + $0x90] sm:$0xff]
        %v4457 = vld [vmem:[%s1566 + $0x98] sm:$0xff]
        %v4458 = vld [vmem:[%s1566 + $0xa8] sm:$0xff]
        %v4459 = vld [vmem:[%s1566 + $0xb0] sm:$0xff]
        %v4460 = vld [vmem:[%s1566 + $0xc0] sm:$0xff]
        %v4461 = vld [vmem:[%s1566 + $0xc8] sm:$0xff]
        %v4462 = vld [vmem:[%s1566 + $0xd8] sm:$0xff]
        %v4463 = vld [vmem:[%s1566 + $0xe0] sm:$0xff]
        %v4464 = vld [vmem:[%s1566 + $0xf0] sm:$0xff]
        %v4465 = vld [vmem:[%s1566 + $0xf8] sm:$0xff]
        %v4466 = vld [vmem:[%s1566 + $0x108] sm:$0xff]
        %v4467 = vld [vmem:[%s1566 + $0x110] sm:$0xff]
        %v4468 = vld [vmem:[%s1566 + $0x120] sm:$0xff]
        %v4469 = vld [vmem:[%s1566 + $0x128] sm:$0xff]
        %v4470 = vld [vmem:[%s1566 + $0x138] sm:$0xff]
        %v4471 = vld [vmem:[%s1566 + $0x140] sm:$0xff]
        %v4472 = vld [vmem:[%s1566 + $0x150] sm:$0xff]
        %v4473 = vld [vmem:[%s1566 + $0x158] sm:$0xff]
        %v4474 = vld [vmem:[%s1566 + $0x168] sm:$0xff]
        %v4475 = vld [vmem:[%s1566 + $0x170] sm:$0xff]
        %s4476 = scalar_lea.vmem [#allocation7], 96
        %v4477 = vld [vmem:[%s4476] sm:$0xff]
        %v4478 = vld [vmem:[%s4476 + $0x8] sm:$0xff]
        %v4479 = vld [vmem:[%s4476 + $0x10] sm:$0xff]
        %v4480 = vld [vmem:[%s4476 + $0x18] sm:$0xff]
        %v4482 = vsel %vm643, %v4444, 0
        %v4485 = vsel %vm643, %v4445, 0
        %v4488 = vsel %vm643, %v4446, 0
        %v4491 = vsel %vm643, %v4447, 0
        %v4494 = vsel %vm643, %v4448, 0
        %v4497 = vsel %vm643, %v4449, 0
        %v4500 = vsel %vm643, %v4450, 0
        %v4503 = vsel %vm643, %v4451, 0
        %v4506 = vsel %vm643, %v4452, 0
        %v4509 = vsel %vm643, %v4453, 0
        %v4512 = vsel %vm643, %v4454, 0
        %v4515 = vsel %vm643, %v4455, 0
        %v4518 = vsel %vm643, %v4456, 0
        %v4521 = vsel %vm643, %v4457, 0
        %v4524 = vsel %vm643, %v4458, 0
        %v4527 = vsel %vm643, %v4459, 0
        %v4530 = vsel %vm643, %v4460, 0
        %v4533 = vsel %vm643, %v4461, 0
        %v4536 = vsel %vm643, %v4462, 0
        %v4539 = vsel %vm643, %v4463, 0
        %v4542 = vsel %vm643, %v4464, 0
        %v4545 = vsel %vm643, %v4465, 0
        %v4548 = vsel %vm643, %v4466, 0
        %v4551 = vsel %vm643, %v4467, 0
        %v4554 = vsel %vm643, %v4468, 0
        %v4557 = vsel %vm643, %v4469, 0
        %v4560 = vsel %vm643, %v4470, 0
        %v4563 = vsel %vm643, %v4471, 0
        %v4566 = vsel %vm643, %v4472, 0
        %v4569 = vsel %vm643, %v4473, 0
        %v4572 = vsel %vm643, %v4474, 0
        %v4575 = vsel %vm643, %v4475, 0
        %4577 = vmatprep.subr.mxu0 0.0
        %4578 = vmatpush1.msra.mxu0 %v4477
        %4579 = vmatprep.subr.mxu0 0.0
        %4580 = vmatpush1.msra.mxu0 %v4478
        %4581 = vmatprep.subr.mxu0 0.0
        %4582 = vmatpush1.msra.mxu0 %v4479
        %4583 = vmatprep.subr.mxu0 0.0
        %4584 = vmatpush1.msra.mxu0 %v4480
        %4585 = vmatprep.subr.mxu0 0.0
        %4586 = vmatpush1.msra.mxu0 0.0
        %4587 = vmatprep.subr.mxu0 0.0
        %4588 = vmatpush1.msra.mxu0 0.0
        %4589 = vmatprep.subr.mxu0 0.0
        %4590 = vmatpush1.msra.mxu0 0.0
        %4591 = vmatprep.subr.mxu0 0.0
        %4592 = vmatpush1.msra.mxu0 0.0
        %4593 = vmatprep.subr.mxu0 0.0
        %4594 = vmatpush1.msra.mxu0 0.0
        %4595 = vmatprep.subr.mxu0 0.0
        %4596 = vmatpush1.msra.mxu0 0.0
        %4597 = vmatprep.subr.mxu0 0.0
        %4598 = vmatpush1.msra.mxu0 0.0
        %4599 = vmatprep.subr.mxu0 0.0
        %4600 = vmatpush1.msra.mxu0 0.0
        %4601 = vmatprep.subr.mxu0 0.0
        %4602 = vmatpush1.msra.mxu0 0.0
        %4603 = vmatprep.subr.mxu0 0.0
        %4604 = vmatpush1.msra.mxu0 0.0
        %4605 = vmatprep.subr.mxu0 0.0
        %4606 = vmatpush1.msra.mxu0 0.0
        %4607 = vmatprep.subr.mxu0 0.0
        %4608 = vmatpush1.msra.mxu0 0.0
        %4609 = vmatprep.subr.mxu0 0.0
        %4610 = vmatpush1.msra.mxu0 0.0
        %4611 = vmatprep.subr.mxu0 0.0
        %4612 = vmatpush1.msra.mxu0 0.0
        %4613 = vmatprep.subr.mxu0 0.0
        %4614 = vmatpush1.msra.mxu0 0.0
        %4615 = vmatprep.subr.mxu0 0.0
        %4616 = vmatpush1.msra.mxu0 0.0
        %4617 = vmatprep.subr.mxu0 0.0
        %4618 = vmatpush1.msra.mxu0 0.0
        %4619 = vmatprep.subr.mxu0 0.0
        %4620 = vmatpush1.msra.mxu0 0.0
        %4621 = vmatprep.subr.mxu0 0.0
        %4622 = vmatpush1.msra.mxu0 0.0
        %4623 = vmatprep.subr.mxu0 0.0
        %4624 = vmatpush1.msra.mxu0 0.0
        %4625 = vmatprep.subr.mxu0 0.0
        %4626 = vmatpush1.msra.mxu0 0.0
        %4627 = vmatprep.subr.mxu0 0.0
        %4628 = vmatpush1.msra.mxu0 0.0
        %4629 = vmatprep.subr.mxu0 0.0
        %4630 = vmatpush1.msra.mxu0 0.0
        %4631 = vmatprep.subr.mxu0 0.0
        %4632 = vmatpush1.msra.mxu0 0.0
        %4633 = vmatprep.subr.mxu0 0.0
        %4634 = vmatpush1.msra.mxu0 0.0
        %4635 = vmatprep.subr.mxu0 0.0
        %4636 = vmatpush1.msra.mxu0 0.0
        %4637 = vmatprep.subr.mxu0 0.0
        %4638 = vmatpush1.msra.mxu0 0.0
        %4639 = vmatprep.subr.mxu0 0.0
        %4640 = vmatpush1.msra.mxu0 0.0
        %4641 = vmatprep.mubr.f32.mxu0 0.0
        %4642 = vmatmul.mubr.f32.gmra.mrb[0].mxu0 %v4482
        %v4643 = vpop.f32.mrb[0].mxu0
        %v4644 = vadd.f32 0.0, %v4643
        %v4645 = vpop.f32.mrb[0].mxu0
        %4646 = vmatprep.mubr.f32.mxu0 0.0
        %4647 = vmatmul.mubr.f32.gmra.mrb[0].mxu0 %v4485
        %v4648 = vpop.f32.mrb[0].mxu0
        %v4649 = vadd.f32 0.0, %v4648
        %v4650 = vpop.f32.mrb[0].mxu0
        %4651 = vmatprep.mubr.f32.mxu0 0.0
        %4652 = vmatmul.mubr.f32.gmra.mrb[0].mxu0 %v4488
        %v4653 = vpop.f32.mrb[0].mxu0
        %v4654 = vadd.f32 0.0, %v4653
        %v4655 = vpop.f32.mrb[0].mxu0
        %4656 = vmatprep.mubr.f32.mxu0 0.0
        %4657 = vmatmul.mubr.f32.gmra.mrb[0].mxu0 %v4491
        %v4658 = vpop.f32.mrb[0].mxu0
        %v4659 = vadd.f32 0.0, %v4658
        %v4660 = vpop.f32.mrb[0].mxu0
        %4661 = vmatprep.mubr.f32.mxu0 0.0
        %4662 = vmatmul.mubr.f32.gmra.mrb[0].mxu0 %v4494
        %v4663 = vpop.f32.mrb[0].mxu0
        %v4664 = vadd.f32 0.0, %v4663
        %v4665 = vpop.f32.mrb[0].mxu0
        %4666 = vmatprep.mubr.f32.mxu0 0.0
        %4667 = vmatmul.mubr.f32.gmra.mrb[0].mxu0 %v4497
        %v4668 = vpop.f32.mrb[0].mxu0
        %v4669 = vadd.f32 0.0, %v4668
        %v4670 = vpop.f32.mrb[0].mxu0
        %4671 = vmatprep.mubr.f32.mxu0 0.0
        %4672 = vmatmul.mubr.f32.gmra.mrb[0].mxu0 %v4500
        %v4673 = vpop.f32.mrb[0].mxu0
        %v4674 = vadd.f32 0.0, %v4673
        %v4675 = vpop.f32.mrb[0].mxu0
        %4676 = vmatprep.mubr.f32.mxu0 0.0
        %4677 = vmatmul.mubr.f32.gmra.mrb[0].mxu0 %v4503
        %v4678 = vpop.f32.mrb[0].mxu0
        %v4679 = vadd.f32 0.0, %v4678
        %v4680 = vpop.f32.mrb[0].mxu0
        %4681 = vmatprep.mubr.f32.mxu0 0.0
        %4682 = vmatmul.mubr.f32.gmra.mrb[0].mxu0 %v4506
        %v4683 = vpop.f32.mrb[0].mxu0
        %v4684 = vadd.f32 0.0, %v4683
        %v4685 = vpop.f32.mrb[0].mxu0
        %4686 = vmatprep.mubr.f32.mxu0 0.0
        %4687 = vmatmul.mubr.f32.gmra.mrb[0].mxu0 %v4509
        %v4688 = vpop.f32.mrb[0].mxu0
        %v4689 = vadd.f32 0.0, %v4688
        %v4690 = vpop.f32.mrb[0].mxu0
        %4691 = vmatprep.mubr.f32.mxu0 0.0
        %4692 = vmatmul.mubr.f32.gmra.mrb[0].mxu0 %v4512
        %v4693 = vpop.f32.mrb[0].mxu0
        %v4694 = vadd.f32 0.0, %v4693
        %v4695 = vpop.f32.mrb[0].mxu0
        %4696 = vmatprep.mubr.f32.mxu0 0.0
        %4697 = vmatmul.mubr.f32.gmra.mrb[0].mxu0 %v4515
        %v4698 = vpop.f32.mrb[0].mxu0
        %v4699 = vadd.f32 0.0, %v4698
        %v4700 = vpop.f32.mrb[0].mxu0
        %4701 = vmatprep.mubr.f32.mxu0 0.0
        %4702 = vmatmul.mubr.f32.gmra.mrb[0].mxu0 %v4518
        %v4703 = vpop.f32.mrb[0].mxu0
        %v4704 = vadd.f32 0.0, %v4703
        %v4705 = vpop.f32.mrb[0].mxu0
        %4706 = vmatprep.mubr.f32.mxu0 0.0
        %4707 = vmatmul.mubr.f32.gmra.mrb[0].mxu0 %v4521
        %v4708 = vpop.f32.mrb[0].mxu0
        %v4709 = vadd.f32 0.0, %v4708
        %v4710 = vpop.f32.mrb[0].mxu0
        %4711 = vmatprep.mubr.f32.mxu0 0.0
        %4712 = vmatmul.mubr.f32.gmra.mrb[0].mxu0 %v4524
        %v4713 = vpop.f32.mrb[0].mxu0
        %v4714 = vadd.f32 0.0, %v4713
        %v4715 = vpop.f32.mrb[0].mxu0
        %4716 = vmatprep.mubr.f32.mxu0 0.0
        %4717 = vmatmul.mubr.f32.gmra.mrb[0].mxu0 %v4527
        %v4718 = vpop.f32.mrb[0].mxu0
        %v4719 = vadd.f32 0.0, %v4718
        %v4720 = vpop.f32.mrb[0].mxu0
        %4721 = vmatprep.mubr.f32.mxu0 0.0
        %4722 = vmatmul.mubr.f32.gmra.mrb[0].mxu0 %v4530
        %v4723 = vpop.f32.mrb[0].mxu0
        %v4724 = vadd.f32 0.0, %v4723
        %v4725 = vpop.f32.mrb[0].mxu0
        %4726 = vmatprep.mubr.f32.mxu0 0.0
        %4727 = vmatmul.mubr.f32.gmra.mrb[0].mxu0 %v4533
        %v4728 = vpop.f32.mrb[0].mxu0
        %v4729 = vadd.f32 0.0, %v4728
        %v4730 = vpop.f32.mrb[0].mxu0
        %4731 = vmatprep.mubr.f32.mxu0 0.0
        %4732 = vmatmul.mubr.f32.gmra.mrb[0].mxu0 %v4536
        %v4733 = vpop.f32.mrb[0].mxu0
        %v4734 = vadd.f32 0.0, %v4733
        %v4735 = vpop.f32.mrb[0].mxu0
        %4736 = vmatprep.mubr.f32.mxu0 0.0
        %4737 = vmatmul.mubr.f32.gmra.mrb[0].mxu0 %v4539
        %v4738 = vpop.f32.mrb[0].mxu0
        %v4739 = vadd.f32 0.0, %v4738
        %v4740 = vpop.f32.mrb[0].mxu0
        %4741 = vmatprep.mubr.f32.mxu0 0.0
        %4742 = vmatmul.mubr.f32.gmra.mrb[0].mxu0 %v4542
        %v4743 = vpop.f32.mrb[0].mxu0
        %v4744 = vadd.f32 0.0, %v4743
        %v4745 = vpop.f32.mrb[0].mxu0
        %4746 = vmatprep.mubr.f32.mxu0 0.0
        %4747 = vmatmul.mubr.f32.gmra.mrb[0].mxu0 %v4545
        %v4748 = vpop.f32.mrb[0].mxu0
        %v4749 = vadd.f32 0.0, %v4748
        %v4750 = vpop.f32.mrb[0].mxu0
        %4751 = vmatprep.mubr.f32.mxu0 0.0
        %4752 = vmatmul.mubr.f32.gmra.mrb[0].mxu0 %v4548
        %v4753 = vpop.f32.mrb[0].mxu0
        %v4754 = vadd.f32 0.0, %v4753
        %v4755 = vpop.f32.mrb[0].mxu0
        %4756 = vmatprep.mubr.f32.mxu0 0.0
        %4757 = vmatmul.mubr.f32.gmra.mrb[0].mxu0 %v4551
        %v4758 = vpop.f32.mrb[0].mxu0
        %v4759 = vadd.f32 0.0, %v4758
        %v4760 = vpop.f32.mrb[0].mxu0
        %4761 = vmatprep.mubr.f32.mxu0 0.0
        %4762 = vmatmul.mubr.f32.gmra.mrb[0].mxu0 %v4554
        %v4763 = vpop.f32.mrb[0].mxu0
        %v4764 = vadd.f32 0.0, %v4763
        %v4765 = vpop.f32.mrb[0].mxu0
        %4766 = vmatprep.mubr.f32.mxu0 0.0
        %4767 = vmatmul.mubr.f32.gmra.mrb[0].mxu0 %v4557
        %v4768 = vpop.f32.mrb[0].mxu0
        %v4769 = vadd.f32 0.0, %v4768
        %v4770 = vpop.f32.mrb[0].mxu0
        %4771 = vmatprep.mubr.f32.mxu0 0.0
        %4772 = vmatmul.mubr.f32.gmra.mrb[0].mxu0 %v4560
        %v4773 = vpop.f32.mrb[0].mxu0
        %v4774 = vadd.f32 0.0, %v4773
        %v4775 = vpop.f32.mrb[0].mxu0
        %4776 = vmatprep.mubr.f32.mxu0 0.0
        %4777 = vmatmul.mubr.f32.gmra.mrb[0].mxu0 %v4563
        %v4778 = vpop.f32.mrb[0].mxu0
        %v4779 = vadd.f32 0.0, %v4778
        %v4780 = vpop.f32.mrb[0].mxu0
        %4781 = vmatprep.mubr.f32.mxu0 0.0
        %4782 = vmatmul.mubr.f32.gmra.mrb[0].mxu0 %v4566
        %v4783 = vpop.f32.mrb[0].mxu0
        %v4784 = vadd.f32 0.0, %v4783
        %v4785 = vpop.f32.mrb[0].mxu0
        %4786 = vmatprep.mubr.f32.mxu0 0.0
        %4787 = vmatmul.mubr.f32.gmra.mrb[0].mxu0 %v4569
        %v4788 = vpop.f32.mrb[0].mxu0
        %v4789 = vadd.f32 0.0, %v4788
        %v4790 = vpop.f32.mrb[0].mxu0
        %4791 = vmatprep.mubr.f32.mxu0 0.0
        %4792 = vmatmul.mubr.f32.gmra.mrb[0].mxu0 %v4572
        %v4793 = vpop.f32.mrb[0].mxu0
        %v4794 = vadd.f32 0.0, %v4793
        %v4795 = vpop.f32.mrb[0].mxu0
        %4796 = vmatprep.mubr.f32.mxu0 0.0
        %4797 = vmatmul.mubr.f32.gmra.mrb[0].mxu0 %v4575
        %v4798 = vpop.f32.mrb[0].mxu0
        %v4799 = vadd.f32 0.0, %v4798
        %v4800 = vpop.f32.mrb[0].mxu0
        %4801 = vdwg.mxu0
        %v4802 = vadd.f32 %v4412, %v4644
        %v4803 = vadd.f32 %v4413, %v4649
        %v4804 = vadd.f32 %v4414, %v4654
        %v4805 = vadd.f32 %v4415, %v4659
        %v4806 = vadd.f32 %v4416, %v4664
        %v4807 = vadd.f32 %v4417, %v4669
        %v4808 = vadd.f32 %v4418, %v4674
        %v4809 = vadd.f32 %v4419, %v4679
        %v4810 = vadd.f32 %v4420, %v4684
        %v4811 = vadd.f32 %v4421, %v4689
        %v4812 = vadd.f32 %v4422, %v4694
        %v4813 = vadd.f32 %v4423, %v4699
        %v4814 = vadd.f32 %v4424, %v4704
        %v4815 = vadd.f32 %v4425, %v4709
        %v4816 = vadd.f32 %v4426, %v4714
        %v4817 = vadd.f32 %v4427, %v4719
        %v4818 = vadd.f32 %v4428, %v4724
        %v4819 = vadd.f32 %v4429, %v4729
        %v4820 = vadd.f32 %v4430, %v4734
        %v4821 = vadd.f32 %v4431, %v4739
        %v4822 = vadd.f32 %v4432, %v4744
        %v4823 = vadd.f32 %v4433, %v4749
        %v4824 = vadd.f32 %v4434, %v4754
        %v4825 = vadd.f32 %v4435, %v4759
        %v4826 = vadd.f32 %v4436, %v4764
        %v4827 = vadd.f32 %v4437, %v4769
        %v4828 = vadd.f32 %v4438, %v4774
        %v4829 = vadd.f32 %v4439, %v4779
        %v4830 = vadd.f32 %v4440, %v4784
        %v4831 = vadd.f32 %v4441, %v4789
        %v4832 = vadd.f32 %v4442, %v4794
        %v4833 = vadd.f32 %v4443, %v4799
        %v4834 = vld [vmem:[%s1566 + $0x1] sm:$0xff]
        %v4835 = vld [vmem:[%s1566 + $0x9] sm:$0xff]
        %v4836 = vld [vmem:[%s1566 + $0x19] sm:$0xff]
        %v4837 = vld [vmem:[%s1566 + $0x21] sm:$0xff]
        %v4838 = vld [vmem:[%s1566 + $0x31] sm:$0xff]
        %v4839 = vld [vmem:[%s1566 + $0x39] sm:$0xff]
        %v4840 = vld [vmem:[%s1566 + $0x49] sm:$0xff]
        %v4841 = vld [vmem:[%s1566 + $0x51] sm:$0xff]
        %v4842 = vld [vmem:[%s1566 + $0x61] sm:$0xff]
        %v4843 = vld [vmem:[%s1566 + $0x69] sm:$0xff]
        %v4844 = vld [vmem:[%s1566 + $0x79] sm:$0xff]
        %v4845 = vld [vmem:[%s1566 + $0x81] sm:$0xff]
        %v4846 = vld [vmem:[%s1566 + $0x91] sm:$0xff]
        %v4847 = vld [vmem:[%s1566 + $0x99] sm:$0xff]
        %v4848 = vld [vmem:[%s1566 + $0xa9] sm:$0xff]
        %v4849 = vld [vmem:[%s1566 + $0xb1] sm:$0xff]
        %v4850 = vld [vmem:[%s1566 + $0xc1] sm:$0xff]
        %v4851 = vld [vmem:[%s1566 + $0xc9] sm:$0xff]
        %v4852 = vld [vmem:[%s1566 + $0xd9] sm:$0xff]
        %v4853 = vld [vmem:[%s1566 + $0xe1] sm:$0xff]
        %v4854 = vld [vmem:[%s1566 + $0xf1] sm:$0xff]
        %v4855 = vld [vmem:[%s1566 + $0xf9] sm:$0xff]
        %v4856 = vld [vmem:[%s1566 + $0x109] sm:$0xff]
        %v4857 = vld [vmem:[%s1566 + $0x111] sm:$0xff]
        %v4858 = vld [vmem:[%s1566 + $0x121] sm:$0xff]
        %v4859 = vld [vmem:[%s1566 + $0x129] sm:$0xff]
        %v4860 = vld [vmem:[%s1566 + $0x139] sm:$0xff]
        %v4861 = vld [vmem:[%s1566 + $0x141] sm:$0xff]
        %v4862 = vld [vmem:[%s1566 + $0x151] sm:$0xff]
        %v4863 = vld [vmem:[%s1566 + $0x159] sm:$0xff]
        %v4864 = vld [vmem:[%s1566 + $0x169] sm:$0xff]
        %v4865 = vld [vmem:[%s1566 + $0x171] sm:$0xff]
        %s4866 = scalar_lea.vmem [#allocation7], 128
        %v4867 = vld [vmem:[%s4866] sm:$0xff]
        %v4868 = vld [vmem:[%s4866 + $0x8] sm:$0xff]
        %v4869 = vld [vmem:[%s4866 + $0x10] sm:$0xff]
        %v4870 = vld [vmem:[%s4866 + $0x18] sm:$0xff]
        %v4872 = vsel %vm643, %v4834, 0
        %v4875 = vsel %vm643, %v4835, 0
        %v4878 = vsel %vm643, %v4836, 0
        %v4881 = vsel %vm643, %v4837, 0
        %v4884 = vsel %vm643, %v4838, 0
        %v4887 = vsel %vm643, %v4839, 0
        %v4890 = vsel %vm643, %v4840, 0
        %v4893 = vsel %vm643, %v4841, 0
        %v4896 = vsel %vm643, %v4842, 0
        %v4899 = vsel %vm643, %v4843, 0
        %v4902 = vsel %vm643, %v4844, 0
        %v4905 = vsel %vm643, %v4845, 0
        %v4908 = vsel %vm643, %v4846, 0
        %v4911 = vsel %vm643, %v4847, 0
        %v4914 = vsel %vm643, %v4848, 0
        %v4917 = vsel %vm643, %v4849, 0
        %v4920 = vsel %vm643, %v4850, 0
        %v4923 = vsel %vm643, %v4851, 0
        %v4926 = vsel %vm643, %v4852, 0
        %v4929 = vsel %vm643, %v4853, 0
        %v4932 = vsel %vm643, %v4854, 0
        %v4935 = vsel %vm643, %v4855, 0
        %v4938 = vsel %vm643, %v4856, 0
        %v4941 = vsel %vm643, %v4857, 0
        %v4944 = vsel %vm643, %v4858, 0
        %v4947 = vsel %vm643, %v4859, 0
        %v4950 = vsel %vm643, %v4860, 0
        %v4953 = vsel %vm643, %v4861, 0
        %v4956 = vsel %vm643, %v4862, 0
        %v4959 = vsel %vm643, %v4863, 0
        %v4962 = vsel %vm643, %v4864, 0
        %v4965 = vsel %vm643, %v4865, 0
        %4967 = vmatprep.subr.mxu0 0.0
        %4968 = vmatpush1.msra.mxu0 %v4867
        %4969 = vmatprep.subr.mxu0 0.0
        %4970 = vmatpush1.msra.mxu0 %v4868
        %4971 = vmatprep.subr.mxu0 0.0
        %4972 = vmatpush1.msra.mxu0 %v4869
        %4973 = vmatprep.subr.mxu0 0.0
        %4974 = vmatpush1.msra.mxu0 %v4870
        %4975 = vmatprep.subr.mxu0 0.0
        %4976 = vmatpush1.msra.mxu0 0.0
        %4977 = vmatprep.subr.mxu0 0.0
        %4978 = vmatpush1.msra.mxu0 0.0
        %4979 = vmatprep.subr.mxu0 0.0
        %4980 = vmatpush1.msra.mxu0 0.0
        %4981 = vmatprep.subr.mxu0 0.0
        %4982 = vmatpush1.msra.mxu0 0.0
        %4983 = vmatprep.subr.mxu0 0.0
        %4984 = vmatpush1.msra.mxu0 0.0
        %4985 = vmatprep.subr.mxu0 0.0
        %4986 = vmatpush1.msra.mxu0 0.0
        %4987 = vmatprep.subr.mxu0 0.0
        %4988 = vmatpush1.msra.mxu0 0.0
        %4989 = vmatprep.subr.mxu0 0.0
        %4990 = vmatpush1.msra.mxu0 0.0
        %4991 = vmatprep.subr.mxu0 0.0
        %4992 = vmatpush1.msra.mxu0 0.0
        %4993 = vmatprep.subr.mxu0 0.0
        %4994 = vmatpush1.msra.mxu0 0.0
        %4995 = vmatprep.subr.mxu0 0.0
        %4996 = vmatpush1.msra.mxu0 0.0
        %4997 = vmatprep.subr.mxu0 0.0
        %4998 = vmatpush1.msra.mxu0 0.0
        %4999 = vmatprep.subr.mxu0 0.0
        %5000 = vmatpush1.msra.mxu0 0.0
        %5001 = vmatprep.subr.mxu0 0.0
        %5002 = vmatpush1.msra.mxu0 0.0
        %5003 = vmatprep.subr.mxu0 0.0
        %5004 = vmatpush1.msra.mxu0 0.0
        %5005 = vmatprep.subr.mxu0 0.0
        %5006 = vmatpush1.msra.mxu0 0.0
        %5007 = vmatprep.subr.mxu0 0.0
        %5008 = vmatpush1.msra.mxu0 0.0
        %5009 = vmatprep.subr.mxu0 0.0
        %5010 = vmatpush1.msra.mxu0 0.0
        %5011 = vmatprep.subr.mxu0 0.0
        %5012 = vmatpush1.msra.mxu0 0.0
        %5013 = vmatprep.subr.mxu0 0.0
        %5014 = vmatpush1.msra.mxu0 0.0
        %5015 = vmatprep.subr.mxu0 0.0
        %5016 = vmatpush1.msra.mxu0 0.0
        %5017 = vmatprep.subr.mxu0 0.0
        %5018 = vmatpush1.msra.mxu0 0.0
        %5019 = vmatprep.subr.mxu0 0.0
        %5020 = vmatpush1.msra.mxu0 0.0
        %5021 = vmatprep.subr.mxu0 0.0
        %5022 = vmatpush1.msra.mxu0 0.0
        %5023 = vmatprep.subr.mxu0 0.0
        %5024 = vmatpush1.msra.mxu0 0.0
        %5025 = vmatprep.subr.mxu0 0.0
        %5026 = vmatpush1.msra.mxu0 0.0
        %5027 = vmatprep.subr.mxu0 0.0
        %5028 = vmatpush1.msra.mxu0 0.0
        %5029 = vmatprep.subr.mxu0 0.0
        %5030 = vmatpush1.msra.mxu0 0.0
        %5031 = vmatprep.mubr.f32.mxu0 0.0
        %5032 = vmatmul.mubr.f32.gmra.mrb[0].mxu0 %v4872
        %v5033 = vpop.f32.mrb[0].mxu0
        %v5034 = vadd.f32 0.0, %v5033
        %v5035 = vpop.f32.mrb[0].mxu0
        %5036 = vmatprep.mubr.f32.mxu0 0.0
        %5037 = vmatmul.mubr.f32.gmra.mrb[0].mxu0 %v4875
        %v5038 = vpop.f32.mrb[0].mxu0
        %v5039 = vadd.f32 0.0, %v5038
        %v5040 = vpop.f32.mrb[0].mxu0
        %5041 = vmatprep.mubr.f32.mxu0 0.0
        %5042 = vmatmul.mubr.f32.gmra.mrb[0].mxu0 %v4878
        %v5043 = vpop.f32.mrb[0].mxu0
        %v5044 = vadd.f32 0.0, %v5043
        %v5045 = vpop.f32.mrb[0].mxu0
        %5046 = vmatprep.mubr.f32.mxu0 0.0
        %5047 = vmatmul.mubr.f32.gmra.mrb[0].mxu0 %v4881
        %v5048 = vpop.f32.mrb[0].mxu0
        %v5049 = vadd.f32 0.0, %v5048
        %v5050 = vpop.f32.mrb[0].mxu0
        %5051 = vmatprep.mubr.f32.mxu0 0.0
        %5052 = vmatmul.mubr.f32.gmra.mrb[0].mxu0 %v4884
        %v5053 = vpop.f32.mrb[0].mxu0
        %v5054 = vadd.f32 0.0, %v5053
        %v5055 = vpop.f32.mrb[0].mxu0
        %5056 = vmatprep.mubr.f32.mxu0 0.0
        %5057 = vmatmul.mubr.f32.gmra.mrb[0].mxu0 %v4887
        %v5058 = vpop.f32.mrb[0].mxu0
        %v5059 = vadd.f32 0.0, %v5058
        %v5060 = vpop.f32.mrb[0].mxu0
        %5061 = vmatprep.mubr.f32.mxu0 0.0
        %5062 = vmatmul.mubr.f32.gmra.mrb[0].mxu0 %v4890
        %v5063 = vpop.f32.mrb[0].mxu0
        %v5064 = vadd.f32 0.0, %v5063
        %v5065 = vpop.f32.mrb[0].mxu0
        %5066 = vmatprep.mubr.f32.mxu0 0.0
        %5067 = vmatmul.mubr.f32.gmra.mrb[0].mxu0 %v4893
        %v5068 = vpop.f32.mrb[0].mxu0
        %v5069 = vadd.f32 0.0, %v5068
        %v5070 = vpop.f32.mrb[0].mxu0
        %5071 = vmatprep.mubr.f32.mxu0 0.0
        %5072 = vmatmul.mubr.f32.gmra.mrb[0].mxu0 %v4896
        %v5073 = vpop.f32.mrb[0].mxu0
        %v5074 = vadd.f32 0.0, %v5073
        %v5075 = vpop.f32.mrb[0].mxu0
        %5076 = vmatprep.mubr.f32.mxu0 0.0
        %5077 = vmatmul.mubr.f32.gmra.mrb[0].mxu0 %v4899
        %v5078 = vpop.f32.mrb[0].mxu0
        %v5079 = vadd.f32 0.0, %v5078
        %v5080 = vpop.f32.mrb[0].mxu0
        %5081 = vmatprep.mubr.f32.mxu0 0.0
        %5082 = vmatmul.mubr.f32.gmra.mrb[0].mxu0 %v4902
        %v5083 = vpop.f32.mrb[0].mxu0
        %v5084 = vadd.f32 0.0, %v5083
        %v5085 = vpop.f32.mrb[0].mxu0
        %5086 = vmatprep.mubr.f32.mxu0 0.0
        %5087 = vmatmul.mubr.f32.gmra.mrb[0].mxu0 %v4905
        %v5088 = vpop.f32.mrb[0].mxu0
        %v5089 = vadd.f32 0.0, %v5088
        %v5090 = vpop.f32.mrb[0].mxu0
        %5091 = vmatprep.mubr.f32.mxu0 0.0
        %5092 = vmatmul.mubr.f32.gmra.mrb[0].mxu0 %v4908
        %v5093 = vpop.f32.mrb[0].mxu0
        %v5094 = vadd.f32 0.0, %v5093
        %v5095 = vpop.f32.mrb[0].mxu0
        %5096 = vmatprep.mubr.f32.mxu0 0.0
        %5097 = vmatmul.mubr.f32.gmra.mrb[0].mxu0 %v4911
        %v5098 = vpop.f32.mrb[0].mxu0
        %v5099 = vadd.f32 0.0, %v5098
        %v5100 = vpop.f32.mrb[0].mxu0
        %5101 = vmatprep.mubr.f32.mxu0 0.0
        %5102 = vmatmul.mubr.f32.gmra.mrb[0].mxu0 %v4914
        %v5103 = vpop.f32.mrb[0].mxu0
        %v5104 = vadd.f32 0.0, %v5103
        %v5105 = vpop.f32.mrb[0].mxu0
        %5106 = vmatprep.mubr.f32.mxu0 0.0
        %5107 = vmatmul.mubr.f32.gmra.mrb[0].mxu0 %v4917
        %v5108 = vpop.f32.mrb[0].mxu0
        %v5109 = vadd.f32 0.0, %v5108
        %v5110 = vpop.f32.mrb[0].mxu0
        %5111 = vmatprep.mubr.f32.mxu0 0.0
        %5112 = vmatmul.mubr.f32.gmra.mrb[0].mxu0 %v4920
        %v5113 = vpop.f32.mrb[0].mxu0
        %v5114 = vadd.f32 0.0, %v5113
        %v5115 = vpop.f32.mrb[0].mxu0
        %5116 = vmatprep.mubr.f32.mxu0 0.0
        %5117 = vmatmul.mubr.f32.gmra.mrb[0].mxu0 %v4923
        %v5118 = vpop.f32.mrb[0].mxu0
        %v5119 = vadd.f32 0.0, %v5118
        %v5120 = vpop.f32.mrb[0].mxu0
        %5121 = vmatprep.mubr.f32.mxu0 0.0
        %5122 = vmatmul.mubr.f32.gmra.mrb[0].mxu0 %v4926
        %v5123 = vpop.f32.mrb[0].mxu0
        %v5124 = vadd.f32 0.0, %v5123
        %v5125 = vpop.f32.mrb[0].mxu0
        %5126 = vmatprep.mubr.f32.mxu0 0.0
        %5127 = vmatmul.mubr.f32.gmra.mrb[0].mxu0 %v4929
        %v5128 = vpop.f32.mrb[0].mxu0
        %v5129 = vadd.f32 0.0, %v5128
        %v5130 = vpop.f32.mrb[0].mxu0
        %5131 = vmatprep.mubr.f32.mxu0 0.0
        %5132 = vmatmul.mubr.f32.gmra.mrb[0].mxu0 %v4932
        %v5133 = vpop.f32.mrb[0].mxu0
        %v5134 = vadd.f32 0.0, %v5133
        %v5135 = vpop.f32.mrb[0].mxu0
        %5136 = vmatprep.mubr.f32.mxu0 0.0
        %5137 = vmatmul.mubr.f32.gmra.mrb[0].mxu0 %v4935
        %v5138 = vpop.f32.mrb[0].mxu0
        %v5139 = vadd.f32 0.0, %v5138
        %v5140 = vpop.f32.mrb[0].mxu0
        %5141 = vmatprep.mubr.f32.mxu0 0.0
        %5142 = vmatmul.mubr.f32.gmra.mrb[0].mxu0 %v4938
        %v5143 = vpop.f32.mrb[0].mxu0
        %v5144 = vadd.f32 0.0, %v5143
        %v5145 = vpop.f32.mrb[0].mxu0
        %5146 = vmatprep.mubr.f32.mxu0 0.0
        %5147 = vmatmul.mubr.f32.gmra.mrb[0].mxu0 %v4941
        %v5148 = vpop.f32.mrb[0].mxu0
        %v5149 = vadd.f32 0.0, %v5148
        %v5150 = vpop.f32.mrb[0].mxu0
        %5151 = vmatprep.mubr.f32.mxu0 0.0
        %5152 = vmatmul.mubr.f32.gmra.mrb[0].mxu0 %v4944
        %v5153 = vpop.f32.mrb[0].mxu0
        %v5154 = vadd.f32 0.0, %v5153
        %v5155 = vpop.f32.mrb[0].mxu0
        %5156 = vmatprep.mubr.f32.mxu0 0.0
        %5157 = vmatmul.mubr.f32.gmra.mrb[0].mxu0 %v4947
        %v5158 = vpop.f32.mrb[0].mxu0
        %v5159 = vadd.f32 0.0, %v5158
        %v5160 = vpop.f32.mrb[0].mxu0
        %5161 = vmatprep.mubr.f32.mxu0 0.0
        %5162 = vmatmul.mubr.f32.gmra.mrb[0].mxu0 %v4950
        %v5163 = vpop.f32.mrb[0].mxu0
        %v5164 = vadd.f32 0.0, %v5163
        %v5165 = vpop.f32.mrb[0].mxu0
        %5166 = vmatprep.mubr.f32.mxu0 0.0
        %5167 = vmatmul.mubr.f32.gmra.mrb[0].mxu0 %v4953
        %v5168 = vpop.f32.mrb[0].mxu0
        %v5169 = vadd.f32 0.0, %v5168
        %v5170 = vpop.f32.mrb[0].mxu0
        %5171 = vmatprep.mubr.f32.mxu0 0.0
        %5172 = vmatmul.mubr.f32.gmra.mrb[0].mxu0 %v4956
        %v5173 = vpop.f32.mrb[0].mxu0
        %v5174 = vadd.f32 0.0, %v5173
        %v5175 = vpop.f32.mrb[0].mxu0
        %5176 = vmatprep.mubr.f32.mxu0 0.0
        %5177 = vmatmul.mubr.f32.gmra.mrb[0].mxu0 %v4959
        %v5178 = vpop.f32.mrb[0].mxu0
        %v5179 = vadd.f32 0.0, %v5178
        %v5180 = vpop.f32.mrb[0].mxu0
        %5181 = vmatprep.mubr.f32.mxu0 0.0
        %5182 = vmatmul.mubr.f32.gmra.mrb[0].mxu0 %v4962
        %v5183 = vpop.f32.mrb[0].mxu0
        %v5184 = vadd.f32 0.0, %v5183
        %v5185 = vpop.f32.mrb[0].mxu0
        %5186 = vmatprep.mubr.f32.mxu0 0.0
        %5187 = vmatmul.mubr.f32.gmra.mrb[0].mxu0 %v4965
        %v5188 = vpop.f32.mrb[0].mxu0
        %v5189 = vadd.f32 0.0, %v5188
        %v5190 = vpop.f32.mrb[0].mxu0
        %5191 = vdwg.mxu0
        %v5192 = vadd.f32 %v4802, %v5034
        %v5193 = vadd.f32 %v4803, %v5039
        %v5194 = vadd.f32 %v4804, %v5044
        %v5195 = vadd.f32 %v4805, %v5049
        %v5196 = vadd.f32 %v4806, %v5054
        %v5197 = vadd.f32 %v4807, %v5059
        %v5198 = vadd.f32 %v4808, %v5064
        %v5199 = vadd.f32 %v4809, %v5069
        %v5200 = vadd.f32 %v4810, %v5074
        %v5201 = vadd.f32 %v4811, %v5079
        %v5202 = vadd.f32 %v4812, %v5084
        %v5203 = vadd.f32 %v4813, %v5089
        %v5204 = vadd.f32 %v4814, %v5094
        %v5205 = vadd.f32 %v4815, %v5099
        %v5206 = vadd.f32 %v4816, %v5104
        %v5207 = vadd.f32 %v4817, %v5109
        %v5208 = vadd.f32 %v4818, %v5114
        %v5209 = vadd.f32 %v4819, %v5119
        %v5210 = vadd.f32 %v4820, %v5124
        %v5211 = vadd.f32 %v4821, %v5129
        %v5212 = vadd.f32 %v4822, %v5134
        %v5213 = vadd.f32 %v4823, %v5139
        %v5214 = vadd.f32 %v4824, %v5144
        %v5215 = vadd.f32 %v4825, %v5149
        %v5216 = vadd.f32 %v4826, %v5154
        %v5217 = vadd.f32 %v4827, %v5159
        %v5218 = vadd.f32 %v4828, %v5164
        %v5219 = vadd.f32 %v4829, %v5169
        %v5220 = vadd.f32 %v4830, %v5174
        %v5221 = vadd.f32 %v4831, %v5179
        %v5222 = vadd.f32 %v4832, %v5184
        %v5223 = vadd.f32 %v4833, %v5189
        %v5224 = vld [vmem:[%s1566 + $0x2] sm:$0xff]
        %v5225 = vld [vmem:[%s1566 + $0xa] sm:$0xff]
        %v5226 = vld [vmem:[%s1566 + $0x1a] sm:$0xff]
        %v5227 = vld [vmem:[%s1566 + $0x22] sm:$0xff]
        %v5228 = vld [vmem:[%s1566 + $0x32] sm:$0xff]
        %v5229 = vld [vmem:[%s1566 + $0x3a] sm:$0xff]
        %v5230 = vld [vmem:[%s1566 + $0x4a] sm:$0xff]
        %v5231 = vld [vmem:[%s1566 + $0x52] sm:$0xff]
        %v5232 = vld [vmem:[%s1566 + $0x62] sm:$0xff]
        %v5233 = vld [vmem:[%s1566 + $0x6a] sm:$0xff]
        %v5234 = vld [vmem:[%s1566 + $0x7a] sm:$0xff]
        %v5235 = vld [vmem:[%s1566 + $0x82] sm:$0xff]
        %v5236 = vld [vmem:[%s1566 + $0x92] sm:$0xff]
        %v5237 = vld [vmem:[%s1566 + $0x9a] sm:$0xff]
        %v5238 = vld [vmem:[%s1566 + $0xaa] sm:$0xff]
        %v5239 = vld [vmem:[%s1566 + $0xb2] sm:$0xff]
        %v5240 = vld [vmem:[%s1566 + $0xc2] sm:$0xff]
        %v5241 = vld [vmem:[%s1566 + $0xca] sm:$0xff]
        %v5242 = vld [vmem:[%s1566 + $0xda] sm:$0xff]
        %v5243 = vld [vmem:[%s1566 + $0xe2] sm:$0xff]
        %v5244 = vld [vmem:[%s1566 + $0xf2] sm:$0xff]
        %v5245 = vld [vmem:[%s1566 + $0xfa] sm:$0xff]
        %v5246 = vld [vmem:[%s1566 + $0x10a] sm:$0xff]
        %v5247 = vld [vmem:[%s1566 + $0x112] sm:$0xff]
        %v5248 = vld [vmem:[%s1566 + $0x122] sm:$0xff]
        %v5249 = vld [vmem:[%s1566 + $0x12a] sm:$0xff]
        %v5250 = vld [vmem:[%s1566 + $0x13a] sm:$0xff]
        %v5251 = vld [vmem:[%s1566 + $0x142] sm:$0xff]
        %v5252 = vld [vmem:[%s1566 + $0x152] sm:$0xff]
        %v5253 = vld [vmem:[%s1566 + $0x15a] sm:$0xff]
        %v5254 = vld [vmem:[%s1566 + $0x16a] sm:$0xff]
        %v5255 = vld [vmem:[%s1566 + $0x172] sm:$0xff]
        %s5256 = scalar_lea.vmem [#allocation7], 160
        %v5257 = vld [vmem:[%s5256] sm:$0xff]
        %v5258 = vld [vmem:[%s5256 + $0x8] sm:$0xff]
        %v5259 = vld [vmem:[%s5256 + $0x10] sm:$0xff]
        %v5260 = vld [vmem:[%s5256 + $0x18] sm:$0xff]
        %v5262 = vsel %vm643, %v5224, 0
        %v5265 = vsel %vm643, %v5225, 0
        %v5268 = vsel %vm643, %v5226, 0
        %v5271 = vsel %vm643, %v5227, 0
        %v5274 = vsel %vm643, %v5228, 0
        %v5277 = vsel %vm643, %v5229, 0
        %v5280 = vsel %vm643, %v5230, 0
        %v5283 = vsel %vm643, %v5231, 0
        %v5286 = vsel %vm643, %v5232, 0
        %v5289 = vsel %vm643, %v5233, 0
        %v5292 = vsel %vm643, %v5234, 0
        %v5295 = vsel %vm643, %v5235, 0
        %v5298 = vsel %vm643, %v5236, 0
        %v5301 = vsel %vm643, %v5237, 0
        %v5304 = vsel %vm643, %v5238, 0
        %v5307 = vsel %vm643, %v5239, 0
        %v5310 = vsel %vm643, %v5240, 0
        %v5313 = vsel %vm643, %v5241, 0
        %v5316 = vsel %vm643, %v5242, 0
        %v5319 = vsel %vm643, %v5243, 0
        %v5322 = vsel %vm643, %v5244, 0
        %v5325 = vsel %vm643, %v5245, 0
        %v5328 = vsel %vm643, %v5246, 0
        %v5331 = vsel %vm643, %v5247, 0
        %v5334 = vsel %vm643, %v5248, 0
        %v5337 = vsel %vm643, %v5249, 0
        %v5340 = vsel %vm643, %v5250, 0
        %v5343 = vsel %vm643, %v5251, 0
        %v5346 = vsel %vm643, %v5252, 0
        %v5349 = vsel %vm643, %v5253, 0
        %v5352 = vsel %vm643, %v5254, 0
        %v5355 = vsel %vm643, %v5255, 0
        %5357 = vmatprep.subr.mxu0 0.0
        %5358 = vmatpush1.msra.mxu0 %v5257
        %5359 = vmatprep.subr.mxu0 0.0
        %5360 = vmatpush1.msra.mxu0 %v5258
        %5361 = vmatprep.subr.mxu0 0.0
        %5362 = vmatpush1.msra.mxu0 %v5259
        %5363 = vmatprep.subr.mxu0 0.0
        %5364 = vmatpush1.msra.mxu0 %v5260
        %5365 = vmatprep.subr.mxu0 0.0
        %5366 = vmatpush1.msra.mxu0 0.0
        %5367 = vmatprep.subr.mxu0 0.0
        %5368 = vmatpush1.msra.mxu0 0.0
        %5369 = vmatprep.subr.mxu0 0.0
        %5370 = vmatpush1.msra.mxu0 0.0
        %5371 = vmatprep.subr.mxu0 0.0
        %5372 = vmatpush1.msra.mxu0 0.0
        %5373 = vmatprep.subr.mxu0 0.0
        %5374 = vmatpush1.msra.mxu0 0.0
        %5375 = vmatprep.subr.mxu0 0.0
        %5376 = vmatpush1.msra.mxu0 0.0
        %5377 = vmatprep.subr.mxu0 0.0
        %5378 = vmatpush1.msra.mxu0 0.0
        %5379 = vmatprep.subr.mxu0 0.0
        %5380 = vmatpush1.msra.mxu0 0.0
        %5381 = vmatprep.subr.mxu0 0.0
        %5382 = vmatpush1.msra.mxu0 0.0
        %5383 = vmatprep.subr.mxu0 0.0
        %5384 = vmatpush1.msra.mxu0 0.0
        %5385 = vmatprep.subr.mxu0 0.0
        %5386 = vmatpush1.msra.mxu0 0.0
        %5387 = vmatprep.subr.mxu0 0.0
        %5388 = vmatpush1.msra.mxu0 0.0
        %5389 = vmatprep.subr.mxu0 0.0
        %5390 = vmatpush1.msra.mxu0 0.0
        %5391 = vmatprep.subr.mxu0 0.0
        %5392 = vmatpush1.msra.mxu0 0.0
        %5393 = vmatprep.subr.mxu0 0.0
        %5394 = vmatpush1.msra.mxu0 0.0
        %5395 = vmatprep.subr.mxu0 0.0
        %5396 = vmatpush1.msra.mxu0 0.0
        %5397 = vmatprep.subr.mxu0 0.0
        %5398 = vmatpush1.msra.mxu0 0.0
        %5399 = vmatprep.subr.mxu0 0.0
        %5400 = vmatpush1.msra.mxu0 0.0
        %5401 = vmatprep.subr.mxu0 0.0
        %5402 = vmatpush1.msra.mxu0 0.0
        %5403 = vmatprep.subr.mxu0 0.0
        %5404 = vmatpush1.msra.mxu0 0.0
        %5405 = vmatprep.subr.mxu0 0.0
        %5406 = vmatpush1.msra.mxu0 0.0
        %5407 = vmatprep.subr.mxu0 0.0
        %5408 = vmatpush1.msra.mxu0 0.0
        %5409 = vmatprep.subr.mxu0 0.0
        %5410 = vmatpush1.msra.mxu0 0.0
        %5411 = vmatprep.subr.mxu0 0.0
        %5412 = vmatpush1.msra.mxu0 0.0
        %5413 = vmatprep.subr.mxu0 0.0
        %5414 = vmatpush1.msra.mxu0 0.0
        %5415 = vmatprep.subr.mxu0 0.0
        %5416 = vmatpush1.msra.mxu0 0.0
        %5417 = vmatprep.subr.mxu0 0.0
        %5418 = vmatpush1.msra.mxu0 0.0
        %5419 = vmatprep.subr.mxu0 0.0
        %5420 = vmatpush1.msra.mxu0 0.0
        %5421 = vmatprep.mubr.f32.mxu0 0.0
        %5422 = vmatmul.mubr.f32.gmra.mrb[0].mxu0 %v5262
        %v5423 = vpop.f32.mrb[0].mxu0
        %v5424 = vadd.f32 0.0, %v5423
        %v5425 = vpop.f32.mrb[0].mxu0
        %5426 = vmatprep.mubr.f32.mxu0 0.0
        %5427 = vmatmul.mubr.f32.gmra.mrb[0].mxu0 %v5265
        %v5428 = vpop.f32.mrb[0].mxu0
        %v5429 = vadd.f32 0.0, %v5428
        %v5430 = vpop.f32.mrb[0].mxu0
        %5431 = vmatprep.mubr.f32.mxu0 0.0
        %5432 = vmatmul.mubr.f32.gmra.mrb[0].mxu0 %v5268
        %v5433 = vpop.f32.mrb[0].mxu0
        %v5434 = vadd.f32 0.0, %v5433
        %v5435 = vpop.f32.mrb[0].mxu0
        %5436 = vmatprep.mubr.f32.mxu0 0.0
        %5437 = vmatmul.mubr.f32.gmra.mrb[0].mxu0 %v5271
        %v5438 = vpop.f32.mrb[0].mxu0
        %v5439 = vadd.f32 0.0, %v5438
        %v5440 = vpop.f32.mrb[0].mxu0
        %5441 = vmatprep.mubr.f32.mxu0 0.0
        %5442 = vmatmul.mubr.f32.gmra.mrb[0].mxu0 %v5274
        %v5443 = vpop.f32.mrb[0].mxu0
        %v5444 = vadd.f32 0.0, %v5443
        %v5445 = vpop.f32.mrb[0].mxu0
        %5446 = vmatprep.mubr.f32.mxu0 0.0
        %5447 = vmatmul.mubr.f32.gmra.mrb[0].mxu0 %v5277
        %v5448 = vpop.f32.mrb[0].mxu0
        %v5449 = vadd.f32 0.0, %v5448
        %v5450 = vpop.f32.mrb[0].mxu0
        %5451 = vmatprep.mubr.f32.mxu0 0.0
        %5452 = vmatmul.mubr.f32.gmra.mrb[0].mxu0 %v5280
        %v5453 = vpop.f32.mrb[0].mxu0
        %v5454 = vadd.f32 0.0, %v5453
        %v5455 = vpop.f32.mrb[0].mxu0
        %5456 = vmatprep.mubr.f32.mxu0 0.0
        %5457 = vmatmul.mubr.f32.gmra.mrb[0].mxu0 %v5283
        %v5458 = vpop.f32.mrb[0].mxu0
        %v5459 = vadd.f32 0.0, %v5458
        %v5460 = vpop.f32.mrb[0].mxu0
        %5461 = vmatprep.mubr.f32.mxu0 0.0
        %5462 = vmatmul.mubr.f32.gmra.mrb[0].mxu0 %v5286
        %v5463 = vpop.f32.mrb[0].mxu0
        %v5464 = vadd.f32 0.0, %v5463
        %v5465 = vpop.f32.mrb[0].mxu0
        %5466 = vmatprep.mubr.f32.mxu0 0.0
        %5467 = vmatmul.mubr.f32.gmra.mrb[0].mxu0 %v5289
        %v5468 = vpop.f32.mrb[0].mxu0
        %v5469 = vadd.f32 0.0, %v5468
        %v5470 = vpop.f32.mrb[0].mxu0
        %5471 = vmatprep.mubr.f32.mxu0 0.0
        %5472 = vmatmul.mubr.f32.gmra.mrb[0].mxu0 %v5292
        %v5473 = vpop.f32.mrb[0].mxu0
        %v5474 = vadd.f32 0.0, %v5473
        %v5475 = vpop.f32.mrb[0].mxu0
        %5476 = vmatprep.mubr.f32.mxu0 0.0
        %5477 = vmatmul.mubr.f32.gmra.mrb[0].mxu0 %v5295
        %v5478 = vpop.f32.mrb[0].mxu0
        %v5479 = vadd.f32 0.0, %v5478
        %v5480 = vpop.f32.mrb[0].mxu0
        %5481 = vmatprep.mubr.f32.mxu0 0.0
        %5482 = vmatmul.mubr.f32.gmra.mrb[0].mxu0 %v5298
        %v5483 = vpop.f32.mrb[0].mxu0
        %v5484 = vadd.f32 0.0, %v5483
        %v5485 = vpop.f32.mrb[0].mxu0
        %5486 = vmatprep.mubr.f32.mxu0 0.0
        %5487 = vmatmul.mubr.f32.gmra.mrb[0].mxu0 %v5301
        %v5488 = vpop.f32.mrb[0].mxu0
        %v5489 = vadd.f32 0.0, %v5488
        %v5490 = vpop.f32.mrb[0].mxu0
        %5491 = vmatprep.mubr.f32.mxu0 0.0
        %5492 = vmatmul.mubr.f32.gmra.mrb[0].mxu0 %v5304
        %v5493 = vpop.f32.mrb[0].mxu0
        %v5494 = vadd.f32 0.0, %v5493
        %v5495 = vpop.f32.mrb[0].mxu0
        %5496 = vmatprep.mubr.f32.mxu0 0.0
        %5497 = vmatmul.mubr.f32.gmra.mrb[0].mxu0 %v5307
        %v5498 = vpop.f32.mrb[0].mxu0
        %v5499 = vadd.f32 0.0, %v5498
        %v5500 = vpop.f32.mrb[0].mxu0
        %5501 = vmatprep.mubr.f32.mxu0 0.0
        %5502 = vmatmul.mubr.f32.gmra.mrb[0].mxu0 %v5310
        %v5503 = vpop.f32.mrb[0].mxu0
        %v5504 = vadd.f32 0.0, %v5503
        %v5505 = vpop.f32.mrb[0].mxu0
        %5506 = vmatprep.mubr.f32.mxu0 0.0
        %5507 = vmatmul.mubr.f32.gmra.mrb[0].mxu0 %v5313
        %v5508 = vpop.f32.mrb[0].mxu0
        %v5509 = vadd.f32 0.0, %v5508
        %v5510 = vpop.f32.mrb[0].mxu0
        %5511 = vmatprep.mubr.f32.mxu0 0.0
        %5512 = vmatmul.mubr.f32.gmra.mrb[0].mxu0 %v5316
        %v5513 = vpop.f32.mrb[0].mxu0
        %v5514 = vadd.f32 0.0, %v5513
        %v5515 = vpop.f32.mrb[0].mxu0
        %5516 = vmatprep.mubr.f32.mxu0 0.0
        %5517 = vmatmul.mubr.f32.gmra.mrb[0].mxu0 %v5319
        %v5518 = vpop.f32.mrb[0].mxu0
        %v5519 = vadd.f32 0.0, %v5518
        %v5520 = vpop.f32.mrb[0].mxu0
        %5521 = vmatprep.mubr.f32.mxu0 0.0
        %5522 = vmatmul.mubr.f32.gmra.mrb[0].mxu0 %v5322
        %v5523 = vpop.f32.mrb[0].mxu0
        %v5524 = vadd.f32 0.0, %v5523
        %v5525 = vpop.f32.mrb[0].mxu0
        %5526 = vmatprep.mubr.f32.mxu0 0.0
        %5527 = vmatmul.mubr.f32.gmra.mrb[0].mxu0 %v5325
        %v5528 = vpop.f32.mrb[0].mxu0
        %v5529 = vadd.f32 0.0, %v5528
        %v5530 = vpop.f32.mrb[0].mxu0
        %5531 = vmatprep.mubr.f32.mxu0 0.0
        %5532 = vmatmul.mubr.f32.gmra.mrb[0].mxu0 %v5328
        %v5533 = vpop.f32.mrb[0].mxu0
        %v5534 = vadd.f32 0.0, %v5533
        %v5535 = vpop.f32.mrb[0].mxu0
        %5536 = vmatprep.mubr.f32.mxu0 0.0
        %5537 = vmatmul.mubr.f32.gmra.mrb[0].mxu0 %v5331
        %v5538 = vpop.f32.mrb[0].mxu0
        %v5539 = vadd.f32 0.0, %v5538
        %v5540 = vpop.f32.mrb[0].mxu0
        %5541 = vmatprep.mubr.f32.mxu0 0.0
        %5542 = vmatmul.mubr.f32.gmra.mrb[0].mxu0 %v5334
        %v5543 = vpop.f32.mrb[0].mxu0
        %v5544 = vadd.f32 0.0, %v5543
        %v5545 = vpop.f32.mrb[0].mxu0
        %5546 = vmatprep.mubr.f32.mxu0 0.0
        %5547 = vmatmul.mubr.f32.gmra.mrb[0].mxu0 %v5337
        %v5548 = vpop.f32.mrb[0].mxu0
        %v5549 = vadd.f32 0.0, %v5548
        %v5550 = vpop.f32.mrb[0].mxu0
        %5551 = vmatprep.mubr.f32.mxu0 0.0
        %5552 = vmatmul.mubr.f32.gmra.mrb[0].mxu0 %v5340
        %v5553 = vpop.f32.mrb[0].mxu0
        %v5554 = vadd.f32 0.0, %v5553
        %v5555 = vpop.f32.mrb[0].mxu0
        %5556 = vmatprep.mubr.f32.mxu0 0.0
        %5557 = vmatmul.mubr.f32.gmra.mrb[0].mxu0 %v5343
        %v5558 = vpop.f32.mrb[0].mxu0
        %v5559 = vadd.f32 0.0, %v5558
        %v5560 = vpop.f32.mrb[0].mxu0
        %5561 = vmatprep.mubr.f32.mxu0 0.0
        %5562 = vmatmul.mubr.f32.gmra.mrb[0].mxu0 %v5346
        %v5563 = vpop.f32.mrb[0].mxu0
        %v5564 = vadd.f32 0.0, %v5563
        %v5565 = vpop.f32.mrb[0].mxu0
        %5566 = vmatprep.mubr.f32.mxu0 0.0
        %5567 = vmatmul.mubr.f32.gmra.mrb[0].mxu0 %v5349
        %v5568 = vpop.f32.mrb[0].mxu0
        %v5569 = vadd.f32 0.0, %v5568
        %v5570 = vpop.f32.mrb[0].mxu0
        %5571 = vmatprep.mubr.f32.mxu0 0.0
        %5572 = vmatmul.mubr.f32.gmra.mrb[0].mxu0 %v5352
        %v5573 = vpop.f32.mrb[0].mxu0
        %v5574 = vadd.f32 0.0, %v5573
        %v5575 = vpop.f32.mrb[0].mxu0
        %5576 = vmatprep.mubr.f32.mxu0 0.0
        %5577 = vmatmul.mubr.f32.gmra.mrb[0].mxu0 %v5355
        %v5578 = vpop.f32.mrb[0].mxu0
        %v5579 = vadd.f32 0.0, %v5578
        %v5580 = vpop.f32.mrb[0].mxu0
        %5581 = vdwg.mxu0
        %v5582 = vadd.f32 %v5192, %v5424
        %v5583 = vadd.f32 %v5193, %v5429
        %v5584 = vadd.f32 %v5194, %v5434
        %v5585 = vadd.f32 %v5195, %v5439
        %v5586 = vadd.f32 %v5196, %v5444
        %v5587 = vadd.f32 %v5197, %v5449
        %v5588 = vadd.f32 %v5198, %v5454
        %v5589 = vadd.f32 %v5199, %v5459
        %v5590 = vadd.f32 %v5200, %v5464
        %v5591 = vadd.f32 %v5201, %v5469
        %v5592 = vadd.f32 %v5202, %v5474
        %v5593 = vadd.f32 %v5203, %v5479
        %v5594 = vadd.f32 %v5204, %v5484
        %v5595 = vadd.f32 %v5205, %v5489
        %v5596 = vadd.f32 %v5206, %v5494
        %v5597 = vadd.f32 %v5207, %v5499
        %v5598 = vadd.f32 %v5208, %v5504
        %v5599 = vadd.f32 %v5209, %v5509
        %v5600 = vadd.f32 %v5210, %v5514
        %v5601 = vadd.f32 %v5211, %v5519
        %v5602 = vadd.f32 %v5212, %v5524
        %v5603 = vadd.f32 %v5213, %v5529
        %v5604 = vadd.f32 %v5214, %v5534
        %v5605 = vadd.f32 %v5215, %v5539
        %v5606 = vadd.f32 %v5216, %v5544
        %v5607 = vadd.f32 %v5217, %v5549
        %v5608 = vadd.f32 %v5218, %v5554
        %v5609 = vadd.f32 %v5219, %v5559
        %v5610 = vadd.f32 %v5220, %v5564
        %v5611 = vadd.f32 %v5221, %v5569
        %v5612 = vadd.f32 %v5222, %v5574
        %v5613 = vadd.f32 %v5223, %v5579
        %v5614 = vld [vmem:[%s2314] sm:$0xff]
        %v5615 = vld [vmem:[%s2314 + $0x8] sm:$0xff]
        %v5616 = vld [vmem:[%s2314 + $0x18] sm:$0xff]
        %v5617 = vld [vmem:[%s2314 + $0x20] sm:$0xff]
        %v5618 = vld [vmem:[%s2314 + $0x30] sm:$0xff]
        %v5619 = vld [vmem:[%s2314 + $0x38] sm:$0xff]
        %v5620 = vld [vmem:[%s2314 + $0x48] sm:$0xff]
        %v5621 = vld [vmem:[%s2314 + $0x50] sm:$0xff]
        %v5622 = vld [vmem:[%s2314 + $0x60] sm:$0xff]
        %v5623 = vld [vmem:[%s2314 + $0x68] sm:$0xff]
        %v5624 = vld [vmem:[%s2314 + $0x78] sm:$0xff]
        %v5625 = vld [vmem:[%s2314 + $0x80] sm:$0xff]
        %v5626 = vld [vmem:[%s2314 + $0x90] sm:$0xff]
        %v5627 = vld [vmem:[%s2314 + $0x98] sm:$0xff]
        %v5628 = vld [vmem:[%s2314 + $0xa8] sm:$0xff]
        %v5629 = vld [vmem:[%s2314 + $0xb0] sm:$0xff]
        %v5630 = vld [vmem:[%s2314 + $0xc0] sm:$0xff]
        %v5631 = vld [vmem:[%s2314 + $0xc8] sm:$0xff]
        %v5632 = vld [vmem:[%s2314 + $0xd8] sm:$0xff]
        %v5633 = vld [vmem:[%s2314 + $0xe0] sm:$0xff]
        %v5634 = vld [vmem:[%s2314 + $0xf0] sm:$0xff]
        %v5635 = vld [vmem:[%s2314 + $0xf8] sm:$0xff]
        %v5636 = vld [vmem:[%s2314 + $0x108] sm:$0xff]
        %v5637 = vld [vmem:[%s2314 + $0x110] sm:$0xff]
        %v5638 = vld [vmem:[%s2314 + $0x120] sm:$0xff]
        %v5639 = vld [vmem:[%s2314 + $0x128] sm:$0xff]
        %v5640 = vld [vmem:[%s2314 + $0x138] sm:$0xff]
        %v5641 = vld [vmem:[%s2314 + $0x140] sm:$0xff]
        %v5642 = vld [vmem:[%s2314 + $0x150] sm:$0xff]
        %v5643 = vld [vmem:[%s2314 + $0x158] sm:$0xff]
        %v5644 = vld [vmem:[%s2314 + $0x168] sm:$0xff]
        %v5645 = vld [vmem:[%s2314 + $0x170] sm:$0xff]
        %s5646 = scalar_lea.vmem [#allocation7], 192
        %v5647 = vld [vmem:[%s5646] sm:$0xff]
        %v5648 = vld [vmem:[%s5646 + $0x8] sm:$0xff]
        %v5649 = vld [vmem:[%s5646 + $0x10] sm:$0xff]
        %v5650 = vld [vmem:[%s5646 + $0x18] sm:$0xff]
        %v5652 = vsel %vm643, %v5614, 0
        %v5655 = vsel %vm643, %v5615, 0
        %v5658 = vsel %vm643, %v5616, 0
        %v5661 = vsel %vm643, %v5617, 0
        %v5664 = vsel %vm643, %v5618, 0
        %v5667 = vsel %vm643, %v5619, 0
        %v5670 = vsel %vm643, %v5620, 0
        %v5673 = vsel %vm643, %v5621, 0
        %v5676 = vsel %vm643, %v5622, 0
        %v5679 = vsel %vm643, %v5623, 0
        %v5682 = vsel %vm643, %v5624, 0
        %v5685 = vsel %vm643, %v5625, 0
        %v5688 = vsel %vm643, %v5626, 0
        %v5691 = vsel %vm643, %v5627, 0
        %v5694 = vsel %vm643, %v5628, 0
        %v5697 = vsel %vm643, %v5629, 0
        %v5700 = vsel %vm643, %v5630, 0
        %v5703 = vsel %vm643, %v5631, 0
        %v5706 = vsel %vm643, %v5632, 0
        %v5709 = vsel %vm643, %v5633, 0
        %v5712 = vsel %vm643, %v5634, 0
        %v5715 = vsel %vm643, %v5635, 0
        %v5718 = vsel %vm643, %v5636, 0
        %v5721 = vsel %vm643, %v5637, 0
        %v5724 = vsel %vm643, %v5638, 0
        %v5727 = vsel %vm643, %v5639, 0
        %v5730 = vsel %vm643, %v5640, 0
        %v5733 = vsel %vm643, %v5641, 0
        %v5736 = vsel %vm643, %v5642, 0
        %v5739 = vsel %vm643, %v5643, 0
        %v5742 = vsel %vm643, %v5644, 0
        %v5745 = vsel %vm643, %v5645, 0
        %5747 = vmatprep.subr.mxu0 0.0
        %5748 = vmatpush1.msra.mxu0 %v5647
        %5749 = vmatprep.subr.mxu0 0.0
        %5750 = vmatpush1.msra.mxu0 %v5648
        %5751 = vmatprep.subr.mxu0 0.0
        %5752 = vmatpush1.msra.mxu0 %v5649
        %5753 = vmatprep.subr.mxu0 0.0
        %5754 = vmatpush1.msra.mxu0 %v5650
        %5755 = vmatprep.subr.mxu0 0.0
        %5756 = vmatpush1.msra.mxu0 0.0
        %5757 = vmatprep.subr.mxu0 0.0
        %5758 = vmatpush1.msra.mxu0 0.0
        %5759 = vmatprep.subr.mxu0 0.0
        %5760 = vmatpush1.msra.mxu0 0.0
        %5761 = vmatprep.subr.mxu0 0.0
        %5762 = vmatpush1.msra.mxu0 0.0
        %5763 = vmatprep.subr.mxu0 0.0
        %5764 = vmatpush1.msra.mxu0 0.0
        %5765 = vmatprep.subr.mxu0 0.0
        %5766 = vmatpush1.msra.mxu0 0.0
        %5767 = vmatprep.subr.mxu0 0.0
        %5768 = vmatpush1.msra.mxu0 0.0
        %5769 = vmatprep.subr.mxu0 0.0
        %5770 = vmatpush1.msra.mxu0 0.0
        %5771 = vmatprep.subr.mxu0 0.0
        %5772 = vmatpush1.msra.mxu0 0.0
        %5773 = vmatprep.subr.mxu0 0.0
        %5774 = vmatpush1.msra.mxu0 0.0
        %5775 = vmatprep.subr.mxu0 0.0
        %5776 = vmatpush1.msra.mxu0 0.0
        %5777 = vmatprep.subr.mxu0 0.0
        %5778 = vmatpush1.msra.mxu0 0.0
        %5779 = vmatprep.subr.mxu0 0.0
        %5780 = vmatpush1.msra.mxu0 0.0
        %5781 = vmatprep.subr.mxu0 0.0
        %5782 = vmatpush1.msra.mxu0 0.0
        %5783 = vmatprep.subr.mxu0 0.0
        %5784 = vmatpush1.msra.mxu0 0.0
        %5785 = vmatprep.subr.mxu0 0.0
        %5786 = vmatpush1.msra.mxu0 0.0
        %5787 = vmatprep.subr.mxu0 0.0
        %5788 = vmatpush1.msra.mxu0 0.0
        %5789 = vmatprep.subr.mxu0 0.0
        %5790 = vmatpush1.msra.mxu0 0.0
        %5791 = vmatprep.subr.mxu0 0.0
        %5792 = vmatpush1.msra.mxu0 0.0
        %5793 = vmatprep.subr.mxu0 0.0
        %5794 = vmatpush1.msra.mxu0 0.0
        %5795 = vmatprep.subr.mxu0 0.0
        %5796 = vmatpush1.msra.mxu0 0.0
        %5797 = vmatprep.subr.mxu0 0.0
        %5798 = vmatpush1.msra.mxu0 0.0
        %5799 = vmatprep.subr.mxu0 0.0
        %5800 = vmatpush1.msra.mxu0 0.0
        %5801 = vmatprep.subr.mxu0 0.0
        %5802 = vmatpush1.msra.mxu0 0.0
        %5803 = vmatprep.subr.mxu0 0.0
        %5804 = vmatpush1.msra.mxu0 0.0
        %5805 = vmatprep.subr.mxu0 0.0
        %5806 = vmatpush1.msra.mxu0 0.0
        %5807 = vmatprep.subr.mxu0 0.0
        %5808 = vmatpush1.msra.mxu0 0.0
        %5809 = vmatprep.subr.mxu0 0.0
        %5810 = vmatpush1.msra.mxu0 0.0
        %5811 = vmatprep.mubr.f32.mxu0 0.0
        %5812 = vmatmul.mubr.f32.gmra.mrb[0].mxu0 %v5652
        %v5813 = vpop.f32.mrb[0].mxu0
        %v5814 = vadd.f32 0.0, %v5813
        %v5815 = vpop.f32.mrb[0].mxu0
        %5816 = vmatprep.mubr.f32.mxu0 0.0
        %5817 = vmatmul.mubr.f32.gmra.mrb[0].mxu0 %v5655
        %v5818 = vpop.f32.mrb[0].mxu0
        %v5819 = vadd.f32 0.0, %v5818
        %v5820 = vpop.f32.mrb[0].mxu0
        %5821 = vmatprep.mubr.f32.mxu0 0.0
        %5822 = vmatmul.mubr.f32.gmra.mrb[0].mxu0 %v5658
        %v5823 = vpop.f32.mrb[0].mxu0
        %v5824 = vadd.f32 0.0, %v5823
        %v5825 = vpop.f32.mrb[0].mxu0
        %5826 = vmatprep.mubr.f32.mxu0 0.0
        %5827 = vmatmul.mubr.f32.gmra.mrb[0].mxu0 %v5661
        %v5828 = vpop.f32.mrb[0].mxu0
        %v5829 = vadd.f32 0.0, %v5828
        %v5830 = vpop.f32.mrb[0].mxu0
        %5831 = vmatprep.mubr.f32.mxu0 0.0
        %5832 = vmatmul.mubr.f32.gmra.mrb[0].mxu0 %v5664
        %v5833 = vpop.f32.mrb[0].mxu0
        %v5834 = vadd.f32 0.0, %v5833
        %v5835 = vpop.f32.mrb[0].mxu0
        %5836 = vmatprep.mubr.f32.mxu0 0.0
        %5837 = vmatmul.mubr.f32.gmra.mrb[0].mxu0 %v5667
        %v5838 = vpop.f32.mrb[0].mxu0
        %v5839 = vadd.f32 0.0, %v5838
        %v5840 = vpop.f32.mrb[0].mxu0
        %5841 = vmatprep.mubr.f32.mxu0 0.0
        %5842 = vmatmul.mubr.f32.gmra.mrb[0].mxu0 %v5670
        %v5843 = vpop.f32.mrb[0].mxu0
        %v5844 = vadd.f32 0.0, %v5843
        %v5845 = vpop.f32.mrb[0].mxu0
        %5846 = vmatprep.mubr.f32.mxu0 0.0
        %5847 = vmatmul.mubr.f32.gmra.mrb[0].mxu0 %v5673
        %v5848 = vpop.f32.mrb[0].mxu0
        %v5849 = vadd.f32 0.0, %v5848
        %v5850 = vpop.f32.mrb[0].mxu0
        %5851 = vmatprep.mubr.f32.mxu0 0.0
        %5852 = vmatmul.mubr.f32.gmra.mrb[0].mxu0 %v5676
        %v5853 = vpop.f32.mrb[0].mxu0
        %v5854 = vadd.f32 0.0, %v5853
        %v5855 = vpop.f32.mrb[0].mxu0
        %5856 = vmatprep.mubr.f32.mxu0 0.0
        %5857 = vmatmul.mubr.f32.gmra.mrb[0].mxu0 %v5679
        %v5858 = vpop.f32.mrb[0].mxu0
        %v5859 = vadd.f32 0.0, %v5858
        %v5860 = vpop.f32.mrb[0].mxu0
        %5861 = vmatprep.mubr.f32.mxu0 0.0
        %5862 = vmatmul.mubr.f32.gmra.mrb[0].mxu0 %v5682
        %v5863 = vpop.f32.mrb[0].mxu0
        %v5864 = vadd.f32 0.0, %v5863
        %v5865 = vpop.f32.mrb[0].mxu0
        %5866 = vmatprep.mubr.f32.mxu0 0.0
        %5867 = vmatmul.mubr.f32.gmra.mrb[0].mxu0 %v5685
        %v5868 = vpop.f32.mrb[0].mxu0
        %v5869 = vadd.f32 0.0, %v5868
        %v5870 = vpop.f32.mrb[0].mxu0
        %5871 = vmatprep.mubr.f32.mxu0 0.0
        %5872 = vmatmul.mubr.f32.gmra.mrb[0].mxu0 %v5688
        %v5873 = vpop.f32.mrb[0].mxu0
        %v5874 = vadd.f32 0.0, %v5873
        %v5875 = vpop.f32.mrb[0].mxu0
        %5876 = vmatprep.mubr.f32.mxu0 0.0
        %5877 = vmatmul.mubr.f32.gmra.mrb[0].mxu0 %v5691
        %v5878 = vpop.f32.mrb[0].mxu0
        %v5879 = vadd.f32 0.0, %v5878
        %v5880 = vpop.f32.mrb[0].mxu0
        %5881 = vmatprep.mubr.f32.mxu0 0.0
        %5882 = vmatmul.mubr.f32.gmra.mrb[0].mxu0 %v5694
        %v5883 = vpop.f32.mrb[0].mxu0
        %v5884 = vadd.f32 0.0, %v5883
        %v5885 = vpop.f32.mrb[0].mxu0
        %5886 = vmatprep.mubr.f32.mxu0 0.0
        %5887 = vmatmul.mubr.f32.gmra.mrb[0].mxu0 %v5697
        %v5888 = vpop.f32.mrb[0].mxu0
        %v5889 = vadd.f32 0.0, %v5888
        %v5890 = vpop.f32.mrb[0].mxu0
        %5891 = vmatprep.mubr.f32.mxu0 0.0
        %5892 = vmatmul.mubr.f32.gmra.mrb[0].mxu0 %v5700
        %v5893 = vpop.f32.mrb[0].mxu0
        %v5894 = vadd.f32 0.0, %v5893
        %v5895 = vpop.f32.mrb[0].mxu0
        %5896 = vmatprep.mubr.f32.mxu0 0.0
        %5897 = vmatmul.mubr.f32.gmra.mrb[0].mxu0 %v5703
        %v5898 = vpop.f32.mrb[0].mxu0
        %v5899 = vadd.f32 0.0, %v5898
        %v5900 = vpop.f32.mrb[0].mxu0
        %5901 = vmatprep.mubr.f32.mxu0 0.0
        %5902 = vmatmul.mubr.f32.gmra.mrb[0].mxu0 %v5706
        %v5903 = vpop.f32.mrb[0].mxu0
        %v5904 = vadd.f32 0.0, %v5903
        %v5905 = vpop.f32.mrb[0].mxu0
        %5906 = vmatprep.mubr.f32.mxu0 0.0
        %5907 = vmatmul.mubr.f32.gmra.mrb[0].mxu0 %v5709
        %v5908 = vpop.f32.mrb[0].mxu0
        %v5909 = vadd.f32 0.0, %v5908
        %v5910 = vpop.f32.mrb[0].mxu0
        %5911 = vmatprep.mubr.f32.mxu0 0.0
        %5912 = vmatmul.mubr.f32.gmra.mrb[0].mxu0 %v5712
        %v5913 = vpop.f32.mrb[0].mxu0
        %v5914 = vadd.f32 0.0, %v5913
        %v5915 = vpop.f32.mrb[0].mxu0
        %5916 = vmatprep.mubr.f32.mxu0 0.0
        %5917 = vmatmul.mubr.f32.gmra.mrb[0].mxu0 %v5715
        %v5918 = vpop.f32.mrb[0].mxu0
        %v5919 = vadd.f32 0.0, %v5918
        %v5920 = vpop.f32.mrb[0].mxu0
        %5921 = vmatprep.mubr.f32.mxu0 0.0
        %5922 = vmatmul.mubr.f32.gmra.mrb[0].mxu0 %v5718
        %v5923 = vpop.f32.mrb[0].mxu0
        %v5924 = vadd.f32 0.0, %v5923
        %v5925 = vpop.f32.mrb[0].mxu0
        %5926 = vmatprep.mubr.f32.mxu0 0.0
        %5927 = vmatmul.mubr.f32.gmra.mrb[0].mxu0 %v5721
        %v5928 = vpop.f32.mrb[0].mxu0
        %v5929 = vadd.f32 0.0, %v5928
        %v5930 = vpop.f32.mrb[0].mxu0
        %5931 = vmatprep.mubr.f32.mxu0 0.0
        %5932 = vmatmul.mubr.f32.gmra.mrb[0].mxu0 %v5724
        %v5933 = vpop.f32.mrb[0].mxu0
        %v5934 = vadd.f32 0.0, %v5933
        %v5935 = vpop.f32.mrb[0].mxu0
        %5936 = vmatprep.mubr.f32.mxu0 0.0
        %5937 = vmatmul.mubr.f32.gmra.mrb[0].mxu0 %v5727
        %v5938 = vpop.f32.mrb[0].mxu0
        %v5939 = vadd.f32 0.0, %v5938
        %v5940 = vpop.f32.mrb[0].mxu0
        %5941 = vmatprep.mubr.f32.mxu0 0.0
        %5942 = vmatmul.mubr.f32.gmra.mrb[0].mxu0 %v5730
        %v5943 = vpop.f32.mrb[0].mxu0
        %v5944 = vadd.f32 0.0, %v5943
        %v5945 = vpop.f32.mrb[0].mxu0
        %5946 = vmatprep.mubr.f32.mxu0 0.0
        %5947 = vmatmul.mubr.f32.gmra.mrb[0].mxu0 %v5733
        %v5948 = vpop.f32.mrb[0].mxu0
        %v5949 = vadd.f32 0.0, %v5948
        %v5950 = vpop.f32.mrb[0].mxu0
        %5951 = vmatprep.mubr.f32.mxu0 0.0
        %5952 = vmatmul.mubr.f32.gmra.mrb[0].mxu0 %v5736
        %v5953 = vpop.f32.mrb[0].mxu0
        %v5954 = vadd.f32 0.0, %v5953
        %v5955 = vpop.f32.mrb[0].mxu0
        %5956 = vmatprep.mubr.f32.mxu0 0.0
        %5957 = vmatmul.mubr.f32.gmra.mrb[0].mxu0 %v5739
        %v5958 = vpop.f32.mrb[0].mxu0
        %v5959 = vadd.f32 0.0, %v5958
        %v5960 = vpop.f32.mrb[0].mxu0
        %5961 = vmatprep.mubr.f32.mxu0 0.0
        %5962 = vmatmul.mubr.f32.gmra.mrb[0].mxu0 %v5742
        %v5963 = vpop.f32.mrb[0].mxu0
        %v5964 = vadd.f32 0.0, %v5963
        %v5965 = vpop.f32.mrb[0].mxu0
        %5966 = vmatprep.mubr.f32.mxu0 0.0
        %5967 = vmatmul.mubr.f32.gmra.mrb[0].mxu0 %v5745
        %v5968 = vpop.f32.mrb[0].mxu0
        %v5969 = vadd.f32 0.0, %v5968
        %v5970 = vpop.f32.mrb[0].mxu0
        %5971 = vdwg.mxu0
        %v5972 = vadd.f32 %v5582, %v5814
        %v5973 = vadd.f32 %v5583, %v5819
        %v5974 = vadd.f32 %v5584, %v5824
        %v5975 = vadd.f32 %v5585, %v5829
        %v5976 = vadd.f32 %v5586, %v5834
        %v5977 = vadd.f32 %v5587, %v5839
        %v5978 = vadd.f32 %v5588, %v5844
        %v5979 = vadd.f32 %v5589, %v5849
        %v5980 = vadd.f32 %v5590, %v5854
        %v5981 = vadd.f32 %v5591, %v5859
        %v5982 = vadd.f32 %v5592, %v5864
        %v5983 = vadd.f32 %v5593, %v5869
        %v5984 = vadd.f32 %v5594, %v5874
        %v5985 = vadd.f32 %v5595, %v5879
        %v5986 = vadd.f32 %v5596, %v5884
        %v5987 = vadd.f32 %v5597, %v5889
        %v5988 = vadd.f32 %v5598, %v5894
        %v5989 = vadd.f32 %v5599, %v5899
        %v5990 = vadd.f32 %v5600, %v5904
        %v5991 = vadd.f32 %v5601, %v5909
        %v5992 = vadd.f32 %v5602, %v5914
        %v5993 = vadd.f32 %v5603, %v5919
        %v5994 = vadd.f32 %v5604, %v5924
        %v5995 = vadd.f32 %v5605, %v5929
        %v5996 = vadd.f32 %v5606, %v5934
        %v5997 = vadd.f32 %v5607, %v5939
        %v5998 = vadd.f32 %v5608, %v5944
        %v5999 = vadd.f32 %v5609, %v5949
        %v6000 = vadd.f32 %v5610, %v5954
        %v6001 = vadd.f32 %v5611, %v5959
        %v6002 = vadd.f32 %v5612, %v5964
        %v6003 = vadd.f32 %v5613, %v5969
        %v6004 = vld [vmem:[%s2314 + $0x1] sm:$0xff]
        %v6005 = vld [vmem:[%s2314 + $0x9] sm:$0xff]
        %v6006 = vld [vmem:[%s2314 + $0x19] sm:$0xff]
        %v6007 = vld [vmem:[%s2314 + $0x21] sm:$0xff]
        %v6008 = vld [vmem:[%s2314 + $0x31] sm:$0xff]
        %v6009 = vld [vmem:[%s2314 + $0x39] sm:$0xff]
        %v6010 = vld [vmem:[%s2314 + $0x49] sm:$0xff]
        %v6011 = vld [vmem:[%s2314 + $0x51] sm:$0xff]
        %v6012 = vld [vmem:[%s2314 + $0x61] sm:$0xff]
        %v6013 = vld [vmem:[%s2314 + $0x69] sm:$0xff]
        %v6014 = vld [vmem:[%s2314 + $0x79] sm:$0xff]
        %v6015 = vld [vmem:[%s2314 + $0x81] sm:$0xff]
        %v6016 = vld [vmem:[%s2314 + $0x91] sm:$0xff]
        %v6017 = vld [vmem:[%s2314 + $0x99] sm:$0xff]
        %v6018 = vld [vmem:[%s2314 + $0xa9] sm:$0xff]
        %v6019 = vld [vmem:[%s2314 + $0xb1] sm:$0xff]
        %v6020 = vld [vmem:[%s2314 + $0xc1] sm:$0xff]
        %v6021 = vld [vmem:[%s2314 + $0xc9] sm:$0xff]
        %v6022 = vld [vmem:[%s2314 + $0xd9] sm:$0xff]
        %v6023 = vld [vmem:[%s2314 + $0xe1] sm:$0xff]
        %v6024 = vld [vmem:[%s2314 + $0xf1] sm:$0xff]
        %v6025 = vld [vmem:[%s2314 + $0xf9] sm:$0xff]
        %v6026 = vld [vmem:[%s2314 + $0x109] sm:$0xff]
        %v6027 = vld [vmem:[%s2314 + $0x111] sm:$0xff]
        %v6028 = vld [vmem:[%s2314 + $0x121] sm:$0xff]
        %v6029 = vld [vmem:[%s2314 + $0x129] sm:$0xff]
        %v6030 = vld [vmem:[%s2314 + $0x139] sm:$0xff]
        %v6031 = vld [vmem:[%s2314 + $0x141] sm:$0xff]
        %v6032 = vld [vmem:[%s2314 + $0x151] sm:$0xff]
        %v6033 = vld [vmem:[%s2314 + $0x159] sm:$0xff]
        %v6034 = vld [vmem:[%s2314 + $0x169] sm:$0xff]
        %v6035 = vld [vmem:[%s2314 + $0x171] sm:$0xff]
        %s6036 = scalar_lea.vmem [#allocation7], 224
        %v6037 = vld [vmem:[%s6036] sm:$0xff]
        %v6038 = vld [vmem:[%s6036 + $0x8] sm:$0xff]
        %v6039 = vld [vmem:[%s6036 + $0x10] sm:$0xff]
        %v6040 = vld [vmem:[%s6036 + $0x18] sm:$0xff]
        %v6042 = vsel %vm643, %v6004, 0
        %v6045 = vsel %vm643, %v6005, 0
        %v6048 = vsel %vm643, %v6006, 0
        %v6051 = vsel %vm643, %v6007, 0
        %v6054 = vsel %vm643, %v6008, 0
        %v6057 = vsel %vm643, %v6009, 0
        %v6060 = vsel %vm643, %v6010, 0
        %v6063 = vsel %vm643, %v6011, 0
        %v6066 = vsel %vm643, %v6012, 0
        %v6069 = vsel %vm643, %v6013, 0
        %v6072 = vsel %vm643, %v6014, 0
        %v6075 = vsel %vm643, %v6015, 0
        %v6078 = vsel %vm643, %v6016, 0
        %v6081 = vsel %vm643, %v6017, 0
        %v6084 = vsel %vm643, %v6018, 0
        %v6087 = vsel %vm643, %v6019, 0
        %v6090 = vsel %vm643, %v6020, 0
        %v6093 = vsel %vm643, %v6021, 0
        %v6096 = vsel %vm643, %v6022, 0
        %v6099 = vsel %vm643, %v6023, 0
        %v6102 = vsel %vm643, %v6024, 0
        %v6105 = vsel %vm643, %v6025, 0
        %v6108 = vsel %vm643, %v6026, 0
        %v6111 = vsel %vm643, %v6027, 0
        %v6114 = vsel %vm643, %v6028, 0
        %v6117 = vsel %vm643, %v6029, 0
        %v6120 = vsel %vm643, %v6030, 0
        %v6123 = vsel %vm643, %v6031, 0
        %v6126 = vsel %vm643, %v6032, 0
        %v6129 = vsel %vm643, %v6033, 0
        %v6132 = vsel %vm643, %v6034, 0
        %v6135 = vsel %vm643, %v6035, 0
        %6137 = vmatprep.subr.mxu0 0.0
        %6138 = vmatpush1.msra.mxu0 %v6037
        %6139 = vmatprep.subr.mxu0 0.0
        %6140 = vmatpush1.msra.mxu0 %v6038
        %6141 = vmatprep.subr.mxu0 0.0
        %6142 = vmatpush1.msra.mxu0 %v6039
        %6143 = vmatprep.subr.mxu0 0.0
        %6144 = vmatpush1.msra.mxu0 %v6040
        %6145 = vmatprep.subr.mxu0 0.0
        %6146 = vmatpush1.msra.mxu0 0.0
        %6147 = vmatprep.subr.mxu0 0.0
        %6148 = vmatpush1.msra.mxu0 0.0
        %6149 = vmatprep.subr.mxu0 0.0
        %6150 = vmatpush1.msra.mxu0 0.0
        %6151 = vmatprep.subr.mxu0 0.0
        %6152 = vmatpush1.msra.mxu0 0.0
        %6153 = vmatprep.subr.mxu0 0.0
        %6154 = vmatpush1.msra.mxu0 0.0
        %6155 = vmatprep.subr.mxu0 0.0
        %6156 = vmatpush1.msra.mxu0 0.0
        %6157 = vmatprep.subr.mxu0 0.0
        %6158 = vmatpush1.msra.mxu0 0.0
        %6159 = vmatprep.subr.mxu0 0.0
        %6160 = vmatpush1.msra.mxu0 0.0
        %6161 = vmatprep.subr.mxu0 0.0
        %6162 = vmatpush1.msra.mxu0 0.0
        %6163 = vmatprep.subr.mxu0 0.0
        %6164 = vmatpush1.msra.mxu0 0.0
        %6165 = vmatprep.subr.mxu0 0.0
        %6166 = vmatpush1.msra.mxu0 0.0
        %6167 = vmatprep.subr.mxu0 0.0
        %6168 = vmatpush1.msra.mxu0 0.0
        %6169 = vmatprep.subr.mxu0 0.0
        %6170 = vmatpush1.msra.mxu0 0.0
        %6171 = vmatprep.subr.mxu0 0.0
        %6172 = vmatpush1.msra.mxu0 0.0
        %6173 = vmatprep.subr.mxu0 0.0
        %6174 = vmatpush1.msra.mxu0 0.0
        %6175 = vmatprep.subr.mxu0 0.0
        %6176 = vmatpush1.msra.mxu0 0.0
        %6177 = vmatprep.subr.mxu0 0.0
        %6178 = vmatpush1.msra.mxu0 0.0
        %6179 = vmatprep.subr.mxu0 0.0
        %6180 = vmatpush1.msra.mxu0 0.0
        %6181 = vmatprep.subr.mxu0 0.0
        %6182 = vmatpush1.msra.mxu0 0.0
        %6183 = vmatprep.subr.mxu0 0.0
        %6184 = vmatpush1.msra.mxu0 0.0
        %6185 = vmatprep.subr.mxu0 0.0
        %6186 = vmatpush1.msra.mxu0 0.0
        %6187 = vmatprep.subr.mxu0 0.0
        %6188 = vmatpush1.msra.mxu0 0.0
        %6189 = vmatprep.subr.mxu0 0.0
        %6190 = vmatpush1.msra.mxu0 0.0
        %6191 = vmatprep.subr.mxu0 0.0
        %6192 = vmatpush1.msra.mxu0 0.0
        %6193 = vmatprep.subr.mxu0 0.0
        %6194 = vmatpush1.msra.mxu0 0.0
        %6195 = vmatprep.subr.mxu0 0.0
        %6196 = vmatpush1.msra.mxu0 0.0
        %6197 = vmatprep.subr.mxu0 0.0
        %6198 = vmatpush1.msra.mxu0 0.0
        %6199 = vmatprep.subr.mxu0 0.0
        %6200 = vmatpush1.msra.mxu0 0.0
        %6201 = vmatprep.mubr.f32.mxu0 0.0
        %6202 = vmatmul.mubr.f32.gmra.mrb[0].mxu0 %v6042
        %v6203 = vpop.f32.mrb[0].mxu0
        %v6204 = vadd.f32 0.0, %v6203
        %v6205 = vpop.f32.mrb[0].mxu0
        %6206 = vmatprep.mubr.f32.mxu0 0.0
        %6207 = vmatmul.mubr.f32.gmra.mrb[0].mxu0 %v6045
        %v6208 = vpop.f32.mrb[0].mxu0
        %v6209 = vadd.f32 0.0, %v6208
        %v6210 = vpop.f32.mrb[0].mxu0
        %6211 = vmatprep.mubr.f32.mxu0 0.0
        %6212 = vmatmul.mubr.f32.gmra.mrb[0].mxu0 %v6048
        %v6213 = vpop.f32.mrb[0].mxu0
        %v6214 = vadd.f32 0.0, %v6213
        %v6215 = vpop.f32.mrb[0].mxu0
        %6216 = vmatprep.mubr.f32.mxu0 0.0
        %6217 = vmatmul.mubr.f32.gmra.mrb[0].mxu0 %v6051
        %v6218 = vpop.f32.mrb[0].mxu0
        %v6219 = vadd.f32 0.0, %v6218
        %v6220 = vpop.f32.mrb[0].mxu0
        %6221 = vmatprep.mubr.f32.mxu0 0.0
        %6222 = vmatmul.mubr.f32.gmra.mrb[0].mxu0 %v6054
        %v6223 = vpop.f32.mrb[0].mxu0
        %v6224 = vadd.f32 0.0, %v6223
        %v6225 = vpop.f32.mrb[0].mxu0
        %6226 = vmatprep.mubr.f32.mxu0 0.0
        %6227 = vmatmul.mubr.f32.gmra.mrb[0].mxu0 %v6057
        %v6228 = vpop.f32.mrb[0].mxu0
        %v6229 = vadd.f32 0.0, %v6228
        %v6230 = vpop.f32.mrb[0].mxu0
        %6231 = vmatprep.mubr.f32.mxu0 0.0
        %6232 = vmatmul.mubr.f32.gmra.mrb[0].mxu0 %v6060
        %v6233 = vpop.f32.mrb[0].mxu0
        %v6234 = vadd.f32 0.0, %v6233
        %v6235 = vpop.f32.mrb[0].mxu0
        %6236 = vmatprep.mubr.f32.mxu0 0.0
        %6237 = vmatmul.mubr.f32.gmra.mrb[0].mxu0 %v6063
        %v6238 = vpop.f32.mrb[0].mxu0
        %v6239 = vadd.f32 0.0, %v6238
        %v6240 = vpop.f32.mrb[0].mxu0
        %6241 = vmatprep.mubr.f32.mxu0 0.0
        %6242 = vmatmul.mubr.f32.gmra.mrb[0].mxu0 %v6066
        %v6243 = vpop.f32.mrb[0].mxu0
        %v6244 = vadd.f32 0.0, %v6243
        %v6245 = vpop.f32.mrb[0].mxu0
        %6246 = vmatprep.mubr.f32.mxu0 0.0
        %6247 = vmatmul.mubr.f32.gmra.mrb[0].mxu0 %v6069
        %v6248 = vpop.f32.mrb[0].mxu0
        %v6249 = vadd.f32 0.0, %v6248
        %v6250 = vpop.f32.mrb[0].mxu0
        %6251 = vmatprep.mubr.f32.mxu0 0.0
        %6252 = vmatmul.mubr.f32.gmra.mrb[0].mxu0 %v6072
        %v6253 = vpop.f32.mrb[0].mxu0
        %v6254 = vadd.f32 0.0, %v6253
        %v6255 = vpop.f32.mrb[0].mxu0
        %6256 = vmatprep.mubr.f32.mxu0 0.0
        %6257 = vmatmul.mubr.f32.gmra.mrb[0].mxu0 %v6075
        %v6258 = vpop.f32.mrb[0].mxu0
        %v6259 = vadd.f32 0.0, %v6258
        %v6260 = vpop.f32.mrb[0].mxu0
        %6261 = vmatprep.mubr.f32.mxu0 0.0
        %6262 = vmatmul.mubr.f32.gmra.mrb[0].mxu0 %v6078
        %v6263 = vpop.f32.mrb[0].mxu0
        %v6264 = vadd.f32 0.0, %v6263
        %v6265 = vpop.f32.mrb[0].mxu0
        %6266 = vmatprep.mubr.f32.mxu0 0.0
        %6267 = vmatmul.mubr.f32.gmra.mrb[0].mxu0 %v6081
        %v6268 = vpop.f32.mrb[0].mxu0
        %v6269 = vadd.f32 0.0, %v6268
        %v6270 = vpop.f32.mrb[0].mxu0
        %6271 = vmatprep.mubr.f32.mxu0 0.0
        %6272 = vmatmul.mubr.f32.gmra.mrb[0].mxu0 %v6084
        %v6273 = vpop.f32.mrb[0].mxu0
        %v6274 = vadd.f32 0.0, %v6273
        %v6275 = vpop.f32.mrb[0].mxu0
        %6276 = vmatprep.mubr.f32.mxu0 0.0
        %6277 = vmatmul.mubr.f32.gmra.mrb[0].mxu0 %v6087
        %v6278 = vpop.f32.mrb[0].mxu0
        %v6279 = vadd.f32 0.0, %v6278
        %v6280 = vpop.f32.mrb[0].mxu0
        %6281 = vmatprep.mubr.f32.mxu0 0.0
        %6282 = vmatmul.mubr.f32.gmra.mrb[0].mxu0 %v6090
        %v6283 = vpop.f32.mrb[0].mxu0
        %v6284 = vadd.f32 0.0, %v6283
        %v6285 = vpop.f32.mrb[0].mxu0
        %6286 = vmatprep.mubr.f32.mxu0 0.0
        %6287 = vmatmul.mubr.f32.gmra.mrb[0].mxu0 %v6093
        %v6288 = vpop.f32.mrb[0].mxu0
        %v6289 = vadd.f32 0.0, %v6288
        %v6290 = vpop.f32.mrb[0].mxu0
        %6291 = vmatprep.mubr.f32.mxu0 0.0
        %6292 = vmatmul.mubr.f32.gmra.mrb[0].mxu0 %v6096
        %v6293 = vpop.f32.mrb[0].mxu0
        %v6294 = vadd.f32 0.0, %v6293
        %v6295 = vpop.f32.mrb[0].mxu0
        %6296 = vmatprep.mubr.f32.mxu0 0.0
        %6297 = vmatmul.mubr.f32.gmra.mrb[0].mxu0 %v6099
        %v6298 = vpop.f32.mrb[0].mxu0
        %v6299 = vadd.f32 0.0, %v6298
        %v6300 = vpop.f32.mrb[0].mxu0
        %6301 = vmatprep.mubr.f32.mxu0 0.0
        %6302 = vmatmul.mubr.f32.gmra.mrb[0].mxu0 %v6102
        %v6303 = vpop.f32.mrb[0].mxu0
        %v6304 = vadd.f32 0.0, %v6303
        %v6305 = vpop.f32.mrb[0].mxu0
        %6306 = vmatprep.mubr.f32.mxu0 0.0
        %6307 = vmatmul.mubr.f32.gmra.mrb[0].mxu0 %v6105
        %v6308 = vpop.f32.mrb[0].mxu0
        %v6309 = vadd.f32 0.0, %v6308
        %v6310 = vpop.f32.mrb[0].mxu0
        %6311 = vmatprep.mubr.f32.mxu0 0.0
        %6312 = vmatmul.mubr.f32.gmra.mrb[0].mxu0 %v6108
        %v6313 = vpop.f32.mrb[0].mxu0
        %v6314 = vadd.f32 0.0, %v6313
        %v6315 = vpop.f32.mrb[0].mxu0
        %6316 = vmatprep.mubr.f32.mxu0 0.0
        %6317 = vmatmul.mubr.f32.gmra.mrb[0].mxu0 %v6111
        %v6318 = vpop.f32.mrb[0].mxu0
        %v6319 = vadd.f32 0.0, %v6318
        %v6320 = vpop.f32.mrb[0].mxu0
        %6321 = vmatprep.mubr.f32.mxu0 0.0
        %6322 = vmatmul.mubr.f32.gmra.mrb[0].mxu0 %v6114
        %v6323 = vpop.f32.mrb[0].mxu0
        %v6324 = vadd.f32 0.0, %v6323
        %v6325 = vpop.f32.mrb[0].mxu0
        %6326 = vmatprep.mubr.f32.mxu0 0.0
        %6327 = vmatmul.mubr.f32.gmra.mrb[0].mxu0 %v6117
        %v6328 = vpop.f32.mrb[0].mxu0
        %v6329 = vadd.f32 0.0, %v6328
        %v6330 = vpop.f32.mrb[0].mxu0
        %6331 = vmatprep.mubr.f32.mxu0 0.0
        %6332 = vmatmul.mubr.f32.gmra.mrb[0].mxu0 %v6120
        %v6333 = vpop.f32.mrb[0].mxu0
        %v6334 = vadd.f32 0.0, %v6333
        %v6335 = vpop.f32.mrb[0].mxu0
        %6336 = vmatprep.mubr.f32.mxu0 0.0
        %6337 = vmatmul.mubr.f32.gmra.mrb[0].mxu0 %v6123
        %v6338 = vpop.f32.mrb[0].mxu0
        %v6339 = vadd.f32 0.0, %v6338
        %v6340 = vpop.f32.mrb[0].mxu0
        %6341 = vmatprep.mubr.f32.mxu0 0.0
        %6342 = vmatmul.mubr.f32.gmra.mrb[0].mxu0 %v6126
        %v6343 = vpop.f32.mrb[0].mxu0
        %v6344 = vadd.f32 0.0, %v6343
        %v6345 = vpop.f32.mrb[0].mxu0
        %6346 = vmatprep.mubr.f32.mxu0 0.0
        %6347 = vmatmul.mubr.f32.gmra.mrb[0].mxu0 %v6129
        %v6348 = vpop.f32.mrb[0].mxu0
        %v6349 = vadd.f32 0.0, %v6348
        %v6350 = vpop.f32.mrb[0].mxu0
        %6351 = vmatprep.mubr.f32.mxu0 0.0
        %6352 = vmatmul.mubr.f32.gmra.mrb[0].mxu0 %v6132
        %v6353 = vpop.f32.mrb[0].mxu0
        %v6354 = vadd.f32 0.0, %v6353
        %v6355 = vpop.f32.mrb[0].mxu0
        %6356 = vmatprep.mubr.f32.mxu0 0.0
        %6357 = vmatmul.mubr.f32.gmra.mrb[0].mxu0 %v6135
        %v6358 = vpop.f32.mrb[0].mxu0
        %v6359 = vadd.f32 0.0, %v6358
        %v6360 = vpop.f32.mrb[0].mxu0
        %6361 = vdwg.mxu0
        %v6362 = vadd.f32 %v5972, %v6204
        %v6363 = vadd.f32 %v5973, %v6209
        %v6364 = vadd.f32 %v5974, %v6214
        %v6365 = vadd.f32 %v5975, %v6219
        %v6366 = vadd.f32 %v5976, %v6224
        %v6367 = vadd.f32 %v5977, %v6229
        %v6368 = vadd.f32 %v5978, %v6234
        %v6369 = vadd.f32 %v5979, %v6239
        %v6370 = vadd.f32 %v5980, %v6244
        %v6371 = vadd.f32 %v5981, %v6249
        %v6372 = vadd.f32 %v5982, %v6254
        %v6373 = vadd.f32 %v5983, %v6259
        %v6374 = vadd.f32 %v5984, %v6264
        %v6375 = vadd.f32 %v5985, %v6269
        %v6376 = vadd.f32 %v5986, %v6274
        %v6377 = vadd.f32 %v5987, %v6279
        %v6378 = vadd.f32 %v5988, %v6284
        %v6379 = vadd.f32 %v5989, %v6289
        %v6380 = vadd.f32 %v5990, %v6294
        %v6381 = vadd.f32 %v5991, %v6299
        %v6382 = vadd.f32 %v5992, %v6304
        %v6383 = vadd.f32 %v5993, %v6309
        %v6384 = vadd.f32 %v5994, %v6314
        %v6385 = vadd.f32 %v5995, %v6319
        %v6386 = vadd.f32 %v5996, %v6324
        %v6387 = vadd.f32 %v5997, %v6329
        %v6388 = vadd.f32 %v5998, %v6334
        %v6389 = vadd.f32 %v5999, %v6339
        %v6390 = vadd.f32 %v6000, %v6344
        %v6391 = vadd.f32 %v6001, %v6349
        %v6392 = vadd.f32 %v6002, %v6354
        %v6393 = vadd.f32 %v6003, %v6359
        %v6394 = vld [vmem:[%s2314 + $0x2] sm:$0xff]
        %v6395 = vld [vmem:[%s2314 + $0xa] sm:$0xff]
        %v6396 = vld [vmem:[%s2314 + $0x1a] sm:$0xff]
        %v6397 = vld [vmem:[%s2314 + $0x22] sm:$0xff]
        %v6398 = vld [vmem:[%s2314 + $0x32] sm:$0xff]
        %v6399 = vld [vmem:[%s2314 + $0x3a] sm:$0xff]
        %v6400 = vld [vmem:[%s2314 + $0x4a] sm:$0xff]
        %v6401 = vld [vmem:[%s2314 + $0x52] sm:$0xff]
        %v6402 = vld [vmem:[%s2314 + $0x62] sm:$0xff]
        %v6403 = vld [vmem:[%s2314 + $0x6a] sm:$0xff]
        %v6404 = vld [vmem:[%s2314 + $0x7a] sm:$0xff]
        %v6405 = vld [vmem:[%s2314 + $0x82] sm:$0xff]
        %v6406 = vld [vmem:[%s2314 + $0x92] sm:$0xff]
        %v6407 = vld [vmem:[%s2314 + $0x9a] sm:$0xff]
        %v6408 = vld [vmem:[%s2314 + $0xaa] sm:$0xff]
        %v6409 = vld [vmem:[%s2314 + $0xb2] sm:$0xff]
        %v6410 = vld [vmem:[%s2314 + $0xc2] sm:$0xff]
        %v6411 = vld [vmem:[%s2314 + $0xca] sm:$0xff]
        %v6412 = vld [vmem:[%s2314 + $0xda] sm:$0xff]
        %v6413 = vld [vmem:[%s2314 + $0xe2] sm:$0xff]
        %v6414 = vld [vmem:[%s2314 + $0xf2] sm:$0xff]
        %v6415 = vld [vmem:[%s2314 + $0xfa] sm:$0xff]
        %v6416 = vld [vmem:[%s2314 + $0x10a] sm:$0xff]
        %v6417 = vld [vmem:[%s2314 + $0x112] sm:$0xff]
        %v6418 = vld [vmem:[%s2314 + $0x122] sm:$0xff]
        %v6419 = vld [vmem:[%s2314 + $0x12a] sm:$0xff]
        %v6420 = vld [vmem:[%s2314 + $0x13a] sm:$0xff]
        %v6421 = vld [vmem:[%s2314 + $0x142] sm:$0xff]
        %v6422 = vld [vmem:[%s2314 + $0x152] sm:$0xff]
        %v6423 = vld [vmem:[%s2314 + $0x15a] sm:$0xff]
        %v6424 = vld [vmem:[%s2314 + $0x16a] sm:$0xff]
        %v6425 = vld [vmem:[%s2314 + $0x172] sm:$0xff]
        %s6426 = scalar_lea.vmem [#allocation7], 256
        %v6427 = vld [vmem:[%s6426] sm:$0xff]
        %v6428 = vld [vmem:[%s6426 + $0x8] sm:$0xff]
        %v6429 = vld [vmem:[%s6426 + $0x10] sm:$0xff]
        %v6430 = vld [vmem:[%s6426 + $0x18] sm:$0xff]
        %v6432 = vsel %vm643, %v6394, 0
        %v6435 = vsel %vm643, %v6395, 0
        %v6438 = vsel %vm643, %v6396, 0
        %v6441 = vsel %vm643, %v6397, 0
        %v6444 = vsel %vm643, %v6398, 0
        %v6447 = vsel %vm643, %v6399, 0
        %v6450 = vsel %vm643, %v6400, 0
        %v6453 = vsel %vm643, %v6401, 0
        %v6456 = vsel %vm643, %v6402, 0
        %v6459 = vsel %vm643, %v6403, 0
        %v6462 = vsel %vm643, %v6404, 0
        %v6465 = vsel %vm643, %v6405, 0
        %v6468 = vsel %vm643, %v6406, 0
        %v6471 = vsel %vm643, %v6407, 0
        %v6474 = vsel %vm643, %v6408, 0
        %v6477 = vsel %vm643, %v6409, 0
        %v6480 = vsel %vm643, %v6410, 0
        %v6483 = vsel %vm643, %v6411, 0
        %v6486 = vsel %vm643, %v6412, 0
        %v6489 = vsel %vm643, %v6413, 0
        %v6492 = vsel %vm643, %v6414, 0
        %v6495 = vsel %vm643, %v6415, 0
        %v6498 = vsel %vm643, %v6416, 0
        %v6501 = vsel %vm643, %v6417, 0
        %v6504 = vsel %vm643, %v6418, 0
        %v6507 = vsel %vm643, %v6419, 0
        %v6510 = vsel %vm643, %v6420, 0
        %v6513 = vsel %vm643, %v6421, 0
        %v6516 = vsel %vm643, %v6422, 0
        %v6519 = vsel %vm643, %v6423, 0
        %v6522 = vsel %vm643, %v6424, 0
        %v6525 = vsel %vm643, %v6425, 0
        %6527 = vmatprep.subr.mxu0 0.0
        %6528 = vmatpush1.msra.mxu0 %v6427
        %6529 = vmatprep.subr.mxu0 0.0
        %6530 = vmatpush1.msra.mxu0 %v6428
        %6531 = vmatprep.subr.mxu0 0.0
        %6532 = vmatpush1.msra.mxu0 %v6429
        %6533 = vmatprep.subr.mxu0 0.0
        %6534 = vmatpush1.msra.mxu0 %v6430
        %6535 = vmatprep.subr.mxu0 0.0
        %6536 = vmatpush1.msra.mxu0 0.0
        %6537 = vmatprep.subr.mxu0 0.0
        %6538 = vmatpush1.msra.mxu0 0.0
        %6539 = vmatprep.subr.mxu0 0.0
        %6540 = vmatpush1.msra.mxu0 0.0
        %6541 = vmatprep.subr.mxu0 0.0
        %6542 = vmatpush1.msra.mxu0 0.0
        %6543 = vmatprep.subr.mxu0 0.0
        %6544 = vmatpush1.msra.mxu0 0.0
        %6545 = vmatprep.subr.mxu0 0.0
        %6546 = vmatpush1.msra.mxu0 0.0
        %6547 = vmatprep.subr.mxu0 0.0
        %6548 = vmatpush1.msra.mxu0 0.0
        %6549 = vmatprep.subr.mxu0 0.0
        %6550 = vmatpush1.msra.mxu0 0.0
        %6551 = vmatprep.subr.mxu0 0.0
        %6552 = vmatpush1.msra.mxu0 0.0
        %6553 = vmatprep.subr.mxu0 0.0
        %6554 = vmatpush1.msra.mxu0 0.0
        %6555 = vmatprep.subr.mxu0 0.0
        %6556 = vmatpush1.msra.mxu0 0.0
        %6557 = vmatprep.subr.mxu0 0.0
        %6558 = vmatpush1.msra.mxu0 0.0
        %6559 = vmatprep.subr.mxu0 0.0
        %6560 = vmatpush1.msra.mxu0 0.0
        %6561 = vmatprep.subr.mxu0 0.0
        %6562 = vmatpush1.msra.mxu0 0.0
        %6563 = vmatprep.subr.mxu0 0.0
        %6564 = vmatpush1.msra.mxu0 0.0
        %6565 = vmatprep.subr.mxu0 0.0
        %6566 = vmatpush1.msra.mxu0 0.0
        %6567 = vmatprep.subr.mxu0 0.0
        %6568 = vmatpush1.msra.mxu0 0.0
        %6569 = vmatprep.subr.mxu0 0.0
        %6570 = vmatpush1.msra.mxu0 0.0
        %6571 = vmatprep.subr.mxu0 0.0
        %6572 = vmatpush1.msra.mxu0 0.0
        %6573 = vmatprep.subr.mxu0 0.0
        %6574 = vmatpush1.msra.mxu0 0.0
        %6575 = vmatprep.subr.mxu0 0.0
        %6576 = vmatpush1.msra.mxu0 0.0
        %6577 = vmatprep.subr.mxu0 0.0
        %6578 = vmatpush1.msra.mxu0 0.0
        %6579 = vmatprep.subr.mxu0 0.0
        %6580 = vmatpush1.msra.mxu0 0.0
        %6581 = vmatprep.subr.mxu0 0.0
        %6582 = vmatpush1.msra.mxu0 0.0
        %6583 = vmatprep.subr.mxu0 0.0
        %6584 = vmatpush1.msra.mxu0 0.0
        %6585 = vmatprep.subr.mxu0 0.0
        %6586 = vmatpush1.msra.mxu0 0.0
        %6587 = vmatprep.subr.mxu0 0.0
        %6588 = vmatpush1.msra.mxu0 0.0
        %6589 = vmatprep.subr.mxu0 0.0
        %6590 = vmatpush1.msra.mxu0 0.0
        %6591 = vmatprep.mubr.f32.mxu0 0.0
        %6592 = vmatmul.mubr.f32.gmra.mrb[0].mxu0 %v6432
        %v6593 = vpop.f32.mrb[0].mxu0
        %v6594 = vadd.f32 0.0, %v6593
        %v6595 = vpop.f32.mrb[0].mxu0
        %6596 = vmatprep.mubr.f32.mxu0 0.0
        %6597 = vmatmul.mubr.f32.gmra.mrb[0].mxu0 %v6435
        %v6598 = vpop.f32.mrb[0].mxu0
        %v6599 = vadd.f32 0.0, %v6598
        %v6600 = vpop.f32.mrb[0].mxu0
        %6601 = vmatprep.mubr.f32.mxu0 0.0
        %6602 = vmatmul.mubr.f32.gmra.mrb[0].mxu0 %v6438
        %v6603 = vpop.f32.mrb[0].mxu0
        %v6604 = vadd.f32 0.0, %v6603
        %v6605 = vpop.f32.mrb[0].mxu0
        %6606 = vmatprep.mubr.f32.mxu0 0.0
        %6607 = vmatmul.mubr.f32.gmra.mrb[0].mxu0 %v6441
        %v6608 = vpop.f32.mrb[0].mxu0
        %v6609 = vadd.f32 0.0, %v6608
        %v6610 = vpop.f32.mrb[0].mxu0
        %6611 = vmatprep.mubr.f32.mxu0 0.0
        %6612 = vmatmul.mubr.f32.gmra.mrb[0].mxu0 %v6444
        %v6613 = vpop.f32.mrb[0].mxu0
        %v6614 = vadd.f32 0.0, %v6613
        %v6615 = vpop.f32.mrb[0].mxu0
        %6616 = vmatprep.mubr.f32.mxu0 0.0
        %6617 = vmatmul.mubr.f32.gmra.mrb[0].mxu0 %v6447
        %v6618 = vpop.f32.mrb[0].mxu0
        %v6619 = vadd.f32 0.0, %v6618
        %v6620 = vpop.f32.mrb[0].mxu0
        %6621 = vmatprep.mubr.f32.mxu0 0.0
        %6622 = vmatmul.mubr.f32.gmra.mrb[0].mxu0 %v6450
        %v6623 = vpop.f32.mrb[0].mxu0
        %v6624 = vadd.f32 0.0, %v6623
        %v6625 = vpop.f32.mrb[0].mxu0
        %6626 = vmatprep.mubr.f32.mxu0 0.0
        %6627 = vmatmul.mubr.f32.gmra.mrb[0].mxu0 %v6453
        %v6628 = vpop.f32.mrb[0].mxu0
        %v6629 = vadd.f32 0.0, %v6628
        %v6630 = vpop.f32.mrb[0].mxu0
        %6631 = vmatprep.mubr.f32.mxu0 0.0
        %6632 = vmatmul.mubr.f32.gmra.mrb[0].mxu0 %v6456
        %v6633 = vpop.f32.mrb[0].mxu0
        %v6634 = vadd.f32 0.0, %v6633
        %v6635 = vpop.f32.mrb[0].mxu0
        %6636 = vmatprep.mubr.f32.mxu0 0.0
        %6637 = vmatmul.mubr.f32.gmra.mrb[0].mxu0 %v6459
        %v6638 = vpop.f32.mrb[0].mxu0
        %v6639 = vadd.f32 0.0, %v6638
        %v6640 = vpop.f32.mrb[0].mxu0
        %6641 = vmatprep.mubr.f32.mxu0 0.0
        %6642 = vmatmul.mubr.f32.gmra.mrb[0].mxu0 %v6462
        %v6643 = vpop.f32.mrb[0].mxu0
        %v6644 = vadd.f32 0.0, %v6643
        %v6645 = vpop.f32.mrb[0].mxu0
        %6646 = vmatprep.mubr.f32.mxu0 0.0
        %6647 = vmatmul.mubr.f32.gmra.mrb[0].mxu0 %v6465
        %v6648 = vpop.f32.mrb[0].mxu0
        %v6649 = vadd.f32 0.0, %v6648
        %v6650 = vpop.f32.mrb[0].mxu0
        %6651 = vmatprep.mubr.f32.mxu0 0.0
        %6652 = vmatmul.mubr.f32.gmra.mrb[0].mxu0 %v6468
        %v6653 = vpop.f32.mrb[0].mxu0
        %v6654 = vadd.f32 0.0, %v6653
        %v6655 = vpop.f32.mrb[0].mxu0
        %6656 = vmatprep.mubr.f32.mxu0 0.0
        %6657 = vmatmul.mubr.f32.gmra.mrb[0].mxu0 %v6471
        %v6658 = vpop.f32.mrb[0].mxu0
        %v6659 = vadd.f32 0.0, %v6658
        %v6660 = vpop.f32.mrb[0].mxu0
        %6661 = vmatprep.mubr.f32.mxu0 0.0
        %6662 = vmatmul.mubr.f32.gmra.mrb[0].mxu0 %v6474
        %v6663 = vpop.f32.mrb[0].mxu0
        %v6664 = vadd.f32 0.0, %v6663
        %v6665 = vpop.f32.mrb[0].mxu0
        %6666 = vmatprep.mubr.f32.mxu0 0.0
        %6667 = vmatmul.mubr.f32.gmra.mrb[0].mxu0 %v6477
        %v6668 = vpop.f32.mrb[0].mxu0
        %v6669 = vadd.f32 0.0, %v6668
        %v6670 = vpop.f32.mrb[0].mxu0
        %6671 = vmatprep.mubr.f32.mxu0 0.0
        %6672 = vmatmul.mubr.f32.gmra.mrb[0].mxu0 %v6480
        %v6673 = vpop.f32.mrb[0].mxu0
        %v6674 = vadd.f32 0.0, %v6673
        %v6675 = vpop.f32.mrb[0].mxu0
        %6676 = vmatprep.mubr.f32.mxu0 0.0
        %6677 = vmatmul.mubr.f32.gmra.mrb[0].mxu0 %v6483
        %v6678 = vpop.f32.mrb[0].mxu0
        %v6679 = vadd.f32 0.0, %v6678
        %v6680 = vpop.f32.mrb[0].mxu0
        %6681 = vmatprep.mubr.f32.mxu0 0.0
        %6682 = vmatmul.mubr.f32.gmra.mrb[0].mxu0 %v6486
        %v6683 = vpop.f32.mrb[0].mxu0
        %v6684 = vadd.f32 0.0, %v6683
        %v6685 = vpop.f32.mrb[0].mxu0
        %6686 = vmatprep.mubr.f32.mxu0 0.0
        %6687 = vmatmul.mubr.f32.gmra.mrb[0].mxu0 %v6489
        %v6688 = vpop.f32.mrb[0].mxu0
        %v6689 = vadd.f32 0.0, %v6688
        %v6690 = vpop.f32.mrb[0].mxu0
        %6691 = vmatprep.mubr.f32.mxu0 0.0
        %6692 = vmatmul.mubr.f32.gmra.mrb[0].mxu0 %v6492
        %v6693 = vpop.f32.mrb[0].mxu0
        %v6694 = vadd.f32 0.0, %v6693
        %v6695 = vpop.f32.mrb[0].mxu0
        %6696 = vmatprep.mubr.f32.mxu0 0.0
        %6697 = vmatmul.mubr.f32.gmra.mrb[0].mxu0 %v6495
        %v6698 = vpop.f32.mrb[0].mxu0
        %v6699 = vadd.f32 0.0, %v6698
        %v6700 = vpop.f32.mrb[0].mxu0
        %6701 = vmatprep.mubr.f32.mxu0 0.0
        %6702 = vmatmul.mubr.f32.gmra.mrb[0].mxu0 %v6498
        %v6703 = vpop.f32.mrb[0].mxu0
        %v6704 = vadd.f32 0.0, %v6703
        %v6705 = vpop.f32.mrb[0].mxu0
        %6706 = vmatprep.mubr.f32.mxu0 0.0
        %6707 = vmatmul.mubr.f32.gmra.mrb[0].mxu0 %v6501
        %v6708 = vpop.f32.mrb[0].mxu0
        %v6709 = vadd.f32 0.0, %v6708
        %v6710 = vpop.f32.mrb[0].mxu0
        %6711 = vmatprep.mubr.f32.mxu0 0.0
        %6712 = vmatmul.mubr.f32.gmra.mrb[0].mxu0 %v6504
        %v6713 = vpop.f32.mrb[0].mxu0
        %v6714 = vadd.f32 0.0, %v6713
        %v6715 = vpop.f32.mrb[0].mxu0
        %6716 = vmatprep.mubr.f32.mxu0 0.0
        %6717 = vmatmul.mubr.f32.gmra.mrb[0].mxu0 %v6507
        %v6718 = vpop.f32.mrb[0].mxu0
        %v6719 = vadd.f32 0.0, %v6718
        %v6720 = vpop.f32.mrb[0].mxu0
        %6721 = vmatprep.mubr.f32.mxu0 0.0
        %6722 = vmatmul.mubr.f32.gmra.mrb[0].mxu0 %v6510
        %v6723 = vpop.f32.mrb[0].mxu0
        %v6724 = vadd.f32 0.0, %v6723
        %v6725 = vpop.f32.mrb[0].mxu0
        %6726 = vmatprep.mubr.f32.mxu0 0.0
        %6727 = vmatmul.mubr.f32.gmra.mrb[0].mxu0 %v6513
        %v6728 = vpop.f32.mrb[0].mxu0
        %v6729 = vadd.f32 0.0, %v6728
        %v6730 = vpop.f32.mrb[0].mxu0
        %6731 = vmatprep.mubr.f32.mxu0 0.0
        %6732 = vmatmul.mubr.f32.gmra.mrb[0].mxu0 %v6516
        %v6733 = vpop.f32.mrb[0].mxu0
        %v6734 = vadd.f32 0.0, %v6733
        %v6735 = vpop.f32.mrb[0].mxu0
        %6736 = vmatprep.mubr.f32.mxu0 0.0
        %6737 = vmatmul.mubr.f32.gmra.mrb[0].mxu0 %v6519
        %v6738 = vpop.f32.mrb[0].mxu0
        %v6739 = vadd.f32 0.0, %v6738
        %v6740 = vpop.f32.mrb[0].mxu0
        %6741 = vmatprep.mubr.f32.mxu0 0.0
        %6742 = vmatmul.mubr.f32.gmra.mrb[0].mxu0 %v6522
        %v6743 = vpop.f32.mrb[0].mxu0
        %v6744 = vadd.f32 0.0, %v6743
        %v6745 = vpop.f32.mrb[0].mxu0
        %6746 = vmatprep.mubr.f32.mxu0 0.0
        %6747 = vmatmul.mubr.f32.gmra.mrb[0].mxu0 %v6525
        %v6748 = vpop.f32.mrb[0].mxu0
        %v6749 = vadd.f32 0.0, %v6748
        %v6750 = vpop.f32.mrb[0].mxu0
        %6751 = vdwg.mxu0
        %v6752 = vadd.f32 %v6362, %v6594
        %v6753 = vadd.f32 %v6363, %v6599
        %v6754 = vadd.f32 %v6364, %v6604
        %v6755 = vadd.f32 %v6365, %v6609
        %v6756 = vadd.f32 %v6366, %v6614
        %v6757 = vadd.f32 %v6367, %v6619
        %v6758 = vadd.f32 %v6368, %v6624
        %v6759 = vadd.f32 %v6369, %v6629
        %v6760 = vadd.f32 %v6370, %v6634
        %v6761 = vadd.f32 %v6371, %v6639
        %v6762 = vadd.f32 %v6372, %v6644
        %v6763 = vadd.f32 %v6373, %v6649
        %v6764 = vadd.f32 %v6374, %v6654
        %v6765 = vadd.f32 %v6375, %v6659
        %v6766 = vadd.f32 %v6376, %v6664
        %v6767 = vadd.f32 %v6377, %v6669
        %v6768 = vadd.f32 %v6378, %v6674
        %v6769 = vadd.f32 %v6379, %v6679
        %v6770 = vadd.f32 %v6380, %v6684
        %v6771 = vadd.f32 %v6381, %v6689
        %v6772 = vadd.f32 %v6382, %v6694
        %v6773 = vadd.f32 %v6383, %v6699
        %v6774 = vadd.f32 %v6384, %v6704
        %v6775 = vadd.f32 %v6385, %v6709
        %v6776 = vadd.f32 %v6386, %v6714
        %v6777 = vadd.f32 %v6387, %v6719
        %v6778 = vadd.f32 %v6388, %v6724
        %v6779 = vadd.f32 %v6389, %v6729
        %v6780 = vadd.f32 %v6390, %v6734
        %v6781 = vadd.f32 %v6391, %v6739
        %v6782 = vadd.f32 %v6392, %v6744
        %v6783 = vadd.f32 %v6393, %v6749
        %v6784 = vld [vmem:[#allocation8] sm:$0x1]
        %v6786 = vlaneseq
        %v6787 = vshrl.u32 %v6786, 7
        %v6788 = vsub.s32 0, %v6787
        %v6789 = vrot.slane %v6784, %v6788
        %v6791 = vadd.f32 %v6752, %v6789
        %v6792 = vadd.f32 %v6753, %v6789
        %v6793 = vadd.f32 %v6754, %v6789
        %v6794 = vadd.f32 %v6755, %v6789
        %v6795 = vadd.f32 %v6756, %v6789
        %v6796 = vadd.f32 %v6757, %v6789
        %v6797 = vadd.f32 %v6758, %v6789
        %v6798 = vadd.f32 %v6759, %v6789
        %v6799 = vadd.f32 %v6760, %v6789
        %v6800 = vadd.f32 %v6761, %v6789
        %v6801 = vadd.f32 %v6762, %v6789
        %v6802 = vadd.f32 %v6763, %v6789
        %v6803 = vadd.f32 %v6764, %v6789
        %v6804 = vadd.f32 %v6765, %v6789
        %v6805 = vadd.f32 %v6766, %v6789
        %v6806 = vadd.f32 %v6767, %v6789
        %v6807 = vadd.f32 %v6768, %v6789
        %v6808 = vadd.f32 %v6769, %v6789
        %v6809 = vadd.f32 %v6770, %v6789
        %v6810 = vadd.f32 %v6771, %v6789
        %v6811 = vadd.f32 %v6772, %v6789
        %v6812 = vadd.f32 %v6773, %v6789
        %v6813 = vadd.f32 %v6774, %v6789
        %v6814 = vadd.f32 %v6775, %v6789
        %v6815 = vadd.f32 %v6776, %v6789
        %v6816 = vadd.f32 %v6777, %v6789
        %v6817 = vadd.f32 %v6778, %v6789
        %v6818 = vadd.f32 %v6779, %v6789
        %v6819 = vadd.f32 %v6780, %v6789
        %v6820 = vadd.f32 %v6781, %v6789
        %v6821 = vadd.f32 %v6782, %v6789
        %v6822 = vadd.f32 %v6783, %v6789
        %v6823 = vsel %vm643, %v6791, 0.0
        %v6824 = vsel %vm643, %v6792, 0.0
        %v6825 = vadd.f32 %v6823, %v6824
        %v6826 = vsel %vm643, %v6793, 0.0
        %v6827 = vadd.f32 %v6825, %v6826
        %v6828 = vsel %vm643, %v6794, 0.0
        %v6829 = vadd.f32 %v6827, %v6828
        %v6830 = vsel %vm643, %v6795, 0.0
        %v6831 = vadd.f32 %v6829, %v6830
        %v6832 = vsel %vm643, %v6796, 0.0
        %v6833 = vadd.f32 %v6831, %v6832
        %v6834 = vsel %vm643, %v6797, 0.0
        %v6835 = vadd.f32 %v6833, %v6834
        %v6836 = vsel %vm643, %v6798, 0.0
        %v6837 = vadd.f32 %v6835, %v6836
        %v6838 = vsel %vm643, %v6799, 0.0
        %v6839 = vadd.f32 %v6837, %v6838
        %v6840 = vsel %vm643, %v6800, 0.0
        %v6841 = vadd.f32 %v6839, %v6840
        %v6842 = vsel %vm643, %v6801, 0.0
        %v6843 = vadd.f32 %v6841, %v6842
        %v6844 = vsel %vm643, %v6802, 0.0
        %v6845 = vadd.f32 %v6843, %v6844
        %v6846 = vsel %vm643, %v6803, 0.0
        %v6847 = vadd.f32 %v6845, %v6846
        %v6848 = vsel %vm643, %v6804, 0.0
        %v6849 = vadd.f32 %v6847, %v6848
        %v6850 = vsel %vm643, %v6805, 0.0
        %v6851 = vadd.f32 %v6849, %v6850
        %v6852 = vsel %vm643, %v6806, 0.0
        %v6853 = vadd.f32 %v6851, %v6852
        %v6854 = vsel %vm643, %v6807, 0.0
        %v6855 = vadd.f32 %v6853, %v6854
        %v6856 = vsel %vm643, %v6808, 0.0
        %v6857 = vadd.f32 %v6855, %v6856
        %v6858 = vsel %vm643, %v6809, 0.0
        %v6859 = vadd.f32 %v6857, %v6858
        %v6860 = vsel %vm643, %v6810, 0.0
        %v6861 = vadd.f32 %v6859, %v6860
        %v6862 = vsel %vm643, %v6811, 0.0
        %v6863 = vadd.f32 %v6861, %v6862
        %v6864 = vsel %vm643, %v6812, 0.0
        %v6865 = vadd.f32 %v6863, %v6864
        %v6866 = vsel %vm643, %v6813, 0.0
        %v6867 = vadd.f32 %v6865, %v6866
        %v6868 = vsel %vm643, %v6814, 0.0
        %v6869 = vadd.f32 %v6867, %v6868
        %v6870 = vsel %vm643, %v6815, 0.0
        %v6871 = vadd.f32 %v6869, %v6870
        %v6872 = vsel %vm643, %v6816, 0.0
        %v6873 = vadd.f32 %v6871, %v6872
        %v6874 = vsel %vm643, %v6817, 0.0
        %v6875 = vadd.f32 %v6873, %v6874
        %v6876 = vsel %vm643, %v6818, 0.0
        %v6877 = vadd.f32 %v6875, %v6876
        %v6878 = vsel %vm643, %v6819, 0.0
        %v6879 = vadd.f32 %v6877, %v6878
        %v6880 = vsel %vm643, %v6820, 0.0
        %v6881 = vadd.f32 %v6879, %v6880
        %v6882 = vsel %vm643, %v6821, 0.0
        %v6883 = vadd.f32 %v6881, %v6882
        %v6884 = vsel %vm643, %v6822, 0.0
        %v6885 = vadd.f32 %v6883, %v6884
        %v6886 = vrot.slane %v6885, 4
        %v6887 = vadd.f32 %v6885, %v6886
        %v6888 = vrot.slane %v6887, 2
        %v6889 = vadd.f32 %v6887, %v6888
        %v6890 = vrot.slane %v6889, 1
        %v6891 = vadd.f32 %v6889, %v6890
        %v6892 = vmul.f32 %v6891, %v1220
        %v6893 = vmul.f32 %v6791, %v6791
        %v6894 = vmul.f32 %v6792, %v6792
        %v6895 = vmul.f32 %v6793, %v6793
        %v6896 = vmul.f32 %v6794, %v6794
        %v6897 = vmul.f32 %v6795, %v6795
        %v6898 = vmul.f32 %v6796, %v6796
        %v6899 = vmul.f32 %v6797, %v6797
        %v6900 = vmul.f32 %v6798, %v6798
        %v6901 = vmul.f32 %v6799, %v6799
        %v6902 = vmul.f32 %v6800, %v6800
        %v6903 = vmul.f32 %v6801, %v6801
        %v6904 = vmul.f32 %v6802, %v6802
        %v6905 = vmul.f32 %v6803, %v6803
        %v6906 = vmul.f32 %v6804, %v6804
        %v6907 = vmul.f32 %v6805, %v6805
        %v6908 = vmul.f32 %v6806, %v6806
        %v6909 = vmul.f32 %v6807, %v6807
        %v6910 = vmul.f32 %v6808, %v6808
        %v6911 = vmul.f32 %v6809, %v6809
        %v6912 = vmul.f32 %v6810, %v6810
        %v6913 = vmul.f32 %v6811, %v6811
        %v6914 = vmul.f32 %v6812, %v6812
        %v6915 = vmul.f32 %v6813, %v6813
        %v6916 = vmul.f32 %v6814, %v6814
        %v6917 = vmul.f32 %v6815, %v6815
        %v6918 = vmul.f32 %v6816, %v6816
        %v6919 = vmul.f32 %v6817, %v6817
        %v6920 = vmul.f32 %v6818, %v6818
        %v6921 = vmul.f32 %v6819, %v6819
        %v6922 = vmul.f32 %v6820, %v6820
        %v6923 = vmul.f32 %v6821, %v6821
        %v6924 = vmul.f32 %v6822, %v6822
        %v6925 = vsel %vm643, %v6893, 0.0
        %v6926 = vsel %vm643, %v6894, 0.0
        %v6927 = vadd.f32 %v6925, %v6926
        %v6928 = vsel %vm643, %v6895, 0.0
        %v6929 = vadd.f32 %v6927, %v6928
        %v6930 = vsel %vm643, %v6896, 0.0
        %v6931 = vadd.f32 %v6929, %v6930
        %v6932 = vsel %vm643, %v6897, 0.0
        %v6933 = vadd.f32 %v6931, %v6932
        %v6934 = vsel %vm643, %v6898, 0.0
        %v6935 = vadd.f32 %v6933, %v6934
        %v6936 = vsel %vm643, %v6899, 0.0
        %v6937 = vadd.f32 %v6935, %v6936
        %v6938 = vsel %vm643, %v6900, 0.0
        %v6939 = vadd.f32 %v6937, %v6938
        %v6940 = vsel %vm643, %v6901, 0.0
        %v6941 = vadd.f32 %v6939, %v6940
        %v6942 = vsel %vm643, %v6902, 0.0
        %v6943 = vadd.f32 %v6941, %v6942
        %v6944 = vsel %vm643, %v6903, 0.0
        %v6945 = vadd.f32 %v6943, %v6944
        %v6946 = vsel %vm643, %v6904, 0.0
        %v6947 = vadd.f32 %v6945, %v6946
        %v6948 = vsel %vm643, %v6905, 0.0
        %v6949 = vadd.f32 %v6947, %v6948
        %v6950 = vsel %vm643, %v6906, 0.0
        %v6951 = vadd.f32 %v6949, %v6950
        %v6952 = vsel %vm643, %v6907, 0.0
        %v6953 = vadd.f32 %v6951, %v6952
        %v6954 = vsel %vm643, %v6908, 0.0
        %v6955 = vadd.f32 %v6953, %v6954
        %v6956 = vsel %vm643, %v6909, 0.0
        %v6957 = vadd.f32 %v6955, %v6956
        %v6958 = vsel %vm643, %v6910, 0.0
        %v6959 = vadd.f32 %v6957, %v6958
        %v6960 = vsel %vm643, %v6911, 0.0
        %v6961 = vadd.f32 %v6959, %v6960
        %v6962 = vsel %vm643, %v6912, 0.0
        %v6963 = vadd.f32 %v6961, %v6962
        %v6964 = vsel %vm643, %v6913, 0.0
        %v6965 = vadd.f32 %v6963, %v6964
        %v6966 = vsel %vm643, %v6914, 0.0
        %v6967 = vadd.f32 %v6965, %v6966
        %v6968 = vsel %vm643, %v6915, 0.0
        %v6969 = vadd.f32 %v6967, %v6968
        %v6970 = vsel %vm643, %v6916, 0.0
        %v6971 = vadd.f32 %v6969, %v6970
        %v6972 = vsel %vm643, %v6917, 0.0
        %v6973 = vadd.f32 %v6971, %v6972
        %v6974 = vsel %vm643, %v6918, 0.0
        %v6975 = vadd.f32 %v6973, %v6974
        %v6976 = vsel %vm643, %v6919, 0.0
        %v6977 = vadd.f32 %v6975, %v6976
        %v6978 = vsel %vm643, %v6920, 0.0
        %v6979 = vadd.f32 %v6977, %v6978
        %v6980 = vsel %vm643, %v6921, 0.0
        %v6981 = vadd.f32 %v6979, %v6980
        %v6982 = vsel %vm643, %v6922, 0.0
        %v6983 = vadd.f32 %v6981, %v6982
        %v6984 = vsel %vm643, %v6923, 0.0
        %v6985 = vadd.f32 %v6983, %v6984
        %v6986 = vsel %vm643, %v6924, 0.0
        %v6987 = vadd.f32 %v6985, %v6986
        %v6988 = vrot.slane %v6987, 4
        %v6989 = vadd.f32 %v6987, %v6988
        %v6990 = vrot.slane %v6989, 2
        %v6991 = vadd.f32 %v6989, %v6990
        %v6992 = vrot.slane %v6991, 1
        %v6993 = vadd.f32 %v6991, %v6992
        %v6994 = vmul.f32 %v6993, %v1220
        %v6995 = vmul.f32 %v6892, %v6892
        %v6996 = vsub.f32 %v6994, %v6995
        %v6997 = vmax.f32 %v6996, 0.0
        %v6998 = vsub.f32 %v6791, %v6892
        %v6999 = vsub.f32 %v6792, %v6892
        %v7000 = vsub.f32 %v6793, %v6892
        %v7001 = vsub.f32 %v6794, %v6892
        %v7002 = vsub.f32 %v6795, %v6892
        %v7003 = vsub.f32 %v6796, %v6892
        %v7004 = vsub.f32 %v6797, %v6892
        %v7005 = vsub.f32 %v6798, %v6892
        %v7006 = vsub.f32 %v6799, %v6892
        %v7007 = vsub.f32 %v6800, %v6892
        %v7008 = vsub.f32 %v6801, %v6892
        %v7009 = vsub.f32 %v6802, %v6892
        %v7010 = vsub.f32 %v6803, %v6892
        %v7011 = vsub.f32 %v6804, %v6892
        %v7012 = vsub.f32 %v6805, %v6892
        %v7013 = vsub.f32 %v6806, %v6892
        %v7014 = vsub.f32 %v6807, %v6892
        %v7015 = vsub.f32 %v6808, %v6892
        %v7016 = vsub.f32 %v6809, %v6892
        %v7017 = vsub.f32 %v6810, %v6892
        %v7018 = vsub.f32 %v6811, %v6892
        %v7019 = vsub.f32 %v6812, %v6892
        %v7020 = vsub.f32 %v6813, %v6892
        %v7021 = vsub.f32 %v6814, %v6892
        %v7022 = vsub.f32 %v6815, %v6892
        %v7023 = vsub.f32 %v6816, %v6892
        %v7024 = vsub.f32 %v6817, %v6892
        %v7025 = vsub.f32 %v6818, %v6892
        %v7026 = vsub.f32 %v6819, %v6892
        %v7027 = vsub.f32 %v6820, %v6892
        %v7028 = vsub.f32 %v6821, %v6892
        %v7029 = vsub.f32 %v6822, %v6892
        %v7030 = vadd.f32 %v6997, 1e-05
        %v7031 = vrsqrt.pop %v7030
        %v7032 = vmul.f32 %v6998, %v7031
        %v7033 = vmul.f32 %v6999, %v7031
        %v7034 = vmul.f32 %v7000, %v7031
        %v7035 = vmul.f32 %v7001, %v7031
        %v7036 = vmul.f32 %v7002, %v7031
        %v7037 = vmul.f32 %v7003, %v7031
        %v7038 = vmul.f32 %v7004, %v7031
        %v7039 = vmul.f32 %v7005, %v7031
        %v7040 = vmul.f32 %v7006, %v7031
        %v7041 = vmul.f32 %v7007, %v7031
        %v7042 = vmul.f32 %v7008, %v7031
        %v7043 = vmul.f32 %v7009, %v7031
        %v7044 = vmul.f32 %v7010, %v7031
        %v7045 = vmul.f32 %v7011, %v7031
        %v7046 = vmul.f32 %v7012, %v7031
        %v7047 = vmul.f32 %v7013, %v7031
        %v7048 = vmul.f32 %v7014, %v7031
        %v7049 = vmul.f32 %v7015, %v7031
        %v7050 = vmul.f32 %v7016, %v7031
        %v7051 = vmul.f32 %v7017, %v7031
        %v7052 = vmul.f32 %v7018, %v7031
        %v7053 = vmul.f32 %v7019, %v7031
        %v7054 = vmul.f32 %v7020, %v7031
        %v7055 = vmul.f32 %v7021, %v7031
        %v7056 = vmul.f32 %v7022, %v7031
        %v7057 = vmul.f32 %v7023, %v7031
        %v7058 = vmul.f32 %v7024, %v7031
        %v7059 = vmul.f32 %v7025, %v7031
        %v7060 = vmul.f32 %v7026, %v7031
        %v7061 = vmul.f32 %v7027, %v7031
        %v7062 = vmul.f32 %v7028, %v7031
        %v7063 = vmul.f32 %v7029, %v7031
        %v7064 = vadd.f32 %v1148, 1.0
        %v7065 = vlaneseq
        %v7066 = vshrl.u32 %v7065, 7
        %v7067 = vsub.s32 0, %v7066
        %v7068 = vrot.slane %v7064, %v7067
        %v7069 = vmul.f32 %v7032, %v7068
        %v7070 = vmul.f32 %v7033, %v7068
        %v7071 = vmul.f32 %v7034, %v7068
        %v7072 = vmul.f32 %v7035, %v7068
        %v7073 = vmul.f32 %v7036, %v7068
        %v7074 = vmul.f32 %v7037, %v7068
        %v7075 = vmul.f32 %v7038, %v7068
        %v7076 = vmul.f32 %v7039, %v7068
        %v7077 = vmul.f32 %v7040, %v7068
        %v7078 = vmul.f32 %v7041, %v7068
        %v7079 = vmul.f32 %v7042, %v7068
        %v7080 = vmul.f32 %v7043, %v7068
        %v7081 = vmul.f32 %v7044, %v7068
        %v7082 = vmul.f32 %v7045, %v7068
        %v7083 = vmul.f32 %v7046, %v7068
        %v7084 = vmul.f32 %v7047, %v7068
        %v7085 = vmul.f32 %v7048, %v7068
        %v7086 = vmul.f32 %v7049, %v7068
        %v7087 = vmul.f32 %v7050, %v7068
        %v7088 = vmul.f32 %v7051, %v7068
        %v7089 = vmul.f32 %v7052, %v7068
        %v7090 = vmul.f32 %v7053, %v7068
        %v7091 = vmul.f32 %v7054, %v7068
        %v7092 = vmul.f32 %v7055, %v7068
        %v7093 = vmul.f32 %v7056, %v7068
        %v7094 = vmul.f32 %v7057, %v7068
        %v7095 = vmul.f32 %v7058, %v7068
        %v7096 = vmul.f32 %v7059, %v7068
        %v7097 = vmul.f32 %v7060, %v7068
        %v7098 = vmul.f32 %v7061, %v7068
        %v7099 = vmul.f32 %v7062, %v7068
        %v7100 = vmul.f32 %v7063, %v7068
        %v7101 = vlaneseq
        %v7102 = vshrl.u32 %v7101, 7
        %v7103 = vsub.s32 0, %v7102
        %v7104 = vrot.slane %v1148, %v7103
        %7106 = vrot.lane.b32.xlu0 %v7104, 96
        %v7107 = vpop.permute.xlu0 %7106
        %v7109 = vadd.f32 %v7069, %v7107
        %v7110 = vadd.f32 %v7070, %v7107
        %v7111 = vadd.f32 %v7071, %v7107
        %v7112 = vadd.f32 %v7072, %v7107
        %v7113 = vadd.f32 %v7073, %v7107
        %v7114 = vadd.f32 %v7074, %v7107
        %v7115 = vadd.f32 %v7075, %v7107
        %v7116 = vadd.f32 %v7076, %v7107
        %v7117 = vadd.f32 %v7077, %v7107
        %v7118 = vadd.f32 %v7078, %v7107
        %v7119 = vadd.f32 %v7079, %v7107
        %v7120 = vadd.f32 %v7080, %v7107
        %v7121 = vadd.f32 %v7081, %v7107
        %v7122 = vadd.f32 %v7082, %v7107
        %v7123 = vadd.f32 %v7083, %v7107
        %v7124 = vadd.f32 %v7084, %v7107
        %v7125 = vadd.f32 %v7085, %v7107
        %v7126 = vadd.f32 %v7086, %v7107
        %v7127 = vadd.f32 %v7087, %v7107
        %v7128 = vadd.f32 %v7088, %v7107
        %v7129 = vadd.f32 %v7089, %v7107
        %v7130 = vadd.f32 %v7090, %v7107
        %v7131 = vadd.f32 %v7091, %v7107
        %v7132 = vadd.f32 %v7092, %v7107
        %v7133 = vadd.f32 %v7093, %v7107
        %v7134 = vadd.f32 %v7094, %v7107
        %v7135 = vadd.f32 %v7095, %v7107
        %v7136 = vadd.f32 %v7096, %v7107
        %v7137 = vadd.f32 %v7097, %v7107
        %v7138 = vadd.f32 %v7098, %v7107
        %v7139 = vadd.f32 %v7099, %v7107
        %v7140 = vadd.f32 %v7100, %v7107
        %vm7141 = vcmp.ge.f32.partialorder %v7109, 0.0
        %vm7142 = vcmp.ge.f32.partialorder %v7110, 0.0
        %vm7143 = vcmp.ge.f32.partialorder %v7111, 0.0
        %vm7144 = vcmp.ge.f32.partialorder %v7112, 0.0
        %vm7145 = vcmp.ge.f32.partialorder %v7113, 0.0
        %vm7146 = vcmp.ge.f32.partialorder %v7114, 0.0
        %vm7147 = vcmp.ge.f32.partialorder %v7115, 0.0
        %vm7148 = vcmp.ge.f32.partialorder %v7116, 0.0
        %vm7149 = vcmp.ge.f32.partialorder %v7117, 0.0
        %vm7150 = vcmp.ge.f32.partialorder %v7118, 0.0
        %vm7151 = vcmp.ge.f32.partialorder %v7119, 0.0
        %vm7152 = vcmp.ge.f32.partialorder %v7120, 0.0
        %vm7153 = vcmp.ge.f32.partialorder %v7121, 0.0
        %vm7154 = vcmp.ge.f32.partialorder %v7122, 0.0
        %vm7155 = vcmp.ge.f32.partialorder %v7123, 0.0
        %vm7156 = vcmp.ge.f32.partialorder %v7124, 0.0
        %vm7157 = vcmp.ge.f32.partialorder %v7125, 0.0
        %vm7158 = vcmp.ge.f32.partialorder %v7126, 0.0
        %vm7159 = vcmp.ge.f32.partialorder %v7127, 0.0
        %vm7160 = vcmp.ge.f32.partialorder %v7128, 0.0
        %vm7161 = vcmp.ge.f32.partialorder %v7129, 0.0
        %vm7162 = vcmp.ge.f32.partialorder %v7130, 0.0
        %vm7163 = vcmp.ge.f32.partialorder %v7131, 0.0
        %vm7164 = vcmp.ge.f32.partialorder %v7132, 0.0
        %vm7165 = vcmp.ge.f32.partialorder %v7133, 0.0
        %vm7166 = vcmp.ge.f32.partialorder %v7134, 0.0
        %vm7167 = vcmp.ge.f32.partialorder %v7135, 0.0
        %vm7168 = vcmp.ge.f32.partialorder %v7136, 0.0
        %vm7169 = vcmp.ge.f32.partialorder %v7137, 0.0
        %vm7170 = vcmp.ge.f32.partialorder %v7138, 0.0
        %vm7171 = vcmp.ge.f32.partialorder %v7139, 0.0
        %vm7172 = vcmp.ge.f32.partialorder %v7140, 0.0
        %v7173 = vmul.f32 %v7109, 0.01
        %v7174 = vmul.f32 %v7110, 0.01
        %v7175 = vmul.f32 %v7111, 0.01
        %v7176 = vmul.f32 %v7112, 0.01
        %v7177 = vmul.f32 %v7113, 0.01
        %v7178 = vmul.f32 %v7114, 0.01
        %v7179 = vmul.f32 %v7115, 0.01
        %v7180 = vmul.f32 %v7116, 0.01
        %v7181 = vmul.f32 %v7117, 0.01
        %v7182 = vmul.f32 %v7118, 0.01
        %v7183 = vmul.f32 %v7119, 0.01
        %v7184 = vmul.f32 %v7120, 0.01
        %v7185 = vmul.f32 %v7121, 0.01
        %v7186 = vmul.f32 %v7122, 0.01
        %v7187 = vmul.f32 %v7123, 0.01
        %v7188 = vmul.f32 %v7124, 0.01
        %v7189 = vmul.f32 %v7125, 0.01
        %v7190 = vmul.f32 %v7126, 0.01
        %v7191 = vmul.f32 %v7127, 0.01
        %v7192 = vmul.f32 %v7128, 0.01
        %v7193 = vmul.f32 %v7129, 0.01
        %v7194 = vmul.f32 %v7130, 0.01
        %v7195 = vmul.f32 %v7131, 0.01
        %v7196 = vmul.f32 %v7132, 0.01
        %v7197 = vmul.f32 %v7133, 0.01
        %v7198 = vmul.f32 %v7134, 0.01
        %v7199 = vmul.f32 %v7135, 0.01
        %v7200 = vmul.f32 %v7136, 0.01
        %v7201 = vmul.f32 %v7137, 0.01
        %v7202 = vmul.f32 %v7138, 0.01
        %v7203 = vmul.f32 %v7139, 0.01
        %v7204 = vmul.f32 %v7140, 0.01
        %v7205 = vsel %vm7141, %v7109, %v7173
        %v7206 = vsel %vm7142, %v7110, %v7174
        %v7207 = vsel %vm7143, %v7111, %v7175
        %v7208 = vsel %vm7144, %v7112, %v7176
        %v7209 = vsel %vm7145, %v7113, %v7177
        %v7210 = vsel %vm7146, %v7114, %v7178
        %v7211 = vsel %vm7147, %v7115, %v7179
        %v7212 = vsel %vm7148, %v7116, %v7180
        %v7213 = vsel %vm7149, %v7117, %v7181
        %v7214 = vsel %vm7150, %v7118, %v7182
        %v7215 = vsel %vm7151, %v7119, %v7183
        %v7216 = vsel %vm7152, %v7120, %v7184
        %v7217 = vsel %vm7153, %v7121, %v7185
        %v7218 = vsel %vm7154, %v7122, %v7186
        %v7219 = vsel %vm7155, %v7123, %v7187
        %v7220 = vsel %vm7156, %v7124, %v7188
        %v7221 = vsel %vm7157, %v7125, %v7189
        %v7222 = vsel %vm7158, %v7126, %v7190
        %v7223 = vsel %vm7159, %v7127, %v7191
        %v7224 = vsel %vm7160, %v7128, %v7192
        %v7225 = vsel %vm7161, %v7129, %v7193
        %v7226 = vsel %vm7162, %v7130, %v7194
        %v7227 = vsel %vm7163, %v7131, %v7195
        %v7228 = vsel %vm7164, %v7132, %v7196
        %v7229 = vsel %vm7165, %v7133, %v7197
        %v7230 = vsel %vm7166, %v7134, %v7198
        %v7231 = vsel %vm7167, %v7135, %v7199
        %v7232 = vsel %vm7168, %v7136, %v7200
        %v7233 = vsel %vm7169, %v7137, %v7201
        %v7234 = vsel %vm7170, %v7138, %v7202
        %v7235 = vsel %vm7171, %v7139, %v7203
        %v7236 = vsel %vm7172, %v7140, %v7204
        %7237 = vst.msk [vmem:[%s1566 + $0x1] sm:$0xff] %vm643, %v7205
        %7238 = vst.msk [vmem:[%s1566 + $0x9] sm:$0xff] %vm643, %v7206
        %7239 = vst.msk [vmem:[%s1566 + $0x19] sm:$0xff] %vm643, %v7207
        %7240 = vst.msk [vmem:[%s1566 + $0x21] sm:$0xff] %vm643, %v7208
        %7241 = vst.msk [vmem:[%s1566 + $0x31] sm:$0xff] %vm643, %v7209
        %7242 = vst.msk [vmem:[%s1566 + $0x39] sm:$0xff] %vm643, %v7210
        %7243 = vst.msk [vmem:[%s1566 + $0x49] sm:$0xff] %vm643, %v7211
        %7244 = vst.msk [vmem:[%s1566 + $0x51] sm:$0xff] %vm643, %v7212
        %7245 = vst.msk [vmem:[%s1566 + $0x61] sm:$0xff] %vm643, %v7213
        %7246 = vst.msk [vmem:[%s1566 + $0x69] sm:$0xff] %vm643, %v7214
        %7247 = vst.msk [vmem:[%s1566 + $0x79] sm:$0xff] %vm643, %v7215
        %7248 = vst.msk [vmem:[%s1566 + $0x81] sm:$0xff] %vm643, %v7216
        %7249 = vst.msk [vmem:[%s1566 + $0x91] sm:$0xff] %vm643, %v7217
        %7250 = vst.msk [vmem:[%s1566 + $0x99] sm:$0xff] %vm643, %v7218
        %7251 = vst.msk [vmem:[%s1566 + $0xa9] sm:$0xff] %vm643, %v7219
        %7252 = vst.msk [vmem:[%s1566 + $0xb1] sm:$0xff] %vm643, %v7220
        %7253 = vst.msk [vmem:[%s1566 + $0xc1] sm:$0xff] %vm643, %v7221
        %7254 = vst.msk [vmem:[%s1566 + $0xc9] sm:$0xff] %vm643, %v7222
        %7255 = vst.msk [vmem:[%s1566 + $0xd9] sm:$0xff] %vm643, %v7223
        %7256 = vst.msk [vmem:[%s1566 + $0xe1] sm:$0xff] %vm643, %v7224
        %7257 = vst.msk [vmem:[%s1566 + $0xf1] sm:$0xff] %vm643, %v7225
        %7258 = vst.msk [vmem:[%s1566 + $0xf9] sm:$0xff] %vm643, %v7226
        %7259 = vst.msk [vmem:[%s1566 + $0x109] sm:$0xff] %vm643, %v7227
        %7260 = vst.msk [vmem:[%s1566 + $0x111] sm:$0xff] %vm643, %v7228
        %7261 = vst.msk [vmem:[%s1566 + $0x121] sm:$0xff] %vm643, %v7229
        %7262 = vst.msk [vmem:[%s1566 + $0x129] sm:$0xff] %vm643, %v7230
        %7263 = vst.msk [vmem:[%s1566 + $0x139] sm:$0xff] %vm643, %v7231
        %7264 = vst.msk [vmem:[%s1566 + $0x141] sm:$0xff] %vm643, %v7232
        %7265 = vst.msk [vmem:[%s1566 + $0x151] sm:$0xff] %vm643, %v7233
        %7266 = vst.msk [vmem:[%s1566 + $0x159] sm:$0xff] %vm643, %v7234
        %7267 = vst.msk [vmem:[%s1566 + $0x169] sm:$0xff] %vm643, %v7235
        %7268 = vst.msk [vmem:[%s1566 + $0x171] sm:$0xff] %vm643, %v7236
        %v7269 = vld [vmem:[%s1566 + $0x1] sm:$0xff]
        %v7270 = vld [vmem:[%s1566 + $0x9] sm:$0xff]
        %v7271 = vld [vmem:[%s1566 + $0x19] sm:$0xff]
        %v7272 = vld [vmem:[%s1566 + $0x21] sm:$0xff]
        %v7273 = vld [vmem:[%s1566 + $0x31] sm:$0xff]
        %v7274 = vld [vmem:[%s1566 + $0x39] sm:$0xff]
        %v7275 = vld [vmem:[%s1566 + $0x49] sm:$0xff]
        %v7276 = vld [vmem:[%s1566 + $0x51] sm:$0xff]
        %v7277 = vld [vmem:[%s1566 + $0x61] sm:$0xff]
        %v7278 = vld [vmem:[%s1566 + $0x69] sm:$0xff]
        %v7279 = vld [vmem:[%s1566 + $0x79] sm:$0xff]
        %v7280 = vld [vmem:[%s1566 + $0x81] sm:$0xff]
        %v7281 = vld [vmem:[%s1566 + $0x91] sm:$0xff]
        %v7282 = vld [vmem:[%s1566 + $0x99] sm:$0xff]
        %v7283 = vld [vmem:[%s1566 + $0xa9] sm:$0xff]
        %v7284 = vld [vmem:[%s1566 + $0xb1] sm:$0xff]
        %v7285 = vld [vmem:[%s1566 + $0xc1] sm:$0xff]
        %v7286 = vld [vmem:[%s1566 + $0xc9] sm:$0xff]
        %v7287 = vld [vmem:[%s1566 + $0xd9] sm:$0xff]
        %v7288 = vld [vmem:[%s1566 + $0xe1] sm:$0xff]
        %v7289 = vld [vmem:[%s1566 + $0xf1] sm:$0xff]
        %v7290 = vld [vmem:[%s1566 + $0xf9] sm:$0xff]
        %v7291 = vld [vmem:[%s1566 + $0x109] sm:$0xff]
        %v7292 = vld [vmem:[%s1566 + $0x111] sm:$0xff]
        %v7293 = vld [vmem:[%s1566 + $0x121] sm:$0xff]
        %v7294 = vld [vmem:[%s1566 + $0x129] sm:$0xff]
        %v7295 = vld [vmem:[%s1566 + $0x139] sm:$0xff]
        %v7296 = vld [vmem:[%s1566 + $0x141] sm:$0xff]
        %v7297 = vld [vmem:[%s1566 + $0x151] sm:$0xff]
        %v7298 = vld [vmem:[%s1566 + $0x159] sm:$0xff]
        %v7299 = vld [vmem:[%s1566 + $0x169] sm:$0xff]
        %v7300 = vld [vmem:[%s1566 + $0x171] sm:$0xff]
        %v7301 = vld [vmem:[#allocation10] sm:$0xff]
        %v7302 = vld [vmem:[#allocation10 + $0x8] sm:$0xff]
        %v7303 = vld [vmem:[#allocation10 + $0x10] sm:$0xff]
        %v7304 = vld [vmem:[#allocation10 + $0x18] sm:$0xff]
        %v7305 = vld [vmem:[%s1566 + $0x2] sm:$0xff]
        %v7306 = vld [vmem:[%s1566 + $0xa] sm:$0xff]
        %v7307 = vld [vmem:[%s1566 + $0x1a] sm:$0xff]
        %v7308 = vld [vmem:[%s1566 + $0x22] sm:$0xff]
        %v7309 = vld [vmem:[%s1566 + $0x32] sm:$0xff]
        %v7310 = vld [vmem:[%s1566 + $0x3a] sm:$0xff]
        %v7311 = vld [vmem:[%s1566 + $0x4a] sm:$0xff]
        %v7312 = vld [vmem:[%s1566 + $0x52] sm:$0xff]
        %v7313 = vld [vmem:[%s1566 + $0x62] sm:$0xff]
        %v7314 = vld [vmem:[%s1566 + $0x6a] sm:$0xff]
        %v7315 = vld [vmem:[%s1566 + $0x7a] sm:$0xff]
        %v7316 = vld [vmem:[%s1566 + $0x82] sm:$0xff]
        %v7317 = vld [vmem:[%s1566 + $0x92] sm:$0xff]
        %v7318 = vld [vmem:[%s1566 + $0x9a] sm:$0xff]
        %v7319 = vld [vmem:[%s1566 + $0xaa] sm:$0xff]
        %v7320 = vld [vmem:[%s1566 + $0xb2] sm:$0xff]
        %v7321 = vld [vmem:[%s1566 + $0xc2] sm:$0xff]
        %v7322 = vld [vmem:[%s1566 + $0xca] sm:$0xff]
        %v7323 = vld [vmem:[%s1566 + $0xda] sm:$0xff]
        %v7324 = vld [vmem:[%s1566 + $0xe2] sm:$0xff]
        %v7325 = vld [vmem:[%s1566 + $0xf2] sm:$0xff]
        %v7326 = vld [vmem:[%s1566 + $0xfa] sm:$0xff]
        %v7327 = vld [vmem:[%s1566 + $0x10a] sm:$0xff]
        %v7328 = vld [vmem:[%s1566 + $0x112] sm:$0xff]
        %v7329 = vld [vmem:[%s1566 + $0x122] sm:$0xff]
        %v7330 = vld [vmem:[%s1566 + $0x12a] sm:$0xff]
        %v7331 = vld [vmem:[%s1566 + $0x13a] sm:$0xff]
        %v7332 = vld [vmem:[%s1566 + $0x142] sm:$0xff]
        %v7333 = vld [vmem:[%s1566 + $0x152] sm:$0xff]
        %v7334 = vld [vmem:[%s1566 + $0x15a] sm:$0xff]
        %v7335 = vld [vmem:[%s1566 + $0x16a] sm:$0xff]
        %v7336 = vld [vmem:[%s1566 + $0x172] sm:$0xff]
        %s7337 = scalar_lea.vmem [#allocation10], 32
        %v7338 = vld [vmem:[%s7337] sm:$0xff]
        %v7339 = vld [vmem:[%s7337 + $0x8] sm:$0xff]
        %v7340 = vld [vmem:[%s7337 + $0x10] sm:$0xff]
        %v7341 = vld [vmem:[%s7337 + $0x18] sm:$0xff]
        %v7343 = vsel %vm643, %v7305, 0
        %v7346 = vsel %vm643, %v7306, 0
        %v7349 = vsel %vm643, %v7307, 0
        %v7352 = vsel %vm643, %v7308, 0
        %v7355 = vsel %vm643, %v7309, 0
        %v7358 = vsel %vm643, %v7310, 0
        %v7361 = vsel %vm643, %v7311, 0
        %v7364 = vsel %vm643, %v7312, 0
        %v7367 = vsel %vm643, %v7313, 0
        %v7370 = vsel %vm643, %v7314, 0
        %v7373 = vsel %vm643, %v7315, 0
        %v7376 = vsel %vm643, %v7316, 0
        %v7379 = vsel %vm643, %v7317, 0
        %v7382 = vsel %vm643, %v7318, 0
        %v7385 = vsel %vm643, %v7319, 0
        %v7388 = vsel %vm643, %v7320, 0
        %v7391 = vsel %vm643, %v7321, 0
        %v7394 = vsel %vm643, %v7322, 0
        %v7397 = vsel %vm643, %v7323, 0
        %v7400 = vsel %vm643, %v7324, 0
        %v7403 = vsel %vm643, %v7325, 0
        %v7406 = vsel %vm643, %v7326, 0
        %v7409 = vsel %vm643, %v7327, 0
        %v7412 = vsel %vm643, %v7328, 0
        %v7415 = vsel %vm643, %v7329, 0
        %v7418 = vsel %vm643, %v7330, 0
        %v7421 = vsel %vm643, %v7331, 0
        %v7424 = vsel %vm643, %v7332, 0
        %v7427 = vsel %vm643, %v7333, 0
        %v7430 = vsel %vm643, %v7334, 0
        %v7433 = vsel %vm643, %v7335, 0
        %v7436 = vsel %vm643, %v7336, 0
        %7438 = vmatprep.subr.mxu0 0.0
        %7439 = vmatpush1.msra.mxu0 %v7338
        %7440 = vmatprep.subr.mxu0 0.0
        %7441 = vmatpush1.msra.mxu0 %v7339
        %7442 = vmatprep.subr.mxu0 0.0
        %7443 = vmatpush1.msra.mxu0 %v7340
        %7444 = vmatprep.subr.mxu0 0.0
        %7445 = vmatpush1.msra.mxu0 %v7341
        %7446 = vmatprep.subr.mxu0 0.0
        %7447 = vmatpush1.msra.mxu0 0.0
        %7448 = vmatprep.subr.mxu0 0.0
        %7449 = vmatpush1.msra.mxu0 0.0
        %7450 = vmatprep.subr.mxu0 0.0
        %7451 = vmatpush1.msra.mxu0 0.0
        %7452 = vmatprep.subr.mxu0 0.0
        %7453 = vmatpush1.msra.mxu0 0.0
        %7454 = vmatprep.subr.mxu0 0.0
        %7455 = vmatpush1.msra.mxu0 0.0
        %7456 = vmatprep.subr.mxu0 0.0
        %7457 = vmatpush1.msra.mxu0 0.0
        %7458 = vmatprep.subr.mxu0 0.0
        %7459 = vmatpush1.msra.mxu0 0.0
        %7460 = vmatprep.subr.mxu0 0.0
        %7461 = vmatpush1.msra.mxu0 0.0
        %7462 = vmatprep.subr.mxu0 0.0
        %7463 = vmatpush1.msra.mxu0 0.0
        %7464 = vmatprep.subr.mxu0 0.0
        %7465 = vmatpush1.msra.mxu0 0.0
        %7466 = vmatprep.subr.mxu0 0.0
        %7467 = vmatpush1.msra.mxu0 0.0
        %7468 = vmatprep.subr.mxu0 0.0
        %7469 = vmatpush1.msra.mxu0 0.0
        %7470 = vmatprep.subr.mxu0 0.0
        %7471 = vmatpush1.msra.mxu0 0.0
        %7472 = vmatprep.subr.mxu0 0.0
        %7473 = vmatpush1.msra.mxu0 0.0
        %7474 = vmatprep.subr.mxu0 0.0
        %7475 = vmatpush1.msra.mxu0 0.0
        %7476 = vmatprep.subr.mxu0 0.0
        %7477 = vmatpush1.msra.mxu0 0.0
        %7478 = vmatprep.subr.mxu0 0.0
        %7479 = vmatpush1.msra.mxu0 0.0
        %7480 = vmatprep.subr.mxu0 0.0
        %7481 = vmatpush1.msra.mxu0 0.0
        %7482 = vmatprep.subr.mxu0 0.0
        %7483 = vmatpush1.msra.mxu0 0.0
        %7484 = vmatprep.subr.mxu0 0.0
        %7485 = vmatpush1.msra.mxu0 0.0
        %7486 = vmatprep.subr.mxu0 0.0
        %7487 = vmatpush1.msra.mxu0 0.0
        %7488 = vmatprep.subr.mxu0 0.0
        %7489 = vmatpush1.msra.mxu0 0.0
        %7490 = vmatprep.subr.mxu0 0.0
        %7491 = vmatpush1.msra.mxu0 0.0
        %7492 = vmatprep.subr.mxu0 0.0
        %7493 = vmatpush1.msra.mxu0 0.0
        %7494 = vmatprep.subr.mxu0 0.0
        %7495 = vmatpush1.msra.mxu0 0.0
        %7496 = vmatprep.subr.mxu0 0.0
        %7497 = vmatpush1.msra.mxu0 0.0
        %7498 = vmatprep.subr.mxu0 0.0
        %7499 = vmatpush1.msra.mxu0 0.0
        %7500 = vmatprep.subr.mxu0 0.0
        %7501 = vmatpush1.msra.mxu0 0.0
        %7502 = vmatprep.mubr.f32.mxu0 0.0
        %7503 = vmatmul.mubr.f32.gmra.mrb[0].mxu0 %v7343
        %v7504 = vpop.f32.mrb[0].mxu0
        %v7505 = vadd.f32 0.0, %v7504
        %v7506 = vpop.f32.mrb[0].mxu0
        %7507 = vmatprep.mubr.f32.mxu0 0.0
        %7508 = vmatmul.mubr.f32.gmra.mrb[0].mxu0 %v7346
        %v7509 = vpop.f32.mrb[0].mxu0
        %v7510 = vadd.f32 0.0, %v7509
        %v7511 = vpop.f32.mrb[0].mxu0
        %7512 = vmatprep.mubr.f32.mxu0 0.0
        %7513 = vmatmul.mubr.f32.gmra.mrb[0].mxu0 %v7349
        %v7514 = vpop.f32.mrb[0].mxu0
        %v7515 = vadd.f32 0.0, %v7514
        %v7516 = vpop.f32.mrb[0].mxu0
        %7517 = vmatprep.mubr.f32.mxu0 0.0
        %7518 = vmatmul.mubr.f32.gmra.mrb[0].mxu0 %v7352
        %v7519 = vpop.f32.mrb[0].mxu0
        %v7520 = vadd.f32 0.0, %v7519
        %v7521 = vpop.f32.mrb[0].mxu0
        %7522 = vmatprep.mubr.f32.mxu0 0.0
        %7523 = vmatmul.mubr.f32.gmra.mrb[0].mxu0 %v7355
        %v7524 = vpop.f32.mrb[0].mxu0
        %v7525 = vadd.f32 0.0, %v7524
        %v7526 = vpop.f32.mrb[0].mxu0
        %7527 = vmatprep.mubr.f32.mxu0 0.0
        %7528 = vmatmul.mubr.f32.gmra.mrb[0].mxu0 %v7358
        %v7529 = vpop.f32.mrb[0].mxu0
        %v7530 = vadd.f32 0.0, %v7529
        %v7531 = vpop.f32.mrb[0].mxu0
        %7532 = vmatprep.mubr.f32.mxu0 0.0
        %7533 = vmatmul.mubr.f32.gmra.mrb[0].mxu0 %v7361
        %v7534 = vpop.f32.mrb[0].mxu0
        %v7535 = vadd.f32 0.0, %v7534
        %v7536 = vpop.f32.mrb[0].mxu0
        %7537 = vmatprep.mubr.f32.mxu0 0.0
        %7538 = vmatmul.mubr.f32.gmra.mrb[0].mxu0 %v7364
        %v7539 = vpop.f32.mrb[0].mxu0
        %v7540 = vadd.f32 0.0, %v7539
        %v7541 = vpop.f32.mrb[0].mxu0
        %7542 = vmatprep.mubr.f32.mxu0 0.0
        %7543 = vmatmul.mubr.f32.gmra.mrb[0].mxu0 %v7367
        %v7544 = vpop.f32.mrb[0].mxu0
        %v7545 = vadd.f32 0.0, %v7544
        %v7546 = vpop.f32.mrb[0].mxu0
        %7547 = vmatprep.mubr.f32.mxu0 0.0
        %7548 = vmatmul.mubr.f32.gmra.mrb[0].mxu0 %v7370
        %v7549 = vpop.f32.mrb[0].mxu0
        %v7550 = vadd.f32 0.0, %v7549
        %v7551 = vpop.f32.mrb[0].mxu0
        %7552 = vmatprep.mubr.f32.mxu0 0.0
        %7553 = vmatmul.mubr.f32.gmra.mrb[0].mxu0 %v7373
        %v7554 = vpop.f32.mrb[0].mxu0
        %v7555 = vadd.f32 0.0, %v7554
        %v7556 = vpop.f32.mrb[0].mxu0
        %7557 = vmatprep.mubr.f32.mxu0 0.0
        %7558 = vmatmul.mubr.f32.gmra.mrb[0].mxu0 %v7376
        %v7559 = vpop.f32.mrb[0].mxu0
        %v7560 = vadd.f32 0.0, %v7559
        %v7561 = vpop.f32.mrb[0].mxu0
        %7562 = vmatprep.mubr.f32.mxu0 0.0
        %7563 = vmatmul.mubr.f32.gmra.mrb[0].mxu0 %v7379
        %v7564 = vpop.f32.mrb[0].mxu0
        %v7565 = vadd.f32 0.0, %v7564
        %v7566 = vpop.f32.mrb[0].mxu0
        %7567 = vmatprep.mubr.f32.mxu0 0.0
        %7568 = vmatmul.mubr.f32.gmra.mrb[0].mxu0 %v7382
        %v7569 = vpop.f32.mrb[0].mxu0
        %v7570 = vadd.f32 0.0, %v7569
        %v7571 = vpop.f32.mrb[0].mxu0
        %7572 = vmatprep.mubr.f32.mxu0 0.0
        %7573 = vmatmul.mubr.f32.gmra.mrb[0].mxu0 %v7385
        %v7574 = vpop.f32.mrb[0].mxu0
        %v7575 = vadd.f32 0.0, %v7574
        %v7576 = vpop.f32.mrb[0].mxu0
        %7577 = vmatprep.mubr.f32.mxu0 0.0
        %7578 = vmatmul.mubr.f32.gmra.mrb[0].mxu0 %v7388
        %v7579 = vpop.f32.mrb[0].mxu0
        %v7580 = vadd.f32 0.0, %v7579
        %v7581 = vpop.f32.mrb[0].mxu0
        %7582 = vmatprep.mubr.f32.mxu0 0.0
        %7583 = vmatmul.mubr.f32.gmra.mrb[0].mxu0 %v7391
        %v7584 = vpop.f32.mrb[0].mxu0
        %v7585 = vadd.f32 0.0, %v7584
        %v7586 = vpop.f32.mrb[0].mxu0
        %7587 = vmatprep.mubr.f32.mxu0 0.0
        %7588 = vmatmul.mubr.f32.gmra.mrb[0].mxu0 %v7394
        %v7589 = vpop.f32.mrb[0].mxu0
        %v7590 = vadd.f32 0.0, %v7589
        %v7591 = vpop.f32.mrb[0].mxu0
        %7592 = vmatprep.mubr.f32.mxu0 0.0
        %7593 = vmatmul.mubr.f32.gmra.mrb[0].mxu0 %v7397
        %v7594 = vpop.f32.mrb[0].mxu0
        %v7595 = vadd.f32 0.0, %v7594
        %v7596 = vpop.f32.mrb[0].mxu0
        %7597 = vmatprep.mubr.f32.mxu0 0.0
        %7598 = vmatmul.mubr.f32.gmra.mrb[0].mxu0 %v7400
        %v7599 = vpop.f32.mrb[0].mxu0
        %v7600 = vadd.f32 0.0, %v7599
        %v7601 = vpop.f32.mrb[0].mxu0
        %7602 = vmatprep.mubr.f32.mxu0 0.0
        %7603 = vmatmul.mubr.f32.gmra.mrb[0].mxu0 %v7403
        %v7604 = vpop.f32.mrb[0].mxu0
        %v7605 = vadd.f32 0.0, %v7604
        %v7606 = vpop.f32.mrb[0].mxu0
        %7607 = vmatprep.mubr.f32.mxu0 0.0
        %7608 = vmatmul.mubr.f32.gmra.mrb[0].mxu0 %v7406
        %v7609 = vpop.f32.mrb[0].mxu0
        %v7610 = vadd.f32 0.0, %v7609
        %v7611 = vpop.f32.mrb[0].mxu0
        %7612 = vmatprep.mubr.f32.mxu0 0.0
        %7613 = vmatmul.mubr.f32.gmra.mrb[0].mxu0 %v7409
        %v7614 = vpop.f32.mrb[0].mxu0
        %v7615 = vadd.f32 0.0, %v7614
        %v7616 = vpop.f32.mrb[0].mxu0
        %7617 = vmatprep.mubr.f32.mxu0 0.0
        %7618 = vmatmul.mubr.f32.gmra.mrb[0].mxu0 %v7412
        %v7619 = vpop.f32.mrb[0].mxu0
        %v7620 = vadd.f32 0.0, %v7619
        %v7621 = vpop.f32.mrb[0].mxu0
        %7622 = vmatprep.mubr.f32.mxu0 0.0
        %7623 = vmatmul.mubr.f32.gmra.mrb[0].mxu0 %v7415
        %v7624 = vpop.f32.mrb[0].mxu0
        %v7625 = vadd.f32 0.0, %v7624
        %v7626 = vpop.f32.mrb[0].mxu0
        %7627 = vmatprep.mubr.f32.mxu0 0.0
        %7628 = vmatmul.mubr.f32.gmra.mrb[0].mxu0 %v7418
        %v7629 = vpop.f32.mrb[0].mxu0
        %v7630 = vadd.f32 0.0, %v7629
        %v7631 = vpop.f32.mrb[0].mxu0
        %7632 = vmatprep.mubr.f32.mxu0 0.0
        %7633 = vmatmul.mubr.f32.gmra.mrb[0].mxu0 %v7421
        %v7634 = vpop.f32.mrb[0].mxu0
        %v7635 = vadd.f32 0.0, %v7634
        %v7636 = vpop.f32.mrb[0].mxu0
        %7637 = vmatprep.mubr.f32.mxu0 0.0
        %7638 = vmatmul.mubr.f32.gmra.mrb[0].mxu0 %v7424
        %v7639 = vpop.f32.mrb[0].mxu0
        %v7640 = vadd.f32 0.0, %v7639
        %v7641 = vpop.f32.mrb[0].mxu0
        %7642 = vmatprep.mubr.f32.mxu0 0.0
        %7643 = vmatmul.mubr.f32.gmra.mrb[0].mxu0 %v7427
        %v7644 = vpop.f32.mrb[0].mxu0
        %v7645 = vadd.f32 0.0, %v7644
        %v7646 = vpop.f32.mrb[0].mxu0
        %7647 = vmatprep.mubr.f32.mxu0 0.0
        %7648 = vmatmul.mubr.f32.gmra.mrb[0].mxu0 %v7430
        %v7649 = vpop.f32.mrb[0].mxu0
        %v7650 = vadd.f32 0.0, %v7649
        %v7651 = vpop.f32.mrb[0].mxu0
        %7652 = vmatprep.mubr.f32.mxu0 0.0
        %7653 = vmatmul.mubr.f32.gmra.mrb[0].mxu0 %v7433
        %v7654 = vpop.f32.mrb[0].mxu0
        %v7655 = vadd.f32 0.0, %v7654
        %v7656 = vpop.f32.mrb[0].mxu0
        %7657 = vmatprep.mubr.f32.mxu0 0.0
        %7658 = vmatmul.mubr.f32.gmra.mrb[0].mxu0 %v7436
        %v7659 = vpop.f32.mrb[0].mxu0
        %v7660 = vadd.f32 0.0, %v7659
        %v7661 = vpop.f32.mrb[0].mxu0
        %7662 = vdwg.mxu0
        %v7664 = vsel %vm643, %v7269, 0
        %v7667 = vsel %vm643, %v7270, 0
        %v7670 = vsel %vm643, %v7271, 0
        %v7673 = vsel %vm643, %v7272, 0
        %v7676 = vsel %vm643, %v7273, 0
        %v7679 = vsel %vm643, %v7274, 0
        %v7682 = vsel %vm643, %v7275, 0
        %v7685 = vsel %vm643, %v7276, 0
        %v7688 = vsel %vm643, %v7277, 0
        %v7691 = vsel %vm643, %v7278, 0
        %v7694 = vsel %vm643, %v7279, 0
        %v7697 = vsel %vm643, %v7280, 0
        %v7700 = vsel %vm643, %v7281, 0
        %v7703 = vsel %vm643, %v7282, 0
        %v7706 = vsel %vm643, %v7283, 0
        %v7709 = vsel %vm643, %v7284, 0
        %v7712 = vsel %vm643, %v7285, 0
        %v7715 = vsel %vm643, %v7286, 0
        %v7718 = vsel %vm643, %v7287, 0
        %v7721 = vsel %vm643, %v7288, 0
        %v7724 = vsel %vm643, %v7289, 0
        %v7727 = vsel %vm643, %v7290, 0
        %v7730 = vsel %vm643, %v7291, 0
        %v7733 = vsel %vm643, %v7292, 0
        %v7736 = vsel %vm643, %v7293, 0
        %v7739 = vsel %vm643, %v7294, 0
        %v7742 = vsel %vm643, %v7295, 0
        %v7745 = vsel %vm643, %v7296, 0
        %v7748 = vsel %vm643, %v7297, 0
        %v7751 = vsel %vm643, %v7298, 0
        %v7754 = vsel %vm643, %v7299, 0
        %v7757 = vsel %vm643, %v7300, 0
        %7759 = vmatprep.subr.mxu0 0.0
        %7760 = vmatpush1.msra.mxu0 %v7301
        %7761 = vmatprep.subr.mxu0 0.0
        %7762 = vmatpush1.msra.mxu0 %v7302
        %7763 = vmatprep.subr.mxu0 0.0
        %7764 = vmatpush1.msra.mxu0 %v7303
        %7765 = vmatprep.subr.mxu0 0.0
        %7766 = vmatpush1.msra.mxu0 %v7304
        %7767 = vmatprep.subr.mxu0 0.0
        %7768 = vmatpush1.msra.mxu0 0.0
        %7769 = vmatprep.subr.mxu0 0.0
        %7770 = vmatpush1.msra.mxu0 0.0
        %7771 = vmatprep.subr.mxu0 0.0
        %7772 = vmatpush1.msra.mxu0 0.0
        %7773 = vmatprep.subr.mxu0 0.0
        %7774 = vmatpush1.msra.mxu0 0.0
        %7775 = vmatprep.subr.mxu0 0.0
        %7776 = vmatpush1.msra.mxu0 0.0
        %7777 = vmatprep.subr.mxu0 0.0
        %7778 = vmatpush1.msra.mxu0 0.0
        %7779 = vmatprep.subr.mxu0 0.0
        %7780 = vmatpush1.msra.mxu0 0.0
        %7781 = vmatprep.subr.mxu0 0.0
        %7782 = vmatpush1.msra.mxu0 0.0
        %7783 = vmatprep.subr.mxu0 0.0
        %7784 = vmatpush1.msra.mxu0 0.0
        %7785 = vmatprep.subr.mxu0 0.0
        %7786 = vmatpush1.msra.mxu0 0.0
        %7787 = vmatprep.subr.mxu0 0.0
        %7788 = vmatpush1.msra.mxu0 0.0
        %7789 = vmatprep.subr.mxu0 0.0
        %7790 = vmatpush1.msra.mxu0 0.0
        %7791 = vmatprep.subr.mxu0 0.0
        %7792 = vmatpush1.msra.mxu0 0.0
        %7793 = vmatprep.subr.mxu0 0.0
        %7794 = vmatpush1.msra.mxu0 0.0
        %7795 = vmatprep.subr.mxu0 0.0
        %7796 = vmatpush1.msra.mxu0 0.0
        %7797 = vmatprep.subr.mxu0 0.0
        %7798 = vmatpush1.msra.mxu0 0.0
        %7799 = vmatprep.subr.mxu0 0.0
        %7800 = vmatpush1.msra.mxu0 0.0
        %7801 = vmatprep.subr.mxu0 0.0
        %7802 = vmatpush1.msra.mxu0 0.0
        %7803 = vmatprep.subr.mxu0 0.0
        %7804 = vmatpush1.msra.mxu0 0.0
        %7805 = vmatprep.subr.mxu0 0.0
        %7806 = vmatpush1.msra.mxu0 0.0
        %7807 = vmatprep.subr.mxu0 0.0
        %7808 = vmatpush1.msra.mxu0 0.0
        %7809 = vmatprep.subr.mxu0 0.0
        %7810 = vmatpush1.msra.mxu0 0.0
        %7811 = vmatprep.subr.mxu0 0.0
        %7812 = vmatpush1.msra.mxu0 0.0
        %7813 = vmatprep.subr.mxu0 0.0
        %7814 = vmatpush1.msra.mxu0 0.0
        %7815 = vmatprep.subr.mxu0 0.0
        %7816 = vmatpush1.msra.mxu0 0.0
        %7817 = vmatprep.subr.mxu0 0.0
        %7818 = vmatpush1.msra.mxu0 0.0
        %7819 = vmatprep.subr.mxu0 0.0
        %7820 = vmatpush1.msra.mxu0 0.0
        %7821 = vmatprep.subr.mxu0 0.0
        %7822 = vmatpush1.msra.mxu0 0.0
        %7823 = vmatprep.mubr.f32.mxu0 0.0
        %7824 = vmatmul.mubr.f32.gmra.mrb[0].mxu0 %v7664
        %v7825 = vpop.f32.mrb[0].mxu0
        %v7826 = vadd.f32 %v7505, %v7825
        %v7827 = vpop.f32.mrb[0].mxu0
        %7828 = vmatprep.mubr.f32.mxu0 0.0
        %7829 = vmatmul.mubr.f32.gmra.mrb[0].mxu0 %v7667
        %v7830 = vpop.f32.mrb[0].mxu0
        %v7831 = vadd.f32 %v7510, %v7830
        %v7832 = vpop.f32.mrb[0].mxu0
        %7833 = vmatprep.mubr.f32.mxu0 0.0
        %7834 = vmatmul.mubr.f32.gmra.mrb[0].mxu0 %v7670
        %v7835 = vpop.f32.mrb[0].mxu0
        %v7836 = vadd.f32 %v7515, %v7835
        %v7837 = vpop.f32.mrb[0].mxu0
        %7838 = vmatprep.mubr.f32.mxu0 0.0
        %7839 = vmatmul.mubr.f32.gmra.mrb[0].mxu0 %v7673
        %v7840 = vpop.f32.mrb[0].mxu0
        %v7841 = vadd.f32 %v7520, %v7840
        %v7842 = vpop.f32.mrb[0].mxu0
        %7843 = vmatprep.mubr.f32.mxu0 0.0
        %7844 = vmatmul.mubr.f32.gmra.mrb[0].mxu0 %v7676
        %v7845 = vpop.f32.mrb[0].mxu0
        %v7846 = vadd.f32 %v7525, %v7845
        %v7847 = vpop.f32.mrb[0].mxu0
        %7848 = vmatprep.mubr.f32.mxu0 0.0
        %7849 = vmatmul.mubr.f32.gmra.mrb[0].mxu0 %v7679
        %v7850 = vpop.f32.mrb[0].mxu0
        %v7851 = vadd.f32 %v7530, %v7850
        %v7852 = vpop.f32.mrb[0].mxu0
        %7853 = vmatprep.mubr.f32.mxu0 0.0
        %7854 = vmatmul.mubr.f32.gmra.mrb[0].mxu0 %v7682
        %v7855 = vpop.f32.mrb[0].mxu0
        %v7856 = vadd.f32 %v7535, %v7855
        %v7857 = vpop.f32.mrb[0].mxu0
        %7858 = vmatprep.mubr.f32.mxu0 0.0
        %7859 = vmatmul.mubr.f32.gmra.mrb[0].mxu0 %v7685
        %v7860 = vpop.f32.mrb[0].mxu0
        %v7861 = vadd.f32 %v7540, %v7860
        %v7862 = vpop.f32.mrb[0].mxu0
        %7863 = vmatprep.mubr.f32.mxu0 0.0
        %7864 = vmatmul.mubr.f32.gmra.mrb[0].mxu0 %v7688
        %v7865 = vpop.f32.mrb[0].mxu0
        %v7866 = vadd.f32 %v7545, %v7865
        %v7867 = vpop.f32.mrb[0].mxu0
        %7868 = vmatprep.mubr.f32.mxu0 0.0
        %7869 = vmatmul.mubr.f32.gmra.mrb[0].mxu0 %v7691
        %v7870 = vpop.f32.mrb[0].mxu0
        %v7871 = vadd.f32 %v7550, %v7870
        %v7872 = vpop.f32.mrb[0].mxu0
        %7873 = vmatprep.mubr.f32.mxu0 0.0
        %7874 = vmatmul.mubr.f32.gmra.mrb[0].mxu0 %v7694
        %v7875 = vpop.f32.mrb[0].mxu0
        %v7876 = vadd.f32 %v7555, %v7875
        %v7877 = vpop.f32.mrb[0].mxu0
        %7878 = vmatprep.mubr.f32.mxu0 0.0
        %7879 = vmatmul.mubr.f32.gmra.mrb[0].mxu0 %v7697
        %v7880 = vpop.f32.mrb[0].mxu0
        %v7881 = vadd.f32 %v7560, %v7880
        %v7882 = vpop.f32.mrb[0].mxu0
        %7883 = vmatprep.mubr.f32.mxu0 0.0
        %7884 = vmatmul.mubr.f32.gmra.mrb[0].mxu0 %v7700
        %v7885 = vpop.f32.mrb[0].mxu0
        %v7886 = vadd.f32 %v7565, %v7885
        %v7887 = vpop.f32.mrb[0].mxu0
        %7888 = vmatprep.mubr.f32.mxu0 0.0
        %7889 = vmatmul.mubr.f32.gmra.mrb[0].mxu0 %v7703
        %v7890 = vpop.f32.mrb[0].mxu0
        %v7891 = vadd.f32 %v7570, %v7890
        %v7892 = vpop.f32.mrb[0].mxu0
        %7893 = vmatprep.mubr.f32.mxu0 0.0
        %7894 = vmatmul.mubr.f32.gmra.mrb[0].mxu0 %v7706
        %v7895 = vpop.f32.mrb[0].mxu0
        %v7896 = vadd.f32 %v7575, %v7895
        %v7897 = vpop.f32.mrb[0].mxu0
        %7898 = vmatprep.mubr.f32.mxu0 0.0
        %7899 = vmatmul.mubr.f32.gmra.mrb[0].mxu0 %v7709
        %v7900 = vpop.f32.mrb[0].mxu0
        %v7901 = vadd.f32 %v7580, %v7900
        %v7902 = vpop.f32.mrb[0].mxu0
        %7903 = vmatprep.mubr.f32.mxu0 0.0
        %7904 = vmatmul.mubr.f32.gmra.mrb[0].mxu0 %v7712
        %v7905 = vpop.f32.mrb[0].mxu0
        %v7906 = vadd.f32 %v7585, %v7905
        %v7907 = vpop.f32.mrb[0].mxu0
        %7908 = vmatprep.mubr.f32.mxu0 0.0
        %7909 = vmatmul.mubr.f32.gmra.mrb[0].mxu0 %v7715
        %v7910 = vpop.f32.mrb[0].mxu0
        %v7911 = vadd.f32 %v7590, %v7910
        %v7912 = vpop.f32.mrb[0].mxu0
        %7913 = vmatprep.mubr.f32.mxu0 0.0
        %7914 = vmatmul.mubr.f32.gmra.mrb[0].mxu0 %v7718
        %v7915 = vpop.f32.mrb[0].mxu0
        %v7916 = vadd.f32 %v7595, %v7915
        %v7917 = vpop.f32.mrb[0].mxu0
        %7918 = vmatprep.mubr.f32.mxu0 0.0
        %7919 = vmatmul.mubr.f32.gmra.mrb[0].mxu0 %v7721
        %v7920 = vpop.f32.mrb[0].mxu0
        %v7921 = vadd.f32 %v7600, %v7920
        %v7922 = vpop.f32.mrb[0].mxu0
        %7923 = vmatprep.mubr.f32.mxu0 0.0
        %7924 = vmatmul.mubr.f32.gmra.mrb[0].mxu0 %v7724
        %v7925 = vpop.f32.mrb[0].mxu0
        %v7926 = vadd.f32 %v7605, %v7925
        %v7927 = vpop.f32.mrb[0].mxu0
        %7928 = vmatprep.mubr.f32.mxu0 0.0
        %7929 = vmatmul.mubr.f32.gmra.mrb[0].mxu0 %v7727
        %v7930 = vpop.f32.mrb[0].mxu0
        %v7931 = vadd.f32 %v7610, %v7930
        %v7932 = vpop.f32.mrb[0].mxu0
        %7933 = vmatprep.mubr.f32.mxu0 0.0
        %7934 = vmatmul.mubr.f32.gmra.mrb[0].mxu0 %v7730
        %v7935 = vpop.f32.mrb[0].mxu0
        %v7936 = vadd.f32 %v7615, %v7935
        %v7937 = vpop.f32.mrb[0].mxu0
        %7938 = vmatprep.mubr.f32.mxu0 0.0
        %7939 = vmatmul.mubr.f32.gmra.mrb[0].mxu0 %v7733
        %v7940 = vpop.f32.mrb[0].mxu0
        %v7941 = vadd.f32 %v7620, %v7940
        %v7942 = vpop.f32.mrb[0].mxu0
        %7943 = vmatprep.mubr.f32.mxu0 0.0
        %7944 = vmatmul.mubr.f32.gmra.mrb[0].mxu0 %v7736
        %v7945 = vpop.f32.mrb[0].mxu0
        %v7946 = vadd.f32 %v7625, %v7945
        %v7947 = vpop.f32.mrb[0].mxu0
        %7948 = vmatprep.mubr.f32.mxu0 0.0
        %7949 = vmatmul.mubr.f32.gmra.mrb[0].mxu0 %v7739
        %v7950 = vpop.f32.mrb[0].mxu0
        %v7951 = vadd.f32 %v7630, %v7950
        %v7952 = vpop.f32.mrb[0].mxu0
        %7953 = vmatprep.mubr.f32.mxu0 0.0
        %7954 = vmatmul.mubr.f32.gmra.mrb[0].mxu0 %v7742
        %v7955 = vpop.f32.mrb[0].mxu0
        %v7956 = vadd.f32 %v7635, %v7955
        %v7957 = vpop.f32.mrb[0].mxu0
        %7958 = vmatprep.mubr.f32.mxu0 0.0
        %7959 = vmatmul.mubr.f32.gmra.mrb[0].mxu0 %v7745
        %v7960 = vpop.f32.mrb[0].mxu0
        %v7961 = vadd.f32 %v7640, %v7960
        %v7962 = vpop.f32.mrb[0].mxu0
        %7963 = vmatprep.mubr.f32.mxu0 0.0
        %7964 = vmatmul.mubr.f32.gmra.mrb[0].mxu0 %v7748
        %v7965 = vpop.f32.mrb[0].mxu0
        %v7966 = vadd.f32 %v7645, %v7965
        %v7967 = vpop.f32.mrb[0].mxu0
        %7968 = vmatprep.mubr.f32.mxu0 0.0
        %7969 = vmatmul.mubr.f32.gmra.mrb[0].mxu0 %v7751
        %v7970 = vpop.f32.mrb[0].mxu0
        %v7971 = vadd.f32 %v7650, %v7970
        %v7972 = vpop.f32.mrb[0].mxu0
        %7973 = vmatprep.mubr.f32.mxu0 0.0
        %7974 = vmatmul.mubr.f32.gmra.mrb[0].mxu0 %v7754
        %v7975 = vpop.f32.mrb[0].mxu0
        %v7976 = vadd.f32 %v7655, %v7975
        %v7977 = vpop.f32.mrb[0].mxu0
        %7978 = vmatprep.mubr.f32.mxu0 0.0
        %7979 = vmatmul.mubr.f32.gmra.mrb[0].mxu0 %v7757
        %v7980 = vpop.f32.mrb[0].mxu0
        %v7981 = vadd.f32 %v7660, %v7980
        %v7982 = vpop.f32.mrb[0].mxu0
        %7983 = vdwg.mxu0
        %v7984 = vld [vmem:[%s2314 + $0x1] sm:$0xff]
        %v7985 = vld [vmem:[%s2314 + $0x9] sm:$0xff]
        %v7986 = vld [vmem:[%s2314 + $0x19] sm:$0xff]
        %v7987 = vld [vmem:[%s2314 + $0x21] sm:$0xff]
        %v7988 = vld [vmem:[%s2314 + $0x31] sm:$0xff]
        %v7989 = vld [vmem:[%s2314 + $0x39] sm:$0xff]
        %v7990 = vld [vmem:[%s2314 + $0x49] sm:$0xff]
        %v7991 = vld [vmem:[%s2314 + $0x51] sm:$0xff]
        %v7992 = vld [vmem:[%s2314 + $0x61] sm:$0xff]
        %v7993 = vld [vmem:[%s2314 + $0x69] sm:$0xff]
        %v7994 = vld [vmem:[%s2314 + $0x79] sm:$0xff]
        %v7995 = vld [vmem:[%s2314 + $0x81] sm:$0xff]
        %v7996 = vld [vmem:[%s2314 + $0x91] sm:$0xff]
        %v7997 = vld [vmem:[%s2314 + $0x99] sm:$0xff]
        %v7998 = vld [vmem:[%s2314 + $0xa9] sm:$0xff]
        %v7999 = vld [vmem:[%s2314 + $0xb1] sm:$0xff]
        %v8000 = vld [vmem:[%s2314 + $0xc1] sm:$0xff]
        %v8001 = vld [vmem:[%s2314 + $0xc9] sm:$0xff]
        %v8002 = vld [vmem:[%s2314 + $0xd9] sm:$0xff]
        %v8003 = vld [vmem:[%s2314 + $0xe1] sm:$0xff]
        %v8004 = vld [vmem:[%s2314 + $0xf1] sm:$0xff]
        %v8005 = vld [vmem:[%s2314 + $0xf9] sm:$0xff]
        %v8006 = vld [vmem:[%s2314 + $0x109] sm:$0xff]
        %v8007 = vld [vmem:[%s2314 + $0x111] sm:$0xff]
        %v8008 = vld [vmem:[%s2314 + $0x121] sm:$0xff]
        %v8009 = vld [vmem:[%s2314 + $0x129] sm:$0xff]
        %v8010 = vld [vmem:[%s2314 + $0x139] sm:$0xff]
        %v8011 = vld [vmem:[%s2314 + $0x141] sm:$0xff]
        %v8012 = vld [vmem:[%s2314 + $0x151] sm:$0xff]
        %v8013 = vld [vmem:[%s2314 + $0x159] sm:$0xff]
        %v8014 = vld [vmem:[%s2314 + $0x169] sm:$0xff]
        %v8015 = vld [vmem:[%s2314 + $0x171] sm:$0xff]
        %s8016 = scalar_lea.vmem [#allocation10], 64
        %v8017 = vld [vmem:[%s8016] sm:$0xff]
        %v8018 = vld [vmem:[%s8016 + $0x8] sm:$0xff]
        %v8019 = vld [vmem:[%s8016 + $0x10] sm:$0xff]
        %v8020 = vld [vmem:[%s8016 + $0x18] sm:$0xff]
        %v8022 = vsel %vm643, %v7984, 0
        %v8025 = vsel %vm643, %v7985, 0
        %v8028 = vsel %vm643, %v7986, 0
        %v8031 = vsel %vm643, %v7987, 0
        %v8034 = vsel %vm643, %v7988, 0
        %v8037 = vsel %vm643, %v7989, 0
        %v8040 = vsel %vm643, %v7990, 0
        %v8043 = vsel %vm643, %v7991, 0
        %v8046 = vsel %vm643, %v7992, 0
        %v8049 = vsel %vm643, %v7993, 0
        %v8052 = vsel %vm643, %v7994, 0
        %v8055 = vsel %vm643, %v7995, 0
        %v8058 = vsel %vm643, %v7996, 0
        %v8061 = vsel %vm643, %v7997, 0
        %v8064 = vsel %vm643, %v7998, 0
        %v8067 = vsel %vm643, %v7999, 0
        %v8070 = vsel %vm643, %v8000, 0
        %v8073 = vsel %vm643, %v8001, 0
        %v8076 = vsel %vm643, %v8002, 0
        %v8079 = vsel %vm643, %v8003, 0
        %v8082 = vsel %vm643, %v8004, 0
        %v8085 = vsel %vm643, %v8005, 0
        %v8088 = vsel %vm643, %v8006, 0
        %v8091 = vsel %vm643, %v8007, 0
        %v8094 = vsel %vm643, %v8008, 0
        %v8097 = vsel %vm643, %v8009, 0
        %v8100 = vsel %vm643, %v8010, 0
        %v8103 = vsel %vm643, %v8011, 0
        %v8106 = vsel %vm643, %v8012, 0
        %v8109 = vsel %vm643, %v8013, 0
        %v8112 = vsel %vm643, %v8014, 0
        %v8115 = vsel %vm643, %v8015, 0
        %8117 = vmatprep.subr.mxu0 0.0
        %8118 = vmatpush1.msra.mxu0 %v8017
        %8119 = vmatprep.subr.mxu0 0.0
        %8120 = vmatpush1.msra.mxu0 %v8018
        %8121 = vmatprep.subr.mxu0 0.0
        %8122 = vmatpush1.msra.mxu0 %v8019
        %8123 = vmatprep.subr.mxu0 0.0
        %8124 = vmatpush1.msra.mxu0 %v8020
        %8125 = vmatprep.subr.mxu0 0.0
        %8126 = vmatpush1.msra.mxu0 0.0
        %8127 = vmatprep.subr.mxu0 0.0
        %8128 = vmatpush1.msra.mxu0 0.0
        %8129 = vmatprep.subr.mxu0 0.0
        %8130 = vmatpush1.msra.mxu0 0.0
        %8131 = vmatprep.subr.mxu0 0.0
        %8132 = vmatpush1.msra.mxu0 0.0
        %8133 = vmatprep.subr.mxu0 0.0
        %8134 = vmatpush1.msra.mxu0 0.0
        %8135 = vmatprep.subr.mxu0 0.0
        %8136 = vmatpush1.msra.mxu0 0.0
        %8137 = vmatprep.subr.mxu0 0.0
        %8138 = vmatpush1.msra.mxu0 0.0
        %8139 = vmatprep.subr.mxu0 0.0
        %8140 = vmatpush1.msra.mxu0 0.0
        %8141 = vmatprep.subr.mxu0 0.0
        %8142 = vmatpush1.msra.mxu0 0.0
        %8143 = vmatprep.subr.mxu0 0.0
        %8144 = vmatpush1.msra.mxu0 0.0
        %8145 = vmatprep.subr.mxu0 0.0
        %8146 = vmatpush1.msra.mxu0 0.0
        %8147 = vmatprep.subr.mxu0 0.0
        %8148 = vmatpush1.msra.mxu0 0.0
        %8149 = vmatprep.subr.mxu0 0.0
        %8150 = vmatpush1.msra.mxu0 0.0
        %8151 = vmatprep.subr.mxu0 0.0
        %8152 = vmatpush1.msra.mxu0 0.0
        %8153 = vmatprep.subr.mxu0 0.0
        %8154 = vmatpush1.msra.mxu0 0.0
        %8155 = vmatprep.subr.mxu0 0.0
        %8156 = vmatpush1.msra.mxu0 0.0
        %8157 = vmatprep.subr.mxu0 0.0
        %8158 = vmatpush1.msra.mxu0 0.0
        %8159 = vmatprep.subr.mxu0 0.0
        %8160 = vmatpush1.msra.mxu0 0.0
        %8161 = vmatprep.subr.mxu0 0.0
        %8162 = vmatpush1.msra.mxu0 0.0
        %8163 = vmatprep.subr.mxu0 0.0
        %8164 = vmatpush1.msra.mxu0 0.0
        %8165 = vmatprep.subr.mxu0 0.0
        %8166 = vmatpush1.msra.mxu0 0.0
        %8167 = vmatprep.subr.mxu0 0.0
        %8168 = vmatpush1.msra.mxu0 0.0
        %8169 = vmatprep.subr.mxu0 0.0
        %8170 = vmatpush1.msra.mxu0 0.0
        %8171 = vmatprep.subr.mxu0 0.0
        %8172 = vmatpush1.msra.mxu0 0.0
        %8173 = vmatprep.subr.mxu0 0.0
        %8174 = vmatpush1.msra.mxu0 0.0
        %8175 = vmatprep.subr.mxu0 0.0
        %8176 = vmatpush1.msra.mxu0 0.0
        %8177 = vmatprep.subr.mxu0 0.0
        %8178 = vmatpush1.msra.mxu0 0.0
        %8179 = vmatprep.subr.mxu0 0.0
        %8180 = vmatpush1.msra.mxu0 0.0
        %8181 = vmatprep.mubr.f32.mxu0 0.0
        %8182 = vmatmul.mubr.f32.gmra.mrb[0].mxu0 %v8022
        %v8183 = vpop.f32.mrb[0].mxu0
        %v8184 = vadd.f32 0.0, %v8183
        %v8185 = vpop.f32.mrb[0].mxu0
        %8186 = vmatprep.mubr.f32.mxu0 0.0
        %8187 = vmatmul.mubr.f32.gmra.mrb[0].mxu0 %v8025
        %v8188 = vpop.f32.mrb[0].mxu0
        %v8189 = vadd.f32 0.0, %v8188
        %v8190 = vpop.f32.mrb[0].mxu0
        %8191 = vmatprep.mubr.f32.mxu0 0.0
        %8192 = vmatmul.mubr.f32.gmra.mrb[0].mxu0 %v8028
        %v8193 = vpop.f32.mrb[0].mxu0
        %v8194 = vadd.f32 0.0, %v8193
        %v8195 = vpop.f32.mrb[0].mxu0
        %8196 = vmatprep.mubr.f32.mxu0 0.0
        %8197 = vmatmul.mubr.f32.gmra.mrb[0].mxu0 %v8031
        %v8198 = vpop.f32.mrb[0].mxu0
        %v8199 = vadd.f32 0.0, %v8198
        %v8200 = vpop.f32.mrb[0].mxu0
        %8201 = vmatprep.mubr.f32.mxu0 0.0
        %8202 = vmatmul.mubr.f32.gmra.mrb[0].mxu0 %v8034
        %v8203 = vpop.f32.mrb[0].mxu0
        %v8204 = vadd.f32 0.0, %v8203
        %v8205 = vpop.f32.mrb[0].mxu0
        %8206 = vmatprep.mubr.f32.mxu0 0.0
        %8207 = vmatmul.mubr.f32.gmra.mrb[0].mxu0 %v8037
        %v8208 = vpop.f32.mrb[0].mxu0
        %v8209 = vadd.f32 0.0, %v8208
        %v8210 = vpop.f32.mrb[0].mxu0
        %8211 = vmatprep.mubr.f32.mxu0 0.0
        %8212 = vmatmul.mubr.f32.gmra.mrb[0].mxu0 %v8040
        %v8213 = vpop.f32.mrb[0].mxu0
        %v8214 = vadd.f32 0.0, %v8213
        %v8215 = vpop.f32.mrb[0].mxu0
        %8216 = vmatprep.mubr.f32.mxu0 0.0
        %8217 = vmatmul.mubr.f32.gmra.mrb[0].mxu0 %v8043
        %v8218 = vpop.f32.mrb[0].mxu0
        %v8219 = vadd.f32 0.0, %v8218
        %v8220 = vpop.f32.mrb[0].mxu0
        %8221 = vmatprep.mubr.f32.mxu0 0.0
        %8222 = vmatmul.mubr.f32.gmra.mrb[0].mxu0 %v8046
        %v8223 = vpop.f32.mrb[0].mxu0
        %v8224 = vadd.f32 0.0, %v8223
        %v8225 = vpop.f32.mrb[0].mxu0
        %8226 = vmatprep.mubr.f32.mxu0 0.0
        %8227 = vmatmul.mubr.f32.gmra.mrb[0].mxu0 %v8049
        %v8228 = vpop.f32.mrb[0].mxu0
        %v8229 = vadd.f32 0.0, %v8228
        %v8230 = vpop.f32.mrb[0].mxu0
        %8231 = vmatprep.mubr.f32.mxu0 0.0
        %8232 = vmatmul.mubr.f32.gmra.mrb[0].mxu0 %v8052
        %v8233 = vpop.f32.mrb[0].mxu0
        %v8234 = vadd.f32 0.0, %v8233
        %v8235 = vpop.f32.mrb[0].mxu0
        %8236 = vmatprep.mubr.f32.mxu0 0.0
        %8237 = vmatmul.mubr.f32.gmra.mrb[0].mxu0 %v8055
        %v8238 = vpop.f32.mrb[0].mxu0
        %v8239 = vadd.f32 0.0, %v8238
        %v8240 = vpop.f32.mrb[0].mxu0
        %8241 = vmatprep.mubr.f32.mxu0 0.0
        %8242 = vmatmul.mubr.f32.gmra.mrb[0].mxu0 %v8058
        %v8243 = vpop.f32.mrb[0].mxu0
        %v8244 = vadd.f32 0.0, %v8243
        %v8245 = vpop.f32.mrb[0].mxu0
        %8246 = vmatprep.mubr.f32.mxu0 0.0
        %8247 = vmatmul.mubr.f32.gmra.mrb[0].mxu0 %v8061
        %v8248 = vpop.f32.mrb[0].mxu0
        %v8249 = vadd.f32 0.0, %v8248
        %v8250 = vpop.f32.mrb[0].mxu0
        %8251 = vmatprep.mubr.f32.mxu0 0.0
        %8252 = vmatmul.mubr.f32.gmra.mrb[0].mxu0 %v8064
        %v8253 = vpop.f32.mrb[0].mxu0
        %v8254 = vadd.f32 0.0, %v8253
        %v8255 = vpop.f32.mrb[0].mxu0
        %8256 = vmatprep.mubr.f32.mxu0 0.0
        %8257 = vmatmul.mubr.f32.gmra.mrb[0].mxu0 %v8067
        %v8258 = vpop.f32.mrb[0].mxu0
        %v8259 = vadd.f32 0.0, %v8258
        %v8260 = vpop.f32.mrb[0].mxu0
        %8261 = vmatprep.mubr.f32.mxu0 0.0
        %8262 = vmatmul.mubr.f32.gmra.mrb[0].mxu0 %v8070
        %v8263 = vpop.f32.mrb[0].mxu0
        %v8264 = vadd.f32 0.0, %v8263
        %v8265 = vpop.f32.mrb[0].mxu0
        %8266 = vmatprep.mubr.f32.mxu0 0.0
        %8267 = vmatmul.mubr.f32.gmra.mrb[0].mxu0 %v8073
        %v8268 = vpop.f32.mrb[0].mxu0
        %v8269 = vadd.f32 0.0, %v8268
        %v8270 = vpop.f32.mrb[0].mxu0
        %8271 = vmatprep.mubr.f32.mxu0 0.0
        %8272 = vmatmul.mubr.f32.gmra.mrb[0].mxu0 %v8076
        %v8273 = vpop.f32.mrb[0].mxu0
        %v8274 = vadd.f32 0.0, %v8273
        %v8275 = vpop.f32.mrb[0].mxu0
        %8276 = vmatprep.mubr.f32.mxu0 0.0
        %8277 = vmatmul.mubr.f32.gmra.mrb[0].mxu0 %v8079
        %v8278 = vpop.f32.mrb[0].mxu0
        %v8279 = vadd.f32 0.0, %v8278
        %v8280 = vpop.f32.mrb[0].mxu0
        %8281 = vmatprep.mubr.f32.mxu0 0.0
        %8282 = vmatmul.mubr.f32.gmra.mrb[0].mxu0 %v8082
        %v8283 = vpop.f32.mrb[0].mxu0
        %v8284 = vadd.f32 0.0, %v8283
        %v8285 = vpop.f32.mrb[0].mxu0
        %8286 = vmatprep.mubr.f32.mxu0 0.0
        %8287 = vmatmul.mubr.f32.gmra.mrb[0].mxu0 %v8085
        %v8288 = vpop.f32.mrb[0].mxu0
        %v8289 = vadd.f32 0.0, %v8288
        %v8290 = vpop.f32.mrb[0].mxu0
        %8291 = vmatprep.mubr.f32.mxu0 0.0
        %8292 = vmatmul.mubr.f32.gmra.mrb[0].mxu0 %v8088
        %v8293 = vpop.f32.mrb[0].mxu0
        %v8294 = vadd.f32 0.0, %v8293
        %v8295 = vpop.f32.mrb[0].mxu0
        %8296 = vmatprep.mubr.f32.mxu0 0.0
        %8297 = vmatmul.mubr.f32.gmra.mrb[0].mxu0 %v8091
        %v8298 = vpop.f32.mrb[0].mxu0
        %v8299 = vadd.f32 0.0, %v8298
        %v8300 = vpop.f32.mrb[0].mxu0
        %8301 = vmatprep.mubr.f32.mxu0 0.0
        %8302 = vmatmul.mubr.f32.gmra.mrb[0].mxu0 %v8094
        %v8303 = vpop.f32.mrb[0].mxu0
        %v8304 = vadd.f32 0.0, %v8303
        %v8305 = vpop.f32.mrb[0].mxu0
        %8306 = vmatprep.mubr.f32.mxu0 0.0
        %8307 = vmatmul.mubr.f32.gmra.mrb[0].mxu0 %v8097
        %v8308 = vpop.f32.mrb[0].mxu0
        %v8309 = vadd.f32 0.0, %v8308
        %v8310 = vpop.f32.mrb[0].mxu0
        %8311 = vmatprep.mubr.f32.mxu0 0.0
        %8312 = vmatmul.mubr.f32.gmra.mrb[0].mxu0 %v8100
        %v8313 = vpop.f32.mrb[0].mxu0
        %v8314 = vadd.f32 0.0, %v8313
        %v8315 = vpop.f32.mrb[0].mxu0
        %8316 = vmatprep.mubr.f32.mxu0 0.0
        %8317 = vmatmul.mubr.f32.gmra.mrb[0].mxu0 %v8103
        %v8318 = vpop.f32.mrb[0].mxu0
        %v8319 = vadd.f32 0.0, %v8318
        %v8320 = vpop.f32.mrb[0].mxu0
        %8321 = vmatprep.mubr.f32.mxu0 0.0
        %8322 = vmatmul.mubr.f32.gmra.mrb[0].mxu0 %v8106
        %v8323 = vpop.f32.mrb[0].mxu0
        %v8324 = vadd.f32 0.0, %v8323
        %v8325 = vpop.f32.mrb[0].mxu0
        %8326 = vmatprep.mubr.f32.mxu0 0.0
        %8327 = vmatmul.mubr.f32.gmra.mrb[0].mxu0 %v8109
        %v8328 = vpop.f32.mrb[0].mxu0
        %v8329 = vadd.f32 0.0, %v8328
        %v8330 = vpop.f32.mrb[0].mxu0
        %8331 = vmatprep.mubr.f32.mxu0 0.0
        %8332 = vmatmul.mubr.f32.gmra.mrb[0].mxu0 %v8112
        %v8333 = vpop.f32.mrb[0].mxu0
        %v8334 = vadd.f32 0.0, %v8333
        %v8335 = vpop.f32.mrb[0].mxu0
        %8336 = vmatprep.mubr.f32.mxu0 0.0
        %8337 = vmatmul.mubr.f32.gmra.mrb[0].mxu0 %v8115
        %v8338 = vpop.f32.mrb[0].mxu0
        %v8339 = vadd.f32 0.0, %v8338
        %v8340 = vpop.f32.mrb[0].mxu0
        %8341 = vdwg.mxu0
        %v8342 = vadd.f32 %v7826, %v8184
        %v8343 = vadd.f32 %v7831, %v8189
        %v8344 = vadd.f32 %v7836, %v8194
        %v8345 = vadd.f32 %v7841, %v8199
        %v8346 = vadd.f32 %v7846, %v8204
        %v8347 = vadd.f32 %v7851, %v8209
        %v8348 = vadd.f32 %v7856, %v8214
        %v8349 = vadd.f32 %v7861, %v8219
        %v8350 = vadd.f32 %v7866, %v8224
        %v8351 = vadd.f32 %v7871, %v8229
        %v8352 = vadd.f32 %v7876, %v8234
        %v8353 = vadd.f32 %v7881, %v8239
        %v8354 = vadd.f32 %v7886, %v8244
        %v8355 = vadd.f32 %v7891, %v8249
        %v8356 = vadd.f32 %v7896, %v8254
        %v8357 = vadd.f32 %v7901, %v8259
        %v8358 = vadd.f32 %v7906, %v8264
        %v8359 = vadd.f32 %v7911, %v8269
        %v8360 = vadd.f32 %v7916, %v8274
        %v8361 = vadd.f32 %v7921, %v8279
        %v8362 = vadd.f32 %v7926, %v8284
        %v8363 = vadd.f32 %v7931, %v8289
        %v8364 = vadd.f32 %v7936, %v8294
        %v8365 = vadd.f32 %v7941, %v8299
        %v8366 = vadd.f32 %v7946, %v8304
        %v8367 = vadd.f32 %v7951, %v8309
        %v8368 = vadd.f32 %v7956, %v8314
        %v8369 = vadd.f32 %v7961, %v8319
        %v8370 = vadd.f32 %v7966, %v8324
        %v8371 = vadd.f32 %v7971, %v8329
        %v8372 = vadd.f32 %v7976, %v8334
        %v8373 = vadd.f32 %v7981, %v8339
        %v8374 = vld [vmem:[%s2314 + $0x2] sm:$0xff]
        %v8375 = vld [vmem:[%s2314 + $0xa] sm:$0xff]
        %v8376 = vld [vmem:[%s2314 + $0x1a] sm:$0xff]
        %v8377 = vld [vmem:[%s2314 + $0x22] sm:$0xff]
        %v8378 = vld [vmem:[%s2314 + $0x32] sm:$0xff]
        %v8379 = vld [vmem:[%s2314 + $0x3a] sm:$0xff]
        %v8380 = vld [vmem:[%s2314 + $0x4a] sm:$0xff]
        %v8381 = vld [vmem:[%s2314 + $0x52] sm:$0xff]
        %v8382 = vld [vmem:[%s2314 + $0x62] sm:$0xff]
        %v8383 = vld [vmem:[%s2314 + $0x6a] sm:$0xff]
        %v8384 = vld [vmem:[%s2314 + $0x7a] sm:$0xff]
        %v8385 = vld [vmem:[%s2314 + $0x82] sm:$0xff]
        %v8386 = vld [vmem:[%s2314 + $0x92] sm:$0xff]
        %v8387 = vld [vmem:[%s2314 + $0x9a] sm:$0xff]
        %v8388 = vld [vmem:[%s2314 + $0xaa] sm:$0xff]
        %v8389 = vld [vmem:[%s2314 + $0xb2] sm:$0xff]
        %v8390 = vld [vmem:[%s2314 + $0xc2] sm:$0xff]
        %v8391 = vld [vmem:[%s2314 + $0xca] sm:$0xff]
        %v8392 = vld [vmem:[%s2314 + $0xda] sm:$0xff]
        %v8393 = vld [vmem:[%s2314 + $0xe2] sm:$0xff]
        %v8394 = vld [vmem:[%s2314 + $0xf2] sm:$0xff]
        %v8395 = vld [vmem:[%s2314 + $0xfa] sm:$0xff]
        %v8396 = vld [vmem:[%s2314 + $0x10a] sm:$0xff]
        %v8397 = vld [vmem:[%s2314 + $0x112] sm:$0xff]
        %v8398 = vld [vmem:[%s2314 + $0x122] sm:$0xff]
        %v8399 = vld [vmem:[%s2314 + $0x12a] sm:$0xff]
        %v8400 = vld [vmem:[%s2314 + $0x13a] sm:$0xff]
        %v8401 = vld [vmem:[%s2314 + $0x142] sm:$0xff]
        %v8402 = vld [vmem:[%s2314 + $0x152] sm:$0xff]
        %v8403 = vld [vmem:[%s2314 + $0x15a] sm:$0xff]
        %v8404 = vld [vmem:[%s2314 + $0x16a] sm:$0xff]
        %v8405 = vld [vmem:[%s2314 + $0x172] sm:$0xff]
        %s8406 = scalar_lea.vmem [#allocation10], 96
        %v8407 = vld [vmem:[%s8406] sm:$0xff]
        %v8408 = vld [vmem:[%s8406 + $0x8] sm:$0xff]
        %v8409 = vld [vmem:[%s8406 + $0x10] sm:$0xff]
        %v8410 = vld [vmem:[%s8406 + $0x18] sm:$0xff]
        %v8412 = vsel %vm643, %v8374, 0
        %v8415 = vsel %vm643, %v8375, 0
        %v8418 = vsel %vm643, %v8376, 0
        %v8421 = vsel %vm643, %v8377, 0
        %v8424 = vsel %vm643, %v8378, 0
        %v8427 = vsel %vm643, %v8379, 0
        %v8430 = vsel %vm643, %v8380, 0
        %v8433 = vsel %vm643, %v8381, 0
        %v8436 = vsel %vm643, %v8382, 0
        %v8439 = vsel %vm643, %v8383, 0
        %v8442 = vsel %vm643, %v8384, 0
        %v8445 = vsel %vm643, %v8385, 0
        %v8448 = vsel %vm643, %v8386, 0
        %v8451 = vsel %vm643, %v8387, 0
        %v8454 = vsel %vm643, %v8388, 0
        %v8457 = vsel %vm643, %v8389, 0
        %v8460 = vsel %vm643, %v8390, 0
        %v8463 = vsel %vm643, %v8391, 0
        %v8466 = vsel %vm643, %v8392, 0
        %v8469 = vsel %vm643, %v8393, 0
        %v8472 = vsel %vm643, %v8394, 0
        %v8475 = vsel %vm643, %v8395, 0
        %v8478 = vsel %vm643, %v8396, 0
        %v8481 = vsel %vm643, %v8397, 0
        %v8484 = vsel %vm643, %v8398, 0
        %v8487 = vsel %vm643, %v8399, 0
        %v8490 = vsel %vm643, %v8400, 0
        %v8493 = vsel %vm643, %v8401, 0
        %v8496 = vsel %vm643, %v8402, 0
        %v8499 = vsel %vm643, %v8403, 0
        %v8502 = vsel %vm643, %v8404, 0
        %v8505 = vsel %vm643, %v8405, 0
        %8507 = vmatprep.subr.mxu0 0.0
        %8508 = vmatpush1.msra.mxu0 %v8407
        %8509 = vmatprep.subr.mxu0 0.0
        %8510 = vmatpush1.msra.mxu0 %v8408
        %8511 = vmatprep.subr.mxu0 0.0
        %8512 = vmatpush1.msra.mxu0 %v8409
        %8513 = vmatprep.subr.mxu0 0.0
        %8514 = vmatpush1.msra.mxu0 %v8410
        %8515 = vmatprep.subr.mxu0 0.0
        %8516 = vmatpush1.msra.mxu0 0.0
        %8517 = vmatprep.subr.mxu0 0.0
        %8518 = vmatpush1.msra.mxu0 0.0
        %8519 = vmatprep.subr.mxu0 0.0
        %8520 = vmatpush1.msra.mxu0 0.0
        %8521 = vmatprep.subr.mxu0 0.0
        %8522 = vmatpush1.msra.mxu0 0.0
        %8523 = vmatprep.subr.mxu0 0.0
        %8524 = vmatpush1.msra.mxu0 0.0
        %8525 = vmatprep.subr.mxu0 0.0
        %8526 = vmatpush1.msra.mxu0 0.0
        %8527 = vmatprep.subr.mxu0 0.0
        %8528 = vmatpush1.msra.mxu0 0.0
        %8529 = vmatprep.subr.mxu0 0.0
        %8530 = vmatpush1.msra.mxu0 0.0
        %8531 = vmatprep.subr.mxu0 0.0
        %8532 = vmatpush1.msra.mxu0 0.0
        %8533 = vmatprep.subr.mxu0 0.0
        %8534 = vmatpush1.msra.mxu0 0.0
        %8535 = vmatprep.subr.mxu0 0.0
        %8536 = vmatpush1.msra.mxu0 0.0
        %8537 = vmatprep.subr.mxu0 0.0
        %8538 = vmatpush1.msra.mxu0 0.0
        %8539 = vmatprep.subr.mxu0 0.0
        %8540 = vmatpush1.msra.mxu0 0.0
        %8541 = vmatprep.subr.mxu0 0.0
        %8542 = vmatpush1.msra.mxu0 0.0
        %8543 = vmatprep.subr.mxu0 0.0
        %8544 = vmatpush1.msra.mxu0 0.0
        %8545 = vmatprep.subr.mxu0 0.0
        %8546 = vmatpush1.msra.mxu0 0.0
        %8547 = vmatprep.subr.mxu0 0.0
        %8548 = vmatpush1.msra.mxu0 0.0
        %8549 = vmatprep.subr.mxu0 0.0
        %8550 = vmatpush1.msra.mxu0 0.0
        %8551 = vmatprep.subr.mxu0 0.0
        %8552 = vmatpush1.msra.mxu0 0.0
        %8553 = vmatprep.subr.mxu0 0.0
        %8554 = vmatpush1.msra.mxu0 0.0
        %8555 = vmatprep.subr.mxu0 0.0
        %8556 = vmatpush1.msra.mxu0 0.0
        %8557 = vmatprep.subr.mxu0 0.0
        %8558 = vmatpush1.msra.mxu0 0.0
        %8559 = vmatprep.subr.mxu0 0.0
        %8560 = vmatpush1.msra.mxu0 0.0
        %8561 = vmatprep.subr.mxu0 0.0
        %8562 = vmatpush1.msra.mxu0 0.0
        %8563 = vmatprep.subr.mxu0 0.0
        %8564 = vmatpush1.msra.mxu0 0.0
        %8565 = vmatprep.subr.mxu0 0.0
        %8566 = vmatpush1.msra.mxu0 0.0
        %8567 = vmatprep.subr.mxu0 0.0
        %8568 = vmatpush1.msra.mxu0 0.0
        %8569 = vmatprep.subr.mxu0 0.0
        %8570 = vmatpush1.msra.mxu0 0.0
        %8571 = vmatprep.mubr.f32.mxu0 0.0
        %8572 = vmatmul.mubr.f32.gmra.mrb[0].mxu0 %v8412
        %v8573 = vpop.f32.mrb[0].mxu0
        %v8574 = vadd.f32 0.0, %v8573
        %v8575 = vpop.f32.mrb[0].mxu0
        %8576 = vmatprep.mubr.f32.mxu0 0.0
        %8577 = vmatmul.mubr.f32.gmra.mrb[0].mxu0 %v8415
        %v8578 = vpop.f32.mrb[0].mxu0
        %v8579 = vadd.f32 0.0, %v8578
        %v8580 = vpop.f32.mrb[0].mxu0
        %8581 = vmatprep.mubr.f32.mxu0 0.0
        %8582 = vmatmul.mubr.f32.gmra.mrb[0].mxu0 %v8418
        %v8583 = vpop.f32.mrb[0].mxu0
        %v8584 = vadd.f32 0.0, %v8583
        %v8585 = vpop.f32.mrb[0].mxu0
        %8586 = vmatprep.mubr.f32.mxu0 0.0
        %8587 = vmatmul.mubr.f32.gmra.mrb[0].mxu0 %v8421
        %v8588 = vpop.f32.mrb[0].mxu0
        %v8589 = vadd.f32 0.0, %v8588
        %v8590 = vpop.f32.mrb[0].mxu0
        %8591 = vmatprep.mubr.f32.mxu0 0.0
        %8592 = vmatmul.mubr.f32.gmra.mrb[0].mxu0 %v8424
        %v8593 = vpop.f32.mrb[0].mxu0
        %v8594 = vadd.f32 0.0, %v8593
        %v8595 = vpop.f32.mrb[0].mxu0
        %8596 = vmatprep.mubr.f32.mxu0 0.0
        %8597 = vmatmul.mubr.f32.gmra.mrb[0].mxu0 %v8427
        %v8598 = vpop.f32.mrb[0].mxu0
        %v8599 = vadd.f32 0.0, %v8598
        %v8600 = vpop.f32.mrb[0].mxu0
        %8601 = vmatprep.mubr.f32.mxu0 0.0
        %8602 = vmatmul.mubr.f32.gmra.mrb[0].mxu0 %v8430
        %v8603 = vpop.f32.mrb[0].mxu0
        %v8604 = vadd.f32 0.0, %v8603
        %v8605 = vpop.f32.mrb[0].mxu0
        %8606 = vmatprep.mubr.f32.mxu0 0.0
        %8607 = vmatmul.mubr.f32.gmra.mrb[0].mxu0 %v8433
        %v8608 = vpop.f32.mrb[0].mxu0
        %v8609 = vadd.f32 0.0, %v8608
        %v8610 = vpop.f32.mrb[0].mxu0
        %8611 = vmatprep.mubr.f32.mxu0 0.0
        %8612 = vmatmul.mubr.f32.gmra.mrb[0].mxu0 %v8436
        %v8613 = vpop.f32.mrb[0].mxu0
        %v8614 = vadd.f32 0.0, %v8613
        %v8615 = vpop.f32.mrb[0].mxu0
        %8616 = vmatprep.mubr.f32.mxu0 0.0
        %8617 = vmatmul.mubr.f32.gmra.mrb[0].mxu0 %v8439
        %v8618 = vpop.f32.mrb[0].mxu0
        %v8619 = vadd.f32 0.0, %v8618
        %v8620 = vpop.f32.mrb[0].mxu0
        %8621 = vmatprep.mubr.f32.mxu0 0.0
        %8622 = vmatmul.mubr.f32.gmra.mrb[0].mxu0 %v8442
        %v8623 = vpop.f32.mrb[0].mxu0
        %v8624 = vadd.f32 0.0, %v8623
        %v8625 = vpop.f32.mrb[0].mxu0
        %8626 = vmatprep.mubr.f32.mxu0 0.0
        %8627 = vmatmul.mubr.f32.gmra.mrb[0].mxu0 %v8445
        %v8628 = vpop.f32.mrb[0].mxu0
        %v8629 = vadd.f32 0.0, %v8628
        %v8630 = vpop.f32.mrb[0].mxu0
        %8631 = vmatprep.mubr.f32.mxu0 0.0
        %8632 = vmatmul.mubr.f32.gmra.mrb[0].mxu0 %v8448
        %v8633 = vpop.f32.mrb[0].mxu0
        %v8634 = vadd.f32 0.0, %v8633
        %v8635 = vpop.f32.mrb[0].mxu0
        %8636 = vmatprep.mubr.f32.mxu0 0.0
        %8637 = vmatmul.mubr.f32.gmra.mrb[0].mxu0 %v8451
        %v8638 = vpop.f32.mrb[0].mxu0
        %v8639 = vadd.f32 0.0, %v8638
        %v8640 = vpop.f32.mrb[0].mxu0
        %8641 = vmatprep.mubr.f32.mxu0 0.0
        %8642 = vmatmul.mubr.f32.gmra.mrb[0].mxu0 %v8454
        %v8643 = vpop.f32.mrb[0].mxu0
        %v8644 = vadd.f32 0.0, %v8643
        %v8645 = vpop.f32.mrb[0].mxu0
        %8646 = vmatprep.mubr.f32.mxu0 0.0
        %8647 = vmatmul.mubr.f32.gmra.mrb[0].mxu0 %v8457
        %v8648 = vpop.f32.mrb[0].mxu0
        %v8649 = vadd.f32 0.0, %v8648
        %v8650 = vpop.f32.mrb[0].mxu0
        %8651 = vmatprep.mubr.f32.mxu0 0.0
        %8652 = vmatmul.mubr.f32.gmra.mrb[0].mxu0 %v8460
        %v8653 = vpop.f32.mrb[0].mxu0
        %v8654 = vadd.f32 0.0, %v8653
        %v8655 = vpop.f32.mrb[0].mxu0
        %8656 = vmatprep.mubr.f32.mxu0 0.0
        %8657 = vmatmul.mubr.f32.gmra.mrb[0].mxu0 %v8463
        %v8658 = vpop.f32.mrb[0].mxu0
        %v8659 = vadd.f32 0.0, %v8658
        %v8660 = vpop.f32.mrb[0].mxu0
        %8661 = vmatprep.mubr.f32.mxu0 0.0
        %8662 = vmatmul.mubr.f32.gmra.mrb[0].mxu0 %v8466
        %v8663 = vpop.f32.mrb[0].mxu0
        %v8664 = vadd.f32 0.0, %v8663
        %v8665 = vpop.f32.mrb[0].mxu0
        %8666 = vmatprep.mubr.f32.mxu0 0.0
        %8667 = vmatmul.mubr.f32.gmra.mrb[0].mxu0 %v8469
        %v8668 = vpop.f32.mrb[0].mxu0
        %v8669 = vadd.f32 0.0, %v8668
        %v8670 = vpop.f32.mrb[0].mxu0
        %8671 = vmatprep.mubr.f32.mxu0 0.0
        %8672 = vmatmul.mubr.f32.gmra.mrb[0].mxu0 %v8472
        %v8673 = vpop.f32.mrb[0].mxu0
        %v8674 = vadd.f32 0.0, %v8673
        %v8675 = vpop.f32.mrb[0].mxu0
        %8676 = vmatprep.mubr.f32.mxu0 0.0
        %8677 = vmatmul.mubr.f32.gmra.mrb[0].mxu0 %v8475
        %v8678 = vpop.f32.mrb[0].mxu0
        %v8679 = vadd.f32 0.0, %v8678
        %v8680 = vpop.f32.mrb[0].mxu0
        %8681 = vmatprep.mubr.f32.mxu0 0.0
        %8682 = vmatmul.mubr.f32.gmra.mrb[0].mxu0 %v8478
        %v8683 = vpop.f32.mrb[0].mxu0
        %v8684 = vadd.f32 0.0, %v8683
        %v8685 = vpop.f32.mrb[0].mxu0
        %8686 = vmatprep.mubr.f32.mxu0 0.0
        %8687 = vmatmul.mubr.f32.gmra.mrb[0].mxu0 %v8481
        %v8688 = vpop.f32.mrb[0].mxu0
        %v8689 = vadd.f32 0.0, %v8688
        %v8690 = vpop.f32.mrb[0].mxu0
        %8691 = vmatprep.mubr.f32.mxu0 0.0
        %8692 = vmatmul.mubr.f32.gmra.mrb[0].mxu0 %v8484
        %v8693 = vpop.f32.mrb[0].mxu0
        %v8694 = vadd.f32 0.0, %v8693
        %v8695 = vpop.f32.mrb[0].mxu0
        %8696 = vmatprep.mubr.f32.mxu0 0.0
        %8697 = vmatmul.mubr.f32.gmra.mrb[0].mxu0 %v8487
        %v8698 = vpop.f32.mrb[0].mxu0
        %v8699 = vadd.f32 0.0, %v8698
        %v8700 = vpop.f32.mrb[0].mxu0
        %8701 = vmatprep.mubr.f32.mxu0 0.0
        %8702 = vmatmul.mubr.f32.gmra.mrb[0].mxu0 %v8490
        %v8703 = vpop.f32.mrb[0].mxu0
        %v8704 = vadd.f32 0.0, %v8703
        %v8705 = vpop.f32.mrb[0].mxu0
        %8706 = vmatprep.mubr.f32.mxu0 0.0
        %8707 = vmatmul.mubr.f32.gmra.mrb[0].mxu0 %v8493
        %v8708 = vpop.f32.mrb[0].mxu0
        %v8709 = vadd.f32 0.0, %v8708
        %v8710 = vpop.f32.mrb[0].mxu0
        %8711 = vmatprep.mubr.f32.mxu0 0.0
        %8712 = vmatmul.mubr.f32.gmra.mrb[0].mxu0 %v8496
        %v8713 = vpop.f32.mrb[0].mxu0
        %v8714 = vadd.f32 0.0, %v8713
        %v8715 = vpop.f32.mrb[0].mxu0
        %8716 = vmatprep.mubr.f32.mxu0 0.0
        %8717 = vmatmul.mubr.f32.gmra.mrb[0].mxu0 %v8499
        %v8718 = vpop.f32.mrb[0].mxu0
        %v8719 = vadd.f32 0.0, %v8718
        %v8720 = vpop.f32.mrb[0].mxu0
        %8721 = vmatprep.mubr.f32.mxu0 0.0
        %8722 = vmatmul.mubr.f32.gmra.mrb[0].mxu0 %v8502
        %v8723 = vpop.f32.mrb[0].mxu0
        %v8724 = vadd.f32 0.0, %v8723
        %v8725 = vpop.f32.mrb[0].mxu0
        %8726 = vmatprep.mubr.f32.mxu0 0.0
        %8727 = vmatmul.mubr.f32.gmra.mrb[0].mxu0 %v8505
        %v8728 = vpop.f32.mrb[0].mxu0
        %v8729 = vadd.f32 0.0, %v8728
        %v8730 = vpop.f32.mrb[0].mxu0
        %8731 = vdwg.mxu0
        %v8732 = vadd.f32 %v8342, %v8574
        %v8733 = vadd.f32 %v8343, %v8579
        %v8734 = vadd.f32 %v8344, %v8584
        %v8735 = vadd.f32 %v8345, %v8589
        %v8736 = vadd.f32 %v8346, %v8594
        %v8737 = vadd.f32 %v8347, %v8599
        %v8738 = vadd.f32 %v8348, %v8604
        %v8739 = vadd.f32 %v8349, %v8609
        %v8740 = vadd.f32 %v8350, %v8614
        %v8741 = vadd.f32 %v8351, %v8619
        %v8742 = vadd.f32 %v8352, %v8624
        %v8743 = vadd.f32 %v8353, %v8629
        %v8744 = vadd.f32 %v8354, %v8634
        %v8745 = vadd.f32 %v8355, %v8639
        %v8746 = vadd.f32 %v8356, %v8644
        %v8747 = vadd.f32 %v8357, %v8649
        %v8748 = vadd.f32 %v8358, %v8654
        %v8749 = vadd.f32 %v8359, %v8659
        %v8750 = vadd.f32 %v8360, %v8664
        %v8751 = vadd.f32 %v8361, %v8669
        %v8752 = vadd.f32 %v8362, %v8674
        %v8753 = vadd.f32 %v8363, %v8679
        %v8754 = vadd.f32 %v8364, %v8684
        %v8755 = vadd.f32 %v8365, %v8689
        %v8756 = vadd.f32 %v8366, %v8694
        %v8757 = vadd.f32 %v8367, %v8699
        %v8758 = vadd.f32 %v8368, %v8704
        %v8759 = vadd.f32 %v8369, %v8709
        %v8760 = vadd.f32 %v8370, %v8714
        %v8761 = vadd.f32 %v8371, %v8719
        %v8762 = vadd.f32 %v8372, %v8724
        %v8763 = vadd.f32 %v8373, %v8729
        %v8764 = vld [vmem:[#allocation11] sm:$0x1]
        %v8766 = vlaneseq
        %v8767 = vshrl.u32 %v8766, 7
        %v8768 = vsub.s32 0, %v8767
        %v8769 = vrot.slane %v8764, %v8768
        %v8771 = vadd.f32 %v8732, %v8769
        %v8772 = vadd.f32 %v8733, %v8769
        %v8773 = vadd.f32 %v8734, %v8769
        %v8774 = vadd.f32 %v8735, %v8769
        %v8775 = vadd.f32 %v8736, %v8769
        %v8776 = vadd.f32 %v8737, %v8769
        %v8777 = vadd.f32 %v8738, %v8769
        %v8778 = vadd.f32 %v8739, %v8769
        %v8779 = vadd.f32 %v8740, %v8769
        %v8780 = vadd.f32 %v8741, %v8769
        %v8781 = vadd.f32 %v8742, %v8769
        %v8782 = vadd.f32 %v8743, %v8769
        %v8783 = vadd.f32 %v8744, %v8769
        %v8784 = vadd.f32 %v8745, %v8769
        %v8785 = vadd.f32 %v8746, %v8769
        %v8786 = vadd.f32 %v8747, %v8769
        %v8787 = vadd.f32 %v8748, %v8769
        %v8788 = vadd.f32 %v8749, %v8769
        %v8789 = vadd.f32 %v8750, %v8769
        %v8790 = vadd.f32 %v8751, %v8769
        %v8791 = vadd.f32 %v8752, %v8769
        %v8792 = vadd.f32 %v8753, %v8769
        %v8793 = vadd.f32 %v8754, %v8769
        %v8794 = vadd.f32 %v8755, %v8769
        %v8795 = vadd.f32 %v8756, %v8769
        %v8796 = vadd.f32 %v8757, %v8769
        %v8797 = vadd.f32 %v8758, %v8769
        %v8798 = vadd.f32 %v8759, %v8769
        %v8799 = vadd.f32 %v8760, %v8769
        %v8800 = vadd.f32 %v8761, %v8769
        %v8801 = vadd.f32 %v8762, %v8769
        %v8802 = vadd.f32 %v8763, %v8769
        %v8803 = vadd.f32 %v3102, %v8771
        %v8804 = vadd.f32 %v3103, %v8772
        %v8805 = vadd.f32 %v3104, %v8773
        %v8806 = vadd.f32 %v3105, %v8774
        %v8807 = vadd.f32 %v3106, %v8775
        %v8808 = vadd.f32 %v3107, %v8776
        %v8809 = vadd.f32 %v3108, %v8777
        %v8810 = vadd.f32 %v3109, %v8778
        %v8811 = vadd.f32 %v3110, %v8779
        %v8812 = vadd.f32 %v3111, %v8780
        %v8813 = vadd.f32 %v3112, %v8781
        %v8814 = vadd.f32 %v3113, %v8782
        %v8815 = vadd.f32 %v3114, %v8783
        %v8816 = vadd.f32 %v3115, %v8784
        %v8817 = vadd.f32 %v3116, %v8785
        %v8818 = vadd.f32 %v3117, %v8786
        %v8819 = vadd.f32 %v3118, %v8787
        %v8820 = vadd.f32 %v3119, %v8788
        %v8821 = vadd.f32 %v3120, %v8789
        %v8822 = vadd.f32 %v3121, %v8790
        %v8823 = vadd.f32 %v3122, %v8791
        %v8824 = vadd.f32 %v3123, %v8792
        %v8825 = vadd.f32 %v3124, %v8793
        %v8826 = vadd.f32 %v3125, %v8794
        %v8827 = vadd.f32 %v3126, %v8795
        %v8828 = vadd.f32 %v3127, %v8796
        %v8829 = vadd.f32 %v3128, %v8797
        %v8830 = vadd.f32 %v3129, %v8798
        %v8831 = vadd.f32 %v3130, %v8799
        %v8832 = vadd.f32 %v3131, %v8800
        %v8833 = vadd.f32 %v3132, %v8801
        %v8834 = vadd.f32 %v3133, %v8802
        %8835 = vst [vmem:[%s642] sm:$0xff] %v8803
        %8836 = vst [vmem:[%s642 + $0x8] sm:$0xff] %v8804
        %8837 = vst [vmem:[%s642 + $0x10] sm:$0xff] %v8805
        %8838 = vst [vmem:[%s642 + $0x18] sm:$0xff] %v8806
        %8839 = vst [vmem:[%s642 + $0x20] sm:$0xff] %v8807
        %8840 = vst [vmem:[%s642 + $0x28] sm:$0xff] %v8808
        %8841 = vst [vmem:[%s642 + $0x30] sm:$0xff] %v8809
        %8842 = vst [vmem:[%s642 + $0x38] sm:$0xff] %v8810
        %8843 = vst [vmem:[%s642 + $0x40] sm:$0xff] %v8811
        %8844 = vst [vmem:[%s642 + $0x48] sm:$0xff] %v8812
        %8845 = vst [vmem:[%s642 + $0x50] sm:$0xff] %v8813
        %8846 = vst [vmem:[%s642 + $0x58] sm:$0xff] %v8814
        %8847 = vst [vmem:[%s642 + $0x60] sm:$0xff] %v8815
        %8848 = vst [vmem:[%s642 + $0x68] sm:$0xff] %v8816
        %8849 = vst [vmem:[%s642 + $0x70] sm:$0xff] %v8817
        %8850 = vst [vmem:[%s642 + $0x78] sm:$0xff] %v8818
        %8851 = vst [vmem:[%s642 + $0x80] sm:$0xff] %v8819
        %8852 = vst [vmem:[%s642 + $0x88] sm:$0xff] %v8820
        %8853 = vst [vmem:[%s642 + $0x90] sm:$0xff] %v8821
        %8854 = vst [vmem:[%s642 + $0x98] sm:$0xff] %v8822
        %8855 = vst [vmem:[%s642 + $0xa0] sm:$0xff] %v8823
        %8856 = vst [vmem:[%s642 + $0xa8] sm:$0xff] %v8824
        %8857 = vst [vmem:[%s642 + $0xb0] sm:$0xff] %v8825
        %8858 = vst [vmem:[%s642 + $0xb8] sm:$0xff] %v8826
        %8859 = vst [vmem:[%s642 + $0xc0] sm:$0xff] %v8827
        %8860 = vst [vmem:[%s642 + $0xc8] sm:$0xff] %v8828
        %8861 = vst [vmem:[%s642 + $0xd0] sm:$0xff] %v8829
        %8862 = vst [vmem:[%s642 + $0xd8] sm:$0xff] %v8830
        %8863 = vst [vmem:[%s642 + $0xe0] sm:$0xff] %v8831
        %8864 = vst [vmem:[%s642 + $0xe8] sm:$0xff] %v8832
        %8865 = vst [vmem:[%s642 + $0xf0] sm:$0xff] %v8833
        %8866 = vst [vmem:[%s642 + $0xf8] sm:$0xff] %v8834
        %p8867 = scmp.lt.s32.totalorder %s32, 1
        %s8868 = scalar_select %p8867, %s32, 1
        %s8869 = smul.addr %s8868, 32
        %s8870 = smul.addr %s8869, 8
        %s8871 = scalar_lea.vmem %s16, %s8870
        // Predicated region
        $region117: #{adain_decoder_block.1} parent=83 // pred_check
          %p8872 = pneg %p396
        $region118: #{adain_decoder_block.1} parent=83 // pred_check_branch
          %8874 = sbr.rel (%p8872) target = $region120
        $region119: #{adain_decoder_block.1} parent=83 // pred_region
          _
        $region120: #{adain_decoder_block.1} parent=83 // pred_fallthru
          _
      $region84: #{adain_decoder_block.1} parent=5 // pred_fallthru
        _
      %p8875 = scmp.le.s32.totalorder 2, %s27
      // Predicated region
      $region121: #{adain_decoder_block.1} parent=5 // pred_check
        %p8876 = pneg %p8875
      $region122: #{adain_decoder_block.1} parent=5 // pred_check_branch
        %8878 = sbr.rel (%p8876) target = $region124
      $region123: #{adain_decoder_block.1} parent=5 // pred_region
        %s8879 = ssub.s32 %s27, 2
        // Predicated region
        $region125: #{adain_decoder_block.1} parent=123 // pred_check
          %p8880 = pneg %p402
        $region126: #{adain_decoder_block.1} parent=123 // pred_check_branch
          %8882 = sbr.rel (%p8880) target = $region128
        $region127: #{adain_decoder_block.1} parent=123 // pred_region
          %p8883 = scmp.lt.s32.totalorder %s33, 1
          %s8884 = scalar_select %p8883, %s33, 1
          %s8885 = smul.addr %s8884, 32
          %s8886 = smul.addr %s8885, 8
          %s8887 = scalar_lea.vmem %s16, %s8886
        $region128: #{adain_decoder_block.1} parent=123 // pred_fallthru
          _
      $region124: #{adain_decoder_block.1} parent=5 // pred_fallthru
        _
    $region6: #{adain_decoder_block.1} parent=1 // loop_footer
      %s31 = sadd.s32 1, %s27
    $region7: #{adain_decoder_block.1} parent=1 // loop_footer_branch
      %26 = sbr.rel target = $region3
    $region8: #{adain_decoder_block.1} parent=1 // loop_exit
      _
    %8888 = vsyncpa [#allocation4], 1
    %s8889 = scalar_lea.sflag [#allocation4], 1
    %8890 = vsyncpa %s8889, 1
    %8891 = vsyncpa [#allocation6], 1
    %8892 = vsyncpa [#allocation9], 1
    %8893 = vsyncpa [#allocation12], 1
    %8894 = vsyncpa [#allocation15], 1

</llo_original>
